<compile_context>
chip_gen: v7x
topology: tpu7x:2x2x1
jax: 0.10.0
libtpu: 0.0.40
codegen_flags: <defaults>
</compile_context>

<pallas_src>
import functools

import jax
import jax.numpy as jnp
from jax.experimental import pallas as pl
from jax.experimental.pallas import tpu as pltpu


def _round_up(v, m):
    return -(-v // m) * m


def _sigmoid(x):
    # sigmoid(x) = 0.5 * tanh(0.5 x) + 0.5  -> one EUP transcendental.
    return 0.5 * jnp.tanh(0.5 * x) + 0.5


# ----------------------------------------------------------------------------
# LSTM layer kernel: grid=(batch_tiles, T/K), K timesteps per grid step.
# x_mode:   "btd"  -> x block (bb, K, Din)   (batch-first raw input)
#           "tbd"  -> x block (K, bb, Din)   (time-major inter-layer sequence)
#           "const"-> x block (1, bb, Din)   (decoder input, constant over time)
# out_mode: "seq"     -> hidden sequence (K, bb, H) time-major
#           "last_fc" -> final h -> encoder_fc -> decoder_fc, (bb, H), last chunk
#           "proj"    -> fused output fc, batch-first (bb, K, Dout)
# ----------------------------------------------------------------------------
def _lstm_chunk_kernel(*refs, hidden, chunk, seq_len, pad_len, x_mode, out_mode):
    if out_mode == "last_fc":
        (x_ref, wih_ref, whh_ref, b_ref,
         wefc_ref, befc_ref, wdfc_ref, bdfc_ref,
         out_ref, h_sc, c_sc) = refs
    elif out_mode == "proj":
        (x_ref, wih_ref, whh_ref, b_ref,
         wout_ref, bout_ref, out_ref, h_sc, c_sc) = refs
    else:  # "seq"
        (x_ref, wih_ref, whh_ref, b_ref, out_ref, h_sc, c_sc) = refs

    H = hidden
    K = chunk
    t = pl.program_id(1)

    @pl.when(t == 0)
    def _():
        h_sc[...] = jnp.zeros_like(h_sc)
        c_sc[...] = jnp.zeros_like(c_sc)

    wih = wih_ref[...]            # (Din, 4H) bf16, VMEM-resident for all chunks
    whh = whh_ref[...]            # (H, 4H)   bf16
    bias = b_ref[...]             # (1, 4H)   f32
    bb = h_sc.shape[0]

    # ---- x-contribution to the gates for the whole chunk: one MXU pass ------
    if x_mode == "const":
        xk = x_ref[0].astype(jnp.bfloat16)                       # (bb, Din)
        gx = jnp.dot(xk, wih, preferred_element_type=jnp.float32) + bias

        def gx_at(k):
            return gx
    elif x_mode == "btd":
        x = x_ref[...]                                           # (bb, K, Din)
        din = x.shape[-1]
        gx = (jnp.dot(x.reshape(bb * K, din).astype(jnp.bfloat16), wih,
                      preferred_element_type=jnp.float32) + bias
              ).reshape(bb, K, 4 * H)

        def gx_at(k):
            return gx[:, k, :]
    else:  # "tbd"
        x = x_ref[...]                                           # (K, bb, Din)
        din = x.shape[-1]
        gx = (jnp.dot(x.reshape(K * bb, din).astype(jnp.bfloat16), wih,
                      preferred_element_type=jnp.float32) + bias
              ).reshape(K, bb, 4 * H)

        def gx_at(k):
            return gx[k]

    # ---- K-step recurrence; h/c carried in vregs, scratch written once ------
    h = h_sc[...]
    c = c_sc[...]
    mask_tail = (pad_len != seq_len)     # static Python bool
    hs = []
    for k in range(K):                   # small static unrolled loop
        gates = gx_at(k) + jnp.dot(h.astype(jnp.bfloat16), whh,
                                   preferred_element_type=jnp.float32)
        i_g = _sigmoid(gates[:, 0 * H:1 * H])        # lane-aligned (H % 128 == 0)
        f_g = _sigmoid(gates[:, 1 * H:2 * H])
        g_g = jnp.tanh(gates[:, 2 * H:3 * H])
        o_g = _sigmoid(gates[:, 3 * H:4 * H])
        c_new = f_g * c + i_g * g_g
        h_new = o_g * jnp.tanh(c_new)
        if mask_tail:                    # only traced when T was padded
            valid = (t * K + k) < seq_len
            h_new = jnp.where(valid, h_new, h)
            c_new = jnp.where(valid, c_new, c)
        h, c = h_new, c_new
        if out_mode != "last_fc":
            hs.append(h)

    h_sc[...] = h
    c_sc[...] = c

    # ---- outputs -------------------------------------------------------------
    if out_mode == "seq":
        out_ref[...] = jnp.stack(hs, axis=0).astype(out_ref.dtype)     # (K, bb, H)
    elif out_mode == "proj":
        # Fused output fc over the whole chunk, emitted batch-first.
        hseq = jnp.stack(hs, axis=1).reshape(bb * K, H)                # (bb*K, H)
        y = (jnp.dot(hseq.astype(jnp.bfloat16), wout_ref[...],
                     preferred_element_type=jnp.float32) + bout_ref[...])
        out_ref[...] = y.reshape(bb, K, -1).astype(out_ref.dtype)      # (bb, K, Dout)
    else:  # "last_fc": final h -> encoder_fc -> decoder_fc (kept sequential)
        @pl.when(t == pl.num_programs(1) - 1)
        def _():
            lat = (jnp.dot(h.astype(jnp.bfloat16), wefc_ref[...],
                           preferred_element_type=jnp.float32) + befc_ref[...])
            hid = (jnp.dot(lat.astype(jnp.bfloat16), wdfc_ref[...],
                           preferred_element_type=jnp.float32) + bdfc_ref[...])
            out_ref[...] = hid.astype(out_ref.dtype)


def run_lstm_layer(x, lstm_weights, *, x_mode, out_mode, extra_weights=(),
                   seq_len, padded_len, chunk, batch_tile, hidden_pad,
                   out_dim=None):
    """One LSTM layer over the whole (padded) sequence in a single pallas_call."""
    w_ih, w_hh, b = lstm_weights
    if x_mode == "btd":
        Bp = x.shape[0]
        x_spec = pl.BlockSpec((batch_tile, chunk, x.shape[-1]),
                              lambda bi, ti: (bi, ti, 0))
    elif x_mode == "tbd":
        Bp = x.shape[1]
        x_spec = pl.BlockSpec((chunk, batch_tile, x.shape[-1]),
                              lambda bi, ti: (ti, bi, 0))
    else:  # "const"
        Bp = x.shape[1]
        x_spec = pl.BlockSpec((1, batch_tile, x.shape[-1]),
                              lambda bi, ti: (0, bi, 0))
    n_b = Bp // batch_tile
    n_chunks = padded_len // chunk

    def const_spec(arr):  # weights/biases: DMA'd once, VMEM-resident
        return pl.BlockSpec(arr.shape, lambda bi, ti: (0, 0))

    ins = [x, w_ih, w_hh, b, *extra_weights]
    in_specs = ([x_spec, const_spec(w_ih), const_spec(w_hh), const_spec(b)]
                + [const_spec(w) for w in extra_weights])

    if out_mode == "seq":
        out_shape = jax.ShapeDtypeStruct((padded_len, Bp, hidden_pad), jnp.float32)
        out_specs = pl.BlockSpec((chunk, batch_tile, hidden_pad),
                                 lambda bi, ti: (ti, bi, 0))
    elif out_mode == "proj":
        out_shape = jax.ShapeDtypeStruct((Bp, padded_len, out_dim), jnp.float32)
        out_specs = pl.BlockSpec((batch_tile, chunk, out_dim),
                                 lambda bi, ti: (bi, ti, 0))
    else:  # "last_fc"
        out_shape = jax.ShapeDtypeStruct((Bp, hidden_pad), jnp.float32)
        out_specs = pl.BlockSpec((batch_tile, hidden_pad), lambda bi, ti: (bi, 0))

    kernel = functools.partial(
        _lstm_chunk_kernel, hidden=hidden_pad, chunk=chunk, seq_len=seq_len,
        pad_len=padded_len, x_mode=x_mode, out_mode=out_mode)

    return pl.pallas_call(
        kernel,
        grid=(n_b, n_chunks),
        in_specs=in_specs,
        out_specs=out_specs,
        out_shape=out_shape,
        scratch_shapes=[pltpu.VMEM((batch_tile, hidden_pad), jnp.float32),
                        pltpu.VMEM((batch_tile, hidden_pad), jnp.float32)],
        compiler_params=pltpu.CompilerParams(
            dimension_semantics=("parallel", "arbitrary")),  # batch || , time seq
    )(*ins)


# ----------------------------------------------------------------------------
# LSTMAE forward (batch-first (B, T, input_dim) -> (B, T, input_dim))
# ----------------------------------------------------------------------------
def lstmae_forward(x, kp, *, chunk_steps=8):
    B, T, _ = x.shape
    Hp = kp["enc"][0][1].shape[0]            # padded hidden size (from W_hh)
    out_dim = kp["out_fc"][0].shape[1]

    chunk = int(chunk_steps)
    Tp = _round_up(T, chunk)
    Bp = max(8, _round_up(B, 8))
    bb = Bp // 2 if (Bp >= 32 and (Bp // 2) % 8 == 0) else Bp   # v7x: 2 TCs

    xp = x
    if (Bp, Tp) != (B, T):
        xp = jnp.pad(x, ((0, Bp - B), (0, Tp - T), (0, 0)))

    common = dict(seq_len=T, padded_len=Tp, chunk=chunk, batch_tile=bb,
                  hidden_pad=Hp)

    # --- Encoder stack. Last layer keeps only the final h and applies
    #     encoder_fc -> decoder_fc in-kernel (the reference repeats identical
    #     rows T times before these FCs, so once-per-row is equivalent). ------
    cur, mode = xp, "btd"
    n_enc = len(kp["enc"])
    x_hid = None
    for li, layer in enumerate(kp["enc"]):
        if li < n_enc - 1:
            cur = run_lstm_layer(cur, layer, x_mode=mode, out_mode="seq", **common)
            mode = "tbd"
        else:
            w_efc, b_efc = kp["enc_fc"]
            w_dfc, b_dfc = kp["dec_fc"]
            x_hid = run_lstm_layer(cur, layer, x_mode=mode, out_mode="last_fc",
                                   extra_weights=(w_efc, b_efc, w_dfc, b_dfc),
                                   **common)                    # (Bp, Hp)

    # --- Decoder stack; layer 0 sees the same input at every timestep.
    #     Last layer fuses the output fc and writes batch-first directly. -----
    cur, mode = x_hid[None], "const"                            # (1, Bp, Hp)
    n_dec = len(kp["dec"])
    y = None
    for li, layer in enumerate(kp["dec"]):
        if li < n_dec - 1:
            cur = run_lstm_layer(cur, layer, x_mode=mode, out_mode="seq", **common)
            mode = "tbd"
        else:
            w_out, b_out = kp["out_fc"]
            y = run_lstm_layer(cur, layer, x_mode=mode, out_mode="proj",
                               extra_weights=(w_out, b_out), out_dim=out_dim,
                               **common)                        # (Bp, Tp, out_dim)
    return y[:B, :T]


# ----------------------------------------------------------------------------
# Parameters: PyTorch-style init + kernel-ready preparation
# (transpose, per-gate column padding of H to a multiple of 128, bias fusion,
#  bf16 weights / f32 biases).  Zero padding is numerically exact.
# ----------------------------------------------------------------------------
def init_params(key, input_dim, hidden_size, latent_dim, num_layers):
    def uniform(k, shape, bound):
        return jax.random.uniform(k, shape, jnp.float32, -bound, bound)

    ks = iter(jax.random.split(key, 8 * num_layers + 6))
    kb = hidden_size ** -0.5

    def lstm(in0):
        layers = []
        for layer in range(num_layers):
            din = in0 if layer == 0 else hidden_size
            layers.append(dict(
                w_ih=uniform(next(ks), (4 * hidden_size, din), kb),
                w_hh=uniform(next(ks), (4 * hidden_size, hidden_size), kb),
                b_ih=uniform(next(ks), (4 * hidden_size,), kb),
                b_hh=uniform(next(ks), (4 * hidden_size,), kb)))
        return layers

    def lin(din, dout):
        kf = din ** -0.5
        return dict(w=uniform(next(ks), (dout, din), kf),
                    b=uniform(next(ks), (dout,), kf))

    return dict(enc_lstm=lstm(input_dim), dec_lstm=lstm(hidden_size),
                enc_fc=lin(hidden_size, latent_dim),
                dec_fc=lin(latent_dim, hidden_size),
                out_fc=lin(hidden_size, input_dim))


def prepare_params(params, hidden_size):
    H = hidden_size
    Hp = _round_up(H, 128)

    def pad_gate_cols(w):               # (R, 4H) -> (R, 4Hp), zero-padded per gate
        r = w.shape[0]
        w = w.reshape(r, 4, H)
        w = jnp.pad(w, ((0, 0), (0, 0), (0, Hp - H)))
        return w.reshape(r, 4 * Hp)

    def prep_lstm(layer, pad_in_rows):
        w_ih = layer["w_ih"].T                       # (din, 4H)
        w_hh = jnp.pad(layer["w_hh"].T, ((0, Hp - H), (0, 0)))
        if pad_in_rows:
            w_ih = jnp.pad(w_ih, ((0, Hp - H), (0, 0)))
        b = (layer["b_ih"] + layer["b_hh"]).reshape(1, 4 * H)
        return (pad_gate_cols(w_ih).astype(jnp.bfloat16),
                pad_gate_cols(w_hh).astype(jnp.bfloat16),
                pad_gate_cols(b))                    # bias stays f32

    def prep_lin(lin, pad_rows=False, pad_cols=False):
        w = lin["w"].T                               # (din, dout)
        b = lin["b"].reshape(1, -1)
        if pad_rows:
            w = jnp.pad(w, ((0, Hp - H), (0, 0)))
        if pad_cols:
            w = jnp.pad(w, ((0, 0), (0, Hp - H)))
            b = jnp.pad(b, ((0, 0), (0, Hp - H)))
        return w.astype(jnp.bfloat16), b

    enc = [prep_lstm(l, pad_in_rows=(i > 0))
           for i, l in enumerate(params["enc_lstm"])]
    dec = [prep_lstm(l, pad_in_rows=True) for l in params["dec_lstm"]]
    return dict(enc=enc, dec=dec,
                enc_fc=prep_lin(params["enc_fc"], pad_rows=True),
                dec_fc=prep_lin(params["dec_fc"], pad_cols=True),
                out_fc=prep_lin(params["out_fc"], pad_rows=True))


if __name__ == "__main__":
    B, T = 2, 8
    input_dim, hidden_size, latent_dim, num_layers = 16, 32, 16, 2

    key = jax.random.PRNGKey(0)
    k_x, k_p = jax.random.split(key)
    x = jax.random.normal(k_x, (B, T, input_dim), jnp.float32)
    params = init_params(k_p, input_dim, hidden_size, latent_dim, num_layers)
    kparams = prepare_params(params, hidden_size)

    fwd = jax.jit(lstmae_forward)
    x_dec = fwd(x, kparams)
    jax.block_until_ready(x_dec)
    assert x_dec.shape == (B, T, input_dim)
    print("KERNEL_OK")
</pallas_src>

<mosaic_0001>
module attributes {stable_mosaic.version = 11 : i64} {
  func.func @_lstm_chunk_kernel(%arg0: i32, %arg1: i32, %arg2: memref<8x8x128xf32, #tpu.memory_space<vmem>>, %arg3: memref<128x512xbf16, #tpu.memory_space<vmem>>, %arg4: memref<128x512xbf16, #tpu.memory_space<vmem>>, %arg5: memref<1x512xf32, #tpu.memory_space<vmem>>, %arg6: memref<128x16xbf16, #tpu.memory_space<vmem>>, %arg7: memref<1x16xf32, #tpu.memory_space<vmem>>, %arg8: memref<16x128xbf16, #tpu.memory_space<vmem>>, %arg9: memref<1x128xf32, #tpu.memory_space<vmem>>, %arg10: memref<8x128xf32, #tpu.memory_space<vmem>>, %arg11: memref<8x128xf32, #tpu.memory_space<vmem>>, %arg12: memref<8x128xf32, #tpu.memory_space<vmem>>) attributes {dimension_semantics = [#tpu.dimension_semantics<parallel>, #tpu.dimension_semantics<arbitrary>], iteration_bounds = array<i64: 1, 1>, scalar_prefetch = 0 : i64, scratch_operands = 2 : i64, tpu.core_type = #tpu.core_type<tc>, window_params = [{transform_indices = @transform_0, window_bounds = array<i64: 8, 8, 128>}, {pipeline_mode = #tpu.pipeline_mode<synchronous>, transform_indices = @transform_1, window_bounds = array<i64: 128, 512>}, {pipeline_mode = #tpu.pipeline_mode<synchronous>, transform_indices = @transform_2, window_bounds = array<i64: 128, 512>}, {pipeline_mode = #tpu.pipeline_mode<synchronous>, transform_indices = @transform_3, window_bounds = array<i64: 1, 512>}, {pipeline_mode = #tpu.pipeline_mode<synchronous>, transform_indices = @transform_4, window_bounds = array<i64: 128, 16>}, {pipeline_mode = #tpu.pipeline_mode<synchronous>, transform_indices = @transform_5, window_bounds = array<i64: 1, 16>}, {pipeline_mode = #tpu.pipeline_mode<synchronous>, transform_indices = @transform_6, window_bounds = array<i64: 16, 128>}, {pipeline_mode = #tpu.pipeline_mode<synchronous>, transform_indices = @transform_7, window_bounds = array<i64: 1, 128>}, {transform_indices = @transform_8, window_bounds = array<i64: 8, 128>}]} {
    %c0_i32 = arith.constant 0 : i32
    %0 = arith.cmpi eq, %arg1, %c0_i32 : i32
    %1 = arith.extui %0 : i1 to i32
    %c0_i32_0 = arith.constant 0 : i32
    %2 = arith.cmpi ne, %1, %c0_i32_0 : i32
    scf.if %2 {
      %cst_99 = arith.constant 0.000000e+00 : f32
      %308 = vector.broadcast %cst_99 : f32 to vector<8x128xf32>
      %c0_100 = arith.constant 0 : index
      %c0_101 = arith.constant 0 : index
      %309 = vector.load %arg11[%c0_100, %c0_101] : memref<8x128xf32, #tpu.memory_space<vmem>>, vector<8x128xf32>
      tpu.vector_store %arg11[%c0_100, %c0_101], %308 {strides = array<i32>} : memref<8x128xf32, #tpu.memory_space<vmem>>, vector<8x128xf32>,
      %cst_102 = arith.constant 0.000000e+00 : f32
      %310 = vector.broadcast %cst_102 : f32 to vector<8x128xf32>
      %c0_103 = arith.constant 0 : index
      %c0_104 = arith.constant 0 : index
      %311 = vector.load %arg12[%c0_103, %c0_104] : memref<8x128xf32, #tpu.memory_space<vmem>>, vector<8x128xf32>
      tpu.vector_store %arg12[%c0_103, %c0_104], %310 {strides = array<i32>} : memref<8x128xf32, #tpu.memory_space<vmem>>, vector<8x128xf32>,
    } else {
    }
    %c0 = arith.constant 0 : index
    %c0_1 = arith.constant 0 : index
    %3 = vector.load %arg3[%c0, %c0_1] : memref<128x512xbf16, #tpu.memory_space<vmem>>, vector<128x512xbf16>
    %c0_2 = arith.constant 0 : index
    %c0_3 = arith.constant 0 : index
    %4 = vector.load %arg4[%c0_2, %c0_3] : memref<128x512xbf16, #tpu.memory_space<vmem>>, vector<128x512xbf16>
    %c0_4 = arith.constant 0 : index
    %c0_5 = arith.constant 0 : index
    %5 = vector.load %arg5[%c0_4, %c0_5] : memref<1x512xf32, #tpu.memory_space<vmem>>, vector<1x512xf32>
    %c0_6 = arith.constant 0 : index
    %c0_7 = arith.constant 0 : index
    %c0_8 = arith.constant 0 : index
    %6 = vector.load %arg2[%c0_6, %c0_7, %c0_8] : memref<8x8x128xf32, #tpu.memory_space<vmem>>, vector<8x8x128xf32>
    %7 = vector.shape_cast %6 : vector<8x8x128xf32> to vector<64x128xf32>
    %8 = arith.truncf %7 : vector<64x128xf32> to vector<64x128xbf16>
    %cst = arith.constant dense<0.000000e+00> : vector<64x512xf32>
    %9 = tpu.matmul %8, %3, %cst {dimension_numbers = #tpu.dot_dimension_numbers<[1], [0], [0], [1], [0, 0, 1, 1], [], []>} : vector<64x128xbf16>, vector<128x512xbf16>, vector<64x512xf32> -> vector<64x512xf32>
    %10 = vector.broadcast %5 : vector<1x512xf32> to vector<64x512xf32>
    %11 = arith.addf %9, %10 : vector<64x512xf32>
    %12 = vector.shape_cast %11 : vector<64x512xf32> to vector<8x8x512xf32>
    %c0_9 = arith.constant 0 : index
    %c0_10 = arith.constant 0 : index
    %13 = vector.load %arg11[%c0_9, %c0_10] : memref<8x128xf32, #tpu.memory_space<vmem>>, vector<8x128xf32>
    %c0_11 = arith.constant 0 : index
    %c0_12 = arith.constant 0 : index
    %14 = vector.load %arg12[%c0_11, %c0_12] : memref<8x128xf32, #tpu.memory_space<vmem>>, vector<8x128xf32>
    %15 = vector.extract_strided_slice %12 {offsets = [0, 0, 0], sizes = [1, 8, 512], strides = [1, 1, 1]} : vector<8x8x512xf32> to vector<1x8x512xf32>
    %16 = vector.shape_cast %15 : vector<1x8x512xf32> to vector<8x512xf32>
    %17 = arith.truncf %13 : vector<8x128xf32> to vector<8x128xbf16>
    %cst_13 = arith.constant dense<0.000000e+00> : vector<8x512xf32>
    %18 = tpu.matmul %17, %4, %cst_13 {dimension_numbers = #tpu.dot_dimension_numbers<[1], [0], [0], [1], [0, 0, 1, 1], [], []>} : vector<8x128xbf16>, vector<128x512xbf16>, vector<8x512xf32> -> vector<8x512xf32>
    %19 = arith.addf %16, %18 : vector<8x512xf32>
    %20 = vector.extract_strided_slice %19 {offsets = [0, 0], sizes = [8, 128], strides = [1, 1]} : vector<8x512xf32> to vector<8x128xf32>
    %cst_14 = arith.constant 5.000000e-01 : f32
    %21 = vector.broadcast %cst_14 : f32 to vector<8x128xf32>
    %22 = arith.mulf %21, %20 : vector<8x128xf32>
    %23 = math.tanh %22 : vector<8x128xf32>
    %cst_15 = arith.constant 5.000000e-01 : f32
    %24 = vector.broadcast %cst_15 : f32 to vector<8x128xf32>
    %25 = arith.mulf %24, %23 : vector<8x128xf32>
    %cst_16 = arith.constant 5.000000e-01 : f32
    %26 = vector.broadcast %cst_16 : f32 to vector<8x128xf32>
    %27 = arith.addf %25, %26 : vector<8x128xf32>
    %28 = vector.extract_strided_slice %19 {offsets = [0, 128], sizes = [8, 128], strides = [1, 1]} : vector<8x512xf32> to vector<8x128xf32>
    %cst_17 = arith.constant 5.000000e-01 : f32
    %29 = vector.broadcast %cst_17 : f32 to vector<8x128xf32>
    %30 = arith.mulf %29, %28 : vector<8x128xf32>
    %31 = math.tanh %30 : vector<8x128xf32>
    %cst_18 = arith.constant 5.000000e-01 : f32
    %32 = vector.broadcast %cst_18 : f32 to vector<8x128xf32>
    %33 = arith.mulf %32, %31 : vector<8x128xf32>
    %cst_19 = arith.constant 5.000000e-01 : f32
    %34 = vector.broadcast %cst_19 : f32 to vector<8x128xf32>
    %35 = arith.addf %33, %34 : vector<8x128xf32>
    %36 = vector.extract_strided_slice %19 {offsets = [0, 256], sizes = [8, 128], strides = [1, 1]} : vector<8x512xf32> to vector<8x128xf32>
    %37 = math.tanh %36 : vector<8x128xf32>
    %38 = vector.extract_strided_slice %19 {offsets = [0, 384], sizes = [8, 128], strides = [1, 1]} : vector<8x512xf32> to vector<8x128xf32>
    %cst_20 = arith.constant 5.000000e-01 : f32
    %39 = vector.broadcast %cst_20 : f32 to vector<8x128xf32>
    %40 = arith.mulf %39, %38 : vector<8x128xf32>
    %41 = math.tanh %40 : vector<8x128xf32>
    %cst_21 = arith.constant 5.000000e-01 : f32
    %42 = vector.broadcast %cst_21 : f32 to vector<8x128xf32>
    %43 = arith.mulf %42, %41 : vector<8x128xf32>
    %cst_22 = arith.constant 5.000000e-01 : f32
    %44 = vector.broadcast %cst_22 : f32 to vector<8x128xf32>
    %45 = arith.addf %43, %44 : vector<8x128xf32>
    %46 = arith.mulf %35, %14 : vector<8x128xf32>
    %47 = arith.mulf %27, %37 : vector<8x128xf32>
    %48 = arith.addf %46, %47 : vector<8x128xf32>
    %49 = math.tanh %48 : vector<8x128xf32>
    %50 = arith.mulf %45, %49 : vector<8x128xf32>
    %51 = vector.extract_strided_slice %12 {offsets = [1, 0, 0], sizes = [1, 8, 512], strides = [1, 1, 1]} : vector<8x8x512xf32> to vector<1x8x512xf32>
    %52 = vector.shape_cast %51 : vector<1x8x512xf32> to vector<8x512xf32>
    %53 = arith.truncf %50 : vector<8x128xf32> to vector<8x128xbf16>
    %cst_23 = arith.constant dense<0.000000e+00> : vector<8x512xf32>
    %54 = tpu.matmul %53, %4, %cst_23 {dimension_numbers = #tpu.dot_dimension_numbers<[1], [0], [0], [1], [0, 0, 1, 1], [], []>} : vector<8x128xbf16>, vector<128x512xbf16>, vector<8x512xf32> -> vector<8x512xf32>
    %55 = arith.addf %52, %54 : vector<8x512xf32>
    %56 = vector.extract_strided_slice %55 {offsets = [0, 0], sizes = [8, 128], strides = [1, 1]} : vector<8x512xf32> to vector<8x128xf32>
    %cst_24 = arith.constant 5.000000e-01 : f32
    %57 = vector.broadcast %cst_24 : f32 to vector<8x128xf32>
    %58 = arith.mulf %57, %56 : vector<8x128xf32>
    %59 = math.tanh %58 : vector<8x128xf32>
    %cst_25 = arith.constant 5.000000e-01 : f32
    %60 = vector.broadcast %cst_25 : f32 to vector<8x128xf32>
    %61 = arith.mulf %60, %59 : vector<8x128xf32>
    %cst_26 = arith.constant 5.000000e-01 : f32
    %62 = vector.broadcast %cst_26 : f32 to vector<8x128xf32>
    %63 = arith.addf %61, %62 : vector<8x128xf32>
    %64 = vector.extract_strided_slice %55 {offsets = [0, 128], sizes = [8, 128], strides = [1, 1]} : vector<8x512xf32> to vector<8x128xf32>
    %cst_27 = arith.constant 5.000000e-01 : f32
    %65 = vector.broadcast %cst_27 : f32 to vector<8x128xf32>
    %66 = arith.mulf %65, %64 : vector<8x128xf32>
    %67 = math.tanh %66 : vector<8x128xf32>
    %cst_28 = arith.constant 5.000000e-01 : f32
    %68 = vector.broadcast %cst_28 : f32 to vector<8x128xf32>
    %69 = arith.mulf %68, %67 : vector<8x128xf32>
    %cst_29 = arith.constant 5.000000e-01 : f32
    %70 = vector.broadcast %cst_29 : f32 to vector<8x128xf32>
    %71 = arith.addf %69, %70 : vector<8x128xf32>
    %72 = vector.extract_strided_slice %55 {offsets = [0, 256], sizes = [8, 128], strides = [1, 1]} : vector<8x512xf32> to vector<8x128xf32>
    %73 = math.tanh %72 : vector<8x128xf32>
    %74 = vector.extract_strided_slice %55 {offsets = [0, 384], sizes = [8, 128], strides = [1, 1]} : vector<8x512xf32> to vector<8x128xf32>
    %cst_30 = arith.constant 5.000000e-01 : f32
    %75 = vector.broadcast %cst_30 : f32 to vector<8x128xf32>
    %76 = arith.mulf %75, %74 : vector<8x128xf32>
    %77 = math.tanh %76 : vector<8x128xf32>
    %cst_31 = arith.constant 5.000000e-01 : f32
    %78 = vector.broadcast %cst_31 : f32 to vector<8x128xf32>
    %79 = arith.mulf %78, %77 : vector<8x128xf32>
    %cst_32 = arith.constant 5.000000e-01 : f32
    %80 = vector.broadcast %cst_32 : f32 to vector<8x128xf32>
    %81 = arith.addf %79, %80 : vector<8x128xf32>
    %82 = arith.mulf %71, %48 : vector<8x128xf32>
    %83 = arith.mulf %63, %73 : vector<8x128xf32>
    %84 = arith.addf %82, %83 : vector<8x128xf32>
    %85 = math.tanh %84 : vector<8x128xf32>
    %86 = arith.mulf %81, %85 : vector<8x128xf32>
    %87 = vector.extract_strided_slice %12 {offsets = [2, 0, 0], sizes = [1, 8, 512], strides = [1, 1, 1]} : vector<8x8x512xf32> to vector<1x8x512xf32>
    %88 = vector.shape_cast %87 : vector<1x8x512xf32> to vector<8x512xf32>
    %89 = arith.truncf %86 : vector<8x128xf32> to vector<8x128xbf16>
    %cst_33 = arith.constant dense<0.000000e+00> : vector<8x512xf32>
    %90 = tpu.matmul %89, %4, %cst_33 {dimension_numbers = #tpu.dot_dimension_numbers<[1], [0], [0], [1], [0, 0, 1, 1], [], []>} : vector<8x128xbf16>, vector<128x512xbf16>, vector<8x512xf32> -> vector<8x512xf32>
    %91 = arith.addf %88, %90 : vector<8x512xf32>
    %92 = vector.extract_strided_slice %91 {offsets = [0, 0], sizes = [8, 128], strides = [1, 1]} : vector<8x512xf32> to vector<8x128xf32>
    %cst_34 = arith.constant 5.000000e-01 : f32
    %93 = vector.broadcast %cst_34 : f32 to vector<8x128xf32>
    %94 = arith.mulf %93, %92 : vector<8x128xf32>
    %95 = math.tanh %94 : vector<8x128xf32>
    %cst_35 = arith.constant 5.000000e-01 : f32
    %96 = vector.broadcast %cst_35 : f32 to vector<8x128xf32>
    %97 = arith.mulf %96, %95 : vector<8x128xf32>
    %cst_36 = arith.constant 5.000000e-01 : f32
    %98 = vector.broadcast %cst_36 : f32 to vector<8x128xf32>
    %99 = arith.addf %97, %98 : vector<8x128xf32>
    %100 = vector.extract_strided_slice %91 {offsets = [0, 128], sizes = [8, 128], strides = [1, 1]} : vector<8x512xf32> to vector<8x128xf32>
    %cst_37 = arith.constant 5.000000e-01 : f32
    %101 = vector.broadcast %cst_37 : f32 to vector<8x128xf32>
    %102 = arith.mulf %101, %100 : vector<8x128xf32>
    %103 = math.tanh %102 : vector<8x128xf32>
    %cst_38 = arith.constant 5.000000e-01 : f32
    %104 = vector.broadcast %cst_38 : f32 to vector<8x128xf32>
    %105 = arith.mulf %104, %103 : vector<8x128xf32>
    %cst_39 = arith.constant 5.000000e-01 : f32
    %106 = vector.broadcast %cst_39 : f32 to vector<8x128xf32>
    %107 = arith.addf %105, %106 : vector<8x128xf32>
    %108 = vector.extract_strided_slice %91 {offsets = [0, 256], sizes = [8, 128], strides = [1, 1]} : vector<8x512xf32> to vector<8x128xf32>
    %109 = math.tanh %108 : vector<8x128xf32>
    %110 = vector.extract_strided_slice %91 {offsets = [0, 384], sizes = [8, 128], strides = [1, 1]} : vector<8x512xf32> to vector<8x128xf32>
    %cst_40 = arith.constant 5.000000e-01 : f32
    %111 = vector.broadcast %cst_40 : f32 to vector<8x128xf32>
    %112 = arith.mulf %111, %110 : vector<8x128xf32>
    %113 = math.tanh %112 : vector<8x128xf32>
    %cst_41 = arith.constant 5.000000e-01 : f32
    %114 = vector.broadcast %cst_41 : f32 to vector<8x128xf32>
    %115 = arith.mulf %114, %113 : vector<8x128xf32>
    %cst_42 = arith.constant 5.000000e-01 : f32
    %116 = vector.broadcast %cst_42 : f32 to vector<8x128xf32>
    %117 = arith.addf %115, %116 : vector<8x128xf32>
    %118 = arith.mulf %107, %84 : vector<8x128xf32>
    %119 = arith.mulf %99, %109 : vector<8x128xf32>
    %120 = arith.addf %118, %119 : vector<8x128xf32>
    %121 = math.tanh %120 : vector<8x128xf32>
    %122 = arith.mulf %117, %121 : vector<8x128xf32>
    %123 = vector.extract_strided_slice %12 {offsets = [3, 0, 0], sizes = [1, 8, 512], strides = [1, 1, 1]} : vector<8x8x512xf32> to vector<1x8x512xf32>
    %124 = vector.shape_cast %123 : vector<1x8x512xf32> to vector<8x512xf32>
    %125 = arith.truncf %122 : vector<8x128xf32> to vector<8x128xbf16>
    %cst_43 = arith.constant dense<0.000000e+00> : vector<8x512xf32>
    %126 = tpu.matmul %125, %4, %cst_43 {dimension_numbers = #tpu.dot_dimension_numbers<[1], [0], [0], [1], [0, 0, 1, 1], [], []>} : vector<8x128xbf16>, vector<128x512xbf16>, vector<8x512xf32> -> vector<8x512xf32>
    %127 = arith.addf %124, %126 : vector<8x512xf32>
    %128 = vector.extract_strided_slice %127 {offsets = [0, 0], sizes = [8, 128], strides = [1, 1]} : vector<8x512xf32> to vector<8x128xf32>
    %cst_44 = arith.constant 5.000000e-01 : f32
    %129 = vector.broadcast %cst_44 : f32 to vector<8x128xf32>
    %130 = arith.mulf %129, %128 : vector<8x128xf32>
    %131 = math.tanh %130 : vector<8x128xf32>
    %cst_45 = arith.constant 5.000000e-01 : f32
    %132 = vector.broadcast %cst_45 : f32 to vector<8x128xf32>
    %133 = arith.mulf %132, %131 : vector<8x128xf32>
    %cst_46 = arith.constant 5.000000e-01 : f32
    %134 = vector.broadcast %cst_46 : f32 to vector<8x128xf32>
    %135 = arith.addf %133, %134 : vector<8x128xf32>
    %136 = vector.extract_strided_slice %127 {offsets = [0, 128], sizes = [8, 128], strides = [1, 1]} : vector<8x512xf32> to vector<8x128xf32>
    %cst_47 = arith.constant 5.000000e-01 : f32
    %137 = vector.broadcast %cst_47 : f32 to vector<8x128xf32>
    %138 = arith.mulf %137, %136 : vector<8x128xf32>
    %139 = math.tanh %138 : vector<8x128xf32>
    %cst_48 = arith.constant 5.000000e-01 : f32
    %140 = vector.broadcast %cst_48 : f32 to vector<8x128xf32>
    %141 = arith.mulf %140, %139 : vector<8x128xf32>
    %cst_49 = arith.constant 5.000000e-01 : f32
    %142 = vector.broadcast %cst_49 : f32 to vector<8x128xf32>
    %143 = arith.addf %141, %142 : vector<8x128xf32>
    %144 = vector.extract_strided_slice %127 {offsets = [0, 256], sizes = [8, 128], strides = [1, 1]} : vector<8x512xf32> to vector<8x128xf32>
    %145 = math.tanh %144 : vector<8x128xf32>
    %146 = vector.extract_strided_slice %127 {offsets = [0, 384], sizes = [8, 128], strides = [1, 1]} : vector<8x512xf32> to vector<8x128xf32>
    %cst_50 = arith.constant 5.000000e-01 : f32
    %147 = vector.broadcast %cst_50 : f32 to vector<8x128xf32>
    %148 = arith.mulf %147, %146 : vector<8x128xf32>
    %149 = math.tanh %148 : vector<8x128xf32>
    %cst_51 = arith.constant 5.000000e-01 : f32
    %150 = vector.broadcast %cst_51 : f32 to vector<8x128xf32>
    %151 = arith.mulf %150, %149 : vector<8x128xf32>
    %cst_52 = arith.constant 5.000000e-01 : f32
    %152 = vector.broadcast %cst_52 : f32 to vector<8x128xf32>
    %153 = arith.addf %151, %152 : vector<8x128xf32>
    %154 = arith.mulf %143, %120 : vector<8x128xf32>
    %155 = arith.mulf %135, %145 : vector<8x128xf32>
    %156 = arith.addf %154, %155 : vector<8x128xf32>
    %157 = math.tanh %156 : vector<8x128xf32>
    %158 = arith.mulf %153, %157 : vector<8x128xf32>
    %159 = vector.extract_strided_slice %12 {offsets = [4, 0, 0], sizes = [1, 8, 512], strides = [1, 1, 1]} : vector<8x8x512xf32> to vector<1x8x512xf32>
    %160 = vector.shape_cast %159 : vector<1x8x512xf32> to vector<8x512xf32>
    %161 = arith.truncf %158 : vector<8x128xf32> to vector<8x128xbf16>
    %cst_53 = arith.constant dense<0.000000e+00> : vector<8x512xf32>
    %162 = tpu.matmul %161, %4, %cst_53 {dimension_numbers = #tpu.dot_dimension_numbers<[1], [0], [0], [1], [0, 0, 1, 1], [], []>} : vector<8x128xbf16>, vector<128x512xbf16>, vector<8x512xf32> -> vector<8x512xf32>
    %163 = arith.addf %160, %162 : vector<8x512xf32>
    %164 = vector.extract_strided_slice %163 {offsets = [0, 0], sizes = [8, 128], strides = [1, 1]} : vector<8x512xf32> to vector<8x128xf32>
    %cst_54 = arith.constant 5.000000e-01 : f32
    %165 = vector.broadcast %cst_54 : f32 to vector<8x128xf32>
    %166 = arith.mulf %165, %164 : vector<8x128xf32>
    %167 = math.tanh %166 : vector<8x128xf32>
    %cst_55 = arith.constant 5.000000e-01 : f32
    %168 = vector.broadcast %cst_55 : f32 to vector<8x128xf32>
    %169 = arith.mulf %168, %167 : vector<8x128xf32>
    %cst_56 = arith.constant 5.000000e-01 : f32
    %170 = vector.broadcast %cst_56 : f32 to vector<8x128xf32>
    %171 = arith.addf %169, %170 : vector<8x128xf32>
    %172 = vector.extract_strided_slice %163 {offsets = [0, 128], sizes = [8, 128], strides = [1, 1]} : vector<8x512xf32> to vector<8x128xf32>
    %cst_57 = arith.constant 5.000000e-01 : f32
    %173 = vector.broadcast %cst_57 : f32 to vector<8x128xf32>
    %174 = arith.mulf %173, %172 : vector<8x128xf32>
    %175 = math.tanh %174 : vector<8x128xf32>
    %cst_58 = arith.constant 5.000000e-01 : f32
    %176 = vector.broadcast %cst_58 : f32 to vector<8x128xf32>
    %177 = arith.mulf %176, %175 : vector<8x128xf32>
    %cst_59 = arith.constant 5.000000e-01 : f32
    %178 = vector.broadcast %cst_59 : f32 to vector<8x128xf32>
    %179 = arith.addf %177, %178 : vector<8x128xf32>
    %180 = vector.extract_strided_slice %163 {offsets = [0, 256], sizes = [8, 128], strides = [1, 1]} : vector<8x512xf32> to vector<8x128xf32>
    %181 = math.tanh %180 : vector<8x128xf32>
    %182 = vector.extract_strided_slice %163 {offsets = [0, 384], sizes = [8, 128], strides = [1, 1]} : vector<8x512xf32> to vector<8x128xf32>
    %cst_60 = arith.constant 5.000000e-01 : f32
    %183 = vector.broadcast %cst_60 : f32 to vector<8x128xf32>
    %184 = arith.mulf %183, %182 : vector<8x128xf32>
    %185 = math.tanh %184 : vector<8x128xf32>
    %cst_61 = arith.constant 5.000000e-01 : f32
    %186 = vector.broadcast %cst_61 : f32 to vector<8x128xf32>
    %187 = arith.mulf %186, %185 : vector<8x128xf32>
    %cst_62 = arith.constant 5.000000e-01 : f32
    %188 = vector.broadcast %cst_62 : f32 to vector<8x128xf32>
    %189 = arith.addf %187, %188 : vector<8x128xf32>
    %190 = arith.mulf %179, %156 : vector<8x128xf32>
    %191 = arith.mulf %171, %181 : vector<8x128xf32>
    %192 = arith.addf %190, %191 : vector<8x128xf32>
    %193 = math.tanh %192 : vector<8x128xf32>
    %194 = arith.mulf %189, %193 : vector<8x128xf32>
    %195 = vector.extract_strided_slice %12 {offsets = [5, 0, 0], sizes = [1, 8, 512], strides = [1, 1, 1]} : vector<8x8x512xf32> to vector<1x8x512xf32>
    %196 = vector.shape_cast %195 : vector<1x8x512xf32> to vector<8x512xf32>
    %197 = arith.truncf %194 : vector<8x128xf32> to vector<8x128xbf16>
    %cst_63 = arith.constant dense<0.000000e+00> : vector<8x512xf32>
    %198 = tpu.matmul %197, %4, %cst_63 {dimension_numbers = #tpu.dot_dimension_numbers<[1], [0], [0], [1], [0, 0, 1, 1], [], []>} : vector<8x128xbf16>, vector<128x512xbf16>, vector<8x512xf32> -> vector<8x512xf32>
    %199 = arith.addf %196, %198 : vector<8x512xf32>
    %200 = vector.extract_strided_slice %199 {offsets = [0, 0], sizes = [8, 128], strides = [1, 1]} : vector<8x512xf32> to vector<8x128xf32>
    %cst_64 = arith.constant 5.000000e-01 : f32
    %201 = vector.broadcast %cst_64 : f32 to vector<8x128xf32>
    %202 = arith.mulf %201, %200 : vector<8x128xf32>
    %203 = math.tanh %202 : vector<8x128xf32>
    %cst_65 = arith.constant 5.000000e-01 : f32
    %204 = vector.broadcast %cst_65 : f32 to vector<8x128xf32>
    %205 = arith.mulf %204, %203 : vector<8x128xf32>
    %cst_66 = arith.constant 5.000000e-01 : f32
    %206 = vector.broadcast %cst_66 : f32 to vector<8x128xf32>
    %207 = arith.addf %205, %206 : vector<8x128xf32>
    %208 = vector.extract_strided_slice %199 {offsets = [0, 128], sizes = [8, 128], strides = [1, 1]} : vector<8x512xf32> to vector<8x128xf32>
    %cst_67 = arith.constant 5.000000e-01 : f32
    %209 = vector.broadcast %cst_67 : f32 to vector<8x128xf32>
    %210 = arith.mulf %209, %208 : vector<8x128xf32>
    %211 = math.tanh %210 : vector<8x128xf32>
    %cst_68 = arith.constant 5.000000e-01 : f32
    %212 = vector.broadcast %cst_68 : f32 to vector<8x128xf32>
    %213 = arith.mulf %212, %211 : vector<8x128xf32>
    %cst_69 = arith.constant 5.000000e-01 : f32
    %214 = vector.broadcast %cst_69 : f32 to vector<8x128xf32>
    %215 = arith.addf %213, %214 : vector<8x128xf32>
    %216 = vector.extract_strided_slice %199 {offsets = [0, 256], sizes = [8, 128], strides = [1, 1]} : vector<8x512xf32> to vector<8x128xf32>
    %217 = math.tanh %216 : vector<8x128xf32>
    %218 = vector.extract_strided_slice %199 {offsets = [0, 384], sizes = [8, 128], strides = [1, 1]} : vector<8x512xf32> to vector<8x128xf32>
    %cst_70 = arith.constant 5.000000e-01 : f32
    %219 = vector.broadcast %cst_70 : f32 to vector<8x128xf32>
    %220 = arith.mulf %219, %218 : vector<8x128xf32>
    %221 = math.tanh %220 : vector<8x128xf32>
    %cst_71 = arith.constant 5.000000e-01 : f32
    %222 = vector.broadcast %cst_71 : f32 to vector<8x128xf32>
    %223 = arith.mulf %222, %221 : vector<8x128xf32>
    %cst_72 = arith.constant 5.000000e-01 : f32
    %224 = vector.broadcast %cst_72 : f32 to vector<8x128xf32>
    %225 = arith.addf %223, %224 : vector<8x128xf32>
    %226 = arith.mulf %215, %192 : vector<8x128xf32>
    %227 = arith.mulf %207, %217 : vector<8x128xf32>
    %228 = arith.addf %226, %227 : vector<8x128xf32>
    %229 = math.tanh %228 : vector<8x128xf32>
    %230 = arith.mulf %225, %229 : vector<8x128xf32>
    %231 = vector.extract_strided_slice %12 {offsets = [6, 0, 0], sizes = [1, 8, 512], strides = [1, 1, 1]} : vector<8x8x512xf32> to vector<1x8x512xf32>
    %232 = vector.shape_cast %231 : vector<1x8x512xf32> to vector<8x512xf32>
    %233 = arith.truncf %230 : vector<8x128xf32> to vector<8x128xbf16>
    %cst_73 = arith.constant dense<0.000000e+00> : vector<8x512xf32>
    %234 = tpu.matmul %233, %4, %cst_73 {dimension_numbers = #tpu.dot_dimension_numbers<[1], [0], [0], [1], [0, 0, 1, 1], [], []>} : vector<8x128xbf16>, vector<128x512xbf16>, vector<8x512xf32> -> vector<8x512xf32>
    %235 = arith.addf %232, %234 : vector<8x512xf32>
    %236 = vector.extract_strided_slice %235 {offsets = [0, 0], sizes = [8, 128], strides = [1, 1]} : vector<8x512xf32> to vector<8x128xf32>
    %cst_74 = arith.constant 5.000000e-01 : f32
    %237 = vector.broadcast %cst_74 : f32 to vector<8x128xf32>
    %238 = arith.mulf %237, %236 : vector<8x128xf32>
    %239 = math.tanh %238 : vector<8x128xf32>
    %cst_75 = arith.constant 5.000000e-01 : f32
    %240 = vector.broadcast %cst_75 : f32 to vector<8x128xf32>
    %241 = arith.mulf %240, %239 : vector<8x128xf32>
    %cst_76 = arith.constant 5.000000e-01 : f32
    %242 = vector.broadcast %cst_76 : f32 to vector<8x128xf32>
    %243 = arith.addf %241, %242 : vector<8x128xf32>
    %244 = vector.extract_strided_slice %235 {offsets = [0, 128], sizes = [8, 128], strides = [1, 1]} : vector<8x512xf32> to vector<8x128xf32>
    %cst_77 = arith.constant 5.000000e-01 : f32
    %245 = vector.broadcast %cst_77 : f32 to vector<8x128xf32>
    %246 = arith.mulf %245, %244 : vector<8x128xf32>
    %247 = math.tanh %246 : vector<8x128xf32>
    %cst_78 = arith.constant 5.000000e-01 : f32
    %248 = vector.broadcast %cst_78 : f32 to vector<8x128xf32>
    %249 = arith.mulf %248, %247 : vector<8x128xf32>
    %cst_79 = arith.constant 5.000000e-01 : f32
    %250 = vector.broadcast %cst_79 : f32 to vector<8x128xf32>
    %251 = arith.addf %249, %250 : vector<8x128xf32>
    %252 = vector.extract_strided_slice %235 {offsets = [0, 256], sizes = [8, 128], strides = [1, 1]} : vector<8x512xf32> to vector<8x128xf32>
    %253 = math.tanh %252 : vector<8x128xf32>
    %254 = vector.extract_strided_slice %235 {offsets = [0, 384], sizes = [8, 128], strides = [1, 1]} : vector<8x512xf32> to vector<8x128xf32>
    %cst_80 = arith.constant 5.000000e-01 : f32
    %255 = vector.broadcast %cst_80 : f32 to vector<8x128xf32>
    %256 = arith.mulf %255, %254 : vector<8x128xf32>
    %257 = math.tanh %256 : vector<8x128xf32>
    %cst_81 = arith.constant 5.000000e-01 : f32
    %258 = vector.broadcast %cst_81 : f32 to vector<8x128xf32>
    %259 = arith.mulf %258, %257 : vector<8x128xf32>
    %cst_82 = arith.constant 5.000000e-01 : f32
    %260 = vector.broadcast %cst_82 : f32 to vector<8x128xf32>
    %261 = arith.addf %259, %260 : vector<8x128xf32>
    %262 = arith.mulf %251, %228 : vector<8x128xf32>
    %263 = arith.mulf %243, %253 : vector<8x128xf32>
    %264 = arith.addf %262, %263 : vector<8x128xf32>
    %265 = math.tanh %264 : vector<8x128xf32>
    %266 = arith.mulf %261, %265 : vector<8x128xf32>
    %267 = vector.extract_strided_slice %12 {offsets = [7, 0, 0], sizes = [1, 8, 512], strides = [1, 1, 1]} : vector<8x8x512xf32> to vector<1x8x512xf32>
    %268 = vector.shape_cast %267 : vector<1x8x512xf32> to vector<8x512xf32>
    %269 = arith.truncf %266 : vector<8x128xf32> to vector<8x128xbf16>
    %cst_83 = arith.constant dense<0.000000e+00> : vector<8x512xf32>
    %270 = tpu.matmul %269, %4, %cst_83 {dimension_numbers = #tpu.dot_dimension_numbers<[1], [0], [0], [1], [0, 0, 1, 1], [], []>} : vector<8x128xbf16>, vector<128x512xbf16>, vector<8x512xf32> -> vector<8x512xf32>
    %271 = arith.addf %268, %270 : vector<8x512xf32>
    %272 = vector.extract_strided_slice %271 {offsets = [0, 0], sizes = [8, 128], strides = [1, 1]} : vector<8x512xf32> to vector<8x128xf32>
    %cst_84 = arith.constant 5.000000e-01 : f32
    %273 = vector.broadcast %cst_84 : f32 to vector<8x128xf32>
    %274 = arith.mulf %273, %272 : vector<8x128xf32>
    %275 = math.tanh %274 : vector<8x128xf32>
    %cst_85 = arith.constant 5.000000e-01 : f32
    %276 = vector.broadcast %cst_85 : f32 to vector<8x128xf32>
    %277 = arith.mulf %276, %275 : vector<8x128xf32>
    %cst_86 = arith.constant 5.000000e-01 : f32
    %278 = vector.broadcast %cst_86 : f32 to vector<8x128xf32>
    %279 = arith.addf %277, %278 : vector<8x128xf32>
    %280 = vector.extract_strided_slice %271 {offsets = [0, 128], sizes = [8, 128], strides = [1, 1]} : vector<8x512xf32> to vector<8x128xf32>
    %cst_87 = arith.constant 5.000000e-01 : f32
    %281 = vector.broadcast %cst_87 : f32 to vector<8x128xf32>
    %282 = arith.mulf %281, %280 : vector<8x128xf32>
    %283 = math.tanh %282 : vector<8x128xf32>
    %cst_88 = arith.constant 5.000000e-01 : f32
    %284 = vector.broadcast %cst_88 : f32 to vector<8x128xf32>
    %285 = arith.mulf %284, %283 : vector<8x128xf32>
    %cst_89 = arith.constant 5.000000e-01 : f32
    %286 = vector.broadcast %cst_89 : f32 to vector<8x128xf32>
    %287 = arith.addf %285, %286 : vector<8x128xf32>
    %288 = vector.extract_strided_slice %271 {offsets = [0, 256], sizes = [8, 128], strides = [1, 1]} : vector<8x512xf32> to vector<8x128xf32>
    %289 = math.tanh %288 : vector<8x128xf32>
    %290 = vector.extract_strided_slice %271 {offsets = [0, 384], sizes = [8, 128], strides = [1, 1]} : vector<8x512xf32> to vector<8x128xf32>
    %cst_90 = arith.constant 5.000000e-01 : f32
    %291 = vector.broadcast %cst_90 : f32 to vector<8x128xf32>
    %292 = arith.mulf %291, %290 : vector<8x128xf32>
    %293 = math.tanh %292 : vector<8x128xf32>
    %cst_91 = arith.constant 5.000000e-01 : f32
    %294 = vector.broadcast %cst_91 : f32 to vector<8x128xf32>
    %295 = arith.mulf %294, %293 : vector<8x128xf32>
    %cst_92 = arith.constant 5.000000e-01 : f32
    %296 = vector.broadcast %cst_92 : f32 to vector<8x128xf32>
    %297 = arith.addf %295, %296 : vector<8x128xf32>
    %298 = arith.mulf %287, %264 : vector<8x128xf32>
    %299 = arith.mulf %279, %289 : vector<8x128xf32>
    %300 = arith.addf %298, %299 : vector<8x128xf32>
    %301 = math.tanh %300 : vector<8x128xf32>
    %302 = arith.mulf %297, %301 : vector<8x128xf32>
    %c0_93 = arith.constant 0 : index
    %c0_94 = arith.constant 0 : index
    %303 = vector.load %arg11[%c0_93, %c0_94] : memref<8x128xf32, #tpu.memory_space<vmem>>, vector<8x128xf32>
    tpu.vector_store %arg11[%c0_93, %c0_94], %302 {strides = array<i32>} : memref<8x128xf32, #tpu.memory_space<vmem>>, vector<8x128xf32>,
    %c0_95 = arith.constant 0 : index
    %c0_96 = arith.constant 0 : index
    %304 = vector.load %arg12[%c0_95, %c0_96] : memref<8x128xf32, #tpu.memory_space<vmem>>, vector<8x128xf32>
    tpu.vector_store %arg12[%c0_95, %c0_96], %300 {strides = array<i32>} : memref<8x128xf32, #tpu.memory_space<vmem>>, vector<8x128xf32>,
    %c0_i32_97 = arith.constant 0 : i32
    %305 = arith.cmpi eq, %arg1, %c0_i32_97 : i32
    %306 = arith.extui %305 : i1 to i32
    %c0_i32_98 = arith.constant 0 : i32
    %307 = arith.cmpi ne, %306, %c0_i32_98 : i32
    scf.if %307 {
      %308 = arith.truncf %302 : vector<8x128xf32> to vector<8x128xbf16>
      %c0_99 = arith.constant 0 : index
      %c0_100 = arith.constant 0 : index
      %309 = vector.load %arg6[%c0_99, %c0_100] : memref<128x16xbf16, #tpu.memory_space<vmem>>, vector<128x16xbf16>
      %cst_101 = arith.constant dense<0.000000e+00> : vector<8x16xf32>
      %310 = tpu.matmul %308, %309, %cst_101 {dimension_numbers = #tpu.dot_dimension_numbers<[1], [0], [0], [1], [0, 0, 1, 1], [], []>} : vector<8x128xbf16>, vector<128x16xbf16>, vector<8x16xf32> -> vector<8x16xf32>
      %c0_102 = arith.constant 0 : index
      %c0_103 = arith.constant 0 : index
      %311 = vector.load %arg7[%c0_102, %c0_103] : memref<1x16xf32, #tpu.memory_space<vmem>>, vector<1x16xf32>
      %312 = vector.broadcast %311 : vector<1x16xf32> to vector<8x16xf32>
      %313 = arith.addf %310, %312 : vector<8x16xf32>
      %314 = arith.truncf %313 : vector<8x16xf32> to vector<8x16xbf16>
      %c0_104 = arith.constant 0 : index
      %c0_105 = arith.constant 0 : index
      %315 = vector.load %arg8[%c0_104, %c0_105] : memref<16x128xbf16, #tpu.memory_space<vmem>>, vector<16x128xbf16>
      %cst_106 = arith.constant dense<0.000000e+00> : vector<8x128xf32>
      %316 = tpu.matmul %314, %315, %cst_106 {dimension_numbers = #tpu.dot_dimension_numbers<[1], [0], [0], [1], [0, 0, 1, 1], [], []>} : vector<8x16xbf16>, vector<16x128xbf16>, vector<8x128xf32> -> vector<8x128xf32>
      %c0_107 = arith.constant 0 : index
      %c0_108 = arith.constant 0 : index
      %317 = vector.load %arg9[%c0_107, %c0_108] : memref<1x128xf32, #tpu.memory_space<vmem>>, vector<1x128xf32>
      %318 = vector.broadcast %317 : vector<1x128xf32> to vector<8x128xf32>
      %319 = arith.addf %316, %318 : vector<8x128xf32>
      %c0_109 = arith.constant 0 : index
      %c0_110 = arith.constant 0 : index
      %320 = vector.load %arg10[%c0_109, %c0_110] : memref<8x128xf32, #tpu.memory_space<vmem>>, vector<8x128xf32>
      tpu.vector_store %arg10[%c0_109, %c0_110], %319 {strides = array<i32>} : memref<8x128xf32, #tpu.memory_space<vmem>>, vector<8x128xf32>,
    } else {
    }
    return
  }
  func.func @transform_0(%arg0: i32, %arg1: i32) -> (i32, i32, i32) {
    %c0_i32 = arith.constant 0 : i32
    %c0_i32_0 = arith.constant 0 : i32
    return %arg1, %arg0, %c0_i32 : i32, i32, i32
  }
  func.func @transform_1(%arg0: i32, %arg1: i32) -> (i32, i32) {
    %c0_i32 = arith.constant 0 : i32
    %c0_i32_0 = arith.constant 0 : i32
    %c0_i32_1 = arith.constant 0 : i32
    return %c0_i32, %c0_i32_0 : i32, i32
  }
  func.func @transform_2(%arg0: i32, %arg1: i32) -> (i32, i32) {
    %c0_i32 = arith.constant 0 : i32
    %c0_i32_0 = arith.constant 0 : i32
    %c0_i32_1 = arith.constant 0 : i32
    return %c0_i32, %c0_i32_0 : i32, i32
  }
  func.func @transform_3(%arg0: i32, %arg1: i32) -> (i32, i32) {
    %c0_i32 = arith.constant 0 : i32
    %c0_i32_0 = arith.constant 0 : i32
    %c0_i32_1 = arith.constant 0 : i32
    return %c0_i32, %c0_i32_0 : i32, i32
  }
  func.func @transform_4(%arg0: i32, %arg1: i32) -> (i32, i32) {
    %c0_i32 = arith.constant 0 : i32
    %c0_i32_0 = arith.constant 0 : i32
    %c0_i32_1 = arith.constant 0 : i32
    return %c0_i32, %c0_i32_0 : i32, i32
  }
  func.func @transform_5(%arg0: i32, %arg1: i32) -> (i32, i32) {
    %c0_i32 = arith.constant 0 : i32
    %c0_i32_0 = arith.constant 0 : i32
    %c0_i32_1 = arith.constant 0 : i32
    return %c0_i32, %c0_i32_0 : i32, i32
  }
  func.func @transform_6(%arg0: i32, %arg1: i32) -> (i32, i32) {
    %c0_i32 = arith.constant 0 : i32
    %c0_i32_0 = arith.constant 0 : i32
    %c0_i32_1 = arith.constant 0 : i32
    return %c0_i32, %c0_i32_0 : i32, i32
  }
  func.func @transform_7(%arg0: i32, %arg1: i32) -> (i32, i32) {
    %c0_i32 = arith.constant 0 : i32
    %c0_i32_0 = arith.constant 0 : i32
    %c0_i32_1 = arith.constant 0 : i32
    return %c0_i32, %c0_i32_0 : i32, i32
  }
  func.func @transform_8(%arg0: i32, %arg1: i32) -> (i32, i32) {
    %c0_i32 = arith.constant 0 : i32
    %c0_i32_0 = arith.constant 0 : i32
    return %arg0, %c0_i32 : i32, i32
  }
}

module attributes {stable_mosaic.version = 11 : i64} {
  func.func @_lstm_chunk_kernel(%arg0: i32, %arg1: i32, %arg2: memref<8x8x16xf32, #tpu.memory_space<vmem>>, %arg3: memref<16x512xbf16, #tpu.memory_space<vmem>>, %arg4: memref<128x512xbf16, #tpu.memory_space<vmem>>, %arg5: memref<1x512xf32, #tpu.memory_space<vmem>>, %arg6: memref<8x8x128xf32, #tpu.memory_space<vmem>>, %arg7: memref<8x128xf32, #tpu.memory_space<vmem>>, %arg8: memref<8x128xf32, #tpu.memory_space<vmem>>) attributes {dimension_semantics = [#tpu.dimension_semantics<parallel>, #tpu.dimension_semantics<arbitrary>], iteration_bounds = array<i64: 1, 1>, scalar_prefetch = 0 : i64, scratch_operands = 2 : i64, tpu.core_type = #tpu.core_type<tc>, window_params = [{transform_indices = @transform_0, window_bounds = array<i64: 8, 8, 16>}, {pipeline_mode = #tpu.pipeline_mode<synchronous>, transform_indices = @transform_1, window_bounds = array<i64: 16, 512>}, {pipeline_mode = #tpu.pipeline_mode<synchronous>, transform_indices = @transform_2, window_bounds = array<i64: 128, 512>}, {pipeline_mode = #tpu.pipeline_mode<synchronous>, transform_indices = @transform_3, window_bounds = array<i64: 1, 512>}, {transform_indices = @transform_4, window_bounds = array<i64: 8, 8, 128>}]} {
    %c0_i32 = arith.constant 0 : i32
    %0 = arith.cmpi eq, %arg1, %c0_i32 : i32
    %1 = arith.extui %0 : i1 to i32
    %c0_i32_0 = arith.constant 0 : i32
    %2 = arith.cmpi ne, %1, %c0_i32_0 : i32
    scf.if %2 {
      %cst_100 = arith.constant 0.000000e+00 : f32
      %315 = vector.broadcast %cst_100 : f32 to vector<8x128xf32>
      %c0_101 = arith.constant 0 : index
      %c0_102 = arith.constant 0 : index
      %316 = vector.load %arg7[%c0_101, %c0_102] : memref<8x128xf32, #tpu.memory_space<vmem>>, vector<8x128xf32>
      tpu.vector_store %arg7[%c0_101, %c0_102], %315 {strides = array<i32>} : memref<8x128xf32, #tpu.memory_space<vmem>>, vector<8x128xf32>,
      %cst_103 = arith.constant 0.000000e+00 : f32
      %317 = vector.broadcast %cst_103 : f32 to vector<8x128xf32>
      %c0_104 = arith.constant 0 : index
      %c0_105 = arith.constant 0 : index
      %318 = vector.load %arg8[%c0_104, %c0_105] : memref<8x128xf32, #tpu.memory_space<vmem>>, vector<8x128xf32>
      tpu.vector_store %arg8[%c0_104, %c0_105], %317 {strides = array<i32>} : memref<8x128xf32, #tpu.memory_space<vmem>>, vector<8x128xf32>,
    } else {
    }
    %c0 = arith.constant 0 : index
    %c0_1 = arith.constant 0 : index
    %3 = vector.load %arg3[%c0, %c0_1] : memref<16x512xbf16, #tpu.memory_space<vmem>>, vector<16x512xbf16>
    %c0_2 = arith.constant 0 : index
    %c0_3 = arith.constant 0 : index
    %4 = vector.load %arg4[%c0_2, %c0_3] : memref<128x512xbf16, #tpu.memory_space<vmem>>, vector<128x512xbf16>
    %c0_4 = arith.constant 0 : index
    %c0_5 = arith.constant 0 : index
    %5 = vector.load %arg5[%c0_4, %c0_5] : memref<1x512xf32, #tpu.memory_space<vmem>>, vector<1x512xf32>
    %c0_6 = arith.constant 0 : index
    %c0_7 = arith.constant 0 : index
    %c0_8 = arith.constant 0 : index
    %6 = vector.load %arg2[%c0_6, %c0_7, %c0_8] : memref<8x8x16xf32, #tpu.memory_space<vmem>>, vector<8x8x16xf32>
    %7 = vector.shape_cast %6 : vector<8x8x16xf32> to vector<64x16xf32>
    %8 = arith.truncf %7 : vector<64x16xf32> to vector<64x16xbf16>
    %cst = arith.constant dense<0.000000e+00> : vector<64x512xf32>
    %9 = tpu.matmul %8, %3, %cst {dimension_numbers = #tpu.dot_dimension_numbers<[1], [0], [0], [1], [0, 0, 1, 1], [], []>} : vector<64x16xbf16>, vector<16x512xbf16>, vector<64x512xf32> -> vector<64x512xf32>
    %10 = vector.broadcast %5 : vector<1x512xf32> to vector<64x512xf32>
    %11 = arith.addf %9, %10 : vector<64x512xf32>
    %12 = vector.shape_cast %11 : vector<64x512xf32> to vector<8x8x512xf32>
    %c0_9 = arith.constant 0 : index
    %c0_10 = arith.constant 0 : index
    %13 = vector.load %arg7[%c0_9, %c0_10] : memref<8x128xf32, #tpu.memory_space<vmem>>, vector<8x128xf32>
    %c0_11 = arith.constant 0 : index
    %c0_12 = arith.constant 0 : index
    %14 = vector.load %arg8[%c0_11, %c0_12] : memref<8x128xf32, #tpu.memory_space<vmem>>, vector<8x128xf32>
    %15 = vector.extract_strided_slice %12 {offsets = [0, 0, 0], sizes = [8, 1, 512], strides = [1, 1, 1]} : vector<8x8x512xf32> to vector<8x1x512xf32>
    %16 = vector.shape_cast %15 : vector<8x1x512xf32> to vector<8x512xf32>
    %17 = arith.truncf %13 : vector<8x128xf32> to vector<8x128xbf16>
    %cst_13 = arith.constant dense<0.000000e+00> : vector<8x512xf32>
    %18 = tpu.matmul %17, %4, %cst_13 {dimension_numbers = #tpu.dot_dimension_numbers<[1], [0], [0], [1], [0, 0, 1, 1], [], []>} : vector<8x128xbf16>, vector<128x512xbf16>, vector<8x512xf32> -> vector<8x512xf32>
    %19 = arith.addf %16, %18 : vector<8x512xf32>
    %20 = vector.extract_strided_slice %19 {offsets = [0, 0], sizes = [8, 128], strides = [1, 1]} : vector<8x512xf32> to vector<8x128xf32>
    %cst_14 = arith.constant 5.000000e-01 : f32
    %21 = vector.broadcast %cst_14 : f32 to vector<8x128xf32>
    %22 = arith.mulf %21, %20 : vector<8x128xf32>
    %23 = math.tanh %22 : vector<8x128xf32>
    %cst_15 = arith.constant 5.000000e-01 : f32
    %24 = vector.broadcast %cst_15 : f32 to vector<8x128xf32>
    %25 = arith.mulf %24, %23 : vector<8x128xf32>
    %cst_16 = arith.constant 5.000000e-01 : f32
    %26 = vector.broadcast %cst_16 : f32 to vector<8x128xf32>
    %27 = arith.addf %25, %26 : vector<8x128xf32>
    %28 = vector.extract_strided_slice %19 {offsets = [0, 128], sizes = [8, 128], strides = [1, 1]} : vector<8x512xf32> to vector<8x128xf32>
    %cst_17 = arith.constant 5.000000e-01 : f32
    %29 = vector.broadcast %cst_17 : f32 to vector<8x128xf32>
    %30 = arith.mulf %29, %28 : vector<8x128xf32>
    %31 = math.tanh %30 : vector<8x128xf32>
    %cst_18 = arith.constant 5.000000e-01 : f32
    %32 = vector.broadcast %cst_18 : f32 to vector<8x128xf32>
    %33 = arith.mulf %32, %31 : vector<8x128xf32>
    %cst_19 = arith.constant 5.000000e-01 : f32
    %34 = vector.broadcast %cst_19 : f32 to vector<8x128xf32>
    %35 = arith.addf %33, %34 : vector<8x128xf32>
    %36 = vector.extract_strided_slice %19 {offsets = [0, 256], sizes = [8, 128], strides = [1, 1]} : vector<8x512xf32> to vector<8x128xf32>
    %37 = math.tanh %36 : vector<8x128xf32>
    %38 = vector.extract_strided_slice %19 {offsets = [0, 384], sizes = [8, 128], strides = [1, 1]} : vector<8x512xf32> to vector<8x128xf32>
    %cst_20 = arith.constant 5.000000e-01 : f32
    %39 = vector.broadcast %cst_20 : f32 to vector<8x128xf32>
    %40 = arith.mulf %39, %38 : vector<8x128xf32>
    %41 = math.tanh %40 : vector<8x128xf32>
    %cst_21 = arith.constant 5.000000e-01 : f32
    %42 = vector.broadcast %cst_21 : f32 to vector<8x128xf32>
    %43 = arith.mulf %42, %41 : vector<8x128xf32>
    %cst_22 = arith.constant 5.000000e-01 : f32
    %44 = vector.broadcast %cst_22 : f32 to vector<8x128xf32>
    %45 = arith.addf %43, %44 : vector<8x128xf32>
    %46 = arith.mulf %35, %14 : vector<8x128xf32>
    %47 = arith.mulf %27, %37 : vector<8x128xf32>
    %48 = arith.addf %46, %47 : vector<8x128xf32>
    %49 = math.tanh %48 : vector<8x128xf32>
    %50 = arith.mulf %45, %49 : vector<8x128xf32>
    %51 = vector.extract_strided_slice %12 {offsets = [0, 1, 0], sizes = [8, 1, 512], strides = [1, 1, 1]} : vector<8x8x512xf32> to vector<8x1x512xf32>
    %52 = vector.shape_cast %51 : vector<8x1x512xf32> to vector<8x512xf32>
    %53 = arith.truncf %50 : vector<8x128xf32> to vector<8x128xbf16>
    %cst_23 = arith.constant dense<0.000000e+00> : vector<8x512xf32>
    %54 = tpu.matmul %53, %4, %cst_23 {dimension_numbers = #tpu.dot_dimension_numbers<[1], [0], [0], [1], [0, 0, 1, 1], [], []>} : vector<8x128xbf16>, vector<128x512xbf16>, vector<8x512xf32> -> vector<8x512xf32>
    %55 = arith.addf %52, %54 : vector<8x512xf32>
    %56 = vector.extract_strided_slice %55 {offsets = [0, 0], sizes = [8, 128], strides = [1, 1]} : vector<8x512xf32> to vector<8x128xf32>
    %cst_24 = arith.constant 5.000000e-01 : f32
    %57 = vector.broadcast %cst_24 : f32 to vector<8x128xf32>
    %58 = arith.mulf %57, %56 : vector<8x128xf32>
    %59 = math.tanh %58 : vector<8x128xf32>
    %cst_25 = arith.constant 5.000000e-01 : f32
    %60 = vector.broadcast %cst_25 : f32 to vector<8x128xf32>
    %61 = arith.mulf %60, %59 : vector<8x128xf32>
    %cst_26 = arith.constant 5.000000e-01 : f32
    %62 = vector.broadcast %cst_26 : f32 to vector<8x128xf32>
    %63 = arith.addf %61, %62 : vector<8x128xf32>
    %64 = vector.extract_strided_slice %55 {offsets = [0, 128], sizes = [8, 128], strides = [1, 1]} : vector<8x512xf32> to vector<8x128xf32>
    %cst_27 = arith.constant 5.000000e-01 : f32
    %65 = vector.broadcast %cst_27 : f32 to vector<8x128xf32>
    %66 = arith.mulf %65, %64 : vector<8x128xf32>
    %67 = math.tanh %66 : vector<8x128xf32>
    %cst_28 = arith.constant 5.000000e-01 : f32
    %68 = vector.broadcast %cst_28 : f32 to vector<8x128xf32>
    %69 = arith.mulf %68, %67 : vector<8x128xf32>
    %cst_29 = arith.constant 5.000000e-01 : f32
    %70 = vector.broadcast %cst_29 : f32 to vector<8x128xf32>
    %71 = arith.addf %69, %70 : vector<8x128xf32>
    %72 = vector.extract_strided_slice %55 {offsets = [0, 256], sizes = [8, 128], strides = [1, 1]} : vector<8x512xf32> to vector<8x128xf32>
    %73 = math.tanh %72 : vector<8x128xf32>
    %74 = vector.extract_strided_slice %55 {offsets = [0, 384], sizes = [8, 128], strides = [1, 1]} : vector<8x512xf32> to vector<8x128xf32>
    %cst_30 = arith.constant 5.000000e-01 : f32
    %75 = vector.broadcast %cst_30 : f32 to vector<8x128xf32>
    %76 = arith.mulf %75, %74 : vector<8x128xf32>
    %77 = math.tanh %76 : vector<8x128xf32>
    %cst_31 = arith.constant 5.000000e-01 : f32
    %78 = vector.broadcast %cst_31 : f32 to vector<8x128xf32>
    %79 = arith.mulf %78, %77 : vector<8x128xf32>
    %cst_32 = arith.constant 5.000000e-01 : f32
    %80 = vector.broadcast %cst_32 : f32 to vector<8x128xf32>
    %81 = arith.addf %79, %80 : vector<8x128xf32>
    %82 = arith.mulf %71, %48 : vector<8x128xf32>
    %83 = arith.mulf %63, %73 : vector<8x128xf32>
    %84 = arith.addf %82, %83 : vector<8x128xf32>
    %85 = math.tanh %84 : vector<8x128xf32>
    %86 = arith.mulf %81, %85 : vector<8x128xf32>
    %87 = vector.extract_strided_slice %12 {offsets = [0, 2, 0], sizes = [8, 1, 512], strides = [1, 1, 1]} : vector<8x8x512xf32> to vector<8x1x512xf32>
    %88 = vector.shape_cast %87 : vector<8x1x512xf32> to vector<8x512xf32>
    %89 = arith.truncf %86 : vector<8x128xf32> to vector<8x128xbf16>
    %cst_33 = arith.constant dense<0.000000e+00> : vector<8x512xf32>
    %90 = tpu.matmul %89, %4, %cst_33 {dimension_numbers = #tpu.dot_dimension_numbers<[1], [0], [0], [1], [0, 0, 1, 1], [], []>} : vector<8x128xbf16>, vector<128x512xbf16>, vector<8x512xf32> -> vector<8x512xf32>
    %91 = arith.addf %88, %90 : vector<8x512xf32>
    %92 = vector.extract_strided_slice %91 {offsets = [0, 0], sizes = [8, 128], strides = [1, 1]} : vector<8x512xf32> to vector<8x128xf32>
    %cst_34 = arith.constant 5.000000e-01 : f32
    %93 = vector.broadcast %cst_34 : f32 to vector<8x128xf32>
    %94 = arith.mulf %93, %92 : vector<8x128xf32>
    %95 = math.tanh %94 : vector<8x128xf32>
    %cst_35 = arith.constant 5.000000e-01 : f32
    %96 = vector.broadcast %cst_35 : f32 to vector<8x128xf32>
    %97 = arith.mulf %96, %95 : vector<8x128xf32>
    %cst_36 = arith.constant 5.000000e-01 : f32
    %98 = vector.broadcast %cst_36 : f32 to vector<8x128xf32>
    %99 = arith.addf %97, %98 : vector<8x128xf32>
    %100 = vector.extract_strided_slice %91 {offsets = [0, 128], sizes = [8, 128], strides = [1, 1]} : vector<8x512xf32> to vector<8x128xf32>
    %cst_37 = arith.constant 5.000000e-01 : f32
    %101 = vector.broadcast %cst_37 : f32 to vector<8x128xf32>
    %102 = arith.mulf %101, %100 : vector<8x128xf32>
    %103 = math.tanh %102 : vector<8x128xf32>
    %cst_38 = arith.constant 5.000000e-01 : f32
    %104 = vector.broadcast %cst_38 : f32 to vector<8x128xf32>
    %105 = arith.mulf %104, %103 : vector<8x128xf32>
    %cst_39 = arith.constant 5.000000e-01 : f32
    %106 = vector.broadcast %cst_39 : f32 to vector<8x128xf32>
    %107 = arith.addf %105, %106 : vector<8x128xf32>
    %108 = vector.extract_strided_slice %91 {offsets = [0, 256], sizes = [8, 128], strides = [1, 1]} : vector<8x512xf32> to vector<8x128xf32>
    %109 = math.tanh %108 : vector<8x128xf32>
    %110 = vector.extract_strided_slice %91 {offsets = [0, 384], sizes = [8, 128], strides = [1, 1]} : vector<8x512xf32> to vector<8x128xf32>
    %cst_40 = arith.constant 5.000000e-01 : f32
    %111 = vector.broadcast %cst_40 : f32 to vector<8x128xf32>
    %112 = arith.mulf %111, %110 : vector<8x128xf32>
    %113 = math.tanh %112 : vector<8x128xf32>
    %cst_41 = arith.constant 5.000000e-01 : f32
    %114 = vector.broadcast %cst_41 : f32 to vector<8x128xf32>
    %115 = arith.mulf %114, %113 : vector<8x128xf32>
    %cst_42 = arith.constant 5.000000e-01 : f32
    %116 = vector.broadcast %cst_42 : f32 to vector<8x128xf32>
    %117 = arith.addf %115, %116 : vector<8x128xf32>
    %118 = arith.mulf %107, %84 : vector<8x128xf32>
    %119 = arith.mulf %99, %109 : vector<8x128xf32>
    %120 = arith.addf %118, %119 : vector<8x128xf32>
    %121 = math.tanh %120 : vector<8x128xf32>
    %122 = arith.mulf %117, %121 : vector<8x128xf32>
    %123 = vector.extract_strided_slice %12 {offsets = [0, 3, 0], sizes = [8, 1, 512], strides = [1, 1, 1]} : vector<8x8x512xf32> to vector<8x1x512xf32>
    %124 = vector.shape_cast %123 : vector<8x1x512xf32> to vector<8x512xf32>
    %125 = arith.truncf %122 : vector<8x128xf32> to vector<8x128xbf16>
    %cst_43 = arith.constant dense<0.000000e+00> : vector<8x512xf32>
    %126 = tpu.matmul %125, %4, %cst_43 {dimension_numbers = #tpu.dot_dimension_numbers<[1], [0], [0], [1], [0, 0, 1, 1], [], []>} : vector<8x128xbf16>, vector<128x512xbf16>, vector<8x512xf32> -> vector<8x512xf32>
    %127 = arith.addf %124, %126 : vector<8x512xf32>
    %128 = vector.extract_strided_slice %127 {offsets = [0, 0], sizes = [8, 128], strides = [1, 1]} : vector<8x512xf32> to vector<8x128xf32>
    %cst_44 = arith.constant 5.000000e-01 : f32
    %129 = vector.broadcast %cst_44 : f32 to vector<8x128xf32>
    %130 = arith.mulf %129, %128 : vector<8x128xf32>
    %131 = math.tanh %130 : vector<8x128xf32>
    %cst_45 = arith.constant 5.000000e-01 : f32
    %132 = vector.broadcast %cst_45 : f32 to vector<8x128xf32>
    %133 = arith.mulf %132, %131 : vector<8x128xf32>
    %cst_46 = arith.constant 5.000000e-01 : f32
    %134 = vector.broadcast %cst_46 : f32 to vector<8x128xf32>
    %135 = arith.addf %133, %134 : vector<8x128xf32>
    %136 = vector.extract_strided_slice %127 {offsets = [0, 128], sizes = [8, 128], strides = [1, 1]} : vector<8x512xf32> to vector<8x128xf32>
    %cst_47 = arith.constant 5.000000e-01 : f32
    %137 = vector.broadcast %cst_47 : f32 to vector<8x128xf32>
    %138 = arith.mulf %137, %136 : vector<8x128xf32>
    %139 = math.tanh %138 : vector<8x128xf32>
    %cst_48 = arith.constant 5.000000e-01 : f32
    %140 = vector.broadcast %cst_48 : f32 to vector<8x128xf32>
    %141 = arith.mulf %140, %139 : vector<8x128xf32>
    %cst_49 = arith.constant 5.000000e-01 : f32
    %142 = vector.broadcast %cst_49 : f32 to vector<8x128xf32>
    %143 = arith.addf %141, %142 : vector<8x128xf32>
    %144 = vector.extract_strided_slice %127 {offsets = [0, 256], sizes = [8, 128], strides = [1, 1]} : vector<8x512xf32> to vector<8x128xf32>
    %145 = math.tanh %144 : vector<8x128xf32>
    %146 = vector.extract_strided_slice %127 {offsets = [0, 384], sizes = [8, 128], strides = [1, 1]} : vector<8x512xf32> to vector<8x128xf32>
    %cst_50 = arith.constant 5.000000e-01 : f32
    %147 = vector.broadcast %cst_50 : f32 to vector<8x128xf32>
    %148 = arith.mulf %147, %146 : vector<8x128xf32>
    %149 = math.tanh %148 : vector<8x128xf32>
    %cst_51 = arith.constant 5.000000e-01 : f32
    %150 = vector.broadcast %cst_51 : f32 to vector<8x128xf32>
    %151 = arith.mulf %150, %149 : vector<8x128xf32>
    %cst_52 = arith.constant 5.000000e-01 : f32
    %152 = vector.broadcast %cst_52 : f32 to vector<8x128xf32>
    %153 = arith.addf %151, %152 : vector<8x128xf32>
    %154 = arith.mulf %143, %120 : vector<8x128xf32>
    %155 = arith.mulf %135, %145 : vector<8x128xf32>
    %156 = arith.addf %154, %155 : vector<8x128xf32>
    %157 = math.tanh %156 : vector<8x128xf32>
    %158 = arith.mulf %153, %157 : vector<8x128xf32>
    %159 = vector.extract_strided_slice %12 {offsets = [0, 4, 0], sizes = [8, 1, 512], strides = [1, 1, 1]} : vector<8x8x512xf32> to vector<8x1x512xf32>
    %160 = vector.shape_cast %159 : vector<8x1x512xf32> to vector<8x512xf32>
    %161 = arith.truncf %158 : vector<8x128xf32> to vector<8x128xbf16>
    %cst_53 = arith.constant dense<0.000000e+00> : vector<8x512xf32>
    %162 = tpu.matmul %161, %4, %cst_53 {dimension_numbers = #tpu.dot_dimension_numbers<[1], [0], [0], [1], [0, 0, 1, 1], [], []>} : vector<8x128xbf16>, vector<128x512xbf16>, vector<8x512xf32> -> vector<8x512xf32>
    %163 = arith.addf %160, %162 : vector<8x512xf32>
    %164 = vector.extract_strided_slice %163 {offsets = [0, 0], sizes = [8, 128], strides = [1, 1]} : vector<8x512xf32> to vector<8x128xf32>
    %cst_54 = arith.constant 5.000000e-01 : f32
    %165 = vector.broadcast %cst_54 : f32 to vector<8x128xf32>
    %166 = arith.mulf %165, %164 : vector<8x128xf32>
    %167 = math.tanh %166 : vector<8x128xf32>
    %cst_55 = arith.constant 5.000000e-01 : f32
    %168 = vector.broadcast %cst_55 : f32 to vector<8x128xf32>
    %169 = arith.mulf %168, %167 : vector<8x128xf32>
    %cst_56 = arith.constant 5.000000e-01 : f32
    %170 = vector.broadcast %cst_56 : f32 to vector<8x128xf32>
    %171 = arith.addf %169, %170 : vector<8x128xf32>
    %172 = vector.extract_strided_slice %163 {offsets = [0, 128], sizes = [8, 128], strides = [1, 1]} : vector<8x512xf32> to vector<8x128xf32>
    %cst_57 = arith.constant 5.000000e-01 : f32
    %173 = vector.broadcast %cst_57 : f32 to vector<8x128xf32>
    %174 = arith.mulf %173, %172 : vector<8x128xf32>
    %175 = math.tanh %174 : vector<8x128xf32>
    %cst_58 = arith.constant 5.000000e-01 : f32
    %176 = vector.broadcast %cst_58 : f32 to vector<8x128xf32>
    %177 = arith.mulf %176, %175 : vector<8x128xf32>
    %cst_59 = arith.constant 5.000000e-01 : f32
    %178 = vector.broadcast %cst_59 : f32 to vector<8x128xf32>
    %179 = arith.addf %177, %178 : vector<8x128xf32>
    %180 = vector.extract_strided_slice %163 {offsets = [0, 256], sizes = [8, 128], strides = [1, 1]} : vector<8x512xf32> to vector<8x128xf32>
    %181 = math.tanh %180 : vector<8x128xf32>
    %182 = vector.extract_strided_slice %163 {offsets = [0, 384], sizes = [8, 128], strides = [1, 1]} : vector<8x512xf32> to vector<8x128xf32>
    %cst_60 = arith.constant 5.000000e-01 : f32
    %183 = vector.broadcast %cst_60 : f32 to vector<8x128xf32>
    %184 = arith.mulf %183, %182 : vector<8x128xf32>
    %185 = math.tanh %184 : vector<8x128xf32>
    %cst_61 = arith.constant 5.000000e-01 : f32
    %186 = vector.broadcast %cst_61 : f32 to vector<8x128xf32>
    %187 = arith.mulf %186, %185 : vector<8x128xf32>
    %cst_62 = arith.constant 5.000000e-01 : f32
    %188 = vector.broadcast %cst_62 : f32 to vector<8x128xf32>
    %189 = arith.addf %187, %188 : vector<8x128xf32>
    %190 = arith.mulf %179, %156 : vector<8x128xf32>
    %191 = arith.mulf %171, %181 : vector<8x128xf32>
    %192 = arith.addf %190, %191 : vector<8x128xf32>
    %193 = math.tanh %192 : vector<8x128xf32>
    %194 = arith.mulf %189, %193 : vector<8x128xf32>
    %195 = vector.extract_strided_slice %12 {offsets = [0, 5, 0], sizes = [8, 1, 512], strides = [1, 1, 1]} : vector<8x8x512xf32> to vector<8x1x512xf32>
    %196 = vector.shape_cast %195 : vector<8x1x512xf32> to vector<8x512xf32>
    %197 = arith.truncf %194 : vector<8x128xf32> to vector<8x128xbf16>
    %cst_63 = arith.constant dense<0.000000e+00> : vector<8x512xf32>
    %198 = tpu.matmul %197, %4, %cst_63 {dimension_numbers = #tpu.dot_dimension_numbers<[1], [0], [0], [1], [0, 0, 1, 1], [], []>} : vector<8x128xbf16>, vector<128x512xbf16>, vector<8x512xf32> -> vector<8x512xf32>
    %199 = arith.addf %196, %198 : vector<8x512xf32>
    %200 = vector.extract_strided_slice %199 {offsets = [0, 0], sizes = [8, 128], strides = [1, 1]} : vector<8x512xf32> to vector<8x128xf32>
    %cst_64 = arith.constant 5.000000e-01 : f32
    %201 = vector.broadcast %cst_64 : f32 to vector<8x128xf32>
    %202 = arith.mulf %201, %200 : vector<8x128xf32>
    %203 = math.tanh %202 : vector<8x128xf32>
    %cst_65 = arith.constant 5.000000e-01 : f32
    %204 = vector.broadcast %cst_65 : f32 to vector<8x128xf32>
    %205 = arith.mulf %204, %203 : vector<8x128xf32>
    %cst_66 = arith.constant 5.000000e-01 : f32
    %206 = vector.broadcast %cst_66 : f32 to vector<8x128xf32>
    %207 = arith.addf %205, %206 : vector<8x128xf32>
    %208 = vector.extract_strided_slice %199 {offsets = [0, 128], sizes = [8, 128], strides = [1, 1]} : vector<8x512xf32> to vector<8x128xf32>
    %cst_67 = arith.constant 5.000000e-01 : f32
    %209 = vector.broadcast %cst_67 : f32 to vector<8x128xf32>
    %210 = arith.mulf %209, %208 : vector<8x128xf32>
    %211 = math.tanh %210 : vector<8x128xf32>
    %cst_68 = arith.constant 5.000000e-01 : f32
    %212 = vector.broadcast %cst_68 : f32 to vector<8x128xf32>
    %213 = arith.mulf %212, %211 : vector<8x128xf32>
    %cst_69 = arith.constant 5.000000e-01 : f32
    %214 = vector.broadcast %cst_69 : f32 to vector<8x128xf32>
    %215 = arith.addf %213, %214 : vector<8x128xf32>
    %216 = vector.extract_strided_slice %199 {offsets = [0, 256], sizes = [8, 128], strides = [1, 1]} : vector<8x512xf32> to vector<8x128xf32>
    %217 = math.tanh %216 : vector<8x128xf32>
    %218 = vector.extract_strided_slice %199 {offsets = [0, 384], sizes = [8, 128], strides = [1, 1]} : vector<8x512xf32> to vector<8x128xf32>
    %cst_70 = arith.constant 5.000000e-01 : f32
    %219 = vector.broadcast %cst_70 : f32 to vector<8x128xf32>
    %220 = arith.mulf %219, %218 : vector<8x128xf32>
    %221 = math.tanh %220 : vector<8x128xf32>
    %cst_71 = arith.constant 5.000000e-01 : f32
    %222 = vector.broadcast %cst_71 : f32 to vector<8x128xf32>
    %223 = arith.mulf %222, %221 : vector<8x128xf32>
    %cst_72 = arith.constant 5.000000e-01 : f32
    %224 = vector.broadcast %cst_72 : f32 to vector<8x128xf32>
    %225 = arith.addf %223, %224 : vector<8x128xf32>
    %226 = arith.mulf %215, %192 : vector<8x128xf32>
    %227 = arith.mulf %207, %217 : vector<8x128xf32>
    %228 = arith.addf %226, %227 : vector<8x128xf32>
    %229 = math.tanh %228 : vector<8x128xf32>
    %230 = arith.mulf %225, %229 : vector<8x128xf32>
    %231 = vector.extract_strided_slice %12 {offsets = [0, 6, 0], sizes = [8, 1, 512], strides = [1, 1, 1]} : vector<8x8x512xf32> to vector<8x1x512xf32>
    %232 = vector.shape_cast %231 : vector<8x1x512xf32> to vector<8x512xf32>
    %233 = arith.truncf %230 : vector<8x128xf32> to vector<8x128xbf16>
    %cst_73 = arith.constant dense<0.000000e+00> : vector<8x512xf32>
    %234 = tpu.matmul %233, %4, %cst_73 {dimension_numbers = #tpu.dot_dimension_numbers<[1], [0], [0], [1], [0, 0, 1, 1], [], []>} : vector<8x128xbf16>, vector<128x512xbf16>, vector<8x512xf32> -> vector<8x512xf32>
    %235 = arith.addf %232, %234 : vector<8x512xf32>
    %236 = vector.extract_strided_slice %235 {offsets = [0, 0], sizes = [8, 128], strides = [1, 1]} : vector<8x512xf32> to vector<8x128xf32>
    %cst_74 = arith.constant 5.000000e-01 : f32
    %237 = vector.broadcast %cst_74 : f32 to vector<8x128xf32>
    %238 = arith.mulf %237, %236 : vector<8x128xf32>
    %239 = math.tanh %238 : vector<8x128xf32>
    %cst_75 = arith.constant 5.000000e-01 : f32
    %240 = vector.broadcast %cst_75 : f32 to vector<8x128xf32>
    %241 = arith.mulf %240, %239 : vector<8x128xf32>
    %cst_76 = arith.constant 5.000000e-01 : f32
    %242 = vector.broadcast %cst_76 : f32 to vector<8x128xf32>
    %243 = arith.addf %241, %242 : vector<8x128xf32>
    %244 = vector.extract_strided_slice %235 {offsets = [0, 128], sizes = [8, 128], strides = [1, 1]} : vector<8x512xf32> to vector<8x128xf32>
    %cst_77 = arith.constant 5.000000e-01 : f32
    %245 = vector.broadcast %cst_77 : f32 to vector<8x128xf32>
    %246 = arith.mulf %245, %244 : vector<8x128xf32>
    %247 = math.tanh %246 : vector<8x128xf32>
    %cst_78 = arith.constant 5.000000e-01 : f32
    %248 = vector.broadcast %cst_78 : f32 to vector<8x128xf32>
    %249 = arith.mulf %248, %247 : vector<8x128xf32>
    %cst_79 = arith.constant 5.000000e-01 : f32
    %250 = vector.broadcast %cst_79 : f32 to vector<8x128xf32>
    %251 = arith.addf %249, %250 : vector<8x128xf32>
    %252 = vector.extract_strided_slice %235 {offsets = [0, 256], sizes = [8, 128], strides = [1, 1]} : vector<8x512xf32> to vector<8x128xf32>
    %253 = math.tanh %252 : vector<8x128xf32>
    %254 = vector.extract_strided_slice %235 {offsets = [0, 384], sizes = [8, 128], strides = [1, 1]} : vector<8x512xf32> to vector<8x128xf32>
    %cst_80 = arith.constant 5.000000e-01 : f32
    %255 = vector.broadcast %cst_80 : f32 to vector<8x128xf32>
    %256 = arith.mulf %255, %254 : vector<8x128xf32>
    %257 = math.tanh %256 : vector<8x128xf32>
    %cst_81 = arith.constant 5.000000e-01 : f32
    %258 = vector.broadcast %cst_81 : f32 to vector<8x128xf32>
    %259 = arith.mulf %258, %257 : vector<8x128xf32>
    %cst_82 = arith.constant 5.000000e-01 : f32
    %260 = vector.broadcast %cst_82 : f32 to vector<8x128xf32>
    %261 = arith.addf %259, %260 : vector<8x128xf32>
    %262 = arith.mulf %251, %228 : vector<8x128xf32>
    %263 = arith.mulf %243, %253 : vector<8x128xf32>
    %264 = arith.addf %262, %263 : vector<8x128xf32>
    %265 = math.tanh %264 : vector<8x128xf32>
    %266 = arith.mulf %261, %265 : vector<8x128xf32>
    %267 = vector.extract_strided_slice %12 {offsets = [0, 7, 0], sizes = [8, 1, 512], strides = [1, 1, 1]} : vector<8x8x512xf32> to vector<8x1x512xf32>
    %268 = vector.shape_cast %267 : vector<8x1x512xf32> to vector<8x512xf32>
    %269 = arith.truncf %266 : vector<8x128xf32> to vector<8x128xbf16>
    %cst_83 = arith.constant dense<0.000000e+00> : vector<8x512xf32>
    %270 = tpu.matmul %269, %4, %cst_83 {dimension_numbers = #tpu.dot_dimension_numbers<[1], [0], [0], [1], [0, 0, 1, 1], [], []>} : vector<8x128xbf16>, vector<128x512xbf16>, vector<8x512xf32> -> vector<8x512xf32>
    %271 = arith.addf %268, %270 : vector<8x512xf32>
    %272 = vector.extract_strided_slice %271 {offsets = [0, 0], sizes = [8, 128], strides = [1, 1]} : vector<8x512xf32> to vector<8x128xf32>
    %cst_84 = arith.constant 5.000000e-01 : f32
    %273 = vector.broadcast %cst_84 : f32 to vector<8x128xf32>
    %274 = arith.mulf %273, %272 : vector<8x128xf32>
    %275 = math.tanh %274 : vector<8x128xf32>
    %cst_85 = arith.constant 5.000000e-01 : f32
    %276 = vector.broadcast %cst_85 : f32 to vector<8x128xf32>
    %277 = arith.mulf %276, %275 : vector<8x128xf32>
    %cst_86 = arith.constant 5.000000e-01 : f32
    %278 = vector.broadcast %cst_86 : f32 to vector<8x128xf32>
    %279 = arith.addf %277, %278 : vector<8x128xf32>
    %280 = vector.extract_strided_slice %271 {offsets = [0, 128], sizes = [8, 128], strides = [1, 1]} : vector<8x512xf32> to vector<8x128xf32>
    %cst_87 = arith.constant 5.000000e-01 : f32
    %281 = vector.broadcast %cst_87 : f32 to vector<8x128xf32>
    %282 = arith.mulf %281, %280 : vector<8x128xf32>
    %283 = math.tanh %282 : vector<8x128xf32>
    %cst_88 = arith.constant 5.000000e-01 : f32
    %284 = vector.broadcast %cst_88 : f32 to vector<8x128xf32>
    %285 = arith.mulf %284, %283 : vector<8x128xf32>
    %cst_89 = arith.constant 5.000000e-01 : f32
    %286 = vector.broadcast %cst_89 : f32 to vector<8x128xf32>
    %287 = arith.addf %285, %286 : vector<8x128xf32>
    %288 = vector.extract_strided_slice %271 {offsets = [0, 256], sizes = [8, 128], strides = [1, 1]} : vector<8x512xf32> to vector<8x128xf32>
    %289 = math.tanh %288 : vector<8x128xf32>
    %290 = vector.extract_strided_slice %271 {offsets = [0, 384], sizes = [8, 128], strides = [1, 1]} : vector<8x512xf32> to vector<8x128xf32>
    %cst_90 = arith.constant 5.000000e-01 : f32
    %291 = vector.broadcast %cst_90 : f32 to vector<8x128xf32>
    %292 = arith.mulf %291, %290 : vector<8x128xf32>
    %293 = math.tanh %292 : vector<8x128xf32>
    %cst_91 = arith.constant 5.000000e-01 : f32
    %294 = vector.broadcast %cst_91 : f32 to vector<8x128xf32>
    %295 = arith.mulf %294, %293 : vector<8x128xf32>
    %cst_92 = arith.constant 5.000000e-01 : f32
    %296 = vector.broadcast %cst_92 : f32 to vector<8x128xf32>
    %297 = arith.addf %295, %296 : vector<8x128xf32>
    %298 = arith.mulf %287, %264 : vector<8x128xf32>
    %299 = arith.mulf %279, %289 : vector<8x128xf32>
    %300 = arith.addf %298, %299 : vector<8x128xf32>
    %301 = math.tanh %300 : vector<8x128xf32>
    %302 = arith.mulf %297, %301 : vector<8x128xf32>
    %c0_93 = arith.constant 0 : index
    %c0_94 = arith.constant 0 : index
    %303 = vector.load %arg7[%c0_93, %c0_94] : memref<8x128xf32, #tpu.memory_space<vmem>>, vector<8x128xf32>
    tpu.vector_store %arg7[%c0_93, %c0_94], %302 {strides = array<i32>} : memref<8x128xf32, #tpu.memory_space<vmem>>, vector<8x128xf32>,
    %c0_95 = arith.constant 0 : index
    %c0_96 = arith.constant 0 : index
    %304 = vector.load %arg8[%c0_95, %c0_96] : memref<8x128xf32, #tpu.memory_space<vmem>>, vector<8x128xf32>
    tpu.vector_store %arg8[%c0_95, %c0_96], %300 {strides = array<i32>} : memref<8x128xf32, #tpu.memory_space<vmem>>, vector<8x128xf32>,
    %305 = vector.shape_cast %50 : vector<8x128xf32> to vector<1x8x128xf32>
    %306 = vector.shape_cast %86 : vector<8x128xf32> to vector<1x8x128xf32>
    %307 = vector.shape_cast %122 : vector<8x128xf32> to vector<1x8x128xf32>
    %308 = vector.shape_cast %158 : vector<8x128xf32> to vector<1x8x128xf32>
    %309 = vector.shape_cast %194 : vector<8x128xf32> to vector<1x8x128xf32>
    %310 = vector.shape_cast %230 : vector<8x128xf32> to vector<1x8x128xf32>
    %311 = vector.shape_cast %266 : vector<8x128xf32> to vector<1x8x128xf32>
    %312 = vector.shape_cast %302 : vector<8x128xf32> to vector<1x8x128xf32>
    %313 = tpu.concatenate %305, %306, %307, %308, %309, %310, %311, %312 in 0 : vector<1x8x128xf32>, vector<1x8x128xf32>, vector<1x8x128xf32>, vector<1x8x128xf32>, vector<1x8x128xf32>, vector<1x8x128xf32>, vector<1x8x128xf32>, vector<1x8x128xf32> -> vector<8x8x128xf32>
    %c0_97 = arith.constant 0 : index
    %c0_98 = arith.constant 0 : index
    %c0_99 = arith.constant 0 : index
    %314 = vector.load %arg6[%c0_97, %c0_98, %c0_99] : memref<8x8x128xf32, #tpu.memory_space<vmem>>, vector<8x8x128xf32>
    tpu.vector_store %arg6[%c0_97, %c0_98, %c0_99], %313 {strides = array<i32>} : memref<8x8x128xf32, #tpu.memory_space<vmem>>, vector<8x8x128xf32>,
    return
  }
  func.func @transform_0(%arg0: i32, %arg1: i32) -> (i32, i32, i32) {
    %c0_i32 = arith.constant 0 : i32
    %c0_i32_0 = arith.constant 0 : i32
    return %arg0, %arg1, %c0_i32 : i32, i32, i32
  }
  func.func @transform_1(%arg0: i32, %arg1: i32) -> (i32, i32) {
    %c0_i32 = arith.constant 0 : i32
    %c0_i32_0 = arith.constant 0 : i32
    %c0_i32_1 = arith.constant 0 : i32
    return %c0_i32, %c0_i32_0 : i32, i32
  }
  func.func @transform_2(%arg0: i32, %arg1: i32) -> (i32, i32) {
    %c0_i32 = arith.constant 0 : i32
    %c0_i32_0 = arith.constant 0 : i32
    %c0_i32_1 = arith.constant 0 : i32
    return %c0_i32, %c0_i32_0 : i32, i32
  }
  func.func @transform_3(%arg0: i32, %arg1: i32) -> (i32, i32) {
    %c0_i32 = arith.constant 0 : i32
    %c0_i32_0 = arith.constant 0 : i32
    %c0_i32_1 = arith.constant 0 : i32
    return %c0_i32, %c0_i32_0 : i32, i32
  }
  func.func @transform_4(%arg0: i32, %arg1: i32) -> (i32, i32, i32) {
    %c0_i32 = arith.constant 0 : i32
    %c0_i32_0 = arith.constant 0 : i32
    return %arg1, %arg0, %c0_i32 : i32, i32, i32
  }
}

module attributes {stable_mosaic.version = 11 : i64} {
  func.func @_lstm_chunk_kernel(%arg0: i32, %arg1: i32, %arg2: memref<1x8x128xf32, #tpu.memory_space<vmem>>, %arg3: memref<128x512xbf16, #tpu.memory_space<vmem>>, %arg4: memref<128x512xbf16, #tpu.memory_space<vmem>>, %arg5: memref<1x512xf32, #tpu.memory_space<vmem>>, %arg6: memref<8x8x128xf32, #tpu.memory_space<vmem>>, %arg7: memref<8x128xf32, #tpu.memory_space<vmem>>, %arg8: memref<8x128xf32, #tpu.memory_space<vmem>>) attributes {dimension_semantics = [#tpu.dimension_semantics<parallel>, #tpu.dimension_semantics<arbitrary>], iteration_bounds = array<i64: 1, 1>, scalar_prefetch = 0 : i64, scratch_operands = 2 : i64, tpu.core_type = #tpu.core_type<tc>, window_params = [{transform_indices = @transform_0, window_bounds = array<i64: 1, 8, 128>}, {pipeline_mode = #tpu.pipeline_mode<synchronous>, transform_indices = @transform_1, window_bounds = array<i64: 128, 512>}, {pipeline_mode = #tpu.pipeline_mode<synchronous>, transform_indices = @transform_2, window_bounds = array<i64: 128, 512>}, {pipeline_mode = #tpu.pipeline_mode<synchronous>, transform_indices = @transform_3, window_bounds = array<i64: 1, 512>}, {transform_indices = @transform_4, window_bounds = array<i64: 8, 8, 128>}]} {
    %c0_i32 = arith.constant 0 : i32
    %0 = arith.cmpi eq, %arg1, %c0_i32 : i32
    %1 = arith.extui %0 : i1 to i32
    %c0_i32_0 = arith.constant 0 : i32
    %2 = arith.cmpi ne, %1, %c0_i32_0 : i32
    scf.if %2 {
      %cst_100 = arith.constant 0.000000e+00 : f32
      %298 = vector.broadcast %cst_100 : f32 to vector<8x128xf32>
      %c0_101 = arith.constant 0 : index
      %c0_102 = arith.constant 0 : index
      %299 = vector.load %arg7[%c0_101, %c0_102] : memref<8x128xf32, #tpu.memory_space<vmem>>, vector<8x128xf32>
      tpu.vector_store %arg7[%c0_101, %c0_102], %298 {strides = array<i32>} : memref<8x128xf32, #tpu.memory_space<vmem>>, vector<8x128xf32>,
      %cst_103 = arith.constant 0.000000e+00 : f32
      %300 = vector.broadcast %cst_103 : f32 to vector<8x128xf32>
      %c0_104 = arith.constant 0 : index
      %c0_105 = arith.constant 0 : index
      %301 = vector.load %arg8[%c0_104, %c0_105] : memref<8x128xf32, #tpu.memory_space<vmem>>, vector<8x128xf32>
      tpu.vector_store %arg8[%c0_104, %c0_105], %300 {strides = array<i32>} : memref<8x128xf32, #tpu.memory_space<vmem>>, vector<8x128xf32>,
    } else {
    }
    %c0 = arith.constant 0 : index
    %c0_1 = arith.constant 0 : index
    %3 = vector.load %arg3[%c0, %c0_1] : memref<128x512xbf16, #tpu.memory_space<vmem>>, vector<128x512xbf16>
    %c0_2 = arith.constant 0 : index
    %c0_3 = arith.constant 0 : index
    %4 = vector.load %arg4[%c0_2, %c0_3] : memref<128x512xbf16, #tpu.memory_space<vmem>>, vector<128x512xbf16>
    %c0_4 = arith.constant 0 : index
    %c0_5 = arith.constant 0 : index
    %5 = vector.load %arg5[%c0_4, %c0_5] : memref<1x512xf32, #tpu.memory_space<vmem>>, vector<1x512xf32>
    %c0_6 = arith.constant 0 : index
    %c0_7 = arith.constant 0 : index
    %c0_8 = arith.constant 0 : index
    %6 = vector.load %arg2[%c0_6, %c0_7, %c0_8] : memref<1x8x128xf32, #tpu.memory_space<vmem>>, vector<1x8x128xf32>
    %7 = vector.shape_cast %6 : vector<1x8x128xf32> to vector<8x128xf32>
    %8 = arith.truncf %7 : vector<8x128xf32> to vector<8x128xbf16>
    %cst = arith.constant dense<0.000000e+00> : vector<8x512xf32>
    %9 = tpu.matmul %8, %3, %cst {dimension_numbers = #tpu.dot_dimension_numbers<[1], [0], [0], [1], [0, 0, 1, 1], [], []>} : vector<8x128xbf16>, vector<128x512xbf16>, vector<8x512xf32> -> vector<8x512xf32>
    %10 = vector.broadcast %5 : vector<1x512xf32> to vector<8x512xf32>
    %11 = arith.addf %9, %10 : vector<8x512xf32>
    %c0_9 = arith.constant 0 : index
    %c0_10 = arith.constant 0 : index
    %12 = vector.load %arg7[%c0_9, %c0_10] : memref<8x128xf32, #tpu.memory_space<vmem>>, vector<8x128xf32>
    %c0_11 = arith.constant 0 : index
    %c0_12 = arith.constant 0 : index
    %13 = vector.load %arg8[%c0_11, %c0_12] : memref<8x128xf32, #tpu.memory_space<vmem>>, vector<8x128xf32>
    %14 = arith.truncf %12 : vector<8x128xf32> to vector<8x128xbf16>
    %cst_13 = arith.constant dense<0.000000e+00> : vector<8x512xf32>
    %15 = tpu.matmul %14, %4, %cst_13 {dimension_numbers = #tpu.dot_dimension_numbers<[1], [0], [0], [1], [0, 0, 1, 1], [], []>} : vector<8x128xbf16>, vector<128x512xbf16>, vector<8x512xf32> -> vector<8x512xf32>
    %16 = arith.addf %11, %15 : vector<8x512xf32>
    %17 = vector.extract_strided_slice %16 {offsets = [0, 0], sizes = [8, 128], strides = [1, 1]} : vector<8x512xf32> to vector<8x128xf32>
    %cst_14 = arith.constant 5.000000e-01 : f32
    %18 = vector.broadcast %cst_14 : f32 to vector<8x128xf32>
    %19 = arith.mulf %18, %17 : vector<8x128xf32>
    %20 = math.tanh %19 : vector<8x128xf32>
    %cst_15 = arith.constant 5.000000e-01 : f32
    %21 = vector.broadcast %cst_15 : f32 to vector<8x128xf32>
    %22 = arith.mulf %21, %20 : vector<8x128xf32>
    %cst_16 = arith.constant 5.000000e-01 : f32
    %23 = vector.broadcast %cst_16 : f32 to vector<8x128xf32>
    %24 = arith.addf %22, %23 : vector<8x128xf32>
    %25 = vector.extract_strided_slice %16 {offsets = [0, 128], sizes = [8, 128], strides = [1, 1]} : vector<8x512xf32> to vector<8x128xf32>
    %cst_17 = arith.constant 5.000000e-01 : f32
    %26 = vector.broadcast %cst_17 : f32 to vector<8x128xf32>
    %27 = arith.mulf %26, %25 : vector<8x128xf32>
    %28 = math.tanh %27 : vector<8x128xf32>
    %cst_18 = arith.constant 5.000000e-01 : f32
    %29 = vector.broadcast %cst_18 : f32 to vector<8x128xf32>
    %30 = arith.mulf %29, %28 : vector<8x128xf32>
    %cst_19 = arith.constant 5.000000e-01 : f32
    %31 = vector.broadcast %cst_19 : f32 to vector<8x128xf32>
    %32 = arith.addf %30, %31 : vector<8x128xf32>
    %33 = vector.extract_strided_slice %16 {offsets = [0, 256], sizes = [8, 128], strides = [1, 1]} : vector<8x512xf32> to vector<8x128xf32>
    %34 = math.tanh %33 : vector<8x128xf32>
    %35 = vector.extract_strided_slice %16 {offsets = [0, 384], sizes = [8, 128], strides = [1, 1]} : vector<8x512xf32> to vector<8x128xf32>
    %cst_20 = arith.constant 5.000000e-01 : f32
    %36 = vector.broadcast %cst_20 : f32 to vector<8x128xf32>
    %37 = arith.mulf %36, %35 : vector<8x128xf32>
    %38 = math.tanh %37 : vector<8x128xf32>
    %cst_21 = arith.constant 5.000000e-01 : f32
    %39 = vector.broadcast %cst_21 : f32 to vector<8x128xf32>
    %40 = arith.mulf %39, %38 : vector<8x128xf32>
    %cst_22 = arith.constant 5.000000e-01 : f32
    %41 = vector.broadcast %cst_22 : f32 to vector<8x128xf32>
    %42 = arith.addf %40, %41 : vector<8x128xf32>
    %43 = arith.mulf %32, %13 : vector<8x128xf32>
    %44 = arith.mulf %24, %34 : vector<8x128xf32>
    %45 = arith.addf %43, %44 : vector<8x128xf32>
    %46 = math.tanh %45 : vector<8x128xf32>
    %47 = arith.mulf %42, %46 : vector<8x128xf32>
    %48 = arith.truncf %47 : vector<8x128xf32> to vector<8x128xbf16>
    %cst_23 = arith.constant dense<0.000000e+00> : vector<8x512xf32>
    %49 = tpu.matmul %48, %4, %cst_23 {dimension_numbers = #tpu.dot_dimension_numbers<[1], [0], [0], [1], [0, 0, 1, 1], [], []>} : vector<8x128xbf16>, vector<128x512xbf16>, vector<8x512xf32> -> vector<8x512xf32>
    %50 = arith.addf %11, %49 : vector<8x512xf32>
    %51 = vector.extract_strided_slice %50 {offsets = [0, 0], sizes = [8, 128], strides = [1, 1]} : vector<8x512xf32> to vector<8x128xf32>
    %cst_24 = arith.constant 5.000000e-01 : f32
    %52 = vector.broadcast %cst_24 : f32 to vector<8x128xf32>
    %53 = arith.mulf %52, %51 : vector<8x128xf32>
    %54 = math.tanh %53 : vector<8x128xf32>
    %cst_25 = arith.constant 5.000000e-01 : f32
    %55 = vector.broadcast %cst_25 : f32 to vector<8x128xf32>
    %56 = arith.mulf %55, %54 : vector<8x128xf32>
    %cst_26 = arith.constant 5.000000e-01 : f32
    %57 = vector.broadcast %cst_26 : f32 to vector<8x128xf32>
    %58 = arith.addf %56, %57 : vector<8x128xf32>
    %59 = vector.extract_strided_slice %50 {offsets = [0, 128], sizes = [8, 128], strides = [1, 1]} : vector<8x512xf32> to vector<8x128xf32>
    %cst_27 = arith.constant 5.000000e-01 : f32
    %60 = vector.broadcast %cst_27 : f32 to vector<8x128xf32>
    %61 = arith.mulf %60, %59 : vector<8x128xf32>
    %62 = math.tanh %61 : vector<8x128xf32>
    %cst_28 = arith.constant 5.000000e-01 : f32
    %63 = vector.broadcast %cst_28 : f32 to vector<8x128xf32>
    %64 = arith.mulf %63, %62 : vector<8x128xf32>
    %cst_29 = arith.constant 5.000000e-01 : f32
    %65 = vector.broadcast %cst_29 : f32 to vector<8x128xf32>
    %66 = arith.addf %64, %65 : vector<8x128xf32>
    %67 = vector.extract_strided_slice %50 {offsets = [0, 256], sizes = [8, 128], strides = [1, 1]} : vector<8x512xf32> to vector<8x128xf32>
    %68 = math.tanh %67 : vector<8x128xf32>
    %69 = vector.extract_strided_slice %50 {offsets = [0, 384], sizes = [8, 128], strides = [1, 1]} : vector<8x512xf32> to vector<8x128xf32>
    %cst_30 = arith.constant 5.000000e-01 : f32
    %70 = vector.broadcast %cst_30 : f32 to vector<8x128xf32>
    %71 = arith.mulf %70, %69 : vector<8x128xf32>
    %72 = math.tanh %71 : vector<8x128xf32>
    %cst_31 = arith.constant 5.000000e-01 : f32
    %73 = vector.broadcast %cst_31 : f32 to vector<8x128xf32>
    %74 = arith.mulf %73, %72 : vector<8x128xf32>
    %cst_32 = arith.constant 5.000000e-01 : f32
    %75 = vector.broadcast %cst_32 : f32 to vector<8x128xf32>
    %76 = arith.addf %74, %75 : vector<8x128xf32>
    %77 = arith.mulf %66, %45 : vector<8x128xf32>
    %78 = arith.mulf %58, %68 : vector<8x128xf32>
    %79 = arith.addf %77, %78 : vector<8x128xf32>
    %80 = math.tanh %79 : vector<8x128xf32>
    %81 = arith.mulf %76, %80 : vector<8x128xf32>
    %82 = arith.truncf %81 : vector<8x128xf32> to vector<8x128xbf16>
    %cst_33 = arith.constant dense<0.000000e+00> : vector<8x512xf32>
    %83 = tpu.matmul %82, %4, %cst_33 {dimension_numbers = #tpu.dot_dimension_numbers<[1], [0], [0], [1], [0, 0, 1, 1], [], []>} : vector<8x128xbf16>, vector<128x512xbf16>, vector<8x512xf32> -> vector<8x512xf32>
    %84 = arith.addf %11, %83 : vector<8x512xf32>
    %85 = vector.extract_strided_slice %84 {offsets = [0, 0], sizes = [8, 128], strides = [1, 1]} : vector<8x512xf32> to vector<8x128xf32>
    %cst_34 = arith.constant 5.000000e-01 : f32
    %86 = vector.broadcast %cst_34 : f32 to vector<8x128xf32>
    %87 = arith.mulf %86, %85 : vector<8x128xf32>
    %88 = math.tanh %87 : vector<8x128xf32>
    %cst_35 = arith.constant 5.000000e-01 : f32
    %89 = vector.broadcast %cst_35 : f32 to vector<8x128xf32>
    %90 = arith.mulf %89, %88 : vector<8x128xf32>
    %cst_36 = arith.constant 5.000000e-01 : f32
    %91 = vector.broadcast %cst_36 : f32 to vector<8x128xf32>
    %92 = arith.addf %90, %91 : vector<8x128xf32>
    %93 = vector.extract_strided_slice %84 {offsets = [0, 128], sizes = [8, 128], strides = [1, 1]} : vector<8x512xf32> to vector<8x128xf32>
    %cst_37 = arith.constant 5.000000e-01 : f32
    %94 = vector.broadcast %cst_37 : f32 to vector<8x128xf32>
    %95 = arith.mulf %94, %93 : vector<8x128xf32>
    %96 = math.tanh %95 : vector<8x128xf32>
    %cst_38 = arith.constant 5.000000e-01 : f32
    %97 = vector.broadcast %cst_38 : f32 to vector<8x128xf32>
    %98 = arith.mulf %97, %96 : vector<8x128xf32>
    %cst_39 = arith.constant 5.000000e-01 : f32
    %99 = vector.broadcast %cst_39 : f32 to vector<8x128xf32>
    %100 = arith.addf %98, %99 : vector<8x128xf32>
    %101 = vector.extract_strided_slice %84 {offsets = [0, 256], sizes = [8, 128], strides = [1, 1]} : vector<8x512xf32> to vector<8x128xf32>
    %102 = math.tanh %101 : vector<8x128xf32>
    %103 = vector.extract_strided_slice %84 {offsets = [0, 384], sizes = [8, 128], strides = [1, 1]} : vector<8x512xf32> to vector<8x128xf32>
    %cst_40 = arith.constant 5.000000e-01 : f32
    %104 = vector.broadcast %cst_40 : f32 to vector<8x128xf32>
    %105 = arith.mulf %104, %103 : vector<8x128xf32>
    %106 = math.tanh %105 : vector<8x128xf32>
    %cst_41 = arith.constant 5.000000e-01 : f32
    %107 = vector.broadcast %cst_41 : f32 to vector<8x128xf32>
    %108 = arith.mulf %107, %106 : vector<8x128xf32>
    %cst_42 = arith.constant 5.000000e-01 : f32
    %109 = vector.broadcast %cst_42 : f32 to vector<8x128xf32>
    %110 = arith.addf %108, %109 : vector<8x128xf32>
    %111 = arith.mulf %100, %79 : vector<8x128xf32>
    %112 = arith.mulf %92, %102 : vector<8x128xf32>
    %113 = arith.addf %111, %112 : vector<8x128xf32>
    %114 = math.tanh %113 : vector<8x128xf32>
    %115 = arith.mulf %110, %114 : vector<8x128xf32>
    %116 = arith.truncf %115 : vector<8x128xf32> to vector<8x128xbf16>
    %cst_43 = arith.constant dense<0.000000e+00> : vector<8x512xf32>
    %117 = tpu.matmul %116, %4, %cst_43 {dimension_numbers = #tpu.dot_dimension_numbers<[1], [0], [0], [1], [0, 0, 1, 1], [], []>} : vector<8x128xbf16>, vector<128x512xbf16>, vector<8x512xf32> -> vector<8x512xf32>
    %118 = arith.addf %11, %117 : vector<8x512xf32>
    %119 = vector.extract_strided_slice %118 {offsets = [0, 0], sizes = [8, 128], strides = [1, 1]} : vector<8x512xf32> to vector<8x128xf32>
    %cst_44 = arith.constant 5.000000e-01 : f32
    %120 = vector.broadcast %cst_44 : f32 to vector<8x128xf32>
    %121 = arith.mulf %120, %119 : vector<8x128xf32>
    %122 = math.tanh %121 : vector<8x128xf32>
    %cst_45 = arith.constant 5.000000e-01 : f32
    %123 = vector.broadcast %cst_45 : f32 to vector<8x128xf32>
    %124 = arith.mulf %123, %122 : vector<8x128xf32>
    %cst_46 = arith.constant 5.000000e-01 : f32
    %125 = vector.broadcast %cst_46 : f32 to vector<8x128xf32>
    %126 = arith.addf %124, %125 : vector<8x128xf32>
    %127 = vector.extract_strided_slice %118 {offsets = [0, 128], sizes = [8, 128], strides = [1, 1]} : vector<8x512xf32> to vector<8x128xf32>
    %cst_47 = arith.constant 5.000000e-01 : f32
    %128 = vector.broadcast %cst_47 : f32 to vector<8x128xf32>
    %129 = arith.mulf %128, %127 : vector<8x128xf32>
    %130 = math.tanh %129 : vector<8x128xf32>
    %cst_48 = arith.constant 5.000000e-01 : f32
    %131 = vector.broadcast %cst_48 : f32 to vector<8x128xf32>
    %132 = arith.mulf %131, %130 : vector<8x128xf32>
    %cst_49 = arith.constant 5.000000e-01 : f32
    %133 = vector.broadcast %cst_49 : f32 to vector<8x128xf32>
    %134 = arith.addf %132, %133 : vector<8x128xf32>
    %135 = vector.extract_strided_slice %118 {offsets = [0, 256], sizes = [8, 128], strides = [1, 1]} : vector<8x512xf32> to vector<8x128xf32>
    %136 = math.tanh %135 : vector<8x128xf32>
    %137 = vector.extract_strided_slice %118 {offsets = [0, 384], sizes = [8, 128], strides = [1, 1]} : vector<8x512xf32> to vector<8x128xf32>
    %cst_50 = arith.constant 5.000000e-01 : f32
    %138 = vector.broadcast %cst_50 : f32 to vector<8x128xf32>
    %139 = arith.mulf %138, %137 : vector<8x128xf32>
    %140 = math.tanh %139 : vector<8x128xf32>
    %cst_51 = arith.constant 5.000000e-01 : f32
    %141 = vector.broadcast %cst_51 : f32 to vector<8x128xf32>
    %142 = arith.mulf %141, %140 : vector<8x128xf32>
    %cst_52 = arith.constant 5.000000e-01 : f32
    %143 = vector.broadcast %cst_52 : f32 to vector<8x128xf32>
    %144 = arith.addf %142, %143 : vector<8x128xf32>
    %145 = arith.mulf %134, %113 : vector<8x128xf32>
    %146 = arith.mulf %126, %136 : vector<8x128xf32>
    %147 = arith.addf %145, %146 : vector<8x128xf32>
    %148 = math.tanh %147 : vector<8x128xf32>
    %149 = arith.mulf %144, %148 : vector<8x128xf32>
    %150 = arith.truncf %149 : vector<8x128xf32> to vector<8x128xbf16>
    %cst_53 = arith.constant dense<0.000000e+00> : vector<8x512xf32>
    %151 = tpu.matmul %150, %4, %cst_53 {dimension_numbers = #tpu.dot_dimension_numbers<[1], [0], [0], [1], [0, 0, 1, 1], [], []>} : vector<8x128xbf16>, vector<128x512xbf16>, vector<8x512xf32> -> vector<8x512xf32>
    %152 = arith.addf %11, %151 : vector<8x512xf32>
    %153 = vector.extract_strided_slice %152 {offsets = [0, 0], sizes = [8, 128], strides = [1, 1]} : vector<8x512xf32> to vector<8x128xf32>
    %cst_54 = arith.constant 5.000000e-01 : f32
    %154 = vector.broadcast %cst_54 : f32 to vector<8x128xf32>
    %155 = arith.mulf %154, %153 : vector<8x128xf32>
    %156 = math.tanh %155 : vector<8x128xf32>
    %cst_55 = arith.constant 5.000000e-01 : f32
    %157 = vector.broadcast %cst_55 : f32 to vector<8x128xf32>
    %158 = arith.mulf %157, %156 : vector<8x128xf32>
    %cst_56 = arith.constant 5.000000e-01 : f32
    %159 = vector.broadcast %cst_56 : f32 to vector<8x128xf32>
    %160 = arith.addf %158, %159 : vector<8x128xf32>
    %161 = vector.extract_strided_slice %152 {offsets = [0, 128], sizes = [8, 128], strides = [1, 1]} : vector<8x512xf32> to vector<8x128xf32>
    %cst_57 = arith.constant 5.000000e-01 : f32
    %162 = vector.broadcast %cst_57 : f32 to vector<8x128xf32>
    %163 = arith.mulf %162, %161 : vector<8x128xf32>
    %164 = math.tanh %163 : vector<8x128xf32>
    %cst_58 = arith.constant 5.000000e-01 : f32
    %165 = vector.broadcast %cst_58 : f32 to vector<8x128xf32>
    %166 = arith.mulf %165, %164 : vector<8x128xf32>
    %cst_59 = arith.constant 5.000000e-01 : f32
    %167 = vector.broadcast %cst_59 : f32 to vector<8x128xf32>
    %168 = arith.addf %166, %167 : vector<8x128xf32>
    %169 = vector.extract_strided_slice %152 {offsets = [0, 256], sizes = [8, 128], strides = [1, 1]} : vector<8x512xf32> to vector<8x128xf32>
    %170 = math.tanh %169 : vector<8x128xf32>
    %171 = vector.extract_strided_slice %152 {offsets = [0, 384], sizes = [8, 128], strides = [1, 1]} : vector<8x512xf32> to vector<8x128xf32>
    %cst_60 = arith.constant 5.000000e-01 : f32
    %172 = vector.broadcast %cst_60 : f32 to vector<8x128xf32>
    %173 = arith.mulf %172, %171 : vector<8x128xf32>
    %174 = math.tanh %173 : vector<8x128xf32>
    %cst_61 = arith.constant 5.000000e-01 : f32
    %175 = vector.broadcast %cst_61 : f32 to vector<8x128xf32>
    %176 = arith.mulf %175, %174 : vector<8x128xf32>
    %cst_62 = arith.constant 5.000000e-01 : f32
    %177 = vector.broadcast %cst_62 : f32 to vector<8x128xf32>
    %178 = arith.addf %176, %177 : vector<8x128xf32>
    %179 = arith.mulf %168, %147 : vector<8x128xf32>
    %180 = arith.mulf %160, %170 : vector<8x128xf32>
    %181 = arith.addf %179, %180 : vector<8x128xf32>
    %182 = math.tanh %181 : vector<8x128xf32>
    %183 = arith.mulf %178, %182 : vector<8x128xf32>
    %184 = arith.truncf %183 : vector<8x128xf32> to vector<8x128xbf16>
    %cst_63 = arith.constant dense<0.000000e+00> : vector<8x512xf32>
    %185 = tpu.matmul %184, %4, %cst_63 {dimension_numbers = #tpu.dot_dimension_numbers<[1], [0], [0], [1], [0, 0, 1, 1], [], []>} : vector<8x128xbf16>, vector<128x512xbf16>, vector<8x512xf32> -> vector<8x512xf32>
    %186 = arith.addf %11, %185 : vector<8x512xf32>
    %187 = vector.extract_strided_slice %186 {offsets = [0, 0], sizes = [8, 128], strides = [1, 1]} : vector<8x512xf32> to vector<8x128xf32>
    %cst_64 = arith.constant 5.000000e-01 : f32
    %188 = vector.broadcast %cst_64 : f32 to vector<8x128xf32>
    %189 = arith.mulf %188, %187 : vector<8x128xf32>
    %190 = math.tanh %189 : vector<8x128xf32>
    %cst_65 = arith.constant 5.000000e-01 : f32
    %191 = vector.broadcast %cst_65 : f32 to vector<8x128xf32>
    %192 = arith.mulf %191, %190 : vector<8x128xf32>
    %cst_66 = arith.constant 5.000000e-01 : f32
    %193 = vector.broadcast %cst_66 : f32 to vector<8x128xf32>
    %194 = arith.addf %192, %193 : vector<8x128xf32>
    %195 = vector.extract_strided_slice %186 {offsets = [0, 128], sizes = [8, 128], strides = [1, 1]} : vector<8x512xf32> to vector<8x128xf32>
    %cst_67 = arith.constant 5.000000e-01 : f32
    %196 = vector.broadcast %cst_67 : f32 to vector<8x128xf32>
    %197 = arith.mulf %196, %195 : vector<8x128xf32>
    %198 = math.tanh %197 : vector<8x128xf32>
    %cst_68 = arith.constant 5.000000e-01 : f32
    %199 = vector.broadcast %cst_68 : f32 to vector<8x128xf32>
    %200 = arith.mulf %199, %198 : vector<8x128xf32>
    %cst_69 = arith.constant 5.000000e-01 : f32
    %201 = vector.broadcast %cst_69 : f32 to vector<8x128xf32>
    %202 = arith.addf %200, %201 : vector<8x128xf32>
    %203 = vector.extract_strided_slice %186 {offsets = [0, 256], sizes = [8, 128], strides = [1, 1]} : vector<8x512xf32> to vector<8x128xf32>
    %204 = math.tanh %203 : vector<8x128xf32>
    %205 = vector.extract_strided_slice %186 {offsets = [0, 384], sizes = [8, 128], strides = [1, 1]} : vector<8x512xf32> to vector<8x128xf32>
    %cst_70 = arith.constant 5.000000e-01 : f32
    %206 = vector.broadcast %cst_70 : f32 to vector<8x128xf32>
    %207 = arith.mulf %206, %205 : vector<8x128xf32>
    %208 = math.tanh %207 : vector<8x128xf32>
    %cst_71 = arith.constant 5.000000e-01 : f32
    %209 = vector.broadcast %cst_71 : f32 to vector<8x128xf32>
    %210 = arith.mulf %209, %208 : vector<8x128xf32>
    %cst_72 = arith.constant 5.000000e-01 : f32
    %211 = vector.broadcast %cst_72 : f32 to vector<8x128xf32>
    %212 = arith.addf %210, %211 : vector<8x128xf32>
    %213 = arith.mulf %202, %181 : vector<8x128xf32>
    %214 = arith.mulf %194, %204 : vector<8x128xf32>
    %215 = arith.addf %213, %214 : vector<8x128xf32>
    %216 = math.tanh %215 : vector<8x128xf32>
    %217 = arith.mulf %212, %216 : vector<8x128xf32>
    %218 = arith.truncf %217 : vector<8x128xf32> to vector<8x128xbf16>
    %cst_73 = arith.constant dense<0.000000e+00> : vector<8x512xf32>
    %219 = tpu.matmul %218, %4, %cst_73 {dimension_numbers = #tpu.dot_dimension_numbers<[1], [0], [0], [1], [0, 0, 1, 1], [], []>} : vector<8x128xbf16>, vector<128x512xbf16>, vector<8x512xf32> -> vector<8x512xf32>
    %220 = arith.addf %11, %219 : vector<8x512xf32>
    %221 = vector.extract_strided_slice %220 {offsets = [0, 0], sizes = [8, 128], strides = [1, 1]} : vector<8x512xf32> to vector<8x128xf32>
    %cst_74 = arith.constant 5.000000e-01 : f32
    %222 = vector.broadcast %cst_74 : f32 to vector<8x128xf32>
    %223 = arith.mulf %222, %221 : vector<8x128xf32>
    %224 = math.tanh %223 : vector<8x128xf32>
    %cst_75 = arith.constant 5.000000e-01 : f32
    %225 = vector.broadcast %cst_75 : f32 to vector<8x128xf32>
    %226 = arith.mulf %225, %224 : vector<8x128xf32>
    %cst_76 = arith.constant 5.000000e-01 : f32
    %227 = vector.broadcast %cst_76 : f32 to vector<8x128xf32>
    %228 = arith.addf %226, %227 : vector<8x128xf32>
    %229 = vector.extract_strided_slice %220 {offsets = [0, 128], sizes = [8, 128], strides = [1, 1]} : vector<8x512xf32> to vector<8x128xf32>
    %cst_77 = arith.constant 5.000000e-01 : f32
    %230 = vector.broadcast %cst_77 : f32 to vector<8x128xf32>
    %231 = arith.mulf %230, %229 : vector<8x128xf32>
    %232 = math.tanh %231 : vector<8x128xf32>
    %cst_78 = arith.constant 5.000000e-01 : f32
    %233 = vector.broadcast %cst_78 : f32 to vector<8x128xf32>
    %234 = arith.mulf %233, %232 : vector<8x128xf32>
    %cst_79 = arith.constant 5.000000e-01 : f32
    %235 = vector.broadcast %cst_79 : f32 to vector<8x128xf32>
    %236 = arith.addf %234, %235 : vector<8x128xf32>
    %237 = vector.extract_strided_slice %220 {offsets = [0, 256], sizes = [8, 128], strides = [1, 1]} : vector<8x512xf32> to vector<8x128xf32>
    %238 = math.tanh %237 : vector<8x128xf32>
    %239 = vector.extract_strided_slice %220 {offsets = [0, 384], sizes = [8, 128], strides = [1, 1]} : vector<8x512xf32> to vector<8x128xf32>
    %cst_80 = arith.constant 5.000000e-01 : f32
    %240 = vector.broadcast %cst_80 : f32 to vector<8x128xf32>
    %241 = arith.mulf %240, %239 : vector<8x128xf32>
    %242 = math.tanh %241 : vector<8x128xf32>
    %cst_81 = arith.constant 5.000000e-01 : f32
    %243 = vector.broadcast %cst_81 : f32 to vector<8x128xf32>
    %244 = arith.mulf %243, %242 : vector<8x128xf32>
    %cst_82 = arith.constant 5.000000e-01 : f32
    %245 = vector.broadcast %cst_82 : f32 to vector<8x128xf32>
    %246 = arith.addf %244, %245 : vector<8x128xf32>
    %247 = arith.mulf %236, %215 : vector<8x128xf32>
    %248 = arith.mulf %228, %238 : vector<8x128xf32>
    %249 = arith.addf %247, %248 : vector<8x128xf32>
    %250 = math.tanh %249 : vector<8x128xf32>
    %251 = arith.mulf %246, %250 : vector<8x128xf32>
    %252 = arith.truncf %251 : vector<8x128xf32> to vector<8x128xbf16>
    %cst_83 = arith.constant dense<0.000000e+00> : vector<8x512xf32>
    %253 = tpu.matmul %252, %4, %cst_83 {dimension_numbers = #tpu.dot_dimension_numbers<[1], [0], [0], [1], [0, 0, 1, 1], [], []>} : vector<8x128xbf16>, vector<128x512xbf16>, vector<8x512xf32> -> vector<8x512xf32>
    %254 = arith.addf %11, %253 : vector<8x512xf32>
    %255 = vector.extract_strided_slice %254 {offsets = [0, 0], sizes = [8, 128], strides = [1, 1]} : vector<8x512xf32> to vector<8x128xf32>
    %cst_84 = arith.constant 5.000000e-01 : f32
    %256 = vector.broadcast %cst_84 : f32 to vector<8x128xf32>
    %257 = arith.mulf %256, %255 : vector<8x128xf32>
    %258 = math.tanh %257 : vector<8x128xf32>
    %cst_85 = arith.constant 5.000000e-01 : f32
    %259 = vector.broadcast %cst_85 : f32 to vector<8x128xf32>
    %260 = arith.mulf %259, %258 : vector<8x128xf32>
    %cst_86 = arith.constant 5.000000e-01 : f32
    %261 = vector.broadcast %cst_86 : f32 to vector<8x128xf32>
    %262 = arith.addf %260, %261 : vector<8x128xf32>
    %263 = vector.extract_strided_slice %254 {offsets = [0, 128], sizes = [8, 128], strides = [1, 1]} : vector<8x512xf32> to vector<8x128xf32>
    %cst_87 = arith.constant 5.000000e-01 : f32
    %264 = vector.broadcast %cst_87 : f32 to vector<8x128xf32>
    %265 = arith.mulf %264, %263 : vector<8x128xf32>
    %266 = math.tanh %265 : vector<8x128xf32>
    %cst_88 = arith.constant 5.000000e-01 : f32
    %267 = vector.broadcast %cst_88 : f32 to vector<8x128xf32>
    %268 = arith.mulf %267, %266 : vector<8x128xf32>
    %cst_89 = arith.constant 5.000000e-01 : f32
    %269 = vector.broadcast %cst_89 : f32 to vector<8x128xf32>
    %270 = arith.addf %268, %269 : vector<8x128xf32>
    %271 = vector.extract_strided_slice %254 {offsets = [0, 256], sizes = [8, 128], strides = [1, 1]} : vector<8x512xf32> to vector<8x128xf32>
    %272 = math.tanh %271 : vector<8x128xf32>
    %273 = vector.extract_strided_slice %254 {offsets = [0, 384], sizes = [8, 128], strides = [1, 1]} : vector<8x512xf32> to vector<8x128xf32>
    %cst_90 = arith.constant 5.000000e-01 : f32
    %274 = vector.broadcast %cst_90 : f32 to vector<8x128xf32>
    %275 = arith.mulf %274, %273 : vector<8x128xf32>
    %276 = math.tanh %275 : vector<8x128xf32>
    %cst_91 = arith.constant 5.000000e-01 : f32
    %277 = vector.broadcast %cst_91 : f32 to vector<8x128xf32>
    %278 = arith.mulf %277, %276 : vector<8x128xf32>
    %cst_92 = arith.constant 5.000000e-01 : f32
    %279 = vector.broadcast %cst_92 : f32 to vector<8x128xf32>
    %280 = arith.addf %278, %279 : vector<8x128xf32>
    %281 = arith.mulf %270, %249 : vector<8x128xf32>
    %282 = arith.mulf %262, %272 : vector<8x128xf32>
    %283 = arith.addf %281, %282 : vector<8x128xf32>
    %284 = math.tanh %283 : vector<8x128xf32>
    %285 = arith.mulf %280, %284 : vector<8x128xf32>
    %c0_93 = arith.constant 0 : index
    %c0_94 = arith.constant 0 : index
    %286 = vector.load %arg7[%c0_93, %c0_94] : memref<8x128xf32, #tpu.memory_space<vmem>>, vector<8x128xf32>
    tpu.vector_store %arg7[%c0_93, %c0_94], %285 {strides = array<i32>} : memref<8x128xf32, #tpu.memory_space<vmem>>, vector<8x128xf32>,
    %c0_95 = arith.constant 0 : index
    %c0_96 = arith.constant 0 : index
    %287 = vector.load %arg8[%c0_95, %c0_96] : memref<8x128xf32, #tpu.memory_space<vmem>>, vector<8x128xf32>
    tpu.vector_store %arg8[%c0_95, %c0_96], %283 {strides = array<i32>} : memref<8x128xf32, #tpu.memory_space<vmem>>, vector<8x128xf32>,
    %288 = vector.shape_cast %47 : vector<8x128xf32> to vector<1x8x128xf32>
    %289 = vector.shape_cast %81 : vector<8x128xf32> to vector<1x8x128xf32>
    %290 = vector.shape_cast %115 : vector<8x128xf32> to vector<1x8x128xf32>
    %291 = vector.shape_cast %149 : vector<8x128xf32> to vector<1x8x128xf32>
    %292 = vector.shape_cast %183 : vector<8x128xf32> to vector<1x8x128xf32>
    %293 = vector.shape_cast %217 : vector<8x128xf32> to vector<1x8x128xf32>
    %294 = vector.shape_cast %251 : vector<8x128xf32> to vector<1x8x128xf32>
    %295 = vector.shape_cast %285 : vector<8x128xf32> to vector<1x8x128xf32>
    %296 = tpu.concatenate %288, %289, %290, %291, %292, %293, %294, %295 in 0 : vector<1x8x128xf32>, vector<1x8x128xf32>, vector<1x8x128xf32>, vector<1x8x128xf32>, vector<1x8x128xf32>, vector<1x8x128xf32>, vector<1x8x128xf32>, vector<1x8x128xf32> -> vector<8x8x128xf32>
    %c0_97 = arith.constant 0 : index
    %c0_98 = arith.constant 0 : index
    %c0_99 = arith.constant 0 : index
    %297 = vector.load %arg6[%c0_97, %c0_98, %c0_99] : memref<8x8x128xf32, #tpu.memory_space<vmem>>, vector<8x8x128xf32>
    tpu.vector_store %arg6[%c0_97, %c0_98, %c0_99], %296 {strides = array<i32>} : memref<8x8x128xf32, #tpu.memory_space<vmem>>, vector<8x8x128xf32>,
    return
  }
  func.func @transform_0(%arg0: i32, %arg1: i32) -> (i32, i32, i32) {
    %c0_i32 = arith.constant 0 : i32
    %c0_i32_0 = arith.constant 0 : i32
    %c0_i32_1 = arith.constant 0 : i32
    return %c0_i32, %arg0, %c0_i32_0 : i32, i32, i32
  }
  func.func @transform_1(%arg0: i32, %arg1: i32) -> (i32, i32) {
    %c0_i32 = arith.constant 0 : i32
    %c0_i32_0 = arith.constant 0 : i32
    %c0_i32_1 = arith.constant 0 : i32
    return %c0_i32, %c0_i32_0 : i32, i32
  }
  func.func @transform_2(%arg0: i32, %arg1: i32) -> (i32, i32) {
    %c0_i32 = arith.constant 0 : i32
    %c0_i32_0 = arith.constant 0 : i32
    %c0_i32_1 = arith.constant 0 : i32
    return %c0_i32, %c0_i32_0 : i32, i32
  }
  func.func @transform_3(%arg0: i32, %arg1: i32) -> (i32, i32) {
    %c0_i32 = arith.constant 0 : i32
    %c0_i32_0 = arith.constant 0 : i32
    %c0_i32_1 = arith.constant 0 : i32
    return %c0_i32, %c0_i32_0 : i32, i32
  }
  func.func @transform_4(%arg0: i32, %arg1: i32) -> (i32, i32, i32) {
    %c0_i32 = arith.constant 0 : i32
    %c0_i32_0 = arith.constant 0 : i32
    return %arg1, %arg0, %c0_i32 : i32, i32, i32
  }
}

module attributes {stable_mosaic.version = 11 : i64} {
  func.func @_lstm_chunk_kernel(%arg0: i32, %arg1: i32, %arg2: memref<8x8x128xf32, #tpu.memory_space<vmem>>, %arg3: memref<128x512xbf16, #tpu.memory_space<vmem>>, %arg4: memref<128x512xbf16, #tpu.memory_space<vmem>>, %arg5: memref<1x512xf32, #tpu.memory_space<vmem>>, %arg6: memref<128x16xbf16, #tpu.memory_space<vmem>>, %arg7: memref<1x16xf32, #tpu.memory_space<vmem>>, %arg8: memref<8x8x16xf32, #tpu.memory_space<vmem>>, %arg9: memref<8x128xf32, #tpu.memory_space<vmem>>, %arg10: memref<8x128xf32, #tpu.memory_space<vmem>>) attributes {dimension_semantics = [#tpu.dimension_semantics<parallel>, #tpu.dimension_semantics<arbitrary>], iteration_bounds = array<i64: 1, 1>, scalar_prefetch = 0 : i64, scratch_operands = 2 : i64, tpu.core_type = #tpu.core_type<tc>, window_params = [{transform_indices = @transform_0, window_bounds = array<i64: 8, 8, 128>}, {pipeline_mode = #tpu.pipeline_mode<synchronous>, transform_indices = @transform_1, window_bounds = array<i64: 128, 512>}, {pipeline_mode = #tpu.pipeline_mode<synchronous>, transform_indices = @transform_2, window_bounds = array<i64: 128, 512>}, {pipeline_mode = #tpu.pipeline_mode<synchronous>, transform_indices = @transform_3, window_bounds = array<i64: 1, 512>}, {pipeline_mode = #tpu.pipeline_mode<synchronous>, transform_indices = @transform_4, window_bounds = array<i64: 128, 16>}, {pipeline_mode = #tpu.pipeline_mode<synchronous>, transform_indices = @transform_5, window_bounds = array<i64: 1, 16>}, {transform_indices = @transform_6, window_bounds = array<i64: 8, 8, 16>}]} {
    %c0_i32 = arith.constant 0 : i32
    %0 = arith.cmpi eq, %arg1, %c0_i32 : i32
    %1 = arith.extui %0 : i1 to i32
    %c0_i32_0 = arith.constant 0 : i32
    %2 = arith.cmpi ne, %1, %c0_i32_0 : i32
    scf.if %2 {
      %cst_105 = arith.constant 0.000000e+00 : f32
      %323 = vector.broadcast %cst_105 : f32 to vector<8x128xf32>
      %c0_106 = arith.constant 0 : index
      %c0_107 = arith.constant 0 : index
      %324 = vector.load %arg9[%c0_106, %c0_107] : memref<8x128xf32, #tpu.memory_space<vmem>>, vector<8x128xf32>
      tpu.vector_store %arg9[%c0_106, %c0_107], %323 {strides = array<i32>} : memref<8x128xf32, #tpu.memory_space<vmem>>, vector<8x128xf32>,
      %cst_108 = arith.constant 0.000000e+00 : f32
      %325 = vector.broadcast %cst_108 : f32 to vector<8x128xf32>
      %c0_109 = arith.constant 0 : index
      %c0_110 = arith.constant 0 : index
      %326 = vector.load %arg10[%c0_109, %c0_110] : memref<8x128xf32, #tpu.memory_space<vmem>>, vector<8x128xf32>
      tpu.vector_store %arg10[%c0_109, %c0_110], %325 {strides = array<i32>} : memref<8x128xf32, #tpu.memory_space<vmem>>, vector<8x128xf32>,
    } else {
    }
    %c0 = arith.constant 0 : index
    %c0_1 = arith.constant 0 : index
    %3 = vector.load %arg3[%c0, %c0_1] : memref<128x512xbf16, #tpu.memory_space<vmem>>, vector<128x512xbf16>
    %c0_2 = arith.constant 0 : index
    %c0_3 = arith.constant 0 : index
    %4 = vector.load %arg4[%c0_2, %c0_3] : memref<128x512xbf16, #tpu.memory_space<vmem>>, vector<128x512xbf16>
    %c0_4 = arith.constant 0 : index
    %c0_5 = arith.constant 0 : index
    %5 = vector.load %arg5[%c0_4, %c0_5] : memref<1x512xf32, #tpu.memory_space<vmem>>, vector<1x512xf32>
    %c0_6 = arith.constant 0 : index
    %c0_7 = arith.constant 0 : index
    %c0_8 = arith.constant 0 : index
    %6 = vector.load %arg2[%c0_6, %c0_7, %c0_8] : memref<8x8x128xf32, #tpu.memory_space<vmem>>, vector<8x8x128xf32>
    %7 = vector.shape_cast %6 : vector<8x8x128xf32> to vector<64x128xf32>
    %8 = arith.truncf %7 : vector<64x128xf32> to vector<64x128xbf16>
    %cst = arith.constant dense<0.000000e+00> : vector<64x512xf32>
    %9 = tpu.matmul %8, %3, %cst {dimension_numbers = #tpu.dot_dimension_numbers<[1], [0], [0], [1], [0, 0, 1, 1], [], []>} : vector<64x128xbf16>, vector<128x512xbf16>, vector<64x512xf32> -> vector<64x512xf32>
    %10 = vector.broadcast %5 : vector<1x512xf32> to vector<64x512xf32>
    %11 = arith.addf %9, %10 : vector<64x512xf32>
    %12 = vector.shape_cast %11 : vector<64x512xf32> to vector<8x8x512xf32>
    %c0_9 = arith.constant 0 : index
    %c0_10 = arith.constant 0 : index
    %13 = vector.load %arg9[%c0_9, %c0_10] : memref<8x128xf32, #tpu.memory_space<vmem>>, vector<8x128xf32>
    %c0_11 = arith.constant 0 : index
    %c0_12 = arith.constant 0 : index
    %14 = vector.load %arg10[%c0_11, %c0_12] : memref<8x128xf32, #tpu.memory_space<vmem>>, vector<8x128xf32>
    %15 = vector.extract_strided_slice %12 {offsets = [0, 0, 0], sizes = [1, 8, 512], strides = [1, 1, 1]} : vector<8x8x512xf32> to vector<1x8x512xf32>
    %16 = vector.shape_cast %15 : vector<1x8x512xf32> to vector<8x512xf32>
    %17 = arith.truncf %13 : vector<8x128xf32> to vector<8x128xbf16>
    %cst_13 = arith.constant dense<0.000000e+00> : vector<8x512xf32>
    %18 = tpu.matmul %17, %4, %cst_13 {dimension_numbers = #tpu.dot_dimension_numbers<[1], [0], [0], [1], [0, 0, 1, 1], [], []>} : vector<8x128xbf16>, vector<128x512xbf16>, vector<8x512xf32> -> vector<8x512xf32>
    %19 = arith.addf %16, %18 : vector<8x512xf32>
    %20 = vector.extract_strided_slice %19 {offsets = [0, 0], sizes = [8, 128], strides = [1, 1]} : vector<8x512xf32> to vector<8x128xf32>
    %cst_14 = arith.constant 5.000000e-01 : f32
    %21 = vector.broadcast %cst_14 : f32 to vector<8x128xf32>
    %22 = arith.mulf %21, %20 : vector<8x128xf32>
    %23 = math.tanh %22 : vector<8x128xf32>
    %cst_15 = arith.constant 5.000000e-01 : f32
    %24 = vector.broadcast %cst_15 : f32 to vector<8x128xf32>
    %25 = arith.mulf %24, %23 : vector<8x128xf32>
    %cst_16 = arith.constant 5.000000e-01 : f32
    %26 = vector.broadcast %cst_16 : f32 to vector<8x128xf32>
    %27 = arith.addf %25, %26 : vector<8x128xf32>
    %28 = vector.extract_strided_slice %19 {offsets = [0, 128], sizes = [8, 128], strides = [1, 1]} : vector<8x512xf32> to vector<8x128xf32>
    %cst_17 = arith.constant 5.000000e-01 : f32
    %29 = vector.broadcast %cst_17 : f32 to vector<8x128xf32>
    %30 = arith.mulf %29, %28 : vector<8x128xf32>
    %31 = math.tanh %30 : vector<8x128xf32>
    %cst_18 = arith.constant 5.000000e-01 : f32
    %32 = vector.broadcast %cst_18 : f32 to vector<8x128xf32>
    %33 = arith.mulf %32, %31 : vector<8x128xf32>
    %cst_19 = arith.constant 5.000000e-01 : f32
    %34 = vector.broadcast %cst_19 : f32 to vector<8x128xf32>
    %35 = arith.addf %33, %34 : vector<8x128xf32>
    %36 = vector.extract_strided_slice %19 {offsets = [0, 256], sizes = [8, 128], strides = [1, 1]} : vector<8x512xf32> to vector<8x128xf32>
    %37 = math.tanh %36 : vector<8x128xf32>
    %38 = vector.extract_strided_slice %19 {offsets = [0, 384], sizes = [8, 128], strides = [1, 1]} : vector<8x512xf32> to vector<8x128xf32>
    %cst_20 = arith.constant 5.000000e-01 : f32
    %39 = vector.broadcast %cst_20 : f32 to vector<8x128xf32>
    %40 = arith.mulf %39, %38 : vector<8x128xf32>
    %41 = math.tanh %40 : vector<8x128xf32>
    %cst_21 = arith.constant 5.000000e-01 : f32
    %42 = vector.broadcast %cst_21 : f32 to vector<8x128xf32>
    %43 = arith.mulf %42, %41 : vector<8x128xf32>
    %cst_22 = arith.constant 5.000000e-01 : f32
    %44 = vector.broadcast %cst_22 : f32 to vector<8x128xf32>
    %45 = arith.addf %43, %44 : vector<8x128xf32>
    %46 = arith.mulf %35, %14 : vector<8x128xf32>
    %47 = arith.mulf %27, %37 : vector<8x128xf32>
    %48 = arith.addf %46, %47 : vector<8x128xf32>
    %49 = math.tanh %48 : vector<8x128xf32>
    %50 = arith.mulf %45, %49 : vector<8x128xf32>
    %51 = vector.extract_strided_slice %12 {offsets = [1, 0, 0], sizes = [1, 8, 512], strides = [1, 1, 1]} : vector<8x8x512xf32> to vector<1x8x512xf32>
    %52 = vector.shape_cast %51 : vector<1x8x512xf32> to vector<8x512xf32>
    %53 = arith.truncf %50 : vector<8x128xf32> to vector<8x128xbf16>
    %cst_23 = arith.constant dense<0.000000e+00> : vector<8x512xf32>
    %54 = tpu.matmul %53, %4, %cst_23 {dimension_numbers = #tpu.dot_dimension_numbers<[1], [0], [0], [1], [0, 0, 1, 1], [], []>} : vector<8x128xbf16>, vector<128x512xbf16>, vector<8x512xf32> -> vector<8x512xf32>
    %55 = arith.addf %52, %54 : vector<8x512xf32>
    %56 = vector.extract_strided_slice %55 {offsets = [0, 0], sizes = [8, 128], strides = [1, 1]} : vector<8x512xf32> to vector<8x128xf32>
    %cst_24 = arith.constant 5.000000e-01 : f32
    %57 = vector.broadcast %cst_24 : f32 to vector<8x128xf32>
    %58 = arith.mulf %57, %56 : vector<8x128xf32>
    %59 = math.tanh %58 : vector<8x128xf32>
    %cst_25 = arith.constant 5.000000e-01 : f32
    %60 = vector.broadcast %cst_25 : f32 to vector<8x128xf32>
    %61 = arith.mulf %60, %59 : vector<8x128xf32>
    %cst_26 = arith.constant 5.000000e-01 : f32
    %62 = vector.broadcast %cst_26 : f32 to vector<8x128xf32>
    %63 = arith.addf %61, %62 : vector<8x128xf32>
    %64 = vector.extract_strided_slice %55 {offsets = [0, 128], sizes = [8, 128], strides = [1, 1]} : vector<8x512xf32> to vector<8x128xf32>
    %cst_27 = arith.constant 5.000000e-01 : f32
    %65 = vector.broadcast %cst_27 : f32 to vector<8x128xf32>
    %66 = arith.mulf %65, %64 : vector<8x128xf32>
    %67 = math.tanh %66 : vector<8x128xf32>
    %cst_28 = arith.constant 5.000000e-01 : f32
    %68 = vector.broadcast %cst_28 : f32 to vector<8x128xf32>
    %69 = arith.mulf %68, %67 : vector<8x128xf32>
    %cst_29 = arith.constant 5.000000e-01 : f32
    %70 = vector.broadcast %cst_29 : f32 to vector<8x128xf32>
    %71 = arith.addf %69, %70 : vector<8x128xf32>
    %72 = vector.extract_strided_slice %55 {offsets = [0, 256], sizes = [8, 128], strides = [1, 1]} : vector<8x512xf32> to vector<8x128xf32>
    %73 = math.tanh %72 : vector<8x128xf32>
    %74 = vector.extract_strided_slice %55 {offsets = [0, 384], sizes = [8, 128], strides = [1, 1]} : vector<8x512xf32> to vector<8x128xf32>
    %cst_30 = arith.constant 5.000000e-01 : f32
    %75 = vector.broadcast %cst_30 : f32 to vector<8x128xf32>
    %76 = arith.mulf %75, %74 : vector<8x128xf32>
    %77 = math.tanh %76 : vector<8x128xf32>
    %cst_31 = arith.constant 5.000000e-01 : f32
    %78 = vector.broadcast %cst_31 : f32 to vector<8x128xf32>
    %79 = arith.mulf %78, %77 : vector<8x128xf32>
    %cst_32 = arith.constant 5.000000e-01 : f32
    %80 = vector.broadcast %cst_32 : f32 to vector<8x128xf32>
    %81 = arith.addf %79, %80 : vector<8x128xf32>
    %82 = arith.mulf %71, %48 : vector<8x128xf32>
    %83 = arith.mulf %63, %73 : vector<8x128xf32>
    %84 = arith.addf %82, %83 : vector<8x128xf32>
    %85 = math.tanh %84 : vector<8x128xf32>
    %86 = arith.mulf %81, %85 : vector<8x128xf32>
    %87 = vector.extract_strided_slice %12 {offsets = [2, 0, 0], sizes = [1, 8, 512], strides = [1, 1, 1]} : vector<8x8x512xf32> to vector<1x8x512xf32>
    %88 = vector.shape_cast %87 : vector<1x8x512xf32> to vector<8x512xf32>
    %89 = arith.truncf %86 : vector<8x128xf32> to vector<8x128xbf16>
    %cst_33 = arith.constant dense<0.000000e+00> : vector<8x512xf32>
    %90 = tpu.matmul %89, %4, %cst_33 {dimension_numbers = #tpu.dot_dimension_numbers<[1], [0], [0], [1], [0, 0, 1, 1], [], []>} : vector<8x128xbf16>, vector<128x512xbf16>, vector<8x512xf32> -> vector<8x512xf32>
    %91 = arith.addf %88, %90 : vector<8x512xf32>
    %92 = vector.extract_strided_slice %91 {offsets = [0, 0], sizes = [8, 128], strides = [1, 1]} : vector<8x512xf32> to vector<8x128xf32>
    %cst_34 = arith.constant 5.000000e-01 : f32
    %93 = vector.broadcast %cst_34 : f32 to vector<8x128xf32>
    %94 = arith.mulf %93, %92 : vector<8x128xf32>
    %95 = math.tanh %94 : vector<8x128xf32>
    %cst_35 = arith.constant 5.000000e-01 : f32
    %96 = vector.broadcast %cst_35 : f32 to vector<8x128xf32>
    %97 = arith.mulf %96, %95 : vector<8x128xf32>
    %cst_36 = arith.constant 5.000000e-01 : f32
    %98 = vector.broadcast %cst_36 : f32 to vector<8x128xf32>
    %99 = arith.addf %97, %98 : vector<8x128xf32>
    %100 = vector.extract_strided_slice %91 {offsets = [0, 128], sizes = [8, 128], strides = [1, 1]} : vector<8x512xf32> to vector<8x128xf32>
    %cst_37 = arith.constant 5.000000e-01 : f32
    %101 = vector.broadcast %cst_37 : f32 to vector<8x128xf32>
    %102 = arith.mulf %101, %100 : vector<8x128xf32>
    %103 = math.tanh %102 : vector<8x128xf32>
    %cst_38 = arith.constant 5.000000e-01 : f32
    %104 = vector.broadcast %cst_38 : f32 to vector<8x128xf32>
    %105 = arith.mulf %104, %103 : vector<8x128xf32>
    %cst_39 = arith.constant 5.000000e-01 : f32
    %106 = vector.broadcast %cst_39 : f32 to vector<8x128xf32>
    %107 = arith.addf %105, %106 : vector<8x128xf32>
    %108 = vector.extract_strided_slice %91 {offsets = [0, 256], sizes = [8, 128], strides = [1, 1]} : vector<8x512xf32> to vector<8x128xf32>
    %109 = math.tanh %108 : vector<8x128xf32>
    %110 = vector.extract_strided_slice %91 {offsets = [0, 384], sizes = [8, 128], strides = [1, 1]} : vector<8x512xf32> to vector<8x128xf32>
    %cst_40 = arith.constant 5.000000e-01 : f32
    %111 = vector.broadcast %cst_40 : f32 to vector<8x128xf32>
    %112 = arith.mulf %111, %110 : vector<8x128xf32>
    %113 = math.tanh %112 : vector<8x128xf32>
    %cst_41 = arith.constant 5.000000e-01 : f32
    %114 = vector.broadcast %cst_41 : f32 to vector<8x128xf32>
    %115 = arith.mulf %114, %113 : vector<8x128xf32>
    %cst_42 = arith.constant 5.000000e-01 : f32
    %116 = vector.broadcast %cst_42 : f32 to vector<8x128xf32>
    %117 = arith.addf %115, %116 : vector<8x128xf32>
    %118 = arith.mulf %107, %84 : vector<8x128xf32>
    %119 = arith.mulf %99, %109 : vector<8x128xf32>
    %120 = arith.addf %118, %119 : vector<8x128xf32>
    %121 = math.tanh %120 : vector<8x128xf32>
    %122 = arith.mulf %117, %121 : vector<8x128xf32>
    %123 = vector.extract_strided_slice %12 {offsets = [3, 0, 0], sizes = [1, 8, 512], strides = [1, 1, 1]} : vector<8x8x512xf32> to vector<1x8x512xf32>
    %124 = vector.shape_cast %123 : vector<1x8x512xf32> to vector<8x512xf32>
    %125 = arith.truncf %122 : vector<8x128xf32> to vector<8x128xbf16>
    %cst_43 = arith.constant dense<0.000000e+00> : vector<8x512xf32>
    %126 = tpu.matmul %125, %4, %cst_43 {dimension_numbers = #tpu.dot_dimension_numbers<[1], [0], [0], [1], [0, 0, 1, 1], [], []>} : vector<8x128xbf16>, vector<128x512xbf16>, vector<8x512xf32> -> vector<8x512xf32>
    %127 = arith.addf %124, %126 : vector<8x512xf32>
    %128 = vector.extract_strided_slice %127 {offsets = [0, 0], sizes = [8, 128], strides = [1, 1]} : vector<8x512xf32> to vector<8x128xf32>
    %cst_44 = arith.constant 5.000000e-01 : f32
    %129 = vector.broadcast %cst_44 : f32 to vector<8x128xf32>
    %130 = arith.mulf %129, %128 : vector<8x128xf32>
    %131 = math.tanh %130 : vector<8x128xf32>
    %cst_45 = arith.constant 5.000000e-01 : f32
    %132 = vector.broadcast %cst_45 : f32 to vector<8x128xf32>
    %133 = arith.mulf %132, %131 : vector<8x128xf32>
    %cst_46 = arith.constant 5.000000e-01 : f32
    %134 = vector.broadcast %cst_46 : f32 to vector<8x128xf32>
    %135 = arith.addf %133, %134 : vector<8x128xf32>
    %136 = vector.extract_strided_slice %127 {offsets = [0, 128], sizes = [8, 128], strides = [1, 1]} : vector<8x512xf32> to vector<8x128xf32>
    %cst_47 = arith.constant 5.000000e-01 : f32
    %137 = vector.broadcast %cst_47 : f32 to vector<8x128xf32>
    %138 = arith.mulf %137, %136 : vector<8x128xf32>
    %139 = math.tanh %138 : vector<8x128xf32>
    %cst_48 = arith.constant 5.000000e-01 : f32
    %140 = vector.broadcast %cst_48 : f32 to vector<8x128xf32>
    %141 = arith.mulf %140, %139 : vector<8x128xf32>
    %cst_49 = arith.constant 5.000000e-01 : f32
    %142 = vector.broadcast %cst_49 : f32 to vector<8x128xf32>
    %143 = arith.addf %141, %142 : vector<8x128xf32>
    %144 = vector.extract_strided_slice %127 {offsets = [0, 256], sizes = [8, 128], strides = [1, 1]} : vector<8x512xf32> to vector<8x128xf32>
    %145 = math.tanh %144 : vector<8x128xf32>
    %146 = vector.extract_strided_slice %127 {offsets = [0, 384], sizes = [8, 128], strides = [1, 1]} : vector<8x512xf32> to vector<8x128xf32>
    %cst_50 = arith.constant 5.000000e-01 : f32
    %147 = vector.broadcast %cst_50 : f32 to vector<8x128xf32>
    %148 = arith.mulf %147, %146 : vector<8x128xf32>
    %149 = math.tanh %148 : vector<8x128xf32>
    %cst_51 = arith.constant 5.000000e-01 : f32
    %150 = vector.broadcast %cst_51 : f32 to vector<8x128xf32>
    %151 = arith.mulf %150, %149 : vector<8x128xf32>
    %cst_52 = arith.constant 5.000000e-01 : f32
    %152 = vector.broadcast %cst_52 : f32 to vector<8x128xf32>
    %153 = arith.addf %151, %152 : vector<8x128xf32>
    %154 = arith.mulf %143, %120 : vector<8x128xf32>
    %155 = arith.mulf %135, %145 : vector<8x128xf32>
    %156 = arith.addf %154, %155 : vector<8x128xf32>
    %157 = math.tanh %156 : vector<8x128xf32>
    %158 = arith.mulf %153, %157 : vector<8x128xf32>
    %159 = vector.extract_strided_slice %12 {offsets = [4, 0, 0], sizes = [1, 8, 512], strides = [1, 1, 1]} : vector<8x8x512xf32> to vector<1x8x512xf32>
    %160 = vector.shape_cast %159 : vector<1x8x512xf32> to vector<8x512xf32>
    %161 = arith.truncf %158 : vector<8x128xf32> to vector<8x128xbf16>
    %cst_53 = arith.constant dense<0.000000e+00> : vector<8x512xf32>
    %162 = tpu.matmul %161, %4, %cst_53 {dimension_numbers = #tpu.dot_dimension_numbers<[1], [0], [0], [1], [0, 0, 1, 1], [], []>} : vector<8x128xbf16>, vector<128x512xbf16>, vector<8x512xf32> -> vector<8x512xf32>
    %163 = arith.addf %160, %162 : vector<8x512xf32>
    %164 = vector.extract_strided_slice %163 {offsets = [0, 0], sizes = [8, 128], strides = [1, 1]} : vector<8x512xf32> to vector<8x128xf32>
    %cst_54 = arith.constant 5.000000e-01 : f32
    %165 = vector.broadcast %cst_54 : f32 to vector<8x128xf32>
    %166 = arith.mulf %165, %164 : vector<8x128xf32>
    %167 = math.tanh %166 : vector<8x128xf32>
    %cst_55 = arith.constant 5.000000e-01 : f32
    %168 = vector.broadcast %cst_55 : f32 to vector<8x128xf32>
    %169 = arith.mulf %168, %167 : vector<8x128xf32>
    %cst_56 = arith.constant 5.000000e-01 : f32
    %170 = vector.broadcast %cst_56 : f32 to vector<8x128xf32>
    %171 = arith.addf %169, %170 : vector<8x128xf32>
    %172 = vector.extract_strided_slice %163 {offsets = [0, 128], sizes = [8, 128], strides = [1, 1]} : vector<8x512xf32> to vector<8x128xf32>
    %cst_57 = arith.constant 5.000000e-01 : f32
    %173 = vector.broadcast %cst_57 : f32 to vector<8x128xf32>
    %174 = arith.mulf %173, %172 : vector<8x128xf32>
    %175 = math.tanh %174 : vector<8x128xf32>
    %cst_58 = arith.constant 5.000000e-01 : f32
    %176 = vector.broadcast %cst_58 : f32 to vector<8x128xf32>
    %177 = arith.mulf %176, %175 : vector<8x128xf32>
    %cst_59 = arith.constant 5.000000e-01 : f32
    %178 = vector.broadcast %cst_59 : f32 to vector<8x128xf32>
    %179 = arith.addf %177, %178 : vector<8x128xf32>
    %180 = vector.extract_strided_slice %163 {offsets = [0, 256], sizes = [8, 128], strides = [1, 1]} : vector<8x512xf32> to vector<8x128xf32>
    %181 = math.tanh %180 : vector<8x128xf32>
    %182 = vector.extract_strided_slice %163 {offsets = [0, 384], sizes = [8, 128], strides = [1, 1]} : vector<8x512xf32> to vector<8x128xf32>
    %cst_60 = arith.constant 5.000000e-01 : f32
    %183 = vector.broadcast %cst_60 : f32 to vector<8x128xf32>
    %184 = arith.mulf %183, %182 : vector<8x128xf32>
    %185 = math.tanh %184 : vector<8x128xf32>
    %cst_61 = arith.constant 5.000000e-01 : f32
    %186 = vector.broadcast %cst_61 : f32 to vector<8x128xf32>
    %187 = arith.mulf %186, %185 : vector<8x128xf32>
    %cst_62 = arith.constant 5.000000e-01 : f32
    %188 = vector.broadcast %cst_62 : f32 to vector<8x128xf32>
    %189 = arith.addf %187, %188 : vector<8x128xf32>
    %190 = arith.mulf %179, %156 : vector<8x128xf32>
    %191 = arith.mulf %171, %181 : vector<8x128xf32>
    %192 = arith.addf %190, %191 : vector<8x128xf32>
    %193 = math.tanh %192 : vector<8x128xf32>
    %194 = arith.mulf %189, %193 : vector<8x128xf32>
    %195 = vector.extract_strided_slice %12 {offsets = [5, 0, 0], sizes = [1, 8, 512], strides = [1, 1, 1]} : vector<8x8x512xf32> to vector<1x8x512xf32>
    %196 = vector.shape_cast %195 : vector<1x8x512xf32> to vector<8x512xf32>
    %197 = arith.truncf %194 : vector<8x128xf32> to vector<8x128xbf16>
    %cst_63 = arith.constant dense<0.000000e+00> : vector<8x512xf32>
    %198 = tpu.matmul %197, %4, %cst_63 {dimension_numbers = #tpu.dot_dimension_numbers<[1], [0], [0], [1], [0, 0, 1, 1], [], []>} : vector<8x128xbf16>, vector<128x512xbf16>, vector<8x512xf32> -> vector<8x512xf32>
    %199 = arith.addf %196, %198 : vector<8x512xf32>
    %200 = vector.extract_strided_slice %199 {offsets = [0, 0], sizes = [8, 128], strides = [1, 1]} : vector<8x512xf32> to vector<8x128xf32>
    %cst_64 = arith.constant 5.000000e-01 : f32
    %201 = vector.broadcast %cst_64 : f32 to vector<8x128xf32>
    %202 = arith.mulf %201, %200 : vector<8x128xf32>
    %203 = math.tanh %202 : vector<8x128xf32>
    %cst_65 = arith.constant 5.000000e-01 : f32
    %204 = vector.broadcast %cst_65 : f32 to vector<8x128xf32>
    %205 = arith.mulf %204, %203 : vector<8x128xf32>
    %cst_66 = arith.constant 5.000000e-01 : f32
    %206 = vector.broadcast %cst_66 : f32 to vector<8x128xf32>
    %207 = arith.addf %205, %206 : vector<8x128xf32>
    %208 = vector.extract_strided_slice %199 {offsets = [0, 128], sizes = [8, 128], strides = [1, 1]} : vector<8x512xf32> to vector<8x128xf32>
    %cst_67 = arith.constant 5.000000e-01 : f32
    %209 = vector.broadcast %cst_67 : f32 to vector<8x128xf32>
    %210 = arith.mulf %209, %208 : vector<8x128xf32>
    %211 = math.tanh %210 : vector<8x128xf32>
    %cst_68 = arith.constant 5.000000e-01 : f32
    %212 = vector.broadcast %cst_68 : f32 to vector<8x128xf32>
    %213 = arith.mulf %212, %211 : vector<8x128xf32>
    %cst_69 = arith.constant 5.000000e-01 : f32
    %214 = vector.broadcast %cst_69 : f32 to vector<8x128xf32>
    %215 = arith.addf %213, %214 : vector<8x128xf32>
    %216 = vector.extract_strided_slice %199 {offsets = [0, 256], sizes = [8, 128], strides = [1, 1]} : vector<8x512xf32> to vector<8x128xf32>
    %217 = math.tanh %216 : vector<8x128xf32>
    %218 = vector.extract_strided_slice %199 {offsets = [0, 384], sizes = [8, 128], strides = [1, 1]} : vector<8x512xf32> to vector<8x128xf32>
    %cst_70 = arith.constant 5.000000e-01 : f32
    %219 = vector.broadcast %cst_70 : f32 to vector<8x128xf32>
    %220 = arith.mulf %219, %218 : vector<8x128xf32>
    %221 = math.tanh %220 : vector<8x128xf32>
    %cst_71 = arith.constant 5.000000e-01 : f32
    %222 = vector.broadcast %cst_71 : f32 to vector<8x128xf32>
    %223 = arith.mulf %222, %221 : vector<8x128xf32>
    %cst_72 = arith.constant 5.000000e-01 : f32
    %224 = vector.broadcast %cst_72 : f32 to vector<8x128xf32>
    %225 = arith.addf %223, %224 : vector<8x128xf32>
    %226 = arith.mulf %215, %192 : vector<8x128xf32>
    %227 = arith.mulf %207, %217 : vector<8x128xf32>
    %228 = arith.addf %226, %227 : vector<8x128xf32>
    %229 = math.tanh %228 : vector<8x128xf32>
    %230 = arith.mulf %225, %229 : vector<8x128xf32>
    %231 = vector.extract_strided_slice %12 {offsets = [6, 0, 0], sizes = [1, 8, 512], strides = [1, 1, 1]} : vector<8x8x512xf32> to vector<1x8x512xf32>
    %232 = vector.shape_cast %231 : vector<1x8x512xf32> to vector<8x512xf32>
    %233 = arith.truncf %230 : vector<8x128xf32> to vector<8x128xbf16>
    %cst_73 = arith.constant dense<0.000000e+00> : vector<8x512xf32>
    %234 = tpu.matmul %233, %4, %cst_73 {dimension_numbers = #tpu.dot_dimension_numbers<[1], [0], [0], [1], [0, 0, 1, 1], [], []>} : vector<8x128xbf16>, vector<128x512xbf16>, vector<8x512xf32> -> vector<8x512xf32>
    %235 = arith.addf %232, %234 : vector<8x512xf32>
    %236 = vector.extract_strided_slice %235 {offsets = [0, 0], sizes = [8, 128], strides = [1, 1]} : vector<8x512xf32> to vector<8x128xf32>
    %cst_74 = arith.constant 5.000000e-01 : f32
    %237 = vector.broadcast %cst_74 : f32 to vector<8x128xf32>
    %238 = arith.mulf %237, %236 : vector<8x128xf32>
    %239 = math.tanh %238 : vector<8x128xf32>
    %cst_75 = arith.constant 5.000000e-01 : f32
    %240 = vector.broadcast %cst_75 : f32 to vector<8x128xf32>
    %241 = arith.mulf %240, %239 : vector<8x128xf32>
    %cst_76 = arith.constant 5.000000e-01 : f32
    %242 = vector.broadcast %cst_76 : f32 to vector<8x128xf32>
    %243 = arith.addf %241, %242 : vector<8x128xf32>
    %244 = vector.extract_strided_slice %235 {offsets = [0, 128], sizes = [8, 128], strides = [1, 1]} : vector<8x512xf32> to vector<8x128xf32>
    %cst_77 = arith.constant 5.000000e-01 : f32
    %245 = vector.broadcast %cst_77 : f32 to vector<8x128xf32>
    %246 = arith.mulf %245, %244 : vector<8x128xf32>
    %247 = math.tanh %246 : vector<8x128xf32>
    %cst_78 = arith.constant 5.000000e-01 : f32
    %248 = vector.broadcast %cst_78 : f32 to vector<8x128xf32>
    %249 = arith.mulf %248, %247 : vector<8x128xf32>
    %cst_79 = arith.constant 5.000000e-01 : f32
    %250 = vector.broadcast %cst_79 : f32 to vector<8x128xf32>
    %251 = arith.addf %249, %250 : vector<8x128xf32>
    %252 = vector.extract_strided_slice %235 {offsets = [0, 256], sizes = [8, 128], strides = [1, 1]} : vector<8x512xf32> to vector<8x128xf32>
    %253 = math.tanh %252 : vector<8x128xf32>
    %254 = vector.extract_strided_slice %235 {offsets = [0, 384], sizes = [8, 128], strides = [1, 1]} : vector<8x512xf32> to vector<8x128xf32>
    %cst_80 = arith.constant 5.000000e-01 : f32
    %255 = vector.broadcast %cst_80 : f32 to vector<8x128xf32>
    %256 = arith.mulf %255, %254 : vector<8x128xf32>
    %257 = math.tanh %256 : vector<8x128xf32>
    %cst_81 = arith.constant 5.000000e-01 : f32
    %258 = vector.broadcast %cst_81 : f32 to vector<8x128xf32>
    %259 = arith.mulf %258, %257 : vector<8x128xf32>
    %cst_82 = arith.constant 5.000000e-01 : f32
    %260 = vector.broadcast %cst_82 : f32 to vector<8x128xf32>
    %261 = arith.addf %259, %260 : vector<8x128xf32>
    %262 = arith.mulf %251, %228 : vector<8x128xf32>
    %263 = arith.mulf %243, %253 : vector<8x128xf32>
    %264 = arith.addf %262, %263 : vector<8x128xf32>
    %265 = math.tanh %264 : vector<8x128xf32>
    %266 = arith.mulf %261, %265 : vector<8x128xf32>
    %267 = vector.extract_strided_slice %12 {offsets = [7, 0, 0], sizes = [1, 8, 512], strides = [1, 1, 1]} : vector<8x8x512xf32> to vector<1x8x512xf32>
    %268 = vector.shape_cast %267 : vector<1x8x512xf32> to vector<8x512xf32>
    %269 = arith.truncf %266 : vector<8x128xf32> to vector<8x128xbf16>
    %cst_83 = arith.constant dense<0.000000e+00> : vector<8x512xf32>
    %270 = tpu.matmul %269, %4, %cst_83 {dimension_numbers = #tpu.dot_dimension_numbers<[1], [0], [0], [1], [0, 0, 1, 1], [], []>} : vector<8x128xbf16>, vector<128x512xbf16>, vector<8x512xf32> -> vector<8x512xf32>
    %271 = arith.addf %268, %270 : vector<8x512xf32>
    %272 = vector.extract_strided_slice %271 {offsets = [0, 0], sizes = [8, 128], strides = [1, 1]} : vector<8x512xf32> to vector<8x128xf32>
    %cst_84 = arith.constant 5.000000e-01 : f32
    %273 = vector.broadcast %cst_84 : f32 to vector<8x128xf32>
    %274 = arith.mulf %273, %272 : vector<8x128xf32>
    %275 = math.tanh %274 : vector<8x128xf32>
    %cst_85 = arith.constant 5.000000e-01 : f32
    %276 = vector.broadcast %cst_85 : f32 to vector<8x128xf32>
    %277 = arith.mulf %276, %275 : vector<8x128xf32>
    %cst_86 = arith.constant 5.000000e-01 : f32
    %278 = vector.broadcast %cst_86 : f32 to vector<8x128xf32>
    %279 = arith.addf %277, %278 : vector<8x128xf32>
    %280 = vector.extract_strided_slice %271 {offsets = [0, 128], sizes = [8, 128], strides = [1, 1]} : vector<8x512xf32> to vector<8x128xf32>
    %cst_87 = arith.constant 5.000000e-01 : f32
    %281 = vector.broadcast %cst_87 : f32 to vector<8x128xf32>
    %282 = arith.mulf %281, %280 : vector<8x128xf32>
    %283 = math.tanh %282 : vector<8x128xf32>
    %cst_88 = arith.constant 5.000000e-01 : f32
    %284 = vector.broadcast %cst_88 : f32 to vector<8x128xf32>
    %285 = arith.mulf %284, %283 : vector<8x128xf32>
    %cst_89 = arith.constant 5.000000e-01 : f32
    %286 = vector.broadcast %cst_89 : f32 to vector<8x128xf32>
    %287 = arith.addf %285, %286 : vector<8x128xf32>
    %288 = vector.extract_strided_slice %271 {offsets = [0, 256], sizes = [8, 128], strides = [1, 1]} : vector<8x512xf32> to vector<8x128xf32>
    %289 = math.tanh %288 : vector<8x128xf32>
    %290 = vector.extract_strided_slice %271 {offsets = [0, 384], sizes = [8, 128], strides = [1, 1]} : vector<8x512xf32> to vector<8x128xf32>
    %cst_90 = arith.constant 5.000000e-01 : f32
    %291 = vector.broadcast %cst_90 : f32 to vector<8x128xf32>
    %292 = arith.mulf %291, %290 : vector<8x128xf32>
    %293 = math.tanh %292 : vector<8x128xf32>
    %cst_91 = arith.constant 5.000000e-01 : f32
    %294 = vector.broadcast %cst_91 : f32 to vector<8x128xf32>
    %295 = arith.mulf %294, %293 : vector<8x128xf32>
    %cst_92 = arith.constant 5.000000e-01 : f32
    %296 = vector.broadcast %cst_92 : f32 to vector<8x128xf32>
    %297 = arith.addf %295, %296 : vector<8x128xf32>
    %298 = arith.mulf %287, %264 : vector<8x128xf32>
    %299 = arith.mulf %279, %289 : vector<8x128xf32>
    %300 = arith.addf %298, %299 : vector<8x128xf32>
    %301 = math.tanh %300 : vector<8x128xf32>
    %302 = arith.mulf %297, %301 : vector<8x128xf32>
    %c0_93 = arith.constant 0 : index
    %c0_94 = arith.constant 0 : index
    %303 = vector.load %arg9[%c0_93, %c0_94] : memref<8x128xf32, #tpu.memory_space<vmem>>, vector<8x128xf32>
    tpu.vector_store %arg9[%c0_93, %c0_94], %302 {strides = array<i32>} : memref<8x128xf32, #tpu.memory_space<vmem>>, vector<8x128xf32>,
    %c0_95 = arith.constant 0 : index
    %c0_96 = arith.constant 0 : index
    %304 = vector.load %arg10[%c0_95, %c0_96] : memref<8x128xf32, #tpu.memory_space<vmem>>, vector<8x128xf32>
    tpu.vector_store %arg10[%c0_95, %c0_96], %300 {strides = array<i32>} : memref<8x128xf32, #tpu.memory_space<vmem>>, vector<8x128xf32>,
    %305 = vector.shape_cast %50 : vector<8x128xf32> to vector<8x1x128xf32>
    %306 = vector.shape_cast %86 : vector<8x128xf32> to vector<8x1x128xf32>
    %307 = vector.shape_cast %122 : vector<8x128xf32> to vector<8x1x128xf32>
    %308 = vector.shape_cast %158 : vector<8x128xf32> to vector<8x1x128xf32>
    %309 = vector.shape_cast %194 : vector<8x128xf32> to vector<8x1x128xf32>
    %310 = vector.shape_cast %230 : vector<8x128xf32> to vector<8x1x128xf32>
    %311 = vector.shape_cast %266 : vector<8x128xf32> to vector<8x1x128xf32>
    %312 = vector.shape_cast %302 : vector<8x128xf32> to vector<8x1x128xf32>
    %313 = tpu.concatenate %305, %306, %307, %308, %309, %310, %311, %312 in 1 : vector<8x1x128xf32>, vector<8x1x128xf32>, vector<8x1x128xf32>, vector<8x1x128xf32>, vector<8x1x128xf32>, vector<8x1x128xf32>, vector<8x1x128xf32>, vector<8x1x128xf32> -> vector<8x8x128xf32>
    %314 = vector.shape_cast %313 : vector<8x8x128xf32> to vector<64x128xf32>
    %315 = arith.truncf %314 : vector<64x128xf32> to vector<64x128xbf16>
    %c0_97 = arith.constant 0 : index
    %c0_98 = arith.constant 0 : index
    %316 = vector.load %arg6[%c0_97, %c0_98] : memref<128x16xbf16, #tpu.memory_space<vmem>>, vector<128x16xbf16>
    %cst_99 = arith.constant dense<0.000000e+00> : vector<64x16xf32>
    %317 = tpu.matmul %315, %316, %cst_99 {dimension_numbers = #tpu.dot_dimension_numbers<[1], [0], [0], [1], [0, 0, 1, 1], [], []>} : vector<64x128xbf16>, vector<128x16xbf16>, vector<64x16xf32> -> vector<64x16xf32>
    %c0_100 = arith.constant 0 : index
    %c0_101 = arith.constant 0 : index
    %318 = vector.load %arg7[%c0_100, %c0_101] : memref<1x16xf32, #tpu.memory_space<vmem>>, vector<1x16xf32>
    %319 = vector.broadcast %318 : vector<1x16xf32> to vector<64x16xf32>
    %320 = arith.addf %317, %319 : vector<64x16xf32>
    %321 = vector.shape_cast %320 : vector<64x16xf32> to vector<8x8x16xf32>
    %c0_102 = arith.constant 0 : index
    %c0_103 = arith.constant 0 : index
    %c0_104 = arith.constant 0 : index
    %322 = vector.load %arg8[%c0_102, %c0_103, %c0_104] : memref<8x8x16xf32, #tpu.memory_space<vmem>>, vector<8x8x16xf32>
    tpu.vector_store %arg8[%c0_102, %c0_103, %c0_104], %321 {strides = array<i32>} : memref<8x8x16xf32, #tpu.memory_space<vmem>>, vector<8x8x16xf32>,
    return
  }
  func.func @transform_0(%arg0: i32, %arg1: i32) -> (i32, i32, i32) {
    %c0_i32 = arith.constant 0 : i32
    %c0_i32_0 = arith.constant 0 : i32
    return %arg1, %arg0, %c0_i32 : i32, i32, i32
  }
  func.func @transform_1(%arg0: i32, %arg1: i32) -> (i32, i32) {
    %c0_i32 = arith.constant 0 : i32
    %c0_i32_0 = arith.constant 0 : i32
    %c0_i32_1 = arith.constant 0 : i32
    return %c0_i32, %c0_i32_0 : i32, i32
  }
  func.func @transform_2(%arg0: i32, %arg1: i32) -> (i32, i32) {
    %c0_i32 = arith.constant 0 : i32
    %c0_i32_0 = arith.constant 0 : i32
    %c0_i32_1 = arith.constant 0 : i32
    return %c0_i32, %c0_i32_0 : i32, i32
  }
  func.func @transform_3(%arg0: i32, %arg1: i32) -> (i32, i32) {
    %c0_i32 = arith.constant 0 : i32
    %c0_i32_0 = arith.constant 0 : i32
    %c0_i32_1 = arith.constant 0 : i32
    return %c0_i32, %c0_i32_0 : i32, i32
  }
  func.func @transform_4(%arg0: i32, %arg1: i32) -> (i32, i32) {
    %c0_i32 = arith.constant 0 : i32
    %c0_i32_0 = arith.constant 0 : i32
    %c0_i32_1 = arith.constant 0 : i32
    return %c0_i32, %c0_i32_0 : i32, i32
  }
  func.func @transform_5(%arg0: i32, %arg1: i32) -> (i32, i32) {
    %c0_i32 = arith.constant 0 : i32
    %c0_i32_0 = arith.constant 0 : i32
    %c0_i32_1 = arith.constant 0 : i32
    return %c0_i32, %c0_i32_0 : i32, i32
  }
  func.func @transform_6(%arg0: i32, %arg1: i32) -> (i32, i32, i32) {
    %c0_i32 = arith.constant 0 : i32
    %c0_i32_0 = arith.constant 0 : i32
    return %arg0, %arg1, %c0_i32 : i32, i32, i32
  }
}

</mosaic_0001>

<llo_original>
// kernel: lstmae_forward.5
$region0: #{lstmae_forward.5}
  #allocation0 [shape = 'u32[]', space=smem, size = 0x4, offset = 0x4, fixed_abs, tag = 'smem constant byte address 0x4 - core index']
  #allocation1 [shape = 'u32[144,128]{1,0:T(1,128)}', space=vmem, size = 0x12000, scoped, tag = 'internal scratch']
  #allocation2 [shape = 'f32[8,128]{1,0:T(8,128)}', space=vmem, size = 0x1000, scoped, tag = 'scratch operand']
  #allocation3 [shape = 'f32[8,128]{1,0:T(8,128)}', space=vmem, size = 0x1000, scoped, tag = 'scratch operand']
  %s0 = inlined_call_operand.vmem [shape: f32[8,8,128], index: 0, kind: input, shape index: {}]
  %s1 = inlined_call_operand.vmem [shape: bf16[128,512], index: 1, kind: input, shape index: {}]
  %s2 = inlined_call_operand.vmem [shape: bf16[128,512], index: 2, kind: input, shape index: {}]
  %s3 = inlined_call_operand.vmem [shape: f32[1,512], index: 3, kind: input, shape index: {}]
  %s4 = inlined_call_operand.vmem [shape: bf16[128,16], index: 4, kind: input, shape index: {}]
  %s5 = inlined_call_operand.vmem [shape: f32[1,16], index: 5, kind: input, shape index: {}]
  %s6 = inlined_call_operand.vmem [shape: bf16[16,128], index: 6, kind: input, shape index: {}]
  %s7 = inlined_call_operand.vmem [shape: f32[1,128], index: 7, kind: input, shape index: {}]
  %s8 = inlined_call_operand.vmem [shape: f32[8,128], index: 8, kind: output, shape index: {}]
  %s9 = sld [smem:[#allocation0]]
  $region50: #{lstmae_forward.5} parent=0
    _
  %s11 = ssub.s32 1, %s9
  %s12 = scalar_select 0, %s11, %s9
  // Predicated region
  $region2: #{lstmae_forward.5} parent=0 // pred_check
    _
  $region3: #{lstmae_forward.5} parent=0 // pred_check_branch
    %14 = sbr.rel (0) target = $region5
  $region4: #{lstmae_forward.5} parent=0 // pred_region
    _
  $region5: #{lstmae_forward.5} parent=0 // pred_fallthru
    _
  // Predicated region
  $region6: #{lstmae_forward.5} parent=0 // pred_check
    _
  $region7: #{lstmae_forward.5} parent=0 // pred_check_branch
    %16 = sbr.rel (0) target = $region9
  $region8: #{lstmae_forward.5} parent=0 // pred_region
    _
  $region9: #{lstmae_forward.5} parent=0 // pred_fallthru
    _
  // Predicated region
  $region10: #{lstmae_forward.5} parent=0 // pred_check
    _
  $region11: #{lstmae_forward.5} parent=0 // pred_check_branch
    %18 = sbr.rel (0) target = $region13
  $region12: #{lstmae_forward.5} parent=0 // pred_region
    _
  $region13: #{lstmae_forward.5} parent=0 // pred_fallthru
    _
  // Predicated region
  $region14: #{lstmae_forward.5} parent=0 // pred_check
    _
  $region15: #{lstmae_forward.5} parent=0 // pred_check_branch
    %20 = sbr.rel (0) target = $region17
  $region16: #{lstmae_forward.5} parent=0 // pred_region
    _
  $region17: #{lstmae_forward.5} parent=0 // pred_fallthru
    _
  // Predicated region
  $region18: #{lstmae_forward.5} parent=0 // pred_check
    _
  $region19: #{lstmae_forward.5} parent=0 // pred_check_branch
    %22 = sbr.rel (0) target = $region21
  $region20: #{lstmae_forward.5} parent=0 // pred_region
    _
  $region21: #{lstmae_forward.5} parent=0 // pred_fallthru
    _
  // Predicated region
  $region22: #{lstmae_forward.5} parent=0 // pred_check
    _
  $region23: #{lstmae_forward.5} parent=0 // pred_check_branch
    %24 = sbr.rel (0) target = $region25
  $region24: #{lstmae_forward.5} parent=0 // pred_region
    _
  $region25: #{lstmae_forward.5} parent=0 // pred_fallthru
    _
  // Predicated region
  $region26: #{lstmae_forward.5} parent=0 // pred_check
    _
  $region27: #{lstmae_forward.5} parent=0 // pred_check_branch
    %26 = sbr.rel (0) target = $region29
  $region28: #{lstmae_forward.5} parent=0 // pred_region
    _
  $region29: #{lstmae_forward.5} parent=0 // pred_fallthru
    _
  // Predicated region
  $region30: #{lstmae_forward.5} parent=0 // pred_check
    _
  $region31: #{lstmae_forward.5} parent=0 // pred_check_branch
    %28 = sbr.rel (0) target = $region33
  $region32: #{lstmae_forward.5} parent=0 // pred_region
    _
  $region33: #{lstmae_forward.5} parent=0 // pred_fallthru
    _
  %p30 = scmp.eq.s32.totalorder 0, 0
  // Predicated region
  $region34: #{lstmae_forward.5} parent=0 // pred_check
    %p31 = pneg %p30
  $region35: #{lstmae_forward.5} parent=0 // pred_check_branch
    %33 = sbr.rel (%p31) target = $region37
  $region36: #{lstmae_forward.5} parent=0 // pred_region
    %34 = vst [vmem:[#allocation2] sm:$0xff] 0.0
    %35 = vst [vmem:[#allocation3] sm:$0xff] 0.0
  $region37: #{lstmae_forward.5} parent=0 // pred_fallthru
    _
  %v36 = vld [vmem:[%s1] sm:$0xff]
  %v37 = vld [vmem:[%s1 + $0x8] sm:$0xff]
  %v38 = vld [vmem:[%s1 + $0x10] sm:$0xff]
  %v39 = vld [vmem:[%s1 + $0x18] sm:$0xff]
  %v40 = vld [vmem:[%s1 + $0x20] sm:$0xff]
  %v41 = vld [vmem:[%s1 + $0x28] sm:$0xff]
  %v42 = vld [vmem:[%s1 + $0x30] sm:$0xff]
  %v43 = vld [vmem:[%s1 + $0x38] sm:$0xff]
  %v44 = vld [vmem:[%s1 + $0x40] sm:$0xff]
  %v45 = vld [vmem:[%s1 + $0x48] sm:$0xff]
  %v46 = vld [vmem:[%s1 + $0x50] sm:$0xff]
  %v47 = vld [vmem:[%s1 + $0x58] sm:$0xff]
  %v48 = vld [vmem:[%s1 + $0x60] sm:$0xff]
  %v49 = vld [vmem:[%s1 + $0x68] sm:$0xff]
  %v50 = vld [vmem:[%s1 + $0x70] sm:$0xff]
  %v51 = vld [vmem:[%s1 + $0x78] sm:$0xff]
  %v52 = vld [vmem:[%s1 + $0x80] sm:$0xff]
  %v53 = vld [vmem:[%s1 + $0x88] sm:$0xff]
  %v54 = vld [vmem:[%s1 + $0x90] sm:$0xff]
  %v55 = vld [vmem:[%s1 + $0x98] sm:$0xff]
  %v56 = vld [vmem:[%s1 + $0xa0] sm:$0xff]
  %v57 = vld [vmem:[%s1 + $0xa8] sm:$0xff]
  %v58 = vld [vmem:[%s1 + $0xb0] sm:$0xff]
  %v59 = vld [vmem:[%s1 + $0xb8] sm:$0xff]
  %v60 = vld [vmem:[%s1 + $0xc0] sm:$0xff]
  %v61 = vld [vmem:[%s1 + $0xc8] sm:$0xff]
  %v62 = vld [vmem:[%s1 + $0xd0] sm:$0xff]
  %v63 = vld [vmem:[%s1 + $0xd8] sm:$0xff]
  %v64 = vld [vmem:[%s1 + $0xe0] sm:$0xff]
  %v65 = vld [vmem:[%s1 + $0xe8] sm:$0xff]
  %v66 = vld [vmem:[%s1 + $0xf0] sm:$0xff]
  %v67 = vld [vmem:[%s1 + $0xf8] sm:$0xff]
  %v68 = vld [vmem:[%s2] sm:$0xff]
  %v69 = vld [vmem:[%s2 + $0x8] sm:$0xff]
  %v70 = vld [vmem:[%s2 + $0x10] sm:$0xff]
  %v71 = vld [vmem:[%s2 + $0x18] sm:$0xff]
  %v72 = vld [vmem:[%s2 + $0x20] sm:$0xff]
  %v73 = vld [vmem:[%s2 + $0x28] sm:$0xff]
  %v74 = vld [vmem:[%s2 + $0x30] sm:$0xff]
  %v75 = vld [vmem:[%s2 + $0x38] sm:$0xff]
  %v76 = vld [vmem:[%s2 + $0x40] sm:$0xff]
  %v77 = vld [vmem:[%s2 + $0x48] sm:$0xff]
  %v78 = vld [vmem:[%s2 + $0x50] sm:$0xff]
  %v79 = vld [vmem:[%s2 + $0x58] sm:$0xff]
  %v80 = vld [vmem:[%s2 + $0x60] sm:$0xff]
  %v81 = vld [vmem:[%s2 + $0x68] sm:$0xff]
  %v82 = vld [vmem:[%s2 + $0x70] sm:$0xff]
  %v83 = vld [vmem:[%s2 + $0x78] sm:$0xff]
  %v84 = vld [vmem:[%s2 + $0x80] sm:$0xff]
  %v85 = vld [vmem:[%s2 + $0x88] sm:$0xff]
  %v86 = vld [vmem:[%s2 + $0x90] sm:$0xff]
  %v87 = vld [vmem:[%s2 + $0x98] sm:$0xff]
  %v88 = vld [vmem:[%s2 + $0xa0] sm:$0xff]
  %v89 = vld [vmem:[%s2 + $0xa8] sm:$0xff]
  %v90 = vld [vmem:[%s2 + $0xb0] sm:$0xff]
  %v91 = vld [vmem:[%s2 + $0xb8] sm:$0xff]
  %v92 = vld [vmem:[%s2 + $0xc0] sm:$0xff]
  %v93 = vld [vmem:[%s2 + $0xc8] sm:$0xff]
  %v94 = vld [vmem:[%s2 + $0xd0] sm:$0xff]
  %v95 = vld [vmem:[%s2 + $0xd8] sm:$0xff]
  %v96 = vld [vmem:[%s2 + $0xe0] sm:$0xff]
  %v97 = vld [vmem:[%s2 + $0xe8] sm:$0xff]
  %v98 = vld [vmem:[%s2 + $0xf0] sm:$0xff]
  %v99 = vld [vmem:[%s2 + $0xf8] sm:$0xff]
  %v100 = vld [vmem:[%s3] sm:$0xf]
  %v101 = vld [vmem:[%s0] sm:$0xff]
  %v102 = vld [vmem:[%s0 + $0x8] sm:$0xff]
  %v103 = vld [vmem:[%s0 + $0x10] sm:$0xff]
  %v104 = vld [vmem:[%s0 + $0x18] sm:$0xff]
  %v105 = vld [vmem:[%s0 + $0x20] sm:$0xff]
  %v106 = vld [vmem:[%s0 + $0x28] sm:$0xff]
  %v107 = vld [vmem:[%s0 + $0x30] sm:$0xff]
  %v108 = vld [vmem:[%s0 + $0x38] sm:$0xff]
  %v109 = vpack.c.bf16 %v102, %v101
  %v110 = vpack.c.bf16 %v104, %v103
  %v111 = vpack.c.bf16 %v106, %v105
  %v112 = vpack.c.bf16 %v108, %v107
  %v114 = vlaneseq
  %v115 = vshrl.u32 %v114, 7
  %v116 = vsub.s32 0, %v115
  %v117 = vrot.slane %v100, %v116
  %v118 = vlaneseq
  %v119 = vshrl.u32 %v118, 7
  %v120 = vsub.s32 1, %v119
  %v121 = vrot.slane %v100, %v120
  %v122 = vlaneseq
  %v123 = vshrl.u32 %v122, 7
  %v124 = vsub.s32 2, %v123
  %v125 = vrot.slane %v100, %v124
  %v126 = vlaneseq
  %v127 = vshrl.u32 %v126, 7
  %v128 = vsub.s32 3, %v127
  %v129 = vrot.slane %v100, %v128
  %v166 = vunpack.c.l.b16 %v36
  %v167 = vunpack.c.h.b16 %v36
  %v168 = vunpack.c.l.b16 %v37
  %v169 = vunpack.c.h.b16 %v37
  %v170 = vunpack.c.l.b16 %v38
  %v171 = vunpack.c.h.b16 %v38
  %v172 = vunpack.c.l.b16 %v39
  %v173 = vunpack.c.h.b16 %v39
  %v174 = vunpack.c.l.b16 %v40
  %v175 = vunpack.c.h.b16 %v40
  %v176 = vunpack.c.l.b16 %v41
  %v177 = vunpack.c.h.b16 %v41
  %v178 = vunpack.c.l.b16 %v42
  %v179 = vunpack.c.h.b16 %v42
  %v180 = vunpack.c.l.b16 %v43
  %v181 = vunpack.c.h.b16 %v43
  %v182 = vunpack.c.l.b16 %v44
  %v183 = vunpack.c.h.b16 %v44
  %v184 = vunpack.c.l.b16 %v45
  %v185 = vunpack.c.h.b16 %v45
  %v186 = vunpack.c.l.b16 %v46
  %v187 = vunpack.c.h.b16 %v46
  %v188 = vunpack.c.l.b16 %v47
  %v189 = vunpack.c.h.b16 %v47
  %v190 = vunpack.c.l.b16 %v48
  %v191 = vunpack.c.h.b16 %v48
  %v192 = vunpack.c.l.b16 %v49
  %v193 = vunpack.c.h.b16 %v49
  %v194 = vunpack.c.l.b16 %v50
  %v195 = vunpack.c.h.b16 %v50
  %v196 = vunpack.c.l.b16 %v51
  %v197 = vunpack.c.h.b16 %v51
  %v198 = vunpack.c.l.b16 %v52
  %v199 = vunpack.c.h.b16 %v52
  %v200 = vunpack.c.l.b16 %v53
  %v201 = vunpack.c.h.b16 %v53
  %v202 = vunpack.c.l.b16 %v54
  %v203 = vunpack.c.h.b16 %v54
  %v204 = vunpack.c.l.b16 %v55
  %v205 = vunpack.c.h.b16 %v55
  %v206 = vunpack.c.l.b16 %v56
  %v207 = vunpack.c.h.b16 %v56
  %v208 = vunpack.c.l.b16 %v57
  %v209 = vunpack.c.h.b16 %v57
  %v210 = vunpack.c.l.b16 %v58
  %v211 = vunpack.c.h.b16 %v58
  %v212 = vunpack.c.l.b16 %v59
  %v213 = vunpack.c.h.b16 %v59
  %v214 = vunpack.c.l.b16 %v60
  %v215 = vunpack.c.h.b16 %v60
  %v216 = vunpack.c.l.b16 %v61
  %v217 = vunpack.c.h.b16 %v61
  %v218 = vunpack.c.l.b16 %v62
  %v219 = vunpack.c.h.b16 %v62
  %v220 = vunpack.c.l.b16 %v63
  %v221 = vunpack.c.h.b16 %v63
  %v222 = vunpack.c.l.b16 %v64
  %v223 = vunpack.c.h.b16 %v64
  %v224 = vunpack.c.l.b16 %v65
  %v225 = vunpack.c.h.b16 %v65
  %v226 = vunpack.c.l.b16 %v66
  %v227 = vunpack.c.h.b16 %v66
  %v228 = vunpack.c.l.b16 %v67
  %v229 = vunpack.c.h.b16 %v67
  %v230 = vpack.c.b16 %v170, %v166
  %v231 = vpack.c.b16 %v171, %v167
  %v232 = vpack.c.b16 %v172, %v168
  %v233 = vpack.c.b16 %v173, %v169
  %v234 = vpack.c.b16 %v178, %v174
  %v235 = vpack.c.b16 %v179, %v175
  %v236 = vpack.c.b16 %v180, %v176
  %v237 = vpack.c.b16 %v181, %v177
  %v238 = vpack.c.b16 %v186, %v182
  %v239 = vpack.c.b16 %v187, %v183
  %v240 = vpack.c.b16 %v188, %v184
  %v241 = vpack.c.b16 %v189, %v185
  %v242 = vpack.c.b16 %v194, %v190
  %v243 = vpack.c.b16 %v195, %v191
  %v244 = vpack.c.b16 %v196, %v192
  %v245 = vpack.c.b16 %v197, %v193
  %v246 = vpack.c.b16 %v202, %v198
  %v247 = vpack.c.b16 %v203, %v199
  %v248 = vpack.c.b16 %v204, %v200
  %v249 = vpack.c.b16 %v205, %v201
  %v250 = vpack.c.b16 %v210, %v206
  %v251 = vpack.c.b16 %v211, %v207
  %v252 = vpack.c.b16 %v212, %v208
  %v253 = vpack.c.b16 %v213, %v209
  %v254 = vpack.c.b16 %v218, %v214
  %v255 = vpack.c.b16 %v219, %v215
  %v256 = vpack.c.b16 %v220, %v216
  %v257 = vpack.c.b16 %v221, %v217
  %v258 = vpack.c.b16 %v226, %v222
  %v259 = vpack.c.b16 %v227, %v223
  %v260 = vpack.c.b16 %v228, %v224
  %v261 = vpack.c.b16 %v229, %v225
  %294 = vmatprep.subr.bf16.mxu0 %v231
  %295 = vmatpush1.bf16.msra.mxu0 %v230
  %296 = vmatprep.subr.bf16.mxu0 %v235
  %297 = vmatpush1.bf16.msra.mxu0 %v234
  %298 = vmatprep.subr.bf16.mxu0 %v239
  %299 = vmatpush1.bf16.msra.mxu0 %v238
  %300 = vmatprep.subr.bf16.mxu0 %v243
  %301 = vmatpush1.bf16.msra.mxu0 %v242
  %302 = vmatprep.subr.bf16.mxu0 %v247
  %303 = vmatpush1.bf16.msra.mxu0 %v246
  %304 = vmatprep.subr.bf16.mxu0 %v251
  %305 = vmatpush1.bf16.msra.mxu0 %v250
  %306 = vmatprep.subr.bf16.mxu0 %v255
  %307 = vmatpush1.bf16.msra.mxu0 %v254
  %308 = vmatprep.subr.bf16.mxu0 %v259
  %309 = vmatpush1.bf16.msra.mxu0 %v258
  %310 = vmatprep.subr.bf16.mxu0 0
  %311 = vmatpush1.bf16.msra.mxu0 0
  %312 = vmatprep.subr.bf16.mxu0 0
  %313 = vmatpush1.bf16.msra.mxu0 0
  %314 = vmatprep.subr.bf16.mxu0 0
  %315 = vmatpush1.bf16.msra.mxu0 0
  %316 = vmatprep.subr.bf16.mxu0 0
  %317 = vmatpush1.bf16.msra.mxu0 0
  %318 = vmatprep.subr.bf16.mxu0 0
  %319 = vmatpush1.bf16.msra.mxu0 0
  %320 = vmatprep.subr.bf16.mxu0 0
  %321 = vmatpush1.bf16.msra.mxu0 0
  %322 = vmatprep.subr.bf16.mxu0 0
  %323 = vmatpush1.bf16.msra.mxu0 0
  %324 = vmatprep.subr.bf16.mxu0 0
  %325 = vmatpush1.bf16.msra.mxu0 0
  %326 = vmatprep.mubr.bf16.mxu0 0
  %327 = vmatmul.mubr.bf16.gmra.mrb[0].mxu0 %v109
  %v328 = vpop.f32.mrb[0].mxu0
  %v329 = vadd.f32 %v117, %v328
  %v330 = vpop.f32.mrb[0].mxu0
  %v331 = vadd.f32 %v121, %v330
  %v332 = vpop.f32.mrb[0].mxu0
  %v333 = vadd.f32 %v117, %v332
  %v334 = vpop.f32.mrb[0].mxu0
  %v335 = vadd.f32 %v121, %v334
  %336 = vmatprep.mubr.bf16.mxu0 0
  %337 = vmatmul.mubr.bf16.gmra.mrb[0].mxu0 %v110
  %v338 = vpop.f32.mrb[0].mxu0
  %v339 = vadd.f32 %v117, %v338
  %v340 = vpop.f32.mrb[0].mxu0
  %v341 = vadd.f32 %v121, %v340
  %v342 = vpop.f32.mrb[0].mxu0
  %v343 = vadd.f32 %v117, %v342
  %v344 = vpop.f32.mrb[0].mxu0
  %v345 = vadd.f32 %v121, %v344
  %346 = vmatprep.mubr.bf16.mxu0 0
  %347 = vmatmul.mubr.bf16.gmra.mrb[0].mxu0 %v111
  %v348 = vpop.f32.mrb[0].mxu0
  %v349 = vadd.f32 %v117, %v348
  %v350 = vpop.f32.mrb[0].mxu0
  %v351 = vadd.f32 %v121, %v350
  %v352 = vpop.f32.mrb[0].mxu0
  %v353 = vadd.f32 %v117, %v352
  %v354 = vpop.f32.mrb[0].mxu0
  %v355 = vadd.f32 %v121, %v354
  %356 = vmatprep.mubr.bf16.mxu0 0
  %357 = vmatmul.mubr.bf16.gmra.mrb[0].mxu0 %v112
  %v358 = vpop.f32.mrb[0].mxu0
  %v359 = vadd.f32 %v117, %v358
  %v360 = vpop.f32.mrb[0].mxu0
  %v361 = vadd.f32 %v121, %v360
  %v362 = vpop.f32.mrb[0].mxu0
  %v363 = vadd.f32 %v117, %v362
  %v364 = vpop.f32.mrb[0].mxu0
  %v365 = vadd.f32 %v121, %v364
  %366 = vdwg.mxu0
  %367 = vmatprep.subr.bf16.mxu0 %v233
  %368 = vmatpush1.bf16.msra.mxu0 %v232
  %369 = vmatprep.subr.bf16.mxu0 %v237
  %370 = vmatpush1.bf16.msra.mxu0 %v236
  %371 = vmatprep.subr.bf16.mxu0 %v241
  %372 = vmatpush1.bf16.msra.mxu0 %v240
  %373 = vmatprep.subr.bf16.mxu0 %v245
  %374 = vmatpush1.bf16.msra.mxu0 %v244
  %375 = vmatprep.subr.bf16.mxu0 %v249
  %376 = vmatpush1.bf16.msra.mxu0 %v248
  %377 = vmatprep.subr.bf16.mxu0 %v253
  %378 = vmatpush1.bf16.msra.mxu0 %v252
  %379 = vmatprep.subr.bf16.mxu0 %v257
  %380 = vmatpush1.bf16.msra.mxu0 %v256
  %381 = vmatprep.subr.bf16.mxu0 %v261
  %382 = vmatpush1.bf16.msra.mxu0 %v260
  %383 = vmatprep.subr.bf16.mxu0 0
  %384 = vmatpush1.bf16.msra.mxu0 0
  %385 = vmatprep.subr.bf16.mxu0 0
  %386 = vmatpush1.bf16.msra.mxu0 0
  %387 = vmatprep.subr.bf16.mxu0 0
  %388 = vmatpush1.bf16.msra.mxu0 0
  %389 = vmatprep.subr.bf16.mxu0 0
  %390 = vmatpush1.bf16.msra.mxu0 0
  %391 = vmatprep.subr.bf16.mxu0 0
  %392 = vmatpush1.bf16.msra.mxu0 0
  %393 = vmatprep.subr.bf16.mxu0 0
  %394 = vmatpush1.bf16.msra.mxu0 0
  %395 = vmatprep.subr.bf16.mxu0 0
  %396 = vmatpush1.bf16.msra.mxu0 0
  %397 = vmatprep.subr.bf16.mxu0 0
  %398 = vmatpush1.bf16.msra.mxu0 0
  %399 = vmatprep.mubr.bf16.mxu0 0
  %400 = vmatmul.mubr.bf16.gmra.mrb[0].mxu0 %v109
  %v401 = vpop.f32.mrb[0].mxu0
  %v402 = vadd.f32 %v125, %v401
  %v403 = vpop.f32.mrb[0].mxu0
  %v404 = vadd.f32 %v129, %v403
  %v405 = vpop.f32.mrb[0].mxu0
  %v406 = vadd.f32 %v125, %v405
  %v407 = vpop.f32.mrb[0].mxu0
  %v408 = vadd.f32 %v129, %v407
  %409 = vmatprep.mubr.bf16.mxu0 0
  %410 = vmatmul.mubr.bf16.gmra.mrb[0].mxu0 %v110
  %v411 = vpop.f32.mrb[0].mxu0
  %v412 = vadd.f32 %v125, %v411
  %v413 = vpop.f32.mrb[0].mxu0
  %v414 = vadd.f32 %v129, %v413
  %v415 = vpop.f32.mrb[0].mxu0
  %v416 = vadd.f32 %v125, %v415
  %v417 = vpop.f32.mrb[0].mxu0
  %v418 = vadd.f32 %v129, %v417
  %419 = vmatprep.mubr.bf16.mxu0 0
  %420 = vmatmul.mubr.bf16.gmra.mrb[0].mxu0 %v111
  %v421 = vpop.f32.mrb[0].mxu0
  %v422 = vadd.f32 %v125, %v421
  %v423 = vpop.f32.mrb[0].mxu0
  %v424 = vadd.f32 %v129, %v423
  %v425 = vpop.f32.mrb[0].mxu0
  %v426 = vadd.f32 %v125, %v425
  %v427 = vpop.f32.mrb[0].mxu0
  %v428 = vadd.f32 %v129, %v427
  %429 = vmatprep.mubr.bf16.mxu0 0
  %430 = vmatmul.mubr.bf16.gmra.mrb[0].mxu0 %v112
  %v431 = vpop.f32.mrb[0].mxu0
  %v432 = vadd.f32 %v125, %v431
  %v433 = vpop.f32.mrb[0].mxu0
  %v434 = vadd.f32 %v129, %v433
  %v435 = vpop.f32.mrb[0].mxu0
  %v436 = vadd.f32 %v125, %v435
  %v437 = vpop.f32.mrb[0].mxu0
  %v438 = vadd.f32 %v129, %v437
  %439 = vdwg.mxu0
  %v440 = vld [vmem:[#allocation2] sm:$0xff]
  %v441 = vld [vmem:[#allocation3] sm:$0xff]
  %v442 = vpack.c.bf16 %v440, %v440
  %v475 = vunpack.c.l.b16 %v68
  %v476 = vunpack.c.h.b16 %v68
  %v477 = vunpack.c.l.b16 %v69
  %v478 = vunpack.c.h.b16 %v69
  %v479 = vunpack.c.l.b16 %v70
  %v480 = vunpack.c.h.b16 %v70
  %v481 = vunpack.c.l.b16 %v71
  %v482 = vunpack.c.h.b16 %v71
  %v483 = vunpack.c.l.b16 %v72
  %v484 = vunpack.c.h.b16 %v72
  %v485 = vunpack.c.l.b16 %v73
  %v486 = vunpack.c.h.b16 %v73
  %v487 = vunpack.c.l.b16 %v74
  %v488 = vunpack.c.h.b16 %v74
  %v489 = vunpack.c.l.b16 %v75
  %v490 = vunpack.c.h.b16 %v75
  %v491 = vunpack.c.l.b16 %v76
  %v492 = vunpack.c.h.b16 %v76
  %v493 = vunpack.c.l.b16 %v77
  %v494 = vunpack.c.h.b16 %v77
  %v495 = vunpack.c.l.b16 %v78
  %v496 = vunpack.c.h.b16 %v78
  %v497 = vunpack.c.l.b16 %v79
  %v498 = vunpack.c.h.b16 %v79
  %v499 = vunpack.c.l.b16 %v80
  %v500 = vunpack.c.h.b16 %v80
  %v501 = vunpack.c.l.b16 %v81
  %v502 = vunpack.c.h.b16 %v81
  %v503 = vunpack.c.l.b16 %v82
  %v504 = vunpack.c.h.b16 %v82
  %v505 = vunpack.c.l.b16 %v83
  %v506 = vunpack.c.h.b16 %v83
  %v507 = vunpack.c.l.b16 %v84
  %v508 = vunpack.c.h.b16 %v84
  %v509 = vunpack.c.l.b16 %v85
  %v510 = vunpack.c.h.b16 %v85
  %v511 = vunpack.c.l.b16 %v86
  %v512 = vunpack.c.h.b16 %v86
  %v513 = vunpack.c.l.b16 %v87
  %v514 = vunpack.c.h.b16 %v87
  %v515 = vunpack.c.l.b16 %v88
  %v516 = vunpack.c.h.b16 %v88
  %v517 = vunpack.c.l.b16 %v89
  %v518 = vunpack.c.h.b16 %v89
  %v519 = vunpack.c.l.b16 %v90
  %v520 = vunpack.c.h.b16 %v90
  %v521 = vunpack.c.l.b16 %v91
  %v522 = vunpack.c.h.b16 %v91
  %v523 = vunpack.c.l.b16 %v92
  %v524 = vunpack.c.h.b16 %v92
  %v525 = vunpack.c.l.b16 %v93
  %v526 = vunpack.c.h.b16 %v93
  %v527 = vunpack.c.l.b16 %v94
  %v528 = vunpack.c.h.b16 %v94
  %v529 = vunpack.c.l.b16 %v95
  %v530 = vunpack.c.h.b16 %v95
  %v531 = vunpack.c.l.b16 %v96
  %v532 = vunpack.c.h.b16 %v96
  %v533 = vunpack.c.l.b16 %v97
  %v534 = vunpack.c.h.b16 %v97
  %v535 = vunpack.c.l.b16 %v98
  %v536 = vunpack.c.h.b16 %v98
  %v537 = vunpack.c.l.b16 %v99
  %v538 = vunpack.c.h.b16 %v99
  %v539 = vpack.c.b16 %v479, %v475
  %v540 = vpack.c.b16 %v480, %v476
  %v541 = vpack.c.b16 %v481, %v477
  %v542 = vpack.c.b16 %v482, %v478
  %v543 = vpack.c.b16 %v487, %v483
  %v544 = vpack.c.b16 %v488, %v484
  %v545 = vpack.c.b16 %v489, %v485
  %v546 = vpack.c.b16 %v490, %v486
  %v547 = vpack.c.b16 %v495, %v491
  %v548 = vpack.c.b16 %v496, %v492
  %v549 = vpack.c.b16 %v497, %v493
  %v550 = vpack.c.b16 %v498, %v494
  %v551 = vpack.c.b16 %v503, %v499
  %v552 = vpack.c.b16 %v504, %v500
  %v553 = vpack.c.b16 %v505, %v501
  %v554 = vpack.c.b16 %v506, %v502
  %v555 = vpack.c.b16 %v511, %v507
  %v556 = vpack.c.b16 %v512, %v508
  %v557 = vpack.c.b16 %v513, %v509
  %v558 = vpack.c.b16 %v514, %v510
  %v559 = vpack.c.b16 %v519, %v515
  %v560 = vpack.c.b16 %v520, %v516
  %v561 = vpack.c.b16 %v521, %v517
  %v562 = vpack.c.b16 %v522, %v518
  %v563 = vpack.c.b16 %v527, %v523
  %v564 = vpack.c.b16 %v528, %v524
  %v565 = vpack.c.b16 %v529, %v525
  %v566 = vpack.c.b16 %v530, %v526
  %v567 = vpack.c.b16 %v535, %v531
  %v568 = vpack.c.b16 %v536, %v532
  %v569 = vpack.c.b16 %v537, %v533
  %v570 = vpack.c.b16 %v538, %v534
  %603 = vmatprep.subr.bf16.mxu0 %v540
  %604 = vmatpush1.bf16.msra.mxu0 %v539
  %605 = vmatprep.subr.bf16.mxu0 %v544
  %606 = vmatpush1.bf16.msra.mxu0 %v543
  %607 = vmatprep.subr.bf16.mxu0 %v548
  %608 = vmatpush1.bf16.msra.mxu0 %v547
  %609 = vmatprep.subr.bf16.mxu0 %v552
  %610 = vmatpush1.bf16.msra.mxu0 %v551
  %611 = vmatprep.subr.bf16.mxu0 %v556
  %612 = vmatpush1.bf16.msra.mxu0 %v555
  %613 = vmatprep.subr.bf16.mxu0 %v560
  %614 = vmatpush1.bf16.msra.mxu0 %v559
  %615 = vmatprep.subr.bf16.mxu0 %v564
  %616 = vmatpush1.bf16.msra.mxu0 %v563
  %617 = vmatprep.subr.bf16.mxu0 %v568
  %618 = vmatpush1.bf16.msra.mxu0 %v567
  %619 = vmatprep.subr.bf16.mxu0 0
  %620 = vmatpush1.bf16.msra.mxu0 0
  %621 = vmatprep.subr.bf16.mxu0 0
  %622 = vmatpush1.bf16.msra.mxu0 0
  %623 = vmatprep.subr.bf16.mxu0 0
  %624 = vmatpush1.bf16.msra.mxu0 0
  %625 = vmatprep.subr.bf16.mxu0 0
  %626 = vmatpush1.bf16.msra.mxu0 0
  %627 = vmatprep.subr.bf16.mxu0 0
  %628 = vmatpush1.bf16.msra.mxu0 0
  %629 = vmatprep.subr.bf16.mxu0 0
  %630 = vmatpush1.bf16.msra.mxu0 0
  %631 = vmatprep.subr.bf16.mxu0 0
  %632 = vmatpush1.bf16.msra.mxu0 0
  %633 = vmatprep.subr.bf16.mxu0 0
  %634 = vmatpush1.bf16.msra.mxu0 0
  %635 = vmatprep.mubr.bf16.mxu0 0
  %636 = vmatmul.mubr.bf16.gmra.mrb[0].mxu0 %v442
  %v637 = vpop.f32.mrb[0].mxu0
  %v638 = vadd.f32 0.0, %v637
  %v639 = vpop.f32.mrb[0].mxu0
  %v640 = vadd.f32 0.0, %v639
  %v641 = vpop.f32.mrb[0].mxu0
  %v642 = vpop.f32.mrb[0].mxu0
  %643 = vdwg.mxu0
  %644 = vmatprep.subr.bf16.mxu0 %v542
  %645 = vmatpush1.bf16.msra.mxu0 %v541
  %646 = vmatprep.subr.bf16.mxu0 %v546
  %647 = vmatpush1.bf16.msra.mxu0 %v545
  %648 = vmatprep.subr.bf16.mxu0 %v550
  %649 = vmatpush1.bf16.msra.mxu0 %v549
  %650 = vmatprep.subr.bf16.mxu0 %v554
  %651 = vmatpush1.bf16.msra.mxu0 %v553
  %652 = vmatprep.subr.bf16.mxu0 %v558
  %653 = vmatpush1.bf16.msra.mxu0 %v557
  %654 = vmatprep.subr.bf16.mxu0 %v562
  %655 = vmatpush1.bf16.msra.mxu0 %v561
  %656 = vmatprep.subr.bf16.mxu0 %v566
  %657 = vmatpush1.bf16.msra.mxu0 %v565
  %658 = vmatprep.subr.bf16.mxu0 %v570
  %659 = vmatpush1.bf16.msra.mxu0 %v569
  %660 = vmatprep.subr.bf16.mxu0 0
  %661 = vmatpush1.bf16.msra.mxu0 0
  %662 = vmatprep.subr.bf16.mxu0 0
  %663 = vmatpush1.bf16.msra.mxu0 0
  %664 = vmatprep.subr.bf16.mxu0 0
  %665 = vmatpush1.bf16.msra.mxu0 0
  %666 = vmatprep.subr.bf16.mxu0 0
  %667 = vmatpush1.bf16.msra.mxu0 0
  %668 = vmatprep.subr.bf16.mxu0 0
  %669 = vmatpush1.bf16.msra.mxu0 0
  %670 = vmatprep.subr.bf16.mxu0 0
  %671 = vmatpush1.bf16.msra.mxu0 0
  %672 = vmatprep.subr.bf16.mxu0 0
  %673 = vmatpush1.bf16.msra.mxu0 0
  %674 = vmatprep.subr.bf16.mxu0 0
  %675 = vmatpush1.bf16.msra.mxu0 0
  %676 = vmatprep.mubr.bf16.mxu0 0
  %677 = vmatmul.mubr.bf16.gmra.mrb[0].mxu0 %v442
  %v678 = vpop.f32.mrb[0].mxu0
  %v679 = vadd.f32 0.0, %v678
  %v680 = vpop.f32.mrb[0].mxu0
  %v681 = vadd.f32 0.0, %v680
  %v682 = vpop.f32.mrb[0].mxu0
  %v683 = vpop.f32.mrb[0].mxu0
  %684 = vdwg.mxu0
  %v685 = vadd.f32 %v329, %v638
  %v686 = vadd.f32 %v331, %v640
  %v687 = vadd.f32 %v402, %v679
  %v688 = vadd.f32 %v404, %v681
  %v689 = vmul.f32 %v685, 0.5
  %v690 = vtanh.pop %v689
  %v691 = vmul.f32 %v690, 0.5
  %v692 = vadd.f32 %v691, 0.5
  %v693 = vmul.f32 %v686, 0.5
  %v694 = vtanh.pop %v693
  %v695 = vmul.f32 %v694, 0.5
  %v696 = vadd.f32 %v695, 0.5
  %v697 = vtanh.pop %v687
  %v698 = vmul.f32 %v688, 0.5
  %v699 = vtanh.pop %v698
  %v700 = vmul.f32 %v699, 0.5
  %v701 = vadd.f32 %v700, 0.5
  %v702 = vmul.f32 %v696, %v441
  %v703 = vmul.f32 %v692, %v697
  %v704 = vadd.f32 %v702, %v703
  %v705 = vtanh.pop %v704
  %v706 = vmul.f32 %v701, %v705
  %v707 = vpack.c.bf16 %v706, %v706
  %708 = vmatprep.subr.bf16.mxu0 %v540
  %709 = vmatpush1.bf16.msra.mxu0 %v539
  %710 = vmatprep.subr.bf16.mxu0 %v544
  %711 = vmatpush1.bf16.msra.mxu0 %v543
  %712 = vmatprep.subr.bf16.mxu0 %v548
  %713 = vmatpush1.bf16.msra.mxu0 %v547
  %714 = vmatprep.subr.bf16.mxu0 %v552
  %715 = vmatpush1.bf16.msra.mxu0 %v551
  %716 = vmatprep.subr.bf16.mxu0 %v556
  %717 = vmatpush1.bf16.msra.mxu0 %v555
  %718 = vmatprep.subr.bf16.mxu0 %v560
  %719 = vmatpush1.bf16.msra.mxu0 %v559
  %720 = vmatprep.subr.bf16.mxu0 %v564
  %721 = vmatpush1.bf16.msra.mxu0 %v563
  %722 = vmatprep.subr.bf16.mxu0 %v568
  %723 = vmatpush1.bf16.msra.mxu0 %v567
  %724 = vmatprep.subr.bf16.mxu0 0
  %725 = vmatpush1.bf16.msra.mxu0 0
  %726 = vmatprep.subr.bf16.mxu0 0
  %727 = vmatpush1.bf16.msra.mxu0 0
  %728 = vmatprep.subr.bf16.mxu0 0
  %729 = vmatpush1.bf16.msra.mxu0 0
  %730 = vmatprep.subr.bf16.mxu0 0
  %731 = vmatpush1.bf16.msra.mxu0 0
  %732 = vmatprep.subr.bf16.mxu0 0
  %733 = vmatpush1.bf16.msra.mxu0 0
  %734 = vmatprep.subr.bf16.mxu0 0
  %735 = vmatpush1.bf16.msra.mxu0 0
  %736 = vmatprep.subr.bf16.mxu0 0
  %737 = vmatpush1.bf16.msra.mxu0 0
  %738 = vmatprep.subr.bf16.mxu0 0
  %739 = vmatpush1.bf16.msra.mxu0 0
  %740 = vmatprep.mubr.bf16.mxu0 0
  %741 = vmatmul.mubr.bf16.gmra.mrb[0].mxu0 %v707
  %v742 = vpop.f32.mrb[0].mxu0
  %v743 = vadd.f32 0.0, %v742
  %v744 = vpop.f32.mrb[0].mxu0
  %v745 = vadd.f32 0.0, %v744
  %v746 = vpop.f32.mrb[0].mxu0
  %v747 = vpop.f32.mrb[0].mxu0
  %748 = vdwg.mxu0
  %749 = vmatprep.subr.bf16.mxu0 %v542
  %750 = vmatpush1.bf16.msra.mxu0 %v541
  %751 = vmatprep.subr.bf16.mxu0 %v546
  %752 = vmatpush1.bf16.msra.mxu0 %v545
  %753 = vmatprep.subr.bf16.mxu0 %v550
  %754 = vmatpush1.bf16.msra.mxu0 %v549
  %755 = vmatprep.subr.bf16.mxu0 %v554
  %756 = vmatpush1.bf16.msra.mxu0 %v553
  %757 = vmatprep.subr.bf16.mxu0 %v558
  %758 = vmatpush1.bf16.msra.mxu0 %v557
  %759 = vmatprep.subr.bf16.mxu0 %v562
  %760 = vmatpush1.bf16.msra.mxu0 %v561
  %761 = vmatprep.subr.bf16.mxu0 %v566
  %762 = vmatpush1.bf16.msra.mxu0 %v565
  %763 = vmatprep.subr.bf16.mxu0 %v570
  %764 = vmatpush1.bf16.msra.mxu0 %v569
  %765 = vmatprep.subr.bf16.mxu0 0
  %766 = vmatpush1.bf16.msra.mxu0 0
  %767 = vmatprep.subr.bf16.mxu0 0
  %768 = vmatpush1.bf16.msra.mxu0 0
  %769 = vmatprep.subr.bf16.mxu0 0
  %770 = vmatpush1.bf16.msra.mxu0 0
  %771 = vmatprep.subr.bf16.mxu0 0
  %772 = vmatpush1.bf16.msra.mxu0 0
  %773 = vmatprep.subr.bf16.mxu0 0
  %774 = vmatpush1.bf16.msra.mxu0 0
  %775 = vmatprep.subr.bf16.mxu0 0
  %776 = vmatpush1.bf16.msra.mxu0 0
  %777 = vmatprep.subr.bf16.mxu0 0
  %778 = vmatpush1.bf16.msra.mxu0 0
  %779 = vmatprep.subr.bf16.mxu0 0
  %780 = vmatpush1.bf16.msra.mxu0 0
  %781 = vmatprep.mubr.bf16.mxu0 0
  %782 = vmatmul.mubr.bf16.gmra.mrb[0].mxu0 %v707
  %v783 = vpop.f32.mrb[0].mxu0
  %v784 = vadd.f32 0.0, %v783
  %v785 = vpop.f32.mrb[0].mxu0
  %v786 = vadd.f32 0.0, %v785
  %v787 = vpop.f32.mrb[0].mxu0
  %v788 = vpop.f32.mrb[0].mxu0
  %789 = vdwg.mxu0
  %v790 = vadd.f32 %v333, %v743
  %v791 = vadd.f32 %v335, %v745
  %v792 = vadd.f32 %v406, %v784
  %v793 = vadd.f32 %v408, %v786
  %v794 = vmul.f32 %v790, 0.5
  %v795 = vtanh.pop %v794
  %v796 = vmul.f32 %v795, 0.5
  %v797 = vadd.f32 %v796, 0.5
  %v798 = vmul.f32 %v791, 0.5
  %v799 = vtanh.pop %v798
  %v800 = vmul.f32 %v799, 0.5
  %v801 = vadd.f32 %v800, 0.5
  %v802 = vtanh.pop %v792
  %v803 = vmul.f32 %v793, 0.5
  %v804 = vtanh.pop %v803
  %v805 = vmul.f32 %v804, 0.5
  %v806 = vadd.f32 %v805, 0.5
  %v807 = vmul.f32 %v801, %v704
  %v808 = vmul.f32 %v797, %v802
  %v809 = vadd.f32 %v807, %v808
  %v810 = vtanh.pop %v809
  %v811 = vmul.f32 %v806, %v810
  %v812 = vpack.c.bf16 %v811, %v811
  %813 = vmatprep.subr.bf16.mxu0 %v540
  %814 = vmatpush1.bf16.msra.mxu0 %v539
  %815 = vmatprep.subr.bf16.mxu0 %v544
  %816 = vmatpush1.bf16.msra.mxu0 %v543
  %817 = vmatprep.subr.bf16.mxu0 %v548
  %818 = vmatpush1.bf16.msra.mxu0 %v547
  %819 = vmatprep.subr.bf16.mxu0 %v552
  %820 = vmatpush1.bf16.msra.mxu0 %v551
  %821 = vmatprep.subr.bf16.mxu0 %v556
  %822 = vmatpush1.bf16.msra.mxu0 %v555
  %823 = vmatprep.subr.bf16.mxu0 %v560
  %824 = vmatpush1.bf16.msra.mxu0 %v559
  %825 = vmatprep.subr.bf16.mxu0 %v564
  %826 = vmatpush1.bf16.msra.mxu0 %v563
  %827 = vmatprep.subr.bf16.mxu0 %v568
  %828 = vmatpush1.bf16.msra.mxu0 %v567
  %829 = vmatprep.subr.bf16.mxu0 0
  %830 = vmatpush1.bf16.msra.mxu0 0
  %831 = vmatprep.subr.bf16.mxu0 0
  %832 = vmatpush1.bf16.msra.mxu0 0
  %833 = vmatprep.subr.bf16.mxu0 0
  %834 = vmatpush1.bf16.msra.mxu0 0
  %835 = vmatprep.subr.bf16.mxu0 0
  %836 = vmatpush1.bf16.msra.mxu0 0
  %837 = vmatprep.subr.bf16.mxu0 0
  %838 = vmatpush1.bf16.msra.mxu0 0
  %839 = vmatprep.subr.bf16.mxu0 0
  %840 = vmatpush1.bf16.msra.mxu0 0
  %841 = vmatprep.subr.bf16.mxu0 0
  %842 = vmatpush1.bf16.msra.mxu0 0
  %843 = vmatprep.subr.bf16.mxu0 0
  %844 = vmatpush1.bf16.msra.mxu0 0
  %845 = vmatprep.mubr.bf16.mxu0 0
  %846 = vmatmul.mubr.bf16.gmra.mrb[0].mxu0 %v812
  %v847 = vpop.f32.mrb[0].mxu0
  %v848 = vadd.f32 0.0, %v847
  %v849 = vpop.f32.mrb[0].mxu0
  %v850 = vadd.f32 0.0, %v849
  %v851 = vpop.f32.mrb[0].mxu0
  %v852 = vpop.f32.mrb[0].mxu0
  %853 = vdwg.mxu0
  %854 = vmatprep.subr.bf16.mxu0 %v542
  %855 = vmatpush1.bf16.msra.mxu0 %v541
  %856 = vmatprep.subr.bf16.mxu0 %v546
  %857 = vmatpush1.bf16.msra.mxu0 %v545
  %858 = vmatprep.subr.bf16.mxu0 %v550
  %859 = vmatpush1.bf16.msra.mxu0 %v549
  %860 = vmatprep.subr.bf16.mxu0 %v554
  %861 = vmatpush1.bf16.msra.mxu0 %v553
  %862 = vmatprep.subr.bf16.mxu0 %v558
  %863 = vmatpush1.bf16.msra.mxu0 %v557
  %864 = vmatprep.subr.bf16.mxu0 %v562
  %865 = vmatpush1.bf16.msra.mxu0 %v561
  %866 = vmatprep.subr.bf16.mxu0 %v566
  %867 = vmatpush1.bf16.msra.mxu0 %v565
  %868 = vmatprep.subr.bf16.mxu0 %v570
  %869 = vmatpush1.bf16.msra.mxu0 %v569
  %870 = vmatprep.subr.bf16.mxu0 0
  %871 = vmatpush1.bf16.msra.mxu0 0
  %872 = vmatprep.subr.bf16.mxu0 0
  %873 = vmatpush1.bf16.msra.mxu0 0
  %874 = vmatprep.subr.bf16.mxu0 0
  %875 = vmatpush1.bf16.msra.mxu0 0
  %876 = vmatprep.subr.bf16.mxu0 0
  %877 = vmatpush1.bf16.msra.mxu0 0
  %878 = vmatprep.subr.bf16.mxu0 0
  %879 = vmatpush1.bf16.msra.mxu0 0
  %880 = vmatprep.subr.bf16.mxu0 0
  %881 = vmatpush1.bf16.msra.mxu0 0
  %882 = vmatprep.subr.bf16.mxu0 0
  %883 = vmatpush1.bf16.msra.mxu0 0
  %884 = vmatprep.subr.bf16.mxu0 0
  %885 = vmatpush1.bf16.msra.mxu0 0
  %886 = vmatprep.mubr.bf16.mxu0 0
  %887 = vmatmul.mubr.bf16.gmra.mrb[0].mxu0 %v812
  %v888 = vpop.f32.mrb[0].mxu0
  %v889 = vadd.f32 0.0, %v888
  %v890 = vpop.f32.mrb[0].mxu0
  %v891 = vadd.f32 0.0, %v890
  %v892 = vpop.f32.mrb[0].mxu0
  %v893 = vpop.f32.mrb[0].mxu0
  %894 = vdwg.mxu0
  %v895 = vadd.f32 %v339, %v848
  %v896 = vadd.f32 %v341, %v850
  %v897 = vadd.f32 %v412, %v889
  %v898 = vadd.f32 %v414, %v891
  %v899 = vmul.f32 %v895, 0.5
  %v900 = vtanh.pop %v899
  %v901 = vmul.f32 %v900, 0.5
  %v902 = vadd.f32 %v901, 0.5
  %v903 = vmul.f32 %v896, 0.5
  %v904 = vtanh.pop %v903
  %v905 = vmul.f32 %v904, 0.5
  %v906 = vadd.f32 %v905, 0.5
  %v907 = vtanh.pop %v897
  %v908 = vmul.f32 %v898, 0.5
  %v909 = vtanh.pop %v908
  %v910 = vmul.f32 %v909, 0.5
  %v911 = vadd.f32 %v910, 0.5
  %v912 = vmul.f32 %v906, %v809
  %v913 = vmul.f32 %v902, %v907
  %v914 = vadd.f32 %v912, %v913
  %v915 = vtanh.pop %v914
  %v916 = vmul.f32 %v911, %v915
  %v917 = vpack.c.bf16 %v916, %v916
  %918 = vmatprep.subr.bf16.mxu0 %v540
  %919 = vmatpush1.bf16.msra.mxu0 %v539
  %920 = vmatprep.subr.bf16.mxu0 %v544
  %921 = vmatpush1.bf16.msra.mxu0 %v543
  %922 = vmatprep.subr.bf16.mxu0 %v548
  %923 = vmatpush1.bf16.msra.mxu0 %v547
  %924 = vmatprep.subr.bf16.mxu0 %v552
  %925 = vmatpush1.bf16.msra.mxu0 %v551
  %926 = vmatprep.subr.bf16.mxu0 %v556
  %927 = vmatpush1.bf16.msra.mxu0 %v555
  %928 = vmatprep.subr.bf16.mxu0 %v560
  %929 = vmatpush1.bf16.msra.mxu0 %v559
  %930 = vmatprep.subr.bf16.mxu0 %v564
  %931 = vmatpush1.bf16.msra.mxu0 %v563
  %932 = vmatprep.subr.bf16.mxu0 %v568
  %933 = vmatpush1.bf16.msra.mxu0 %v567
  %934 = vmatprep.subr.bf16.mxu0 0
  %935 = vmatpush1.bf16.msra.mxu0 0
  %936 = vmatprep.subr.bf16.mxu0 0
  %937 = vmatpush1.bf16.msra.mxu0 0
  %938 = vmatprep.subr.bf16.mxu0 0
  %939 = vmatpush1.bf16.msra.mxu0 0
  %940 = vmatprep.subr.bf16.mxu0 0
  %941 = vmatpush1.bf16.msra.mxu0 0
  %942 = vmatprep.subr.bf16.mxu0 0
  %943 = vmatpush1.bf16.msra.mxu0 0
  %944 = vmatprep.subr.bf16.mxu0 0
  %945 = vmatpush1.bf16.msra.mxu0 0
  %946 = vmatprep.subr.bf16.mxu0 0
  %947 = vmatpush1.bf16.msra.mxu0 0
  %948 = vmatprep.subr.bf16.mxu0 0
  %949 = vmatpush1.bf16.msra.mxu0 0
  %950 = vmatprep.mubr.bf16.mxu0 0
  %951 = vmatmul.mubr.bf16.gmra.mrb[0].mxu0 %v917
  %v952 = vpop.f32.mrb[0].mxu0
  %v953 = vadd.f32 0.0, %v952
  %v954 = vpop.f32.mrb[0].mxu0
  %v955 = vadd.f32 0.0, %v954
  %v956 = vpop.f32.mrb[0].mxu0
  %v957 = vpop.f32.mrb[0].mxu0
  %958 = vdwg.mxu0
  %959 = vmatprep.subr.bf16.mxu0 %v542
  %960 = vmatpush1.bf16.msra.mxu0 %v541
  %961 = vmatprep.subr.bf16.mxu0 %v546
  %962 = vmatpush1.bf16.msra.mxu0 %v545
  %963 = vmatprep.subr.bf16.mxu0 %v550
  %964 = vmatpush1.bf16.msra.mxu0 %v549
  %965 = vmatprep.subr.bf16.mxu0 %v554
  %966 = vmatpush1.bf16.msra.mxu0 %v553
  %967 = vmatprep.subr.bf16.mxu0 %v558
  %968 = vmatpush1.bf16.msra.mxu0 %v557
  %969 = vmatprep.subr.bf16.mxu0 %v562
  %970 = vmatpush1.bf16.msra.mxu0 %v561
  %971 = vmatprep.subr.bf16.mxu0 %v566
  %972 = vmatpush1.bf16.msra.mxu0 %v565
  %973 = vmatprep.subr.bf16.mxu0 %v570
  %974 = vmatpush1.bf16.msra.mxu0 %v569
  %975 = vmatprep.subr.bf16.mxu0 0
  %976 = vmatpush1.bf16.msra.mxu0 0
  %977 = vmatprep.subr.bf16.mxu0 0
  %978 = vmatpush1.bf16.msra.mxu0 0
  %979 = vmatprep.subr.bf16.mxu0 0
  %980 = vmatpush1.bf16.msra.mxu0 0
  %981 = vmatprep.subr.bf16.mxu0 0
  %982 = vmatpush1.bf16.msra.mxu0 0
  %983 = vmatprep.subr.bf16.mxu0 0
  %984 = vmatpush1.bf16.msra.mxu0 0
  %985 = vmatprep.subr.bf16.mxu0 0
  %986 = vmatpush1.bf16.msra.mxu0 0
  %987 = vmatprep.subr.bf16.mxu0 0
  %988 = vmatpush1.bf16.msra.mxu0 0
  %989 = vmatprep.subr.bf16.mxu0 0
  %990 = vmatpush1.bf16.msra.mxu0 0
  %991 = vmatprep.mubr.bf16.mxu0 0
  %992 = vmatmul.mubr.bf16.gmra.mrb[0].mxu0 %v917
  %v993 = vpop.f32.mrb[0].mxu0
  %v994 = vadd.f32 0.0, %v993
  %v995 = vpop.f32.mrb[0].mxu0
  %v996 = vadd.f32 0.0, %v995
  %v997 = vpop.f32.mrb[0].mxu0
  %v998 = vpop.f32.mrb[0].mxu0
  %999 = vdwg.mxu0
  %v1000 = vadd.f32 %v343, %v953
  %v1001 = vadd.f32 %v345, %v955
  %v1002 = vadd.f32 %v416, %v994
  %v1003 = vadd.f32 %v418, %v996
  %v1004 = vmul.f32 %v1000, 0.5
  %v1005 = vtanh.pop %v1004
  %v1006 = vmul.f32 %v1005, 0.5
  %v1007 = vadd.f32 %v1006, 0.5
  %v1008 = vmul.f32 %v1001, 0.5
  %v1009 = vtanh.pop %v1008
  %v1010 = vmul.f32 %v1009, 0.5
  %v1011 = vadd.f32 %v1010, 0.5
  %v1012 = vtanh.pop %v1002
  %v1013 = vmul.f32 %v1003, 0.5
  %v1014 = vtanh.pop %v1013
  %v1015 = vmul.f32 %v1014, 0.5
  %v1016 = vadd.f32 %v1015, 0.5
  %v1017 = vmul.f32 %v1011, %v914
  %v1018 = vmul.f32 %v1007, %v1012
  %v1019 = vadd.f32 %v1017, %v1018
  %v1020 = vtanh.pop %v1019
  %v1021 = vmul.f32 %v1016, %v1020
  %v1022 = vpack.c.bf16 %v1021, %v1021
  %1023 = vmatprep.subr.bf16.mxu0 %v540
  %1024 = vmatpush1.bf16.msra.mxu0 %v539
  %1025 = vmatprep.subr.bf16.mxu0 %v544
  %1026 = vmatpush1.bf16.msra.mxu0 %v543
  %1027 = vmatprep.subr.bf16.mxu0 %v548
  %1028 = vmatpush1.bf16.msra.mxu0 %v547
  %1029 = vmatprep.subr.bf16.mxu0 %v552
  %1030 = vmatpush1.bf16.msra.mxu0 %v551
  %1031 = vmatprep.subr.bf16.mxu0 %v556
  %1032 = vmatpush1.bf16.msra.mxu0 %v555
  %1033 = vmatprep.subr.bf16.mxu0 %v560
  %1034 = vmatpush1.bf16.msra.mxu0 %v559
  %1035 = vmatprep.subr.bf16.mxu0 %v564
  %1036 = vmatpush1.bf16.msra.mxu0 %v563
  %1037 = vmatprep.subr.bf16.mxu0 %v568
  %1038 = vmatpush1.bf16.msra.mxu0 %v567
  %1039 = vmatprep.subr.bf16.mxu0 0
  %1040 = vmatpush1.bf16.msra.mxu0 0
  %1041 = vmatprep.subr.bf16.mxu0 0
  %1042 = vmatpush1.bf16.msra.mxu0 0
  %1043 = vmatprep.subr.bf16.mxu0 0
  %1044 = vmatpush1.bf16.msra.mxu0 0
  %1045 = vmatprep.subr.bf16.mxu0 0
  %1046 = vmatpush1.bf16.msra.mxu0 0
  %1047 = vmatprep.subr.bf16.mxu0 0
  %1048 = vmatpush1.bf16.msra.mxu0 0
  %1049 = vmatprep.subr.bf16.mxu0 0
  %1050 = vmatpush1.bf16.msra.mxu0 0
  %1051 = vmatprep.subr.bf16.mxu0 0
  %1052 = vmatpush1.bf16.msra.mxu0 0
  %1053 = vmatprep.subr.bf16.mxu0 0
  %1054 = vmatpush1.bf16.msra.mxu0 0
  %1055 = vmatprep.mubr.bf16.mxu0 0
  %1056 = vmatmul.mubr.bf16.gmra.mrb[0].mxu0 %v1022
  %v1057 = vpop.f32.mrb[0].mxu0
  %v1058 = vadd.f32 0.0, %v1057
  %v1059 = vpop.f32.mrb[0].mxu0
  %v1060 = vadd.f32 0.0, %v1059
  %v1061 = vpop.f32.mrb[0].mxu0
  %v1062 = vpop.f32.mrb[0].mxu0
  %1063 = vdwg.mxu0
  %1064 = vmatprep.subr.bf16.mxu0 %v542
  %1065 = vmatpush1.bf16.msra.mxu0 %v541
  %1066 = vmatprep.subr.bf16.mxu0 %v546
  %1067 = vmatpush1.bf16.msra.mxu0 %v545
  %1068 = vmatprep.subr.bf16.mxu0 %v550
  %1069 = vmatpush1.bf16.msra.mxu0 %v549
  %1070 = vmatprep.subr.bf16.mxu0 %v554
  %1071 = vmatpush1.bf16.msra.mxu0 %v553
  %1072 = vmatprep.subr.bf16.mxu0 %v558
  %1073 = vmatpush1.bf16.msra.mxu0 %v557
  %1074 = vmatprep.subr.bf16.mxu0 %v562
  %1075 = vmatpush1.bf16.msra.mxu0 %v561
  %1076 = vmatprep.subr.bf16.mxu0 %v566
  %1077 = vmatpush1.bf16.msra.mxu0 %v565
  %1078 = vmatprep.subr.bf16.mxu0 %v570
  %1079 = vmatpush1.bf16.msra.mxu0 %v569
  %1080 = vmatprep.subr.bf16.mxu0 0
  %1081 = vmatpush1.bf16.msra.mxu0 0
  %1082 = vmatprep.subr.bf16.mxu0 0
  %1083 = vmatpush1.bf16.msra.mxu0 0
  %1084 = vmatprep.subr.bf16.mxu0 0
  %1085 = vmatpush1.bf16.msra.mxu0 0
  %1086 = vmatprep.subr.bf16.mxu0 0
  %1087 = vmatpush1.bf16.msra.mxu0 0
  %1088 = vmatprep.subr.bf16.mxu0 0
  %1089 = vmatpush1.bf16.msra.mxu0 0
  %1090 = vmatprep.subr.bf16.mxu0 0
  %1091 = vmatpush1.bf16.msra.mxu0 0
  %1092 = vmatprep.subr.bf16.mxu0 0
  %1093 = vmatpush1.bf16.msra.mxu0 0
  %1094 = vmatprep.subr.bf16.mxu0 0
  %1095 = vmatpush1.bf16.msra.mxu0 0
  %1096 = vmatprep.mubr.bf16.mxu0 0
  %1097 = vmatmul.mubr.bf16.gmra.mrb[0].mxu0 %v1022
  %v1098 = vpop.f32.mrb[0].mxu0
  %v1099 = vadd.f32 0.0, %v1098
  %v1100 = vpop.f32.mrb[0].mxu0
  %v1101 = vadd.f32 0.0, %v1100
  %v1102 = vpop.f32.mrb[0].mxu0
  %v1103 = vpop.f32.mrb[0].mxu0
  %1104 = vdwg.mxu0
  %v1105 = vadd.f32 %v349, %v1058
  %v1106 = vadd.f32 %v351, %v1060
  %v1107 = vadd.f32 %v422, %v1099
  %v1108 = vadd.f32 %v424, %v1101
  %v1109 = vmul.f32 %v1105, 0.5
  %v1110 = vtanh.pop %v1109
  %v1111 = vmul.f32 %v1110, 0.5
  %v1112 = vadd.f32 %v1111, 0.5
  %v1113 = vmul.f32 %v1106, 0.5
  %v1114 = vtanh.pop %v1113
  %v1115 = vmul.f32 %v1114, 0.5
  %v1116 = vadd.f32 %v1115, 0.5
  %v1117 = vtanh.pop %v1107
  %v1118 = vmul.f32 %v1108, 0.5
  %v1119 = vtanh.pop %v1118
  %v1120 = vmul.f32 %v1119, 0.5
  %v1121 = vadd.f32 %v1120, 0.5
  %v1122 = vmul.f32 %v1116, %v1019
  %v1123 = vmul.f32 %v1112, %v1117
  %v1124 = vadd.f32 %v1122, %v1123
  %v1125 = vtanh.pop %v1124
  %v1126 = vmul.f32 %v1121, %v1125
  %v1127 = vpack.c.bf16 %v1126, %v1126
  %1128 = vmatprep.subr.bf16.mxu0 %v540
  %1129 = vmatpush1.bf16.msra.mxu0 %v539
  %1130 = vmatprep.subr.bf16.mxu0 %v544
  %1131 = vmatpush1.bf16.msra.mxu0 %v543
  %1132 = vmatprep.subr.bf16.mxu0 %v548
  %1133 = vmatpush1.bf16.msra.mxu0 %v547
  %1134 = vmatprep.subr.bf16.mxu0 %v552
  %1135 = vmatpush1.bf16.msra.mxu0 %v551
  %1136 = vmatprep.subr.bf16.mxu0 %v556
  %1137 = vmatpush1.bf16.msra.mxu0 %v555
  %1138 = vmatprep.subr.bf16.mxu0 %v560
  %1139 = vmatpush1.bf16.msra.mxu0 %v559
  %1140 = vmatprep.subr.bf16.mxu0 %v564
  %1141 = vmatpush1.bf16.msra.mxu0 %v563
  %1142 = vmatprep.subr.bf16.mxu0 %v568
  %1143 = vmatpush1.bf16.msra.mxu0 %v567
  %1144 = vmatprep.subr.bf16.mxu0 0
  %1145 = vmatpush1.bf16.msra.mxu0 0
  %1146 = vmatprep.subr.bf16.mxu0 0
  %1147 = vmatpush1.bf16.msra.mxu0 0
  %1148 = vmatprep.subr.bf16.mxu0 0
  %1149 = vmatpush1.bf16.msra.mxu0 0
  %1150 = vmatprep.subr.bf16.mxu0 0
  %1151 = vmatpush1.bf16.msra.mxu0 0
  %1152 = vmatprep.subr.bf16.mxu0 0
  %1153 = vmatpush1.bf16.msra.mxu0 0
  %1154 = vmatprep.subr.bf16.mxu0 0
  %1155 = vmatpush1.bf16.msra.mxu0 0
  %1156 = vmatprep.subr.bf16.mxu0 0
  %1157 = vmatpush1.bf16.msra.mxu0 0
  %1158 = vmatprep.subr.bf16.mxu0 0
  %1159 = vmatpush1.bf16.msra.mxu0 0
  %1160 = vmatprep.mubr.bf16.mxu0 0
  %1161 = vmatmul.mubr.bf16.gmra.mrb[0].mxu0 %v1127
  %v1162 = vpop.f32.mrb[0].mxu0
  %v1163 = vadd.f32 0.0, %v1162
  %v1164 = vpop.f32.mrb[0].mxu0
  %v1165 = vadd.f32 0.0, %v1164
  %v1166 = vpop.f32.mrb[0].mxu0
  %v1167 = vpop.f32.mrb[0].mxu0
  %1168 = vdwg.mxu0
  %1169 = vmatprep.subr.bf16.mxu0 %v542
  %1170 = vmatpush1.bf16.msra.mxu0 %v541
  %1171 = vmatprep.subr.bf16.mxu0 %v546
  %1172 = vmatpush1.bf16.msra.mxu0 %v545
  %1173 = vmatprep.subr.bf16.mxu0 %v550
  %1174 = vmatpush1.bf16.msra.mxu0 %v549
  %1175 = vmatprep.subr.bf16.mxu0 %v554
  %1176 = vmatpush1.bf16.msra.mxu0 %v553
  %1177 = vmatprep.subr.bf16.mxu0 %v558
  %1178 = vmatpush1.bf16.msra.mxu0 %v557
  %1179 = vmatprep.subr.bf16.mxu0 %v562
  %1180 = vmatpush1.bf16.msra.mxu0 %v561
  %1181 = vmatprep.subr.bf16.mxu0 %v566
  %1182 = vmatpush1.bf16.msra.mxu0 %v565
  %1183 = vmatprep.subr.bf16.mxu0 %v570
  %1184 = vmatpush1.bf16.msra.mxu0 %v569
  %1185 = vmatprep.subr.bf16.mxu0 0
  %1186 = vmatpush1.bf16.msra.mxu0 0
  %1187 = vmatprep.subr.bf16.mxu0 0
  %1188 = vmatpush1.bf16.msra.mxu0 0
  %1189 = vmatprep.subr.bf16.mxu0 0
  %1190 = vmatpush1.bf16.msra.mxu0 0
  %1191 = vmatprep.subr.bf16.mxu0 0
  %1192 = vmatpush1.bf16.msra.mxu0 0
  %1193 = vmatprep.subr.bf16.mxu0 0
  %1194 = vmatpush1.bf16.msra.mxu0 0
  %1195 = vmatprep.subr.bf16.mxu0 0
  %1196 = vmatpush1.bf16.msra.mxu0 0
  %1197 = vmatprep.subr.bf16.mxu0 0
  %1198 = vmatpush1.bf16.msra.mxu0 0
  %1199 = vmatprep.subr.bf16.mxu0 0
  %1200 = vmatpush1.bf16.msra.mxu0 0
  %1201 = vmatprep.mubr.bf16.mxu0 0
  %1202 = vmatmul.mubr.bf16.gmra.mrb[0].mxu0 %v1127
  %v1203 = vpop.f32.mrb[0].mxu0
  %v1204 = vadd.f32 0.0, %v1203
  %v1205 = vpop.f32.mrb[0].mxu0
  %v1206 = vadd.f32 0.0, %v1205
  %v1207 = vpop.f32.mrb[0].mxu0
  %v1208 = vpop.f32.mrb[0].mxu0
  %1209 = vdwg.mxu0
  %v1210 = vadd.f32 %v353, %v1163
  %v1211 = vadd.f32 %v355, %v1165
  %v1212 = vadd.f32 %v426, %v1204
  %v1213 = vadd.f32 %v428, %v1206
  %v1214 = vmul.f32 %v1210, 0.5
  %v1215 = vtanh.pop %v1214
  %v1216 = vmul.f32 %v1215, 0.5
  %v1217 = vadd.f32 %v1216, 0.5
  %v1218 = vmul.f32 %v1211, 0.5
  %v1219 = vtanh.pop %v1218
  %v1220 = vmul.f32 %v1219, 0.5
  %v1221 = vadd.f32 %v1220, 0.5
  %v1222 = vtanh.pop %v1212
  %v1223 = vmul.f32 %v1213, 0.5
  %v1224 = vtanh.pop %v1223
  %v1225 = vmul.f32 %v1224, 0.5
  %v1226 = vadd.f32 %v1225, 0.5
  %v1227 = vmul.f32 %v1221, %v1124
  %v1228 = vmul.f32 %v1217, %v1222
  %v1229 = vadd.f32 %v1227, %v1228
  %v1230 = vtanh.pop %v1229
  %v1231 = vmul.f32 %v1226, %v1230
  %v1232 = vpack.c.bf16 %v1231, %v1231
  %1233 = vmatprep.subr.bf16.mxu0 %v540
  %1234 = vmatpush1.bf16.msra.mxu0 %v539
  %1235 = vmatprep.subr.bf16.mxu0 %v544
  %1236 = vmatpush1.bf16.msra.mxu0 %v543
  %1237 = vmatprep.subr.bf16.mxu0 %v548
  %1238 = vmatpush1.bf16.msra.mxu0 %v547
  %1239 = vmatprep.subr.bf16.mxu0 %v552
  %1240 = vmatpush1.bf16.msra.mxu0 %v551
  %1241 = vmatprep.subr.bf16.mxu0 %v556
  %1242 = vmatpush1.bf16.msra.mxu0 %v555
  %1243 = vmatprep.subr.bf16.mxu0 %v560
  %1244 = vmatpush1.bf16.msra.mxu0 %v559
  %1245 = vmatprep.subr.bf16.mxu0 %v564
  %1246 = vmatpush1.bf16.msra.mxu0 %v563
  %1247 = vmatprep.subr.bf16.mxu0 %v568
  %1248 = vmatpush1.bf16.msra.mxu0 %v567
  %1249 = vmatprep.subr.bf16.mxu0 0
  %1250 = vmatpush1.bf16.msra.mxu0 0
  %1251 = vmatprep.subr.bf16.mxu0 0
  %1252 = vmatpush1.bf16.msra.mxu0 0
  %1253 = vmatprep.subr.bf16.mxu0 0
  %1254 = vmatpush1.bf16.msra.mxu0 0
  %1255 = vmatprep.subr.bf16.mxu0 0
  %1256 = vmatpush1.bf16.msra.mxu0 0
  %1257 = vmatprep.subr.bf16.mxu0 0
  %1258 = vmatpush1.bf16.msra.mxu0 0
  %1259 = vmatprep.subr.bf16.mxu0 0
  %1260 = vmatpush1.bf16.msra.mxu0 0
  %1261 = vmatprep.subr.bf16.mxu0 0
  %1262 = vmatpush1.bf16.msra.mxu0 0
  %1263 = vmatprep.subr.bf16.mxu0 0
  %1264 = vmatpush1.bf16.msra.mxu0 0
  %1265 = vmatprep.mubr.bf16.mxu0 0
  %1266 = vmatmul.mubr.bf16.gmra.mrb[0].mxu0 %v1232
  %v1267 = vpop.f32.mrb[0].mxu0
  %v1268 = vadd.f32 0.0, %v1267
  %v1269 = vpop.f32.mrb[0].mxu0
  %v1270 = vadd.f32 0.0, %v1269
  %v1271 = vpop.f32.mrb[0].mxu0
  %v1272 = vpop.f32.mrb[0].mxu0
  %1273 = vdwg.mxu0
  %1274 = vmatprep.subr.bf16.mxu0 %v542
  %1275 = vmatpush1.bf16.msra.mxu0 %v541
  %1276 = vmatprep.subr.bf16.mxu0 %v546
  %1277 = vmatpush1.bf16.msra.mxu0 %v545
  %1278 = vmatprep.subr.bf16.mxu0 %v550
  %1279 = vmatpush1.bf16.msra.mxu0 %v549
  %1280 = vmatprep.subr.bf16.mxu0 %v554
  %1281 = vmatpush1.bf16.msra.mxu0 %v553
  %1282 = vmatprep.subr.bf16.mxu0 %v558
  %1283 = vmatpush1.bf16.msra.mxu0 %v557
  %1284 = vmatprep.subr.bf16.mxu0 %v562
  %1285 = vmatpush1.bf16.msra.mxu0 %v561
  %1286 = vmatprep.subr.bf16.mxu0 %v566
  %1287 = vmatpush1.bf16.msra.mxu0 %v565
  %1288 = vmatprep.subr.bf16.mxu0 %v570
  %1289 = vmatpush1.bf16.msra.mxu0 %v569
  %1290 = vmatprep.subr.bf16.mxu0 0
  %1291 = vmatpush1.bf16.msra.mxu0 0
  %1292 = vmatprep.subr.bf16.mxu0 0
  %1293 = vmatpush1.bf16.msra.mxu0 0
  %1294 = vmatprep.subr.bf16.mxu0 0
  %1295 = vmatpush1.bf16.msra.mxu0 0
  %1296 = vmatprep.subr.bf16.mxu0 0
  %1297 = vmatpush1.bf16.msra.mxu0 0
  %1298 = vmatprep.subr.bf16.mxu0 0
  %1299 = vmatpush1.bf16.msra.mxu0 0
  %1300 = vmatprep.subr.bf16.mxu0 0
  %1301 = vmatpush1.bf16.msra.mxu0 0
  %1302 = vmatprep.subr.bf16.mxu0 0
  %1303 = vmatpush1.bf16.msra.mxu0 0
  %1304 = vmatprep.subr.bf16.mxu0 0
  %1305 = vmatpush1.bf16.msra.mxu0 0
  %1306 = vmatprep.mubr.bf16.mxu0 0
  %1307 = vmatmul.mubr.bf16.gmra.mrb[0].mxu0 %v1232
  %v1308 = vpop.f32.mrb[0].mxu0
  %v1309 = vadd.f32 0.0, %v1308
  %v1310 = vpop.f32.mrb[0].mxu0
  %v1311 = vadd.f32 0.0, %v1310
  %v1312 = vpop.f32.mrb[0].mxu0
  %v1313 = vpop.f32.mrb[0].mxu0
  %1314 = vdwg.mxu0
  %v1315 = vadd.f32 %v359, %v1268
  %v1316 = vadd.f32 %v361, %v1270
  %v1317 = vadd.f32 %v432, %v1309
  %v1318 = vadd.f32 %v434, %v1311
  %v1319 = vmul.f32 %v1315, 0.5
  %v1320 = vtanh.pop %v1319
  %v1321 = vmul.f32 %v1320, 0.5
  %v1322 = vadd.f32 %v1321, 0.5
  %v1323 = vmul.f32 %v1316, 0.5
  %v1324 = vtanh.pop %v1323
  %v1325 = vmul.f32 %v1324, 0.5
  %v1326 = vadd.f32 %v1325, 0.5
  %v1327 = vtanh.pop %v1317
  %v1328 = vmul.f32 %v1318, 0.5
  %v1329 = vtanh.pop %v1328
  %v1330 = vmul.f32 %v1329, 0.5
  %v1331 = vadd.f32 %v1330, 0.5
  %v1332 = vmul.f32 %v1326, %v1229
  %v1333 = vmul.f32 %v1322, %v1327
  %v1334 = vadd.f32 %v1332, %v1333
  %v1335 = vtanh.pop %v1334
  %v1336 = vmul.f32 %v1331, %v1335
  %v1337 = vpack.c.bf16 %v1336, %v1336
  %1338 = vmatprep.subr.bf16.mxu0 %v540
  %1339 = vmatpush1.bf16.msra.mxu0 %v539
  %1340 = vmatprep.subr.bf16.mxu0 %v544
  %1341 = vmatpush1.bf16.msra.mxu0 %v543
  %1342 = vmatprep.subr.bf16.mxu0 %v548
  %1343 = vmatpush1.bf16.msra.mxu0 %v547
  %1344 = vmatprep.subr.bf16.mxu0 %v552
  %1345 = vmatpush1.bf16.msra.mxu0 %v551
  %1346 = vmatprep.subr.bf16.mxu0 %v556
  %1347 = vmatpush1.bf16.msra.mxu0 %v555
  %1348 = vmatprep.subr.bf16.mxu0 %v560
  %1349 = vmatpush1.bf16.msra.mxu0 %v559
  %1350 = vmatprep.subr.bf16.mxu0 %v564
  %1351 = vmatpush1.bf16.msra.mxu0 %v563
  %1352 = vmatprep.subr.bf16.mxu0 %v568
  %1353 = vmatpush1.bf16.msra.mxu0 %v567
  %1354 = vmatprep.subr.bf16.mxu0 0
  %1355 = vmatpush1.bf16.msra.mxu0 0
  %1356 = vmatprep.subr.bf16.mxu0 0
  %1357 = vmatpush1.bf16.msra.mxu0 0
  %1358 = vmatprep.subr.bf16.mxu0 0
  %1359 = vmatpush1.bf16.msra.mxu0 0
  %1360 = vmatprep.subr.bf16.mxu0 0
  %1361 = vmatpush1.bf16.msra.mxu0 0
  %1362 = vmatprep.subr.bf16.mxu0 0
  %1363 = vmatpush1.bf16.msra.mxu0 0
  %1364 = vmatprep.subr.bf16.mxu0 0
  %1365 = vmatpush1.bf16.msra.mxu0 0
  %1366 = vmatprep.subr.bf16.mxu0 0
  %1367 = vmatpush1.bf16.msra.mxu0 0
  %1368 = vmatprep.subr.bf16.mxu0 0
  %1369 = vmatpush1.bf16.msra.mxu0 0
  %1370 = vmatprep.mubr.bf16.mxu0 0
  %1371 = vmatmul.mubr.bf16.gmra.mrb[0].mxu0 %v1337
  %v1372 = vpop.f32.mrb[0].mxu0
  %v1373 = vadd.f32 0.0, %v1372
  %v1374 = vpop.f32.mrb[0].mxu0
  %v1375 = vadd.f32 0.0, %v1374
  %v1376 = vpop.f32.mrb[0].mxu0
  %v1377 = vpop.f32.mrb[0].mxu0
  %1378 = vdwg.mxu0
  %1379 = vmatprep.subr.bf16.mxu0 %v542
  %1380 = vmatpush1.bf16.msra.mxu0 %v541
  %1381 = vmatprep.subr.bf16.mxu0 %v546
  %1382 = vmatpush1.bf16.msra.mxu0 %v545
  %1383 = vmatprep.subr.bf16.mxu0 %v550
  %1384 = vmatpush1.bf16.msra.mxu0 %v549
  %1385 = vmatprep.subr.bf16.mxu0 %v554
  %1386 = vmatpush1.bf16.msra.mxu0 %v553
  %1387 = vmatprep.subr.bf16.mxu0 %v558
  %1388 = vmatpush1.bf16.msra.mxu0 %v557
  %1389 = vmatprep.subr.bf16.mxu0 %v562
  %1390 = vmatpush1.bf16.msra.mxu0 %v561
  %1391 = vmatprep.subr.bf16.mxu0 %v566
  %1392 = vmatpush1.bf16.msra.mxu0 %v565
  %1393 = vmatprep.subr.bf16.mxu0 %v570
  %1394 = vmatpush1.bf16.msra.mxu0 %v569
  %1395 = vmatprep.subr.bf16.mxu0 0
  %1396 = vmatpush1.bf16.msra.mxu0 0
  %1397 = vmatprep.subr.bf16.mxu0 0
  %1398 = vmatpush1.bf16.msra.mxu0 0
  %1399 = vmatprep.subr.bf16.mxu0 0
  %1400 = vmatpush1.bf16.msra.mxu0 0
  %1401 = vmatprep.subr.bf16.mxu0 0
  %1402 = vmatpush1.bf16.msra.mxu0 0
  %1403 = vmatprep.subr.bf16.mxu0 0
  %1404 = vmatpush1.bf16.msra.mxu0 0
  %1405 = vmatprep.subr.bf16.mxu0 0
  %1406 = vmatpush1.bf16.msra.mxu0 0
  %1407 = vmatprep.subr.bf16.mxu0 0
  %1408 = vmatpush1.bf16.msra.mxu0 0
  %1409 = vmatprep.subr.bf16.mxu0 0
  %1410 = vmatpush1.bf16.msra.mxu0 0
  %1411 = vmatprep.mubr.bf16.mxu0 0
  %1412 = vmatmul.mubr.bf16.gmra.mrb[0].mxu0 %v1337
  %v1413 = vpop.f32.mrb[0].mxu0
  %v1414 = vadd.f32 0.0, %v1413
  %v1415 = vpop.f32.mrb[0].mxu0
  %v1416 = vadd.f32 0.0, %v1415
  %v1417 = vpop.f32.mrb[0].mxu0
  %v1418 = vpop.f32.mrb[0].mxu0
  %1419 = vdwg.mxu0
  %v1420 = vadd.f32 %v363, %v1373
  %v1421 = vadd.f32 %v365, %v1375
  %v1422 = vadd.f32 %v436, %v1414
  %v1423 = vadd.f32 %v438, %v1416
  %v1424 = vmul.f32 %v1420, 0.5
  %v1425 = vtanh.pop %v1424
  %v1426 = vmul.f32 %v1425, 0.5
  %v1427 = vadd.f32 %v1426, 0.5
  %v1428 = vmul.f32 %v1421, 0.5
  %v1429 = vtanh.pop %v1428
  %v1430 = vmul.f32 %v1429, 0.5
  %v1431 = vadd.f32 %v1430, 0.5
  %v1432 = vtanh.pop %v1422
  %v1433 = vmul.f32 %v1423, 0.5
  %v1434 = vtanh.pop %v1433
  %v1435 = vmul.f32 %v1434, 0.5
  %v1436 = vadd.f32 %v1435, 0.5
  %v1437 = vmul.f32 %v1431, %v1334
  %v1438 = vmul.f32 %v1427, %v1432
  %v1439 = vadd.f32 %v1437, %v1438
  %v1440 = vtanh.pop %v1439
  %v1441 = vmul.f32 %v1436, %v1440
  %1442 = vst [vmem:[#allocation2] sm:$0xff] %v1441
  %1443 = vst [vmem:[#allocation3] sm:$0xff] %v1439
  // Predicated region
  $region38: #{lstmae_forward.5} parent=0 // pred_check
    %p1444 = pneg %p30
  $region39: #{lstmae_forward.5} parent=0 // pred_check_branch
    %1446 = sbr.rel (%p1444) target = $region41
  $region40: #{lstmae_forward.5} parent=0 // pred_region
    %v1447 = vpack.c.bf16 %v1441, %v1441
    %v1448 = vld [vmem:[%s4] sm:$0xf]
    %v1449 = vld [vmem:[%s4 + $0x4] sm:$0xf]
    %v1450 = vld [vmem:[%s4 + $0x8] sm:$0xf]
    %v1451 = vld [vmem:[%s4 + $0xc] sm:$0xf]
    %v1452 = vld [vmem:[%s4 + $0x10] sm:$0xf]
    %v1453 = vld [vmem:[%s4 + $0x14] sm:$0xf]
    %v1454 = vld [vmem:[%s4 + $0x18] sm:$0xf]
    %v1455 = vld [vmem:[%s4 + $0x1c] sm:$0xf]
    %v1456 = vld [vmem:[%s4 + $0x20] sm:$0xf]
    %v1457 = vld [vmem:[%s4 + $0x24] sm:$0xf]
    %v1458 = vld [vmem:[%s4 + $0x28] sm:$0xf]
    %v1459 = vld [vmem:[%s4 + $0x2c] sm:$0xf]
    %v1460 = vld [vmem:[%s4 + $0x30] sm:$0xf]
    %v1461 = vld [vmem:[%s4 + $0x34] sm:$0xf]
    %v1462 = vld [vmem:[%s4 + $0x38] sm:$0xf]
    %v1463 = vld [vmem:[%s4 + $0x3c] sm:$0xf]
    %v1464 = vld [vmem:[%s5] sm:$0x1]
    %v1466 = vlaneseq
    %v1467 = vshrl.u32 %v1466, 7
    %v1468 = vsub.s32 0, %v1467
    %v1469 = vrot.slane %v1464, %v1468
    %v1487 = vunpack.c.l.b16 %v1448
    %v1488 = vunpack.c.l.b16 %v1449
    %v1489 = vunpack.c.l.b16 %v1450
    %v1490 = vunpack.c.l.b16 %v1451
    %v1491 = vunpack.c.l.b16 %v1452
    %v1492 = vunpack.c.l.b16 %v1453
    %v1493 = vunpack.c.l.b16 %v1454
    %v1494 = vunpack.c.l.b16 %v1455
    %v1495 = vunpack.c.l.b16 %v1456
    %v1496 = vunpack.c.l.b16 %v1457
    %v1497 = vunpack.c.l.b16 %v1458
    %v1498 = vunpack.c.l.b16 %v1459
    %v1499 = vunpack.c.l.b16 %v1460
    %v1500 = vunpack.c.l.b16 %v1461
    %v1501 = vunpack.c.l.b16 %v1462
    %v1502 = vunpack.c.l.b16 %v1463
    %v1503 = vpack.c.b16 %v1488, %v1487
    %v1504 = vpack.c.b16 %v1490, %v1489
    %v1505 = vpack.c.b16 %v1492, %v1491
    %v1506 = vpack.c.b16 %v1494, %v1493
    %v1507 = vpack.c.b16 %v1496, %v1495
    %v1508 = vpack.c.b16 %v1498, %v1497
    %v1509 = vpack.c.b16 %v1500, %v1499
    %v1510 = vpack.c.b16 %v1502, %v1501
    %1519 = vmatprep.subr.bf16.mxu0 0
    %1520 = vmatpush1.bf16.msra.mxu0 %v1503
    %1521 = vmatprep.subr.bf16.mxu0 0
    %1522 = vmatpush1.bf16.msra.mxu0 %v1504
    %1523 = vmatprep.subr.bf16.mxu0 0
    %1524 = vmatpush1.bf16.msra.mxu0 %v1505
    %1525 = vmatprep.subr.bf16.mxu0 0
    %1526 = vmatpush1.bf16.msra.mxu0 %v1506
    %1527 = vmatprep.subr.bf16.mxu0 0
    %1528 = vmatpush1.bf16.msra.mxu0 %v1507
    %1529 = vmatprep.subr.bf16.mxu0 0
    %1530 = vmatpush1.bf16.msra.mxu0 %v1508
    %1531 = vmatprep.subr.bf16.mxu0 0
    %1532 = vmatpush1.bf16.msra.mxu0 %v1509
    %1533 = vmatprep.subr.bf16.mxu0 0
    %1534 = vmatpush1.bf16.msra.mxu0 %v1510
    %1535 = vmatprep.subr.bf16.mxu0 0
    %1536 = vmatpush1.bf16.msra.mxu0 0
    %1537 = vmatprep.subr.bf16.mxu0 0
    %1538 = vmatpush1.bf16.msra.mxu0 0
    %1539 = vmatprep.subr.bf16.mxu0 0
    %1540 = vmatpush1.bf16.msra.mxu0 0
    %1541 = vmatprep.subr.bf16.mxu0 0
    %1542 = vmatpush1.bf16.msra.mxu0 0
    %1543 = vmatprep.subr.bf16.mxu0 0
    %1544 = vmatpush1.bf16.msra.mxu0 0
    %1545 = vmatprep.subr.bf16.mxu0 0
    %1546 = vmatpush1.bf16.msra.mxu0 0
    %1547 = vmatprep.subr.bf16.mxu0 0
    %1548 = vmatpush1.bf16.msra.mxu0 0
    %1549 = vmatprep.subr.bf16.mxu0 0
    %1550 = vmatpush1.bf16.msra.mxu0 0
    %1551 = vmatprep.mubr.bf16.mxu0 0
    %1552 = vmatmul.mubr.bf16.gmra.mrb[0].mxu0 %v1447
    %v1553 = vpop.f32.mrb[0].mxu0
    %v1554 = vadd.f32 %v1469, %v1553
    %v1555 = vpop.f32.mrb[0].mxu0
    %v1556 = vpop.f32.mrb[0].mxu0
    %v1557 = vpop.f32.mrb[0].mxu0
    %1558 = vdwg.mxu0
    %v1559 = vpack.c.bf16 %v1554, %v1554
    %v1560 = vld [vmem:[%s6] sm:$0xf]
    %v1561 = vld [vmem:[%s6 + $0x4] sm:$0xf]
    %v1562 = vld [vmem:[%s7] sm:$0x1]
    %v1564 = vlaneseq
    %v1565 = vshrl.u32 %v1564, 7
    %v1566 = vsub.s32 0, %v1565
    %v1567 = vrot.slane %v1562, %v1566
    %v1571 = vunpack.c.l.b16 %v1560
    %v1572 = vunpack.c.l.b16 %v1561
    %v1573 = vpack.c.b16 %v1572, %v1571
    %vm1575 = vcmask 130048
    %v1577 = vsel %vm1575, %v1559, 0
    %1579 = vmatprep.subr.bf16.mxu0 0
    %1580 = vmatpush1.bf16.msra.mxu0 %v1573
    %1581 = vmatprep.subr.bf16.mxu0 0
    %1582 = vmatpush1.bf16.msra.mxu0 0
    %1583 = vmatprep.subr.bf16.mxu0 0
    %1584 = vmatpush1.bf16.msra.mxu0 0
    %1585 = vmatprep.subr.bf16.mxu0 0
    %1586 = vmatpush1.bf16.msra.mxu0 0
    %1587 = vmatprep.subr.bf16.mxu0 0
    %1588 = vmatpush1.bf16.msra.mxu0 0
    %1589 = vmatprep.subr.bf16.mxu0 0
    %1590 = vmatpush1.bf16.msra.mxu0 0
    %1591 = vmatprep.subr.bf16.mxu0 0
    %1592 = vmatpush1.bf16.msra.mxu0 0
    %1593 = vmatprep.subr.bf16.mxu0 0
    %1594 = vmatpush1.bf16.msra.mxu0 0
    %1595 = vmatprep.subr.bf16.mxu0 0
    %1596 = vmatpush1.bf16.msra.mxu0 0
    %1597 = vmatprep.subr.bf16.mxu0 0
    %1598 = vmatpush1.bf16.msra.mxu0 0
    %1599 = vmatprep.subr.bf16.mxu0 0
    %1600 = vmatpush1.bf16.msra.mxu0 0
    %1601 = vmatprep.subr.bf16.mxu0 0
    %1602 = vmatpush1.bf16.msra.mxu0 0
    %1603 = vmatprep.subr.bf16.mxu0 0
    %1604 = vmatpush1.bf16.msra.mxu0 0
    %1605 = vmatprep.subr.bf16.mxu0 0
    %1606 = vmatpush1.bf16.msra.mxu0 0
    %1607 = vmatprep.subr.bf16.mxu0 0
    %1608 = vmatpush1.bf16.msra.mxu0 0
    %1609 = vmatprep.subr.bf16.mxu0 0
    %1610 = vmatpush1.bf16.msra.mxu0 0
    %1611 = vmatprep.mubr.bf16.mxu0 0
    %1612 = vmatmul.mubr.bf16.gmra.mrb[0].mxu0 %v1577
    %v1613 = vpop.f32.mrb[0].mxu0
    %v1614 = vadd.f32 %v1567, %v1613
    %v1615 = vpop.f32.mrb[0].mxu0
    %v1616 = vpop.f32.mrb[0].mxu0
    %v1617 = vpop.f32.mrb[0].mxu0
    %1618 = vdwg.mxu0
    %1619 = vst [vmem:[%s8] sm:$0xff] %v1614
  $region41: #{lstmae_forward.5} parent=0 // pred_fallthru
    _
  // Predicated region
  $region42: #{lstmae_forward.5} parent=0 // pred_check
    _
  $region43: #{lstmae_forward.5} parent=0 // pred_check_branch
    %1621 = sbr.rel (0) target = $region45
  $region44: #{lstmae_forward.5} parent=0 // pred_region
    _
  $region45: #{lstmae_forward.5} parent=0 // pred_fallthru
    _
  // Predicated region
  $region46: #{lstmae_forward.5} parent=0 // pred_check
    _
  $region47: #{lstmae_forward.5} parent=0 // pred_check_branch
    %1623 = sbr.rel (0) target = $region49
  $region48: #{lstmae_forward.5} parent=0 // pred_region
    _
  $region49: #{lstmae_forward.5} parent=0 // pred_fallthru
    _

// kernel: lstmae_forward.6
$region0: #{lstmae_forward.6}
  #allocation0 [shape = 'u32[]', space=smem, size = 0x4, offset = 0x4, fixed_abs, tag = 'smem constant byte address 0x4 - core index']
  #allocation1 [shape = 'u32[144,128]{1,0:T(1,128)}', space=vmem, size = 0x12000, scoped, tag = 'internal scratch']
  #allocation2 [shape = 'f32[8,128]{1,0:T(8,128)}', space=vmem, size = 0x1000, scoped, tag = 'scratch operand']
  #allocation3 [shape = 'f32[8,128]{1,0:T(8,128)}', space=vmem, size = 0x1000, scoped, tag = 'scratch operand']
  %s0 = inlined_call_operand.vmem [shape: f32[1,8,128], index: 0, kind: input, shape index: {}]
  %s1 = inlined_call_operand.vmem [shape: bf16[128,512], index: 1, kind: input, shape index: {}]
  %s2 = inlined_call_operand.vmem [shape: bf16[128,512], index: 2, kind: input, shape index: {}]
  %s3 = inlined_call_operand.vmem [shape: f32[1,512], index: 3, kind: input, shape index: {}]
  %s4 = inlined_call_operand.vmem [shape: f32[8,8,128], index: 4, kind: output, shape index: {}]
  %s5 = sld [smem:[#allocation0]]
  $region30: #{lstmae_forward.6} parent=0
    _
  %s7 = ssub.s32 1, %s5
  %s8 = scalar_select 0, %s7, %s5
  // Predicated region
  $region2: #{lstmae_forward.6} parent=0 // pred_check
    _
  $region3: #{lstmae_forward.6} parent=0 // pred_check_branch
    %10 = sbr.rel (0) target = $region5
  $region4: #{lstmae_forward.6} parent=0 // pred_region
    _
  $region5: #{lstmae_forward.6} parent=0 // pred_fallthru
    _
  // Predicated region
  $region6: #{lstmae_forward.6} parent=0 // pred_check
    _
  $region7: #{lstmae_forward.6} parent=0 // pred_check_branch
    %12 = sbr.rel (0) target = $region9
  $region8: #{lstmae_forward.6} parent=0 // pred_region
    _
  $region9: #{lstmae_forward.6} parent=0 // pred_fallthru
    _
  // Predicated region
  $region10: #{lstmae_forward.6} parent=0 // pred_check
    _
  $region11: #{lstmae_forward.6} parent=0 // pred_check_branch
    %14 = sbr.rel (0) target = $region13
  $region12: #{lstmae_forward.6} parent=0 // pred_region
    _
  $region13: #{lstmae_forward.6} parent=0 // pred_fallthru
    _
  // Predicated region
  $region14: #{lstmae_forward.6} parent=0 // pred_check
    _
  $region15: #{lstmae_forward.6} parent=0 // pred_check_branch
    %16 = sbr.rel (0) target = $region17
  $region16: #{lstmae_forward.6} parent=0 // pred_region
    _
  $region17: #{lstmae_forward.6} parent=0 // pred_fallthru
    _
  %p18 = scmp.eq.s32.totalorder 0, 0
  // Predicated region
  $region18: #{lstmae_forward.6} parent=0 // pred_check
    %p19 = pneg %p18
  $region19: #{lstmae_forward.6} parent=0 // pred_check_branch
    %21 = sbr.rel (%p19) target = $region21
  $region20: #{lstmae_forward.6} parent=0 // pred_region
    %22 = vst [vmem:[#allocation2] sm:$0xff] 0.0
    %23 = vst [vmem:[#allocation3] sm:$0xff] 0.0
  $region21: #{lstmae_forward.6} parent=0 // pred_fallthru
    _
  %v24 = vld [vmem:[%s1] sm:$0xff]
  %v25 = vld [vmem:[%s1 + $0x8] sm:$0xff]
  %v26 = vld [vmem:[%s1 + $0x10] sm:$0xff]
  %v27 = vld [vmem:[%s1 + $0x18] sm:$0xff]
  %v28 = vld [vmem:[%s1 + $0x20] sm:$0xff]
  %v29 = vld [vmem:[%s1 + $0x28] sm:$0xff]
  %v30 = vld [vmem:[%s1 + $0x30] sm:$0xff]
  %v31 = vld [vmem:[%s1 + $0x38] sm:$0xff]
  %v32 = vld [vmem:[%s1 + $0x40] sm:$0xff]
  %v33 = vld [vmem:[%s1 + $0x48] sm:$0xff]
  %v34 = vld [vmem:[%s1 + $0x50] sm:$0xff]
  %v35 = vld [vmem:[%s1 + $0x58] sm:$0xff]
  %v36 = vld [vmem:[%s1 + $0x60] sm:$0xff]
  %v37 = vld [vmem:[%s1 + $0x68] sm:$0xff]
  %v38 = vld [vmem:[%s1 + $0x70] sm:$0xff]
  %v39 = vld [vmem:[%s1 + $0x78] sm:$0xff]
  %v40 = vld [vmem:[%s1 + $0x80] sm:$0xff]
  %v41 = vld [vmem:[%s1 + $0x88] sm:$0xff]
  %v42 = vld [vmem:[%s1 + $0x90] sm:$0xff]
  %v43 = vld [vmem:[%s1 + $0x98] sm:$0xff]
  %v44 = vld [vmem:[%s1 + $0xa0] sm:$0xff]
  %v45 = vld [vmem:[%s1 + $0xa8] sm:$0xff]
  %v46 = vld [vmem:[%s1 + $0xb0] sm:$0xff]
  %v47 = vld [vmem:[%s1 + $0xb8] sm:$0xff]
  %v48 = vld [vmem:[%s1 + $0xc0] sm:$0xff]
  %v49 = vld [vmem:[%s1 + $0xc8] sm:$0xff]
  %v50 = vld [vmem:[%s1 + $0xd0] sm:$0xff]
  %v51 = vld [vmem:[%s1 + $0xd8] sm:$0xff]
  %v52 = vld [vmem:[%s1 + $0xe0] sm:$0xff]
  %v53 = vld [vmem:[%s1 + $0xe8] sm:$0xff]
  %v54 = vld [vmem:[%s1 + $0xf0] sm:$0xff]
  %v55 = vld [vmem:[%s1 + $0xf8] sm:$0xff]
  %v56 = vld [vmem:[%s2] sm:$0xff]
  %v57 = vld [vmem:[%s2 + $0x8] sm:$0xff]
  %v58 = vld [vmem:[%s2 + $0x10] sm:$0xff]
  %v59 = vld [vmem:[%s2 + $0x18] sm:$0xff]
  %v60 = vld [vmem:[%s2 + $0x20] sm:$0xff]
  %v61 = vld [vmem:[%s2 + $0x28] sm:$0xff]
  %v62 = vld [vmem:[%s2 + $0x30] sm:$0xff]
  %v63 = vld [vmem:[%s2 + $0x38] sm:$0xff]
  %v64 = vld [vmem:[%s2 + $0x40] sm:$0xff]
  %v65 = vld [vmem:[%s2 + $0x48] sm:$0xff]
  %v66 = vld [vmem:[%s2 + $0x50] sm:$0xff]
  %v67 = vld [vmem:[%s2 + $0x58] sm:$0xff]
  %v68 = vld [vmem:[%s2 + $0x60] sm:$0xff]
  %v69 = vld [vmem:[%s2 + $0x68] sm:$0xff]
  %v70 = vld [vmem:[%s2 + $0x70] sm:$0xff]
  %v71 = vld [vmem:[%s2 + $0x78] sm:$0xff]
  %v72 = vld [vmem:[%s2 + $0x80] sm:$0xff]
  %v73 = vld [vmem:[%s2 + $0x88] sm:$0xff]
  %v74 = vld [vmem:[%s2 + $0x90] sm:$0xff]
  %v75 = vld [vmem:[%s2 + $0x98] sm:$0xff]
  %v76 = vld [vmem:[%s2 + $0xa0] sm:$0xff]
  %v77 = vld [vmem:[%s2 + $0xa8] sm:$0xff]
  %v78 = vld [vmem:[%s2 + $0xb0] sm:$0xff]
  %v79 = vld [vmem:[%s2 + $0xb8] sm:$0xff]
  %v80 = vld [vmem:[%s2 + $0xc0] sm:$0xff]
  %v81 = vld [vmem:[%s2 + $0xc8] sm:$0xff]
  %v82 = vld [vmem:[%s2 + $0xd0] sm:$0xff]
  %v83 = vld [vmem:[%s2 + $0xd8] sm:$0xff]
  %v84 = vld [vmem:[%s2 + $0xe0] sm:$0xff]
  %v85 = vld [vmem:[%s2 + $0xe8] sm:$0xff]
  %v86 = vld [vmem:[%s2 + $0xf0] sm:$0xff]
  %v87 = vld [vmem:[%s2 + $0xf8] sm:$0xff]
  %v88 = vld [vmem:[%s3] sm:$0xf]
  %v89 = vld [vmem:[%s0] sm:$0xff]
  %v90 = vpack.c.bf16 %v89, %v89
  %v92 = vlaneseq
  %v93 = vshrl.u32 %v92, 7
  %v94 = vsub.s32 0, %v93
  %v95 = vrot.slane %v88, %v94
  %v96 = vlaneseq
  %v97 = vshrl.u32 %v96, 7
  %v98 = vsub.s32 1, %v97
  %v99 = vrot.slane %v88, %v98
  %v100 = vlaneseq
  %v101 = vshrl.u32 %v100, 7
  %v102 = vsub.s32 2, %v101
  %v103 = vrot.slane %v88, %v102
  %v104 = vlaneseq
  %v105 = vshrl.u32 %v104, 7
  %v106 = vsub.s32 3, %v105
  %v107 = vrot.slane %v88, %v106
  %v144 = vunpack.c.l.b16 %v24
  %v145 = vunpack.c.h.b16 %v24
  %v146 = vunpack.c.l.b16 %v25
  %v147 = vunpack.c.h.b16 %v25
  %v148 = vunpack.c.l.b16 %v26
  %v149 = vunpack.c.h.b16 %v26
  %v150 = vunpack.c.l.b16 %v27
  %v151 = vunpack.c.h.b16 %v27
  %v152 = vunpack.c.l.b16 %v28
  %v153 = vunpack.c.h.b16 %v28
  %v154 = vunpack.c.l.b16 %v29
  %v155 = vunpack.c.h.b16 %v29
  %v156 = vunpack.c.l.b16 %v30
  %v157 = vunpack.c.h.b16 %v30
  %v158 = vunpack.c.l.b16 %v31
  %v159 = vunpack.c.h.b16 %v31
  %v160 = vunpack.c.l.b16 %v32
  %v161 = vunpack.c.h.b16 %v32
  %v162 = vunpack.c.l.b16 %v33
  %v163 = vunpack.c.h.b16 %v33
  %v164 = vunpack.c.l.b16 %v34
  %v165 = vunpack.c.h.b16 %v34
  %v166 = vunpack.c.l.b16 %v35
  %v167 = vunpack.c.h.b16 %v35
  %v168 = vunpack.c.l.b16 %v36
  %v169 = vunpack.c.h.b16 %v36
  %v170 = vunpack.c.l.b16 %v37
  %v171 = vunpack.c.h.b16 %v37
  %v172 = vunpack.c.l.b16 %v38
  %v173 = vunpack.c.h.b16 %v38
  %v174 = vunpack.c.l.b16 %v39
  %v175 = vunpack.c.h.b16 %v39
  %v176 = vunpack.c.l.b16 %v40
  %v177 = vunpack.c.h.b16 %v40
  %v178 = vunpack.c.l.b16 %v41
  %v179 = vunpack.c.h.b16 %v41
  %v180 = vunpack.c.l.b16 %v42
  %v181 = vunpack.c.h.b16 %v42
  %v182 = vunpack.c.l.b16 %v43
  %v183 = vunpack.c.h.b16 %v43
  %v184 = vunpack.c.l.b16 %v44
  %v185 = vunpack.c.h.b16 %v44
  %v186 = vunpack.c.l.b16 %v45
  %v187 = vunpack.c.h.b16 %v45
  %v188 = vunpack.c.l.b16 %v46
  %v189 = vunpack.c.h.b16 %v46
  %v190 = vunpack.c.l.b16 %v47
  %v191 = vunpack.c.h.b16 %v47
  %v192 = vunpack.c.l.b16 %v48
  %v193 = vunpack.c.h.b16 %v48
  %v194 = vunpack.c.l.b16 %v49
  %v195 = vunpack.c.h.b16 %v49
  %v196 = vunpack.c.l.b16 %v50
  %v197 = vunpack.c.h.b16 %v50
  %v198 = vunpack.c.l.b16 %v51
  %v199 = vunpack.c.h.b16 %v51
  %v200 = vunpack.c.l.b16 %v52
  %v201 = vunpack.c.h.b16 %v52
  %v202 = vunpack.c.l.b16 %v53
  %v203 = vunpack.c.h.b16 %v53
  %v204 = vunpack.c.l.b16 %v54
  %v205 = vunpack.c.h.b16 %v54
  %v206 = vunpack.c.l.b16 %v55
  %v207 = vunpack.c.h.b16 %v55
  %v208 = vpack.c.b16 %v148, %v144
  %v209 = vpack.c.b16 %v149, %v145
  %v210 = vpack.c.b16 %v150, %v146
  %v211 = vpack.c.b16 %v151, %v147
  %v212 = vpack.c.b16 %v156, %v152
  %v213 = vpack.c.b16 %v157, %v153
  %v214 = vpack.c.b16 %v158, %v154
  %v215 = vpack.c.b16 %v159, %v155
  %v216 = vpack.c.b16 %v164, %v160
  %v217 = vpack.c.b16 %v165, %v161
  %v218 = vpack.c.b16 %v166, %v162
  %v219 = vpack.c.b16 %v167, %v163
  %v220 = vpack.c.b16 %v172, %v168
  %v221 = vpack.c.b16 %v173, %v169
  %v222 = vpack.c.b16 %v174, %v170
  %v223 = vpack.c.b16 %v175, %v171
  %v224 = vpack.c.b16 %v180, %v176
  %v225 = vpack.c.b16 %v181, %v177
  %v226 = vpack.c.b16 %v182, %v178
  %v227 = vpack.c.b16 %v183, %v179
  %v228 = vpack.c.b16 %v188, %v184
  %v229 = vpack.c.b16 %v189, %v185
  %v230 = vpack.c.b16 %v190, %v186
  %v231 = vpack.c.b16 %v191, %v187
  %v232 = vpack.c.b16 %v196, %v192
  %v233 = vpack.c.b16 %v197, %v193
  %v234 = vpack.c.b16 %v198, %v194
  %v235 = vpack.c.b16 %v199, %v195
  %v236 = vpack.c.b16 %v204, %v200
  %v237 = vpack.c.b16 %v205, %v201
  %v238 = vpack.c.b16 %v206, %v202
  %v239 = vpack.c.b16 %v207, %v203
  %272 = vmatprep.subr.bf16.mxu0 %v209
  %273 = vmatpush1.bf16.msra.mxu0 %v208
  %274 = vmatprep.subr.bf16.mxu0 %v213
  %275 = vmatpush1.bf16.msra.mxu0 %v212
  %276 = vmatprep.subr.bf16.mxu0 %v217
  %277 = vmatpush1.bf16.msra.mxu0 %v216
  %278 = vmatprep.subr.bf16.mxu0 %v221
  %279 = vmatpush1.bf16.msra.mxu0 %v220
  %280 = vmatprep.subr.bf16.mxu0 %v225
  %281 = vmatpush1.bf16.msra.mxu0 %v224
  %282 = vmatprep.subr.bf16.mxu0 %v229
  %283 = vmatpush1.bf16.msra.mxu0 %v228
  %284 = vmatprep.subr.bf16.mxu0 %v233
  %285 = vmatpush1.bf16.msra.mxu0 %v232
  %286 = vmatprep.subr.bf16.mxu0 %v237
  %287 = vmatpush1.bf16.msra.mxu0 %v236
  %288 = vmatprep.subr.bf16.mxu0 0
  %289 = vmatpush1.bf16.msra.mxu0 0
  %290 = vmatprep.subr.bf16.mxu0 0
  %291 = vmatpush1.bf16.msra.mxu0 0
  %292 = vmatprep.subr.bf16.mxu0 0
  %293 = vmatpush1.bf16.msra.mxu0 0
  %294 = vmatprep.subr.bf16.mxu0 0
  %295 = vmatpush1.bf16.msra.mxu0 0
  %296 = vmatprep.subr.bf16.mxu0 0
  %297 = vmatpush1.bf16.msra.mxu0 0
  %298 = vmatprep.subr.bf16.mxu0 0
  %299 = vmatpush1.bf16.msra.mxu0 0
  %300 = vmatprep.subr.bf16.mxu0 0
  %301 = vmatpush1.bf16.msra.mxu0 0
  %302 = vmatprep.subr.bf16.mxu0 0
  %303 = vmatpush1.bf16.msra.mxu0 0
  %304 = vmatprep.mubr.bf16.mxu0 0
  %305 = vmatmul.mubr.bf16.gmra.mrb[0].mxu0 %v90
  %v306 = vpop.f32.mrb[0].mxu0
  %v307 = vadd.f32 %v95, %v306
  %v308 = vpop.f32.mrb[0].mxu0
  %v309 = vadd.f32 %v99, %v308
  %v310 = vpop.f32.mrb[0].mxu0
  %v311 = vpop.f32.mrb[0].mxu0
  %312 = vdwg.mxu0
  %313 = vmatprep.subr.bf16.mxu0 %v211
  %314 = vmatpush1.bf16.msra.mxu0 %v210
  %315 = vmatprep.subr.bf16.mxu0 %v215
  %316 = vmatpush1.bf16.msra.mxu0 %v214
  %317 = vmatprep.subr.bf16.mxu0 %v219
  %318 = vmatpush1.bf16.msra.mxu0 %v218
  %319 = vmatprep.subr.bf16.mxu0 %v223
  %320 = vmatpush1.bf16.msra.mxu0 %v222
  %321 = vmatprep.subr.bf16.mxu0 %v227
  %322 = vmatpush1.bf16.msra.mxu0 %v226
  %323 = vmatprep.subr.bf16.mxu0 %v231
  %324 = vmatpush1.bf16.msra.mxu0 %v230
  %325 = vmatprep.subr.bf16.mxu0 %v235
  %326 = vmatpush1.bf16.msra.mxu0 %v234
  %327 = vmatprep.subr.bf16.mxu0 %v239
  %328 = vmatpush1.bf16.msra.mxu0 %v238
  %329 = vmatprep.subr.bf16.mxu0 0
  %330 = vmatpush1.bf16.msra.mxu0 0
  %331 = vmatprep.subr.bf16.mxu0 0
  %332 = vmatpush1.bf16.msra.mxu0 0
  %333 = vmatprep.subr.bf16.mxu0 0
  %334 = vmatpush1.bf16.msra.mxu0 0
  %335 = vmatprep.subr.bf16.mxu0 0
  %336 = vmatpush1.bf16.msra.mxu0 0
  %337 = vmatprep.subr.bf16.mxu0 0
  %338 = vmatpush1.bf16.msra.mxu0 0
  %339 = vmatprep.subr.bf16.mxu0 0
  %340 = vmatpush1.bf16.msra.mxu0 0
  %341 = vmatprep.subr.bf16.mxu0 0
  %342 = vmatpush1.bf16.msra.mxu0 0
  %343 = vmatprep.subr.bf16.mxu0 0
  %344 = vmatpush1.bf16.msra.mxu0 0
  %345 = vmatprep.mubr.bf16.mxu0 0
  %346 = vmatmul.mubr.bf16.gmra.mrb[0].mxu0 %v90
  %v347 = vpop.f32.mrb[0].mxu0
  %v348 = vadd.f32 %v103, %v347
  %v349 = vpop.f32.mrb[0].mxu0
  %v350 = vadd.f32 %v107, %v349
  %v351 = vpop.f32.mrb[0].mxu0
  %v352 = vpop.f32.mrb[0].mxu0
  %353 = vdwg.mxu0
  %v354 = vld [vmem:[#allocation2] sm:$0xff]
  %v355 = vld [vmem:[#allocation3] sm:$0xff]
  %v356 = vpack.c.bf16 %v354, %v354
  %v389 = vunpack.c.l.b16 %v56
  %v390 = vunpack.c.h.b16 %v56
  %v391 = vunpack.c.l.b16 %v57
  %v392 = vunpack.c.h.b16 %v57
  %v393 = vunpack.c.l.b16 %v58
  %v394 = vunpack.c.h.b16 %v58
  %v395 = vunpack.c.l.b16 %v59
  %v396 = vunpack.c.h.b16 %v59
  %v397 = vunpack.c.l.b16 %v60
  %v398 = vunpack.c.h.b16 %v60
  %v399 = vunpack.c.l.b16 %v61
  %v400 = vunpack.c.h.b16 %v61
  %v401 = vunpack.c.l.b16 %v62
  %v402 = vunpack.c.h.b16 %v62
  %v403 = vunpack.c.l.b16 %v63
  %v404 = vunpack.c.h.b16 %v63
  %v405 = vunpack.c.l.b16 %v64
  %v406 = vunpack.c.h.b16 %v64
  %v407 = vunpack.c.l.b16 %v65
  %v408 = vunpack.c.h.b16 %v65
  %v409 = vunpack.c.l.b16 %v66
  %v410 = vunpack.c.h.b16 %v66
  %v411 = vunpack.c.l.b16 %v67
  %v412 = vunpack.c.h.b16 %v67
  %v413 = vunpack.c.l.b16 %v68
  %v414 = vunpack.c.h.b16 %v68
  %v415 = vunpack.c.l.b16 %v69
  %v416 = vunpack.c.h.b16 %v69
  %v417 = vunpack.c.l.b16 %v70
  %v418 = vunpack.c.h.b16 %v70
  %v419 = vunpack.c.l.b16 %v71
  %v420 = vunpack.c.h.b16 %v71
  %v421 = vunpack.c.l.b16 %v72
  %v422 = vunpack.c.h.b16 %v72
  %v423 = vunpack.c.l.b16 %v73
  %v424 = vunpack.c.h.b16 %v73
  %v425 = vunpack.c.l.b16 %v74
  %v426 = vunpack.c.h.b16 %v74
  %v427 = vunpack.c.l.b16 %v75
  %v428 = vunpack.c.h.b16 %v75
  %v429 = vunpack.c.l.b16 %v76
  %v430 = vunpack.c.h.b16 %v76
  %v431 = vunpack.c.l.b16 %v77
  %v432 = vunpack.c.h.b16 %v77
  %v433 = vunpack.c.l.b16 %v78
  %v434 = vunpack.c.h.b16 %v78
  %v435 = vunpack.c.l.b16 %v79
  %v436 = vunpack.c.h.b16 %v79
  %v437 = vunpack.c.l.b16 %v80
  %v438 = vunpack.c.h.b16 %v80
  %v439 = vunpack.c.l.b16 %v81
  %v440 = vunpack.c.h.b16 %v81
  %v441 = vunpack.c.l.b16 %v82
  %v442 = vunpack.c.h.b16 %v82
  %v443 = vunpack.c.l.b16 %v83
  %v444 = vunpack.c.h.b16 %v83
  %v445 = vunpack.c.l.b16 %v84
  %v446 = vunpack.c.h.b16 %v84
  %v447 = vunpack.c.l.b16 %v85
  %v448 = vunpack.c.h.b16 %v85
  %v449 = vunpack.c.l.b16 %v86
  %v450 = vunpack.c.h.b16 %v86
  %v451 = vunpack.c.l.b16 %v87
  %v452 = vunpack.c.h.b16 %v87
  %v453 = vpack.c.b16 %v393, %v389
  %v454 = vpack.c.b16 %v394, %v390
  %v455 = vpack.c.b16 %v395, %v391
  %v456 = vpack.c.b16 %v396, %v392
  %v457 = vpack.c.b16 %v401, %v397
  %v458 = vpack.c.b16 %v402, %v398
  %v459 = vpack.c.b16 %v403, %v399
  %v460 = vpack.c.b16 %v404, %v400
  %v461 = vpack.c.b16 %v409, %v405
  %v462 = vpack.c.b16 %v410, %v406
  %v463 = vpack.c.b16 %v411, %v407
  %v464 = vpack.c.b16 %v412, %v408
  %v465 = vpack.c.b16 %v417, %v413
  %v466 = vpack.c.b16 %v418, %v414
  %v467 = vpack.c.b16 %v419, %v415
  %v468 = vpack.c.b16 %v420, %v416
  %v469 = vpack.c.b16 %v425, %v421
  %v470 = vpack.c.b16 %v426, %v422
  %v471 = vpack.c.b16 %v427, %v423
  %v472 = vpack.c.b16 %v428, %v424
  %v473 = vpack.c.b16 %v433, %v429
  %v474 = vpack.c.b16 %v434, %v430
  %v475 = vpack.c.b16 %v435, %v431
  %v476 = vpack.c.b16 %v436, %v432
  %v477 = vpack.c.b16 %v441, %v437
  %v478 = vpack.c.b16 %v442, %v438
  %v479 = vpack.c.b16 %v443, %v439
  %v480 = vpack.c.b16 %v444, %v440
  %v481 = vpack.c.b16 %v449, %v445
  %v482 = vpack.c.b16 %v450, %v446
  %v483 = vpack.c.b16 %v451, %v447
  %v484 = vpack.c.b16 %v452, %v448
  %517 = vmatprep.subr.bf16.mxu0 %v454
  %518 = vmatpush1.bf16.msra.mxu0 %v453
  %519 = vmatprep.subr.bf16.mxu0 %v458
  %520 = vmatpush1.bf16.msra.mxu0 %v457
  %521 = vmatprep.subr.bf16.mxu0 %v462
  %522 = vmatpush1.bf16.msra.mxu0 %v461
  %523 = vmatprep.subr.bf16.mxu0 %v466
  %524 = vmatpush1.bf16.msra.mxu0 %v465
  %525 = vmatprep.subr.bf16.mxu0 %v470
  %526 = vmatpush1.bf16.msra.mxu0 %v469
  %527 = vmatprep.subr.bf16.mxu0 %v474
  %528 = vmatpush1.bf16.msra.mxu0 %v473
  %529 = vmatprep.subr.bf16.mxu0 %v478
  %530 = vmatpush1.bf16.msra.mxu0 %v477
  %531 = vmatprep.subr.bf16.mxu0 %v482
  %532 = vmatpush1.bf16.msra.mxu0 %v481
  %533 = vmatprep.subr.bf16.mxu0 0
  %534 = vmatpush1.bf16.msra.mxu0 0
  %535 = vmatprep.subr.bf16.mxu0 0
  %536 = vmatpush1.bf16.msra.mxu0 0
  %537 = vmatprep.subr.bf16.mxu0 0
  %538 = vmatpush1.bf16.msra.mxu0 0
  %539 = vmatprep.subr.bf16.mxu0 0
  %540 = vmatpush1.bf16.msra.mxu0 0
  %541 = vmatprep.subr.bf16.mxu0 0
  %542 = vmatpush1.bf16.msra.mxu0 0
  %543 = vmatprep.subr.bf16.mxu0 0
  %544 = vmatpush1.bf16.msra.mxu0 0
  %545 = vmatprep.subr.bf16.mxu0 0
  %546 = vmatpush1.bf16.msra.mxu0 0
  %547 = vmatprep.subr.bf16.mxu0 0
  %548 = vmatpush1.bf16.msra.mxu0 0
  %549 = vmatprep.mubr.bf16.mxu0 0
  %550 = vmatmul.mubr.bf16.gmra.mrb[0].mxu0 %v356
  %v551 = vpop.f32.mrb[0].mxu0
  %v552 = vadd.f32 0.0, %v551
  %v553 = vpop.f32.mrb[0].mxu0
  %v554 = vadd.f32 0.0, %v553
  %v555 = vpop.f32.mrb[0].mxu0
  %v556 = vpop.f32.mrb[0].mxu0
  %557 = vdwg.mxu0
  %558 = vmatprep.subr.bf16.mxu0 %v456
  %559 = vmatpush1.bf16.msra.mxu0 %v455
  %560 = vmatprep.subr.bf16.mxu0 %v460
  %561 = vmatpush1.bf16.msra.mxu0 %v459
  %562 = vmatprep.subr.bf16.mxu0 %v464
  %563 = vmatpush1.bf16.msra.mxu0 %v463
  %564 = vmatprep.subr.bf16.mxu0 %v468
  %565 = vmatpush1.bf16.msra.mxu0 %v467
  %566 = vmatprep.subr.bf16.mxu0 %v472
  %567 = vmatpush1.bf16.msra.mxu0 %v471
  %568 = vmatprep.subr.bf16.mxu0 %v476
  %569 = vmatpush1.bf16.msra.mxu0 %v475
  %570 = vmatprep.subr.bf16.mxu0 %v480
  %571 = vmatpush1.bf16.msra.mxu0 %v479
  %572 = vmatprep.subr.bf16.mxu0 %v484
  %573 = vmatpush1.bf16.msra.mxu0 %v483
  %574 = vmatprep.subr.bf16.mxu0 0
  %575 = vmatpush1.bf16.msra.mxu0 0
  %576 = vmatprep.subr.bf16.mxu0 0
  %577 = vmatpush1.bf16.msra.mxu0 0
  %578 = vmatprep.subr.bf16.mxu0 0
  %579 = vmatpush1.bf16.msra.mxu0 0
  %580 = vmatprep.subr.bf16.mxu0 0
  %581 = vmatpush1.bf16.msra.mxu0 0
  %582 = vmatprep.subr.bf16.mxu0 0
  %583 = vmatpush1.bf16.msra.mxu0 0
  %584 = vmatprep.subr.bf16.mxu0 0
  %585 = vmatpush1.bf16.msra.mxu0 0
  %586 = vmatprep.subr.bf16.mxu0 0
  %587 = vmatpush1.bf16.msra.mxu0 0
  %588 = vmatprep.subr.bf16.mxu0 0
  %589 = vmatpush1.bf16.msra.mxu0 0
  %590 = vmatprep.mubr.bf16.mxu0 0
  %591 = vmatmul.mubr.bf16.gmra.mrb[0].mxu0 %v356
  %v592 = vpop.f32.mrb[0].mxu0
  %v593 = vadd.f32 0.0, %v592
  %v594 = vpop.f32.mrb[0].mxu0
  %v595 = vadd.f32 0.0, %v594
  %v596 = vpop.f32.mrb[0].mxu0
  %v597 = vpop.f32.mrb[0].mxu0
  %598 = vdwg.mxu0
  %v599 = vadd.f32 %v307, %v552
  %v600 = vadd.f32 %v309, %v554
  %v601 = vadd.f32 %v348, %v593
  %v602 = vadd.f32 %v350, %v595
  %v603 = vmul.f32 %v599, 0.5
  %v604 = vtanh.pop %v603
  %v605 = vmul.f32 %v604, 0.5
  %v606 = vadd.f32 %v605, 0.5
  %v607 = vmul.f32 %v600, 0.5
  %v608 = vtanh.pop %v607
  %v609 = vmul.f32 %v608, 0.5
  %v610 = vadd.f32 %v609, 0.5
  %v611 = vtanh.pop %v601
  %v612 = vmul.f32 %v602, 0.5
  %v613 = vtanh.pop %v612
  %v614 = vmul.f32 %v613, 0.5
  %v615 = vadd.f32 %v614, 0.5
  %v616 = vmul.f32 %v610, %v355
  %v617 = vmul.f32 %v606, %v611
  %v618 = vadd.f32 %v616, %v617
  %v619 = vtanh.pop %v618
  %v620 = vmul.f32 %v615, %v619
  %v621 = vpack.c.bf16 %v620, %v620
  %622 = vmatprep.subr.bf16.mxu0 %v454
  %623 = vmatpush1.bf16.msra.mxu0 %v453
  %624 = vmatprep.subr.bf16.mxu0 %v458
  %625 = vmatpush1.bf16.msra.mxu0 %v457
  %626 = vmatprep.subr.bf16.mxu0 %v462
  %627 = vmatpush1.bf16.msra.mxu0 %v461
  %628 = vmatprep.subr.bf16.mxu0 %v466
  %629 = vmatpush1.bf16.msra.mxu0 %v465
  %630 = vmatprep.subr.bf16.mxu0 %v470
  %631 = vmatpush1.bf16.msra.mxu0 %v469
  %632 = vmatprep.subr.bf16.mxu0 %v474
  %633 = vmatpush1.bf16.msra.mxu0 %v473
  %634 = vmatprep.subr.bf16.mxu0 %v478
  %635 = vmatpush1.bf16.msra.mxu0 %v477
  %636 = vmatprep.subr.bf16.mxu0 %v482
  %637 = vmatpush1.bf16.msra.mxu0 %v481
  %638 = vmatprep.subr.bf16.mxu0 0
  %639 = vmatpush1.bf16.msra.mxu0 0
  %640 = vmatprep.subr.bf16.mxu0 0
  %641 = vmatpush1.bf16.msra.mxu0 0
  %642 = vmatprep.subr.bf16.mxu0 0
  %643 = vmatpush1.bf16.msra.mxu0 0
  %644 = vmatprep.subr.bf16.mxu0 0
  %645 = vmatpush1.bf16.msra.mxu0 0
  %646 = vmatprep.subr.bf16.mxu0 0
  %647 = vmatpush1.bf16.msra.mxu0 0
  %648 = vmatprep.subr.bf16.mxu0 0
  %649 = vmatpush1.bf16.msra.mxu0 0
  %650 = vmatprep.subr.bf16.mxu0 0
  %651 = vmatpush1.bf16.msra.mxu0 0
  %652 = vmatprep.subr.bf16.mxu0 0
  %653 = vmatpush1.bf16.msra.mxu0 0
  %654 = vmatprep.mubr.bf16.mxu0 0
  %655 = vmatmul.mubr.bf16.gmra.mrb[0].mxu0 %v621
  %v656 = vpop.f32.mrb[0].mxu0
  %v657 = vadd.f32 0.0, %v656
  %v658 = vpop.f32.mrb[0].mxu0
  %v659 = vadd.f32 0.0, %v658
  %v660 = vpop.f32.mrb[0].mxu0
  %v661 = vpop.f32.mrb[0].mxu0
  %662 = vdwg.mxu0
  %663 = vmatprep.subr.bf16.mxu0 %v456
  %664 = vmatpush1.bf16.msra.mxu0 %v455
  %665 = vmatprep.subr.bf16.mxu0 %v460
  %666 = vmatpush1.bf16.msra.mxu0 %v459
  %667 = vmatprep.subr.bf16.mxu0 %v464
  %668 = vmatpush1.bf16.msra.mxu0 %v463
  %669 = vmatprep.subr.bf16.mxu0 %v468
  %670 = vmatpush1.bf16.msra.mxu0 %v467
  %671 = vmatprep.subr.bf16.mxu0 %v472
  %672 = vmatpush1.bf16.msra.mxu0 %v471
  %673 = vmatprep.subr.bf16.mxu0 %v476
  %674 = vmatpush1.bf16.msra.mxu0 %v475
  %675 = vmatprep.subr.bf16.mxu0 %v480
  %676 = vmatpush1.bf16.msra.mxu0 %v479
  %677 = vmatprep.subr.bf16.mxu0 %v484
  %678 = vmatpush1.bf16.msra.mxu0 %v483
  %679 = vmatprep.subr.bf16.mxu0 0
  %680 = vmatpush1.bf16.msra.mxu0 0
  %681 = vmatprep.subr.bf16.mxu0 0
  %682 = vmatpush1.bf16.msra.mxu0 0
  %683 = vmatprep.subr.bf16.mxu0 0
  %684 = vmatpush1.bf16.msra.mxu0 0
  %685 = vmatprep.subr.bf16.mxu0 0
  %686 = vmatpush1.bf16.msra.mxu0 0
  %687 = vmatprep.subr.bf16.mxu0 0
  %688 = vmatpush1.bf16.msra.mxu0 0
  %689 = vmatprep.subr.bf16.mxu0 0
  %690 = vmatpush1.bf16.msra.mxu0 0
  %691 = vmatprep.subr.bf16.mxu0 0
  %692 = vmatpush1.bf16.msra.mxu0 0
  %693 = vmatprep.subr.bf16.mxu0 0
  %694 = vmatpush1.bf16.msra.mxu0 0
  %695 = vmatprep.mubr.bf16.mxu0 0
  %696 = vmatmul.mubr.bf16.gmra.mrb[0].mxu0 %v621
  %v697 = vpop.f32.mrb[0].mxu0
  %v698 = vadd.f32 0.0, %v697
  %v699 = vpop.f32.mrb[0].mxu0
  %v700 = vadd.f32 0.0, %v699
  %v701 = vpop.f32.mrb[0].mxu0
  %v702 = vpop.f32.mrb[0].mxu0
  %703 = vdwg.mxu0
  %v704 = vadd.f32 %v307, %v657
  %v705 = vadd.f32 %v309, %v659
  %v706 = vadd.f32 %v348, %v698
  %v707 = vadd.f32 %v350, %v700
  %v708 = vmul.f32 %v704, 0.5
  %v709 = vtanh.pop %v708
  %v710 = vmul.f32 %v709, 0.5
  %v711 = vadd.f32 %v710, 0.5
  %v712 = vmul.f32 %v705, 0.5
  %v713 = vtanh.pop %v712
  %v714 = vmul.f32 %v713, 0.5
  %v715 = vadd.f32 %v714, 0.5
  %v716 = vtanh.pop %v706
  %v717 = vmul.f32 %v707, 0.5
  %v718 = vtanh.pop %v717
  %v719 = vmul.f32 %v718, 0.5
  %v720 = vadd.f32 %v719, 0.5
  %v721 = vmul.f32 %v715, %v618
  %v722 = vmul.f32 %v711, %v716
  %v723 = vadd.f32 %v721, %v722
  %v724 = vtanh.pop %v723
  %v725 = vmul.f32 %v720, %v724
  %v726 = vpack.c.bf16 %v725, %v725
  %727 = vmatprep.subr.bf16.mxu0 %v454
  %728 = vmatpush1.bf16.msra.mxu0 %v453
  %729 = vmatprep.subr.bf16.mxu0 %v458
  %730 = vmatpush1.bf16.msra.mxu0 %v457
  %731 = vmatprep.subr.bf16.mxu0 %v462
  %732 = vmatpush1.bf16.msra.mxu0 %v461
  %733 = vmatprep.subr.bf16.mxu0 %v466
  %734 = vmatpush1.bf16.msra.mxu0 %v465
  %735 = vmatprep.subr.bf16.mxu0 %v470
  %736 = vmatpush1.bf16.msra.mxu0 %v469
  %737 = vmatprep.subr.bf16.mxu0 %v474
  %738 = vmatpush1.bf16.msra.mxu0 %v473
  %739 = vmatprep.subr.bf16.mxu0 %v478
  %740 = vmatpush1.bf16.msra.mxu0 %v477
  %741 = vmatprep.subr.bf16.mxu0 %v482
  %742 = vmatpush1.bf16.msra.mxu0 %v481
  %743 = vmatprep.subr.bf16.mxu0 0
  %744 = vmatpush1.bf16.msra.mxu0 0
  %745 = vmatprep.subr.bf16.mxu0 0
  %746 = vmatpush1.bf16.msra.mxu0 0
  %747 = vmatprep.subr.bf16.mxu0 0
  %748 = vmatpush1.bf16.msra.mxu0 0
  %749 = vmatprep.subr.bf16.mxu0 0
  %750 = vmatpush1.bf16.msra.mxu0 0
  %751 = vmatprep.subr.bf16.mxu0 0
  %752 = vmatpush1.bf16.msra.mxu0 0
  %753 = vmatprep.subr.bf16.mxu0 0
  %754 = vmatpush1.bf16.msra.mxu0 0
  %755 = vmatprep.subr.bf16.mxu0 0
  %756 = vmatpush1.bf16.msra.mxu0 0
  %757 = vmatprep.subr.bf16.mxu0 0
  %758 = vmatpush1.bf16.msra.mxu0 0
  %759 = vmatprep.mubr.bf16.mxu0 0
  %760 = vmatmul.mubr.bf16.gmra.mrb[0].mxu0 %v726
  %v761 = vpop.f32.mrb[0].mxu0
  %v762 = vadd.f32 0.0, %v761
  %v763 = vpop.f32.mrb[0].mxu0
  %v764 = vadd.f32 0.0, %v763
  %v765 = vpop.f32.mrb[0].mxu0
  %v766 = vpop.f32.mrb[0].mxu0
  %767 = vdwg.mxu0
  %768 = vmatprep.subr.bf16.mxu0 %v456
  %769 = vmatpush1.bf16.msra.mxu0 %v455
  %770 = vmatprep.subr.bf16.mxu0 %v460
  %771 = vmatpush1.bf16.msra.mxu0 %v459
  %772 = vmatprep.subr.bf16.mxu0 %v464
  %773 = vmatpush1.bf16.msra.mxu0 %v463
  %774 = vmatprep.subr.bf16.mxu0 %v468
  %775 = vmatpush1.bf16.msra.mxu0 %v467
  %776 = vmatprep.subr.bf16.mxu0 %v472
  %777 = vmatpush1.bf16.msra.mxu0 %v471
  %778 = vmatprep.subr.bf16.mxu0 %v476
  %779 = vmatpush1.bf16.msra.mxu0 %v475
  %780 = vmatprep.subr.bf16.mxu0 %v480
  %781 = vmatpush1.bf16.msra.mxu0 %v479
  %782 = vmatprep.subr.bf16.mxu0 %v484
  %783 = vmatpush1.bf16.msra.mxu0 %v483
  %784 = vmatprep.subr.bf16.mxu0 0
  %785 = vmatpush1.bf16.msra.mxu0 0
  %786 = vmatprep.subr.bf16.mxu0 0
  %787 = vmatpush1.bf16.msra.mxu0 0
  %788 = vmatprep.subr.bf16.mxu0 0
  %789 = vmatpush1.bf16.msra.mxu0 0
  %790 = vmatprep.subr.bf16.mxu0 0
  %791 = vmatpush1.bf16.msra.mxu0 0
  %792 = vmatprep.subr.bf16.mxu0 0
  %793 = vmatpush1.bf16.msra.mxu0 0
  %794 = vmatprep.subr.bf16.mxu0 0
  %795 = vmatpush1.bf16.msra.mxu0 0
  %796 = vmatprep.subr.bf16.mxu0 0
  %797 = vmatpush1.bf16.msra.mxu0 0
  %798 = vmatprep.subr.bf16.mxu0 0
  %799 = vmatpush1.bf16.msra.mxu0 0
  %800 = vmatprep.mubr.bf16.mxu0 0
  %801 = vmatmul.mubr.bf16.gmra.mrb[0].mxu0 %v726
  %v802 = vpop.f32.mrb[0].mxu0
  %v803 = vadd.f32 0.0, %v802
  %v804 = vpop.f32.mrb[0].mxu0
  %v805 = vadd.f32 0.0, %v804
  %v806 = vpop.f32.mrb[0].mxu0
  %v807 = vpop.f32.mrb[0].mxu0
  %808 = vdwg.mxu0
  %v809 = vadd.f32 %v307, %v762
  %v810 = vadd.f32 %v309, %v764
  %v811 = vadd.f32 %v348, %v803
  %v812 = vadd.f32 %v350, %v805
  %v813 = vmul.f32 %v809, 0.5
  %v814 = vtanh.pop %v813
  %v815 = vmul.f32 %v814, 0.5
  %v816 = vadd.f32 %v815, 0.5
  %v817 = vmul.f32 %v810, 0.5
  %v818 = vtanh.pop %v817
  %v819 = vmul.f32 %v818, 0.5
  %v820 = vadd.f32 %v819, 0.5
  %v821 = vtanh.pop %v811
  %v822 = vmul.f32 %v812, 0.5
  %v823 = vtanh.pop %v822
  %v824 = vmul.f32 %v823, 0.5
  %v825 = vadd.f32 %v824, 0.5
  %v826 = vmul.f32 %v820, %v723
  %v827 = vmul.f32 %v816, %v821
  %v828 = vadd.f32 %v826, %v827
  %v829 = vtanh.pop %v828
  %v830 = vmul.f32 %v825, %v829
  %v831 = vpack.c.bf16 %v830, %v830
  %832 = vmatprep.subr.bf16.mxu0 %v454
  %833 = vmatpush1.bf16.msra.mxu0 %v453
  %834 = vmatprep.subr.bf16.mxu0 %v458
  %835 = vmatpush1.bf16.msra.mxu0 %v457
  %836 = vmatprep.subr.bf16.mxu0 %v462
  %837 = vmatpush1.bf16.msra.mxu0 %v461
  %838 = vmatprep.subr.bf16.mxu0 %v466
  %839 = vmatpush1.bf16.msra.mxu0 %v465
  %840 = vmatprep.subr.bf16.mxu0 %v470
  %841 = vmatpush1.bf16.msra.mxu0 %v469
  %842 = vmatprep.subr.bf16.mxu0 %v474
  %843 = vmatpush1.bf16.msra.mxu0 %v473
  %844 = vmatprep.subr.bf16.mxu0 %v478
  %845 = vmatpush1.bf16.msra.mxu0 %v477
  %846 = vmatprep.subr.bf16.mxu0 %v482
  %847 = vmatpush1.bf16.msra.mxu0 %v481
  %848 = vmatprep.subr.bf16.mxu0 0
  %849 = vmatpush1.bf16.msra.mxu0 0
  %850 = vmatprep.subr.bf16.mxu0 0
  %851 = vmatpush1.bf16.msra.mxu0 0
  %852 = vmatprep.subr.bf16.mxu0 0
  %853 = vmatpush1.bf16.msra.mxu0 0
  %854 = vmatprep.subr.bf16.mxu0 0
  %855 = vmatpush1.bf16.msra.mxu0 0
  %856 = vmatprep.subr.bf16.mxu0 0
  %857 = vmatpush1.bf16.msra.mxu0 0
  %858 = vmatprep.subr.bf16.mxu0 0
  %859 = vmatpush1.bf16.msra.mxu0 0
  %860 = vmatprep.subr.bf16.mxu0 0
  %861 = vmatpush1.bf16.msra.mxu0 0
  %862 = vmatprep.subr.bf16.mxu0 0
  %863 = vmatpush1.bf16.msra.mxu0 0
  %864 = vmatprep.mubr.bf16.mxu0 0
  %865 = vmatmul.mubr.bf16.gmra.mrb[0].mxu0 %v831
  %v866 = vpop.f32.mrb[0].mxu0
  %v867 = vadd.f32 0.0, %v866
  %v868 = vpop.f32.mrb[0].mxu0
  %v869 = vadd.f32 0.0, %v868
  %v870 = vpop.f32.mrb[0].mxu0
  %v871 = vpop.f32.mrb[0].mxu0
  %872 = vdwg.mxu0
  %873 = vmatprep.subr.bf16.mxu0 %v456
  %874 = vmatpush1.bf16.msra.mxu0 %v455
  %875 = vmatprep.subr.bf16.mxu0 %v460
  %876 = vmatpush1.bf16.msra.mxu0 %v459
  %877 = vmatprep.subr.bf16.mxu0 %v464
  %878 = vmatpush1.bf16.msra.mxu0 %v463
  %879 = vmatprep.subr.bf16.mxu0 %v468
  %880 = vmatpush1.bf16.msra.mxu0 %v467
  %881 = vmatprep.subr.bf16.mxu0 %v472
  %882 = vmatpush1.bf16.msra.mxu0 %v471
  %883 = vmatprep.subr.bf16.mxu0 %v476
  %884 = vmatpush1.bf16.msra.mxu0 %v475
  %885 = vmatprep.subr.bf16.mxu0 %v480
  %886 = vmatpush1.bf16.msra.mxu0 %v479
  %887 = vmatprep.subr.bf16.mxu0 %v484
  %888 = vmatpush1.bf16.msra.mxu0 %v483
  %889 = vmatprep.subr.bf16.mxu0 0
  %890 = vmatpush1.bf16.msra.mxu0 0
  %891 = vmatprep.subr.bf16.mxu0 0
  %892 = vmatpush1.bf16.msra.mxu0 0
  %893 = vmatprep.subr.bf16.mxu0 0
  %894 = vmatpush1.bf16.msra.mxu0 0
  %895 = vmatprep.subr.bf16.mxu0 0
  %896 = vmatpush1.bf16.msra.mxu0 0
  %897 = vmatprep.subr.bf16.mxu0 0
  %898 = vmatpush1.bf16.msra.mxu0 0
  %899 = vmatprep.subr.bf16.mxu0 0
  %900 = vmatpush1.bf16.msra.mxu0 0
  %901 = vmatprep.subr.bf16.mxu0 0
  %902 = vmatpush1.bf16.msra.mxu0 0
  %903 = vmatprep.subr.bf16.mxu0 0
  %904 = vmatpush1.bf16.msra.mxu0 0
  %905 = vmatprep.mubr.bf16.mxu0 0
  %906 = vmatmul.mubr.bf16.gmra.mrb[0].mxu0 %v831
  %v907 = vpop.f32.mrb[0].mxu0
  %v908 = vadd.f32 0.0, %v907
  %v909 = vpop.f32.mrb[0].mxu0
  %v910 = vadd.f32 0.0, %v909
  %v911 = vpop.f32.mrb[0].mxu0
  %v912 = vpop.f32.mrb[0].mxu0
  %913 = vdwg.mxu0
  %v914 = vadd.f32 %v307, %v867
  %v915 = vadd.f32 %v309, %v869
  %v916 = vadd.f32 %v348, %v908
  %v917 = vadd.f32 %v350, %v910
  %v918 = vmul.f32 %v914, 0.5
  %v919 = vtanh.pop %v918
  %v920 = vmul.f32 %v919, 0.5
  %v921 = vadd.f32 %v920, 0.5
  %v922 = vmul.f32 %v915, 0.5
  %v923 = vtanh.pop %v922
  %v924 = vmul.f32 %v923, 0.5
  %v925 = vadd.f32 %v924, 0.5
  %v926 = vtanh.pop %v916
  %v927 = vmul.f32 %v917, 0.5
  %v928 = vtanh.pop %v927
  %v929 = vmul.f32 %v928, 0.5
  %v930 = vadd.f32 %v929, 0.5
  %v931 = vmul.f32 %v925, %v828
  %v932 = vmul.f32 %v921, %v926
  %v933 = vadd.f32 %v931, %v932
  %v934 = vtanh.pop %v933
  %v935 = vmul.f32 %v930, %v934
  %v936 = vpack.c.bf16 %v935, %v935
  %937 = vmatprep.subr.bf16.mxu0 %v454
  %938 = vmatpush1.bf16.msra.mxu0 %v453
  %939 = vmatprep.subr.bf16.mxu0 %v458
  %940 = vmatpush1.bf16.msra.mxu0 %v457
  %941 = vmatprep.subr.bf16.mxu0 %v462
  %942 = vmatpush1.bf16.msra.mxu0 %v461
  %943 = vmatprep.subr.bf16.mxu0 %v466
  %944 = vmatpush1.bf16.msra.mxu0 %v465
  %945 = vmatprep.subr.bf16.mxu0 %v470
  %946 = vmatpush1.bf16.msra.mxu0 %v469
  %947 = vmatprep.subr.bf16.mxu0 %v474
  %948 = vmatpush1.bf16.msra.mxu0 %v473
  %949 = vmatprep.subr.bf16.mxu0 %v478
  %950 = vmatpush1.bf16.msra.mxu0 %v477
  %951 = vmatprep.subr.bf16.mxu0 %v482
  %952 = vmatpush1.bf16.msra.mxu0 %v481
  %953 = vmatprep.subr.bf16.mxu0 0
  %954 = vmatpush1.bf16.msra.mxu0 0
  %955 = vmatprep.subr.bf16.mxu0 0
  %956 = vmatpush1.bf16.msra.mxu0 0
  %957 = vmatprep.subr.bf16.mxu0 0
  %958 = vmatpush1.bf16.msra.mxu0 0
  %959 = vmatprep.subr.bf16.mxu0 0
  %960 = vmatpush1.bf16.msra.mxu0 0
  %961 = vmatprep.subr.bf16.mxu0 0
  %962 = vmatpush1.bf16.msra.mxu0 0
  %963 = vmatprep.subr.bf16.mxu0 0
  %964 = vmatpush1.bf16.msra.mxu0 0
  %965 = vmatprep.subr.bf16.mxu0 0
  %966 = vmatpush1.bf16.msra.mxu0 0
  %967 = vmatprep.subr.bf16.mxu0 0
  %968 = vmatpush1.bf16.msra.mxu0 0
  %969 = vmatprep.mubr.bf16.mxu0 0
  %970 = vmatmul.mubr.bf16.gmra.mrb[0].mxu0 %v936
  %v971 = vpop.f32.mrb[0].mxu0
  %v972 = vadd.f32 0.0, %v971
  %v973 = vpop.f32.mrb[0].mxu0
  %v974 = vadd.f32 0.0, %v973
  %v975 = vpop.f32.mrb[0].mxu0
  %v976 = vpop.f32.mrb[0].mxu0
  %977 = vdwg.mxu0
  %978 = vmatprep.subr.bf16.mxu0 %v456
  %979 = vmatpush1.bf16.msra.mxu0 %v455
  %980 = vmatprep.subr.bf16.mxu0 %v460
  %981 = vmatpush1.bf16.msra.mxu0 %v459
  %982 = vmatprep.subr.bf16.mxu0 %v464
  %983 = vmatpush1.bf16.msra.mxu0 %v463
  %984 = vmatprep.subr.bf16.mxu0 %v468
  %985 = vmatpush1.bf16.msra.mxu0 %v467
  %986 = vmatprep.subr.bf16.mxu0 %v472
  %987 = vmatpush1.bf16.msra.mxu0 %v471
  %988 = vmatprep.subr.bf16.mxu0 %v476
  %989 = vmatpush1.bf16.msra.mxu0 %v475
  %990 = vmatprep.subr.bf16.mxu0 %v480
  %991 = vmatpush1.bf16.msra.mxu0 %v479
  %992 = vmatprep.subr.bf16.mxu0 %v484
  %993 = vmatpush1.bf16.msra.mxu0 %v483
  %994 = vmatprep.subr.bf16.mxu0 0
  %995 = vmatpush1.bf16.msra.mxu0 0
  %996 = vmatprep.subr.bf16.mxu0 0
  %997 = vmatpush1.bf16.msra.mxu0 0
  %998 = vmatprep.subr.bf16.mxu0 0
  %999 = vmatpush1.bf16.msra.mxu0 0
  %1000 = vmatprep.subr.bf16.mxu0 0
  %1001 = vmatpush1.bf16.msra.mxu0 0
  %1002 = vmatprep.subr.bf16.mxu0 0
  %1003 = vmatpush1.bf16.msra.mxu0 0
  %1004 = vmatprep.subr.bf16.mxu0 0
  %1005 = vmatpush1.bf16.msra.mxu0 0
  %1006 = vmatprep.subr.bf16.mxu0 0
  %1007 = vmatpush1.bf16.msra.mxu0 0
  %1008 = vmatprep.subr.bf16.mxu0 0
  %1009 = vmatpush1.bf16.msra.mxu0 0
  %1010 = vmatprep.mubr.bf16.mxu0 0
  %1011 = vmatmul.mubr.bf16.gmra.mrb[0].mxu0 %v936
  %v1012 = vpop.f32.mrb[0].mxu0
  %v1013 = vadd.f32 0.0, %v1012
  %v1014 = vpop.f32.mrb[0].mxu0
  %v1015 = vadd.f32 0.0, %v1014
  %v1016 = vpop.f32.mrb[0].mxu0
  %v1017 = vpop.f32.mrb[0].mxu0
  %1018 = vdwg.mxu0
  %v1019 = vadd.f32 %v307, %v972
  %v1020 = vadd.f32 %v309, %v974
  %v1021 = vadd.f32 %v348, %v1013
  %v1022 = vadd.f32 %v350, %v1015
  %v1023 = vmul.f32 %v1019, 0.5
  %v1024 = vtanh.pop %v1023
  %v1025 = vmul.f32 %v1024, 0.5
  %v1026 = vadd.f32 %v1025, 0.5
  %v1027 = vmul.f32 %v1020, 0.5
  %v1028 = vtanh.pop %v1027
  %v1029 = vmul.f32 %v1028, 0.5
  %v1030 = vadd.f32 %v1029, 0.5
  %v1031 = vtanh.pop %v1021
  %v1032 = vmul.f32 %v1022, 0.5
  %v1033 = vtanh.pop %v1032
  %v1034 = vmul.f32 %v1033, 0.5
  %v1035 = vadd.f32 %v1034, 0.5
  %v1036 = vmul.f32 %v1030, %v933
  %v1037 = vmul.f32 %v1026, %v1031
  %v1038 = vadd.f32 %v1036, %v1037
  %v1039 = vtanh.pop %v1038
  %v1040 = vmul.f32 %v1035, %v1039
  %v1041 = vpack.c.bf16 %v1040, %v1040
  %1042 = vmatprep.subr.bf16.mxu0 %v454
  %1043 = vmatpush1.bf16.msra.mxu0 %v453
  %1044 = vmatprep.subr.bf16.mxu0 %v458
  %1045 = vmatpush1.bf16.msra.mxu0 %v457
  %1046 = vmatprep.subr.bf16.mxu0 %v462
  %1047 = vmatpush1.bf16.msra.mxu0 %v461
  %1048 = vmatprep.subr.bf16.mxu0 %v466
  %1049 = vmatpush1.bf16.msra.mxu0 %v465
  %1050 = vmatprep.subr.bf16.mxu0 %v470
  %1051 = vmatpush1.bf16.msra.mxu0 %v469
  %1052 = vmatprep.subr.bf16.mxu0 %v474
  %1053 = vmatpush1.bf16.msra.mxu0 %v473
  %1054 = vmatprep.subr.bf16.mxu0 %v478
  %1055 = vmatpush1.bf16.msra.mxu0 %v477
  %1056 = vmatprep.subr.bf16.mxu0 %v482
  %1057 = vmatpush1.bf16.msra.mxu0 %v481
  %1058 = vmatprep.subr.bf16.mxu0 0
  %1059 = vmatpush1.bf16.msra.mxu0 0
  %1060 = vmatprep.subr.bf16.mxu0 0
  %1061 = vmatpush1.bf16.msra.mxu0 0
  %1062 = vmatprep.subr.bf16.mxu0 0
  %1063 = vmatpush1.bf16.msra.mxu0 0
  %1064 = vmatprep.subr.bf16.mxu0 0
  %1065 = vmatpush1.bf16.msra.mxu0 0
  %1066 = vmatprep.subr.bf16.mxu0 0
  %1067 = vmatpush1.bf16.msra.mxu0 0
  %1068 = vmatprep.subr.bf16.mxu0 0
  %1069 = vmatpush1.bf16.msra.mxu0 0
  %1070 = vmatprep.subr.bf16.mxu0 0
  %1071 = vmatpush1.bf16.msra.mxu0 0
  %1072 = vmatprep.subr.bf16.mxu0 0
  %1073 = vmatpush1.bf16.msra.mxu0 0
  %1074 = vmatprep.mubr.bf16.mxu0 0
  %1075 = vmatmul.mubr.bf16.gmra.mrb[0].mxu0 %v1041
  %v1076 = vpop.f32.mrb[0].mxu0
  %v1077 = vadd.f32 0.0, %v1076
  %v1078 = vpop.f32.mrb[0].mxu0
  %v1079 = vadd.f32 0.0, %v1078
  %v1080 = vpop.f32.mrb[0].mxu0
  %v1081 = vpop.f32.mrb[0].mxu0
  %1082 = vdwg.mxu0
  %1083 = vmatprep.subr.bf16.mxu0 %v456
  %1084 = vmatpush1.bf16.msra.mxu0 %v455
  %1085 = vmatprep.subr.bf16.mxu0 %v460
  %1086 = vmatpush1.bf16.msra.mxu0 %v459
  %1087 = vmatprep.subr.bf16.mxu0 %v464
  %1088 = vmatpush1.bf16.msra.mxu0 %v463
  %1089 = vmatprep.subr.bf16.mxu0 %v468
  %1090 = vmatpush1.bf16.msra.mxu0 %v467
  %1091 = vmatprep.subr.bf16.mxu0 %v472
  %1092 = vmatpush1.bf16.msra.mxu0 %v471
  %1093 = vmatprep.subr.bf16.mxu0 %v476
  %1094 = vmatpush1.bf16.msra.mxu0 %v475
  %1095 = vmatprep.subr.bf16.mxu0 %v480
  %1096 = vmatpush1.bf16.msra.mxu0 %v479
  %1097 = vmatprep.subr.bf16.mxu0 %v484
  %1098 = vmatpush1.bf16.msra.mxu0 %v483
  %1099 = vmatprep.subr.bf16.mxu0 0
  %1100 = vmatpush1.bf16.msra.mxu0 0
  %1101 = vmatprep.subr.bf16.mxu0 0
  %1102 = vmatpush1.bf16.msra.mxu0 0
  %1103 = vmatprep.subr.bf16.mxu0 0
  %1104 = vmatpush1.bf16.msra.mxu0 0
  %1105 = vmatprep.subr.bf16.mxu0 0
  %1106 = vmatpush1.bf16.msra.mxu0 0
  %1107 = vmatprep.subr.bf16.mxu0 0
  %1108 = vmatpush1.bf16.msra.mxu0 0
  %1109 = vmatprep.subr.bf16.mxu0 0
  %1110 = vmatpush1.bf16.msra.mxu0 0
  %1111 = vmatprep.subr.bf16.mxu0 0
  %1112 = vmatpush1.bf16.msra.mxu0 0
  %1113 = vmatprep.subr.bf16.mxu0 0
  %1114 = vmatpush1.bf16.msra.mxu0 0
  %1115 = vmatprep.mubr.bf16.mxu0 0
  %1116 = vmatmul.mubr.bf16.gmra.mrb[0].mxu0 %v1041
  %v1117 = vpop.f32.mrb[0].mxu0
  %v1118 = vadd.f32 0.0, %v1117
  %v1119 = vpop.f32.mrb[0].mxu0
  %v1120 = vadd.f32 0.0, %v1119
  %v1121 = vpop.f32.mrb[0].mxu0
  %v1122 = vpop.f32.mrb[0].mxu0
  %1123 = vdwg.mxu0
  %v1124 = vadd.f32 %v307, %v1077
  %v1125 = vadd.f32 %v309, %v1079
  %v1126 = vadd.f32 %v348, %v1118
  %v1127 = vadd.f32 %v350, %v1120
  %v1128 = vmul.f32 %v1124, 0.5
  %v1129 = vtanh.pop %v1128
  %v1130 = vmul.f32 %v1129, 0.5
  %v1131 = vadd.f32 %v1130, 0.5
  %v1132 = vmul.f32 %v1125, 0.5
  %v1133 = vtanh.pop %v1132
  %v1134 = vmul.f32 %v1133, 0.5
  %v1135 = vadd.f32 %v1134, 0.5
  %v1136 = vtanh.pop %v1126
  %v1137 = vmul.f32 %v1127, 0.5
  %v1138 = vtanh.pop %v1137
  %v1139 = vmul.f32 %v1138, 0.5
  %v1140 = vadd.f32 %v1139, 0.5
  %v1141 = vmul.f32 %v1135, %v1038
  %v1142 = vmul.f32 %v1131, %v1136
  %v1143 = vadd.f32 %v1141, %v1142
  %v1144 = vtanh.pop %v1143
  %v1145 = vmul.f32 %v1140, %v1144
  %v1146 = vpack.c.bf16 %v1145, %v1145
  %1147 = vmatprep.subr.bf16.mxu0 %v454
  %1148 = vmatpush1.bf16.msra.mxu0 %v453
  %1149 = vmatprep.subr.bf16.mxu0 %v458
  %1150 = vmatpush1.bf16.msra.mxu0 %v457
  %1151 = vmatprep.subr.bf16.mxu0 %v462
  %1152 = vmatpush1.bf16.msra.mxu0 %v461
  %1153 = vmatprep.subr.bf16.mxu0 %v466
  %1154 = vmatpush1.bf16.msra.mxu0 %v465
  %1155 = vmatprep.subr.bf16.mxu0 %v470
  %1156 = vmatpush1.bf16.msra.mxu0 %v469
  %1157 = vmatprep.subr.bf16.mxu0 %v474
  %1158 = vmatpush1.bf16.msra.mxu0 %v473
  %1159 = vmatprep.subr.bf16.mxu0 %v478
  %1160 = vmatpush1.bf16.msra.mxu0 %v477
  %1161 = vmatprep.subr.bf16.mxu0 %v482
  %1162 = vmatpush1.bf16.msra.mxu0 %v481
  %1163 = vmatprep.subr.bf16.mxu0 0
  %1164 = vmatpush1.bf16.msra.mxu0 0
  %1165 = vmatprep.subr.bf16.mxu0 0
  %1166 = vmatpush1.bf16.msra.mxu0 0
  %1167 = vmatprep.subr.bf16.mxu0 0
  %1168 = vmatpush1.bf16.msra.mxu0 0
  %1169 = vmatprep.subr.bf16.mxu0 0
  %1170 = vmatpush1.bf16.msra.mxu0 0
  %1171 = vmatprep.subr.bf16.mxu0 0
  %1172 = vmatpush1.bf16.msra.mxu0 0
  %1173 = vmatprep.subr.bf16.mxu0 0
  %1174 = vmatpush1.bf16.msra.mxu0 0
  %1175 = vmatprep.subr.bf16.mxu0 0
  %1176 = vmatpush1.bf16.msra.mxu0 0
  %1177 = vmatprep.subr.bf16.mxu0 0
  %1178 = vmatpush1.bf16.msra.mxu0 0
  %1179 = vmatprep.mubr.bf16.mxu0 0
  %1180 = vmatmul.mubr.bf16.gmra.mrb[0].mxu0 %v1146
  %v1181 = vpop.f32.mrb[0].mxu0
  %v1182 = vadd.f32 0.0, %v1181
  %v1183 = vpop.f32.mrb[0].mxu0
  %v1184 = vadd.f32 0.0, %v1183
  %v1185 = vpop.f32.mrb[0].mxu0
  %v1186 = vpop.f32.mrb[0].mxu0
  %1187 = vdwg.mxu0
  %1188 = vmatprep.subr.bf16.mxu0 %v456
  %1189 = vmatpush1.bf16.msra.mxu0 %v455
  %1190 = vmatprep.subr.bf16.mxu0 %v460
  %1191 = vmatpush1.bf16.msra.mxu0 %v459
  %1192 = vmatprep.subr.bf16.mxu0 %v464
  %1193 = vmatpush1.bf16.msra.mxu0 %v463
  %1194 = vmatprep.subr.bf16.mxu0 %v468
  %1195 = vmatpush1.bf16.msra.mxu0 %v467
  %1196 = vmatprep.subr.bf16.mxu0 %v472
  %1197 = vmatpush1.bf16.msra.mxu0 %v471
  %1198 = vmatprep.subr.bf16.mxu0 %v476
  %1199 = vmatpush1.bf16.msra.mxu0 %v475
  %1200 = vmatprep.subr.bf16.mxu0 %v480
  %1201 = vmatpush1.bf16.msra.mxu0 %v479
  %1202 = vmatprep.subr.bf16.mxu0 %v484
  %1203 = vmatpush1.bf16.msra.mxu0 %v483
  %1204 = vmatprep.subr.bf16.mxu0 0
  %1205 = vmatpush1.bf16.msra.mxu0 0
  %1206 = vmatprep.subr.bf16.mxu0 0
  %1207 = vmatpush1.bf16.msra.mxu0 0
  %1208 = vmatprep.subr.bf16.mxu0 0
  %1209 = vmatpush1.bf16.msra.mxu0 0
  %1210 = vmatprep.subr.bf16.mxu0 0
  %1211 = vmatpush1.bf16.msra.mxu0 0
  %1212 = vmatprep.subr.bf16.mxu0 0
  %1213 = vmatpush1.bf16.msra.mxu0 0
  %1214 = vmatprep.subr.bf16.mxu0 0
  %1215 = vmatpush1.bf16.msra.mxu0 0
  %1216 = vmatprep.subr.bf16.mxu0 0
  %1217 = vmatpush1.bf16.msra.mxu0 0
  %1218 = vmatprep.subr.bf16.mxu0 0
  %1219 = vmatpush1.bf16.msra.mxu0 0
  %1220 = vmatprep.mubr.bf16.mxu0 0
  %1221 = vmatmul.mubr.bf16.gmra.mrb[0].mxu0 %v1146
  %v1222 = vpop.f32.mrb[0].mxu0
  %v1223 = vadd.f32 0.0, %v1222
  %v1224 = vpop.f32.mrb[0].mxu0
  %v1225 = vadd.f32 0.0, %v1224
  %v1226 = vpop.f32.mrb[0].mxu0
  %v1227 = vpop.f32.mrb[0].mxu0
  %1228 = vdwg.mxu0
  %v1229 = vadd.f32 %v307, %v1182
  %v1230 = vadd.f32 %v309, %v1184
  %v1231 = vadd.f32 %v348, %v1223
  %v1232 = vadd.f32 %v350, %v1225
  %v1233 = vmul.f32 %v1229, 0.5
  %v1234 = vtanh.pop %v1233
  %v1235 = vmul.f32 %v1234, 0.5
  %v1236 = vadd.f32 %v1235, 0.5
  %v1237 = vmul.f32 %v1230, 0.5
  %v1238 = vtanh.pop %v1237
  %v1239 = vmul.f32 %v1238, 0.5
  %v1240 = vadd.f32 %v1239, 0.5
  %v1241 = vtanh.pop %v1231
  %v1242 = vmul.f32 %v1232, 0.5
  %v1243 = vtanh.pop %v1242
  %v1244 = vmul.f32 %v1243, 0.5
  %v1245 = vadd.f32 %v1244, 0.5
  %v1246 = vmul.f32 %v1240, %v1143
  %v1247 = vmul.f32 %v1236, %v1241
  %v1248 = vadd.f32 %v1246, %v1247
  %v1249 = vtanh.pop %v1248
  %v1250 = vmul.f32 %v1245, %v1249
  %v1251 = vpack.c.bf16 %v1250, %v1250
  %1252 = vmatprep.subr.bf16.mxu0 %v454
  %1253 = vmatpush1.bf16.msra.mxu0 %v453
  %1254 = vmatprep.subr.bf16.mxu0 %v458
  %1255 = vmatpush1.bf16.msra.mxu0 %v457
  %1256 = vmatprep.subr.bf16.mxu0 %v462
  %1257 = vmatpush1.bf16.msra.mxu0 %v461
  %1258 = vmatprep.subr.bf16.mxu0 %v466
  %1259 = vmatpush1.bf16.msra.mxu0 %v465
  %1260 = vmatprep.subr.bf16.mxu0 %v470
  %1261 = vmatpush1.bf16.msra.mxu0 %v469
  %1262 = vmatprep.subr.bf16.mxu0 %v474
  %1263 = vmatpush1.bf16.msra.mxu0 %v473
  %1264 = vmatprep.subr.bf16.mxu0 %v478
  %1265 = vmatpush1.bf16.msra.mxu0 %v477
  %1266 = vmatprep.subr.bf16.mxu0 %v482
  %1267 = vmatpush1.bf16.msra.mxu0 %v481
  %1268 = vmatprep.subr.bf16.mxu0 0
  %1269 = vmatpush1.bf16.msra.mxu0 0
  %1270 = vmatprep.subr.bf16.mxu0 0
  %1271 = vmatpush1.bf16.msra.mxu0 0
  %1272 = vmatprep.subr.bf16.mxu0 0
  %1273 = vmatpush1.bf16.msra.mxu0 0
  %1274 = vmatprep.subr.bf16.mxu0 0
  %1275 = vmatpush1.bf16.msra.mxu0 0
  %1276 = vmatprep.subr.bf16.mxu0 0
  %1277 = vmatpush1.bf16.msra.mxu0 0
  %1278 = vmatprep.subr.bf16.mxu0 0
  %1279 = vmatpush1.bf16.msra.mxu0 0
  %1280 = vmatprep.subr.bf16.mxu0 0
  %1281 = vmatpush1.bf16.msra.mxu0 0
  %1282 = vmatprep.subr.bf16.mxu0 0
  %1283 = vmatpush1.bf16.msra.mxu0 0
  %1284 = vmatprep.mubr.bf16.mxu0 0
  %1285 = vmatmul.mubr.bf16.gmra.mrb[0].mxu0 %v1251
  %v1286 = vpop.f32.mrb[0].mxu0
  %v1287 = vadd.f32 0.0, %v1286
  %v1288 = vpop.f32.mrb[0].mxu0
  %v1289 = vadd.f32 0.0, %v1288
  %v1290 = vpop.f32.mrb[0].mxu0
  %v1291 = vpop.f32.mrb[0].mxu0
  %1292 = vdwg.mxu0
  %1293 = vmatprep.subr.bf16.mxu0 %v456
  %1294 = vmatpush1.bf16.msra.mxu0 %v455
  %1295 = vmatprep.subr.bf16.mxu0 %v460
  %1296 = vmatpush1.bf16.msra.mxu0 %v459
  %1297 = vmatprep.subr.bf16.mxu0 %v464
  %1298 = vmatpush1.bf16.msra.mxu0 %v463
  %1299 = vmatprep.subr.bf16.mxu0 %v468
  %1300 = vmatpush1.bf16.msra.mxu0 %v467
  %1301 = vmatprep.subr.bf16.mxu0 %v472
  %1302 = vmatpush1.bf16.msra.mxu0 %v471
  %1303 = vmatprep.subr.bf16.mxu0 %v476
  %1304 = vmatpush1.bf16.msra.mxu0 %v475
  %1305 = vmatprep.subr.bf16.mxu0 %v480
  %1306 = vmatpush1.bf16.msra.mxu0 %v479
  %1307 = vmatprep.subr.bf16.mxu0 %v484
  %1308 = vmatpush1.bf16.msra.mxu0 %v483
  %1309 = vmatprep.subr.bf16.mxu0 0
  %1310 = vmatpush1.bf16.msra.mxu0 0
  %1311 = vmatprep.subr.bf16.mxu0 0
  %1312 = vmatpush1.bf16.msra.mxu0 0
  %1313 = vmatprep.subr.bf16.mxu0 0
  %1314 = vmatpush1.bf16.msra.mxu0 0
  %1315 = vmatprep.subr.bf16.mxu0 0
  %1316 = vmatpush1.bf16.msra.mxu0 0
  %1317 = vmatprep.subr.bf16.mxu0 0
  %1318 = vmatpush1.bf16.msra.mxu0 0
  %1319 = vmatprep.subr.bf16.mxu0 0
  %1320 = vmatpush1.bf16.msra.mxu0 0
  %1321 = vmatprep.subr.bf16.mxu0 0
  %1322 = vmatpush1.bf16.msra.mxu0 0
  %1323 = vmatprep.subr.bf16.mxu0 0
  %1324 = vmatpush1.bf16.msra.mxu0 0
  %1325 = vmatprep.mubr.bf16.mxu0 0
  %1326 = vmatmul.mubr.bf16.gmra.mrb[0].mxu0 %v1251
  %v1327 = vpop.f32.mrb[0].mxu0
  %v1328 = vadd.f32 0.0, %v1327
  %v1329 = vpop.f32.mrb[0].mxu0
  %v1330 = vadd.f32 0.0, %v1329
  %v1331 = vpop.f32.mrb[0].mxu0
  %v1332 = vpop.f32.mrb[0].mxu0
  %1333 = vdwg.mxu0
  %v1334 = vadd.f32 %v307, %v1287
  %v1335 = vadd.f32 %v309, %v1289
  %v1336 = vadd.f32 %v348, %v1328
  %v1337 = vadd.f32 %v350, %v1330
  %v1338 = vmul.f32 %v1334, 0.5
  %v1339 = vtanh.pop %v1338
  %v1340 = vmul.f32 %v1339, 0.5
  %v1341 = vadd.f32 %v1340, 0.5
  %v1342 = vmul.f32 %v1335, 0.5
  %v1343 = vtanh.pop %v1342
  %v1344 = vmul.f32 %v1343, 0.5
  %v1345 = vadd.f32 %v1344, 0.5
  %v1346 = vtanh.pop %v1336
  %v1347 = vmul.f32 %v1337, 0.5
  %v1348 = vtanh.pop %v1347
  %v1349 = vmul.f32 %v1348, 0.5
  %v1350 = vadd.f32 %v1349, 0.5
  %v1351 = vmul.f32 %v1345, %v1248
  %v1352 = vmul.f32 %v1341, %v1346
  %v1353 = vadd.f32 %v1351, %v1352
  %v1354 = vtanh.pop %v1353
  %v1355 = vmul.f32 %v1350, %v1354
  %1356 = vst [vmem:[#allocation2] sm:$0xff] %v1355
  %1357 = vst [vmem:[#allocation3] sm:$0xff] %v1353
  %1358 = vst [vmem:[%s4] sm:$0xff] %v620
  %1359 = vst [vmem:[%s4 + $0x8] sm:$0xff] %v725
  %1360 = vst [vmem:[%s4 + $0x10] sm:$0xff] %v830
  %1361 = vst [vmem:[%s4 + $0x18] sm:$0xff] %v935
  %1362 = vst [vmem:[%s4 + $0x20] sm:$0xff] %v1040
  %1363 = vst [vmem:[%s4 + $0x28] sm:$0xff] %v1145
  %1364 = vst [vmem:[%s4 + $0x30] sm:$0xff] %v1250
  %1365 = vst [vmem:[%s4 + $0x38] sm:$0xff] %v1355
  // Predicated region
  $region22: #{lstmae_forward.6} parent=0 // pred_check
    _
  $region23: #{lstmae_forward.6} parent=0 // pred_check_branch
    %1367 = sbr.rel (0) target = $region25
  $region24: #{lstmae_forward.6} parent=0 // pred_region
    _
  $region25: #{lstmae_forward.6} parent=0 // pred_fallthru
    _
  // Predicated region
  $region26: #{lstmae_forward.6} parent=0 // pred_check
    _
  $region27: #{lstmae_forward.6} parent=0 // pred_check_branch
    %1369 = sbr.rel (0) target = $region29
  $region28: #{lstmae_forward.6} parent=0 // pred_region
    _
  $region29: #{lstmae_forward.6} parent=0 // pred_fallthru
    _

// kernel: lstmae_forward.7
$region0: #{lstmae_forward.7}
  #allocation0 [shape = 'u32[]', space=smem, size = 0x4, offset = 0x4, fixed_abs, tag = 'smem constant byte address 0x4 - core index']
  #allocation1 [shape = 'u32[144,128]{1,0:T(1,128)}', space=vmem, size = 0x12000, scoped, tag = 'internal scratch']
  #allocation2 [shape = 'f32[8,128]{1,0:T(8,128)}', space=vmem, size = 0x1000, scoped, tag = 'scratch operand']
  #allocation3 [shape = 'f32[8,128]{1,0:T(8,128)}', space=vmem, size = 0x1000, scoped, tag = 'scratch operand']
  %s0 = inlined_call_operand.vmem [shape: f32[8,8,128], index: 0, kind: input, shape index: {}]
  %s1 = inlined_call_operand.vmem [shape: bf16[128,512], index: 1, kind: input, shape index: {}]
  %s2 = inlined_call_operand.vmem [shape: bf16[128,512], index: 2, kind: input, shape index: {}]
  %s3 = inlined_call_operand.vmem [shape: f32[1,512], index: 3, kind: input, shape index: {}]
  %s4 = inlined_call_operand.vmem [shape: bf16[128,16], index: 4, kind: input, shape index: {}]
  %s5 = inlined_call_operand.vmem [shape: f32[1,16], index: 5, kind: input, shape index: {}]
  %s6 = inlined_call_operand.vmem [shape: f32[8,8,16], index: 6, kind: output, shape index: {}]
  %s7 = sld [smem:[#allocation0]]
  $region38: #{lstmae_forward.7} parent=0
    _
  %s9 = ssub.s32 1, %s7
  %s10 = scalar_select 0, %s9, %s7
  // Predicated region
  $region2: #{lstmae_forward.7} parent=0 // pred_check
    _
  $region3: #{lstmae_forward.7} parent=0 // pred_check_branch
    %12 = sbr.rel (0) target = $region5
  $region4: #{lstmae_forward.7} parent=0 // pred_region
    _
  $region5: #{lstmae_forward.7} parent=0 // pred_fallthru
    _
  // Predicated region
  $region6: #{lstmae_forward.7} parent=0 // pred_check
    _
  $region7: #{lstmae_forward.7} parent=0 // pred_check_branch
    %14 = sbr.rel (0) target = $region9
  $region8: #{lstmae_forward.7} parent=0 // pred_region
    _
  $region9: #{lstmae_forward.7} parent=0 // pred_fallthru
    _
  // Predicated region
  $region10: #{lstmae_forward.7} parent=0 // pred_check
    _
  $region11: #{lstmae_forward.7} parent=0 // pred_check_branch
    %16 = sbr.rel (0) target = $region13
  $region12: #{lstmae_forward.7} parent=0 // pred_region
    _
  $region13: #{lstmae_forward.7} parent=0 // pred_fallthru
    _
  // Predicated region
  $region14: #{lstmae_forward.7} parent=0 // pred_check
    _
  $region15: #{lstmae_forward.7} parent=0 // pred_check_branch
    %18 = sbr.rel (0) target = $region17
  $region16: #{lstmae_forward.7} parent=0 // pred_region
    _
  $region17: #{lstmae_forward.7} parent=0 // pred_fallthru
    _
  // Predicated region
  $region18: #{lstmae_forward.7} parent=0 // pred_check
    _
  $region19: #{lstmae_forward.7} parent=0 // pred_check_branch
    %20 = sbr.rel (0) target = $region21
  $region20: #{lstmae_forward.7} parent=0 // pred_region
    _
  $region21: #{lstmae_forward.7} parent=0 // pred_fallthru
    _
  // Predicated region
  $region22: #{lstmae_forward.7} parent=0 // pred_check
    _
  $region23: #{lstmae_forward.7} parent=0 // pred_check_branch
    %22 = sbr.rel (0) target = $region25
  $region24: #{lstmae_forward.7} parent=0 // pred_region
    _
  $region25: #{lstmae_forward.7} parent=0 // pred_fallthru
    _
  %p24 = scmp.eq.s32.totalorder 0, 0
  // Predicated region
  $region26: #{lstmae_forward.7} parent=0 // pred_check
    %p25 = pneg %p24
  $region27: #{lstmae_forward.7} parent=0 // pred_check_branch
    %27 = sbr.rel (%p25) target = $region29
  $region28: #{lstmae_forward.7} parent=0 // pred_region
    %28 = vst [vmem:[#allocation2] sm:$0xff] 0.0
    %29 = vst [vmem:[#allocation3] sm:$0xff] 0.0
  $region29: #{lstmae_forward.7} parent=0 // pred_fallthru
    _
  %v30 = vld [vmem:[%s1] sm:$0xff]
  %v31 = vld [vmem:[%s1 + $0x8] sm:$0xff]
  %v32 = vld [vmem:[%s1 + $0x10] sm:$0xff]
  %v33 = vld [vmem:[%s1 + $0x18] sm:$0xff]
  %v34 = vld [vmem:[%s1 + $0x20] sm:$0xff]
  %v35 = vld [vmem:[%s1 + $0x28] sm:$0xff]
  %v36 = vld [vmem:[%s1 + $0x30] sm:$0xff]
  %v37 = vld [vmem:[%s1 + $0x38] sm:$0xff]
  %v38 = vld [vmem:[%s1 + $0x40] sm:$0xff]
  %v39 = vld [vmem:[%s1 + $0x48] sm:$0xff]
  %v40 = vld [vmem:[%s1 + $0x50] sm:$0xff]
  %v41 = vld [vmem:[%s1 + $0x58] sm:$0xff]
  %v42 = vld [vmem:[%s1 + $0x60] sm:$0xff]
  %v43 = vld [vmem:[%s1 + $0x68] sm:$0xff]
  %v44 = vld [vmem:[%s1 + $0x70] sm:$0xff]
  %v45 = vld [vmem:[%s1 + $0x78] sm:$0xff]
  %v46 = vld [vmem:[%s1 + $0x80] sm:$0xff]
  %v47 = vld [vmem:[%s1 + $0x88] sm:$0xff]
  %v48 = vld [vmem:[%s1 + $0x90] sm:$0xff]
  %v49 = vld [vmem:[%s1 + $0x98] sm:$0xff]
  %v50 = vld [vmem:[%s1 + $0xa0] sm:$0xff]
  %v51 = vld [vmem:[%s1 + $0xa8] sm:$0xff]
  %v52 = vld [vmem:[%s1 + $0xb0] sm:$0xff]
  %v53 = vld [vmem:[%s1 + $0xb8] sm:$0xff]
  %v54 = vld [vmem:[%s1 + $0xc0] sm:$0xff]
  %v55 = vld [vmem:[%s1 + $0xc8] sm:$0xff]
  %v56 = vld [vmem:[%s1 + $0xd0] sm:$0xff]
  %v57 = vld [vmem:[%s1 + $0xd8] sm:$0xff]
  %v58 = vld [vmem:[%s1 + $0xe0] sm:$0xff]
  %v59 = vld [vmem:[%s1 + $0xe8] sm:$0xff]
  %v60 = vld [vmem:[%s1 + $0xf0] sm:$0xff]
  %v61 = vld [vmem:[%s1 + $0xf8] sm:$0xff]
  %v62 = vld [vmem:[%s2] sm:$0xff]
  %v63 = vld [vmem:[%s2 + $0x8] sm:$0xff]
  %v64 = vld [vmem:[%s2 + $0x10] sm:$0xff]
  %v65 = vld [vmem:[%s2 + $0x18] sm:$0xff]
  %v66 = vld [vmem:[%s2 + $0x20] sm:$0xff]
  %v67 = vld [vmem:[%s2 + $0x28] sm:$0xff]
  %v68 = vld [vmem:[%s2 + $0x30] sm:$0xff]
  %v69 = vld [vmem:[%s2 + $0x38] sm:$0xff]
  %v70 = vld [vmem:[%s2 + $0x40] sm:$0xff]
  %v71 = vld [vmem:[%s2 + $0x48] sm:$0xff]
  %v72 = vld [vmem:[%s2 + $0x50] sm:$0xff]
  %v73 = vld [vmem:[%s2 + $0x58] sm:$0xff]
  %v74 = vld [vmem:[%s2 + $0x60] sm:$0xff]
  %v75 = vld [vmem:[%s2 + $0x68] sm:$0xff]
  %v76 = vld [vmem:[%s2 + $0x70] sm:$0xff]
  %v77 = vld [vmem:[%s2 + $0x78] sm:$0xff]
  %v78 = vld [vmem:[%s2 + $0x80] sm:$0xff]
  %v79 = vld [vmem:[%s2 + $0x88] sm:$0xff]
  %v80 = vld [vmem:[%s2 + $0x90] sm:$0xff]
  %v81 = vld [vmem:[%s2 + $0x98] sm:$0xff]
  %v82 = vld [vmem:[%s2 + $0xa0] sm:$0xff]
  %v83 = vld [vmem:[%s2 + $0xa8] sm:$0xff]
  %v84 = vld [vmem:[%s2 + $0xb0] sm:$0xff]
  %v85 = vld [vmem:[%s2 + $0xb8] sm:$0xff]
  %v86 = vld [vmem:[%s2 + $0xc0] sm:$0xff]
  %v87 = vld [vmem:[%s2 + $0xc8] sm:$0xff]
  %v88 = vld [vmem:[%s2 + $0xd0] sm:$0xff]
  %v89 = vld [vmem:[%s2 + $0xd8] sm:$0xff]
  %v90 = vld [vmem:[%s2 + $0xe0] sm:$0xff]
  %v91 = vld [vmem:[%s2 + $0xe8] sm:$0xff]
  %v92 = vld [vmem:[%s2 + $0xf0] sm:$0xff]
  %v93 = vld [vmem:[%s2 + $0xf8] sm:$0xff]
  %v94 = vld [vmem:[%s3] sm:$0xf]
  %v95 = vld [vmem:[%s0] sm:$0xff]
  %v96 = vld [vmem:[%s0 + $0x8] sm:$0xff]
  %v97 = vld [vmem:[%s0 + $0x10] sm:$0xff]
  %v98 = vld [vmem:[%s0 + $0x18] sm:$0xff]
  %v99 = vld [vmem:[%s0 + $0x20] sm:$0xff]
  %v100 = vld [vmem:[%s0 + $0x28] sm:$0xff]
  %v101 = vld [vmem:[%s0 + $0x30] sm:$0xff]
  %v102 = vld [vmem:[%s0 + $0x38] sm:$0xff]
  %v103 = vpack.c.bf16 %v96, %v95
  %v104 = vpack.c.bf16 %v98, %v97
  %v105 = vpack.c.bf16 %v100, %v99
  %v106 = vpack.c.bf16 %v102, %v101
  %v108 = vlaneseq
  %v109 = vshrl.u32 %v108, 7
  %v110 = vsub.s32 0, %v109
  %v111 = vrot.slane %v94, %v110
  %v112 = vlaneseq
  %v113 = vshrl.u32 %v112, 7
  %v114 = vsub.s32 1, %v113
  %v115 = vrot.slane %v94, %v114
  %v116 = vlaneseq
  %v117 = vshrl.u32 %v116, 7
  %v118 = vsub.s32 2, %v117
  %v119 = vrot.slane %v94, %v118
  %v120 = vlaneseq
  %v121 = vshrl.u32 %v120, 7
  %v122 = vsub.s32 3, %v121
  %v123 = vrot.slane %v94, %v122
  %v160 = vunpack.c.l.b16 %v30
  %v161 = vunpack.c.h.b16 %v30
  %v162 = vunpack.c.l.b16 %v31
  %v163 = vunpack.c.h.b16 %v31
  %v164 = vunpack.c.l.b16 %v32
  %v165 = vunpack.c.h.b16 %v32
  %v166 = vunpack.c.l.b16 %v33
  %v167 = vunpack.c.h.b16 %v33
  %v168 = vunpack.c.l.b16 %v34
  %v169 = vunpack.c.h.b16 %v34
  %v170 = vunpack.c.l.b16 %v35
  %v171 = vunpack.c.h.b16 %v35
  %v172 = vunpack.c.l.b16 %v36
  %v173 = vunpack.c.h.b16 %v36
  %v174 = vunpack.c.l.b16 %v37
  %v175 = vunpack.c.h.b16 %v37
  %v176 = vunpack.c.l.b16 %v38
  %v177 = vunpack.c.h.b16 %v38
  %v178 = vunpack.c.l.b16 %v39
  %v179 = vunpack.c.h.b16 %v39
  %v180 = vunpack.c.l.b16 %v40
  %v181 = vunpack.c.h.b16 %v40
  %v182 = vunpack.c.l.b16 %v41
  %v183 = vunpack.c.h.b16 %v41
  %v184 = vunpack.c.l.b16 %v42
  %v185 = vunpack.c.h.b16 %v42
  %v186 = vunpack.c.l.b16 %v43
  %v187 = vunpack.c.h.b16 %v43
  %v188 = vunpack.c.l.b16 %v44
  %v189 = vunpack.c.h.b16 %v44
  %v190 = vunpack.c.l.b16 %v45
  %v191 = vunpack.c.h.b16 %v45
  %v192 = vunpack.c.l.b16 %v46
  %v193 = vunpack.c.h.b16 %v46
  %v194 = vunpack.c.l.b16 %v47
  %v195 = vunpack.c.h.b16 %v47
  %v196 = vunpack.c.l.b16 %v48
  %v197 = vunpack.c.h.b16 %v48
  %v198 = vunpack.c.l.b16 %v49
  %v199 = vunpack.c.h.b16 %v49
  %v200 = vunpack.c.l.b16 %v50
  %v201 = vunpack.c.h.b16 %v50
  %v202 = vunpack.c.l.b16 %v51
  %v203 = vunpack.c.h.b16 %v51
  %v204 = vunpack.c.l.b16 %v52
  %v205 = vunpack.c.h.b16 %v52
  %v206 = vunpack.c.l.b16 %v53
  %v207 = vunpack.c.h.b16 %v53
  %v208 = vunpack.c.l.b16 %v54
  %v209 = vunpack.c.h.b16 %v54
  %v210 = vunpack.c.l.b16 %v55
  %v211 = vunpack.c.h.b16 %v55
  %v212 = vunpack.c.l.b16 %v56
  %v213 = vunpack.c.h.b16 %v56
  %v214 = vunpack.c.l.b16 %v57
  %v215 = vunpack.c.h.b16 %v57
  %v216 = vunpack.c.l.b16 %v58
  %v217 = vunpack.c.h.b16 %v58
  %v218 = vunpack.c.l.b16 %v59
  %v219 = vunpack.c.h.b16 %v59
  %v220 = vunpack.c.l.b16 %v60
  %v221 = vunpack.c.h.b16 %v60
  %v222 = vunpack.c.l.b16 %v61
  %v223 = vunpack.c.h.b16 %v61
  %v224 = vpack.c.b16 %v164, %v160
  %v225 = vpack.c.b16 %v165, %v161
  %v226 = vpack.c.b16 %v166, %v162
  %v227 = vpack.c.b16 %v167, %v163
  %v228 = vpack.c.b16 %v172, %v168
  %v229 = vpack.c.b16 %v173, %v169
  %v230 = vpack.c.b16 %v174, %v170
  %v231 = vpack.c.b16 %v175, %v171
  %v232 = vpack.c.b16 %v180, %v176
  %v233 = vpack.c.b16 %v181, %v177
  %v234 = vpack.c.b16 %v182, %v178
  %v235 = vpack.c.b16 %v183, %v179
  %v236 = vpack.c.b16 %v188, %v184
  %v237 = vpack.c.b16 %v189, %v185
  %v238 = vpack.c.b16 %v190, %v186
  %v239 = vpack.c.b16 %v191, %v187
  %v240 = vpack.c.b16 %v196, %v192
  %v241 = vpack.c.b16 %v197, %v193
  %v242 = vpack.c.b16 %v198, %v194
  %v243 = vpack.c.b16 %v199, %v195
  %v244 = vpack.c.b16 %v204, %v200
  %v245 = vpack.c.b16 %v205, %v201
  %v246 = vpack.c.b16 %v206, %v202
  %v247 = vpack.c.b16 %v207, %v203
  %v248 = vpack.c.b16 %v212, %v208
  %v249 = vpack.c.b16 %v213, %v209
  %v250 = vpack.c.b16 %v214, %v210
  %v251 = vpack.c.b16 %v215, %v211
  %v252 = vpack.c.b16 %v220, %v216
  %v253 = vpack.c.b16 %v221, %v217
  %v254 = vpack.c.b16 %v222, %v218
  %v255 = vpack.c.b16 %v223, %v219
  %288 = vmatprep.subr.bf16.mxu0 %v225
  %289 = vmatpush1.bf16.msra.mxu0 %v224
  %290 = vmatprep.subr.bf16.mxu0 %v229
  %291 = vmatpush1.bf16.msra.mxu0 %v228
  %292 = vmatprep.subr.bf16.mxu0 %v233
  %293 = vmatpush1.bf16.msra.mxu0 %v232
  %294 = vmatprep.subr.bf16.mxu0 %v237
  %295 = vmatpush1.bf16.msra.mxu0 %v236
  %296 = vmatprep.subr.bf16.mxu0 %v241
  %297 = vmatpush1.bf16.msra.mxu0 %v240
  %298 = vmatprep.subr.bf16.mxu0 %v245
  %299 = vmatpush1.bf16.msra.mxu0 %v244
  %300 = vmatprep.subr.bf16.mxu0 %v249
  %301 = vmatpush1.bf16.msra.mxu0 %v248
  %302 = vmatprep.subr.bf16.mxu0 %v253
  %303 = vmatpush1.bf16.msra.mxu0 %v252
  %304 = vmatprep.subr.bf16.mxu0 0
  %305 = vmatpush1.bf16.msra.mxu0 0
  %306 = vmatprep.subr.bf16.mxu0 0
  %307 = vmatpush1.bf16.msra.mxu0 0
  %308 = vmatprep.subr.bf16.mxu0 0
  %309 = vmatpush1.bf16.msra.mxu0 0
  %310 = vmatprep.subr.bf16.mxu0 0
  %311 = vmatpush1.bf16.msra.mxu0 0
  %312 = vmatprep.subr.bf16.mxu0 0
  %313 = vmatpush1.bf16.msra.mxu0 0
  %314 = vmatprep.subr.bf16.mxu0 0
  %315 = vmatpush1.bf16.msra.mxu0 0
  %316 = vmatprep.subr.bf16.mxu0 0
  %317 = vmatpush1.bf16.msra.mxu0 0
  %318 = vmatprep.subr.bf16.mxu0 0
  %319 = vmatpush1.bf16.msra.mxu0 0
  %320 = vmatprep.mubr.bf16.mxu0 0
  %321 = vmatmul.mubr.bf16.gmra.mrb[0].mxu0 %v103
  %v322 = vpop.f32.mrb[0].mxu0
  %v323 = vadd.f32 %v111, %v322
  %v324 = vpop.f32.mrb[0].mxu0
  %v325 = vadd.f32 %v115, %v324
  %v326 = vpop.f32.mrb[0].mxu0
  %v327 = vadd.f32 %v111, %v326
  %v328 = vpop.f32.mrb[0].mxu0
  %v329 = vadd.f32 %v115, %v328
  %330 = vmatprep.mubr.bf16.mxu0 0
  %331 = vmatmul.mubr.bf16.gmra.mrb[0].mxu0 %v104
  %v332 = vpop.f32.mrb[0].mxu0
  %v333 = vadd.f32 %v111, %v332
  %v334 = vpop.f32.mrb[0].mxu0
  %v335 = vadd.f32 %v115, %v334
  %v336 = vpop.f32.mrb[0].mxu0
  %v337 = vadd.f32 %v111, %v336
  %v338 = vpop.f32.mrb[0].mxu0
  %v339 = vadd.f32 %v115, %v338
  %340 = vmatprep.mubr.bf16.mxu0 0
  %341 = vmatmul.mubr.bf16.gmra.mrb[0].mxu0 %v105
  %v342 = vpop.f32.mrb[0].mxu0
  %v343 = vadd.f32 %v111, %v342
  %v344 = vpop.f32.mrb[0].mxu0
  %v345 = vadd.f32 %v115, %v344
  %v346 = vpop.f32.mrb[0].mxu0
  %v347 = vadd.f32 %v111, %v346
  %v348 = vpop.f32.mrb[0].mxu0
  %v349 = vadd.f32 %v115, %v348
  %350 = vmatprep.mubr.bf16.mxu0 0
  %351 = vmatmul.mubr.bf16.gmra.mrb[0].mxu0 %v106
  %v352 = vpop.f32.mrb[0].mxu0
  %v353 = vadd.f32 %v111, %v352
  %v354 = vpop.f32.mrb[0].mxu0
  %v355 = vadd.f32 %v115, %v354
  %v356 = vpop.f32.mrb[0].mxu0
  %v357 = vadd.f32 %v111, %v356
  %v358 = vpop.f32.mrb[0].mxu0
  %v359 = vadd.f32 %v115, %v358
  %360 = vdwg.mxu0
  %361 = vmatprep.subr.bf16.mxu0 %v227
  %362 = vmatpush1.bf16.msra.mxu0 %v226
  %363 = vmatprep.subr.bf16.mxu0 %v231
  %364 = vmatpush1.bf16.msra.mxu0 %v230
  %365 = vmatprep.subr.bf16.mxu0 %v235
  %366 = vmatpush1.bf16.msra.mxu0 %v234
  %367 = vmatprep.subr.bf16.mxu0 %v239
  %368 = vmatpush1.bf16.msra.mxu0 %v238
  %369 = vmatprep.subr.bf16.mxu0 %v243
  %370 = vmatpush1.bf16.msra.mxu0 %v242
  %371 = vmatprep.subr.bf16.mxu0 %v247
  %372 = vmatpush1.bf16.msra.mxu0 %v246
  %373 = vmatprep.subr.bf16.mxu0 %v251
  %374 = vmatpush1.bf16.msra.mxu0 %v250
  %375 = vmatprep.subr.bf16.mxu0 %v255
  %376 = vmatpush1.bf16.msra.mxu0 %v254
  %377 = vmatprep.subr.bf16.mxu0 0
  %378 = vmatpush1.bf16.msra.mxu0 0
  %379 = vmatprep.subr.bf16.mxu0 0
  %380 = vmatpush1.bf16.msra.mxu0 0
  %381 = vmatprep.subr.bf16.mxu0 0
  %382 = vmatpush1.bf16.msra.mxu0 0
  %383 = vmatprep.subr.bf16.mxu0 0
  %384 = vmatpush1.bf16.msra.mxu0 0
  %385 = vmatprep.subr.bf16.mxu0 0
  %386 = vmatpush1.bf16.msra.mxu0 0
  %387 = vmatprep.subr.bf16.mxu0 0
  %388 = vmatpush1.bf16.msra.mxu0 0
  %389 = vmatprep.subr.bf16.mxu0 0
  %390 = vmatpush1.bf16.msra.mxu0 0
  %391 = vmatprep.subr.bf16.mxu0 0
  %392 = vmatpush1.bf16.msra.mxu0 0
  %393 = vmatprep.mubr.bf16.mxu0 0
  %394 = vmatmul.mubr.bf16.gmra.mrb[0].mxu0 %v103
  %v395 = vpop.f32.mrb[0].mxu0
  %v396 = vadd.f32 %v119, %v395
  %v397 = vpop.f32.mrb[0].mxu0
  %v398 = vadd.f32 %v123, %v397
  %v399 = vpop.f32.mrb[0].mxu0
  %v400 = vadd.f32 %v119, %v399
  %v401 = vpop.f32.mrb[0].mxu0
  %v402 = vadd.f32 %v123, %v401
  %403 = vmatprep.mubr.bf16.mxu0 0
  %404 = vmatmul.mubr.bf16.gmra.mrb[0].mxu0 %v104
  %v405 = vpop.f32.mrb[0].mxu0
  %v406 = vadd.f32 %v119, %v405
  %v407 = vpop.f32.mrb[0].mxu0
  %v408 = vadd.f32 %v123, %v407
  %v409 = vpop.f32.mrb[0].mxu0
  %v410 = vadd.f32 %v119, %v409
  %v411 = vpop.f32.mrb[0].mxu0
  %v412 = vadd.f32 %v123, %v411
  %413 = vmatprep.mubr.bf16.mxu0 0
  %414 = vmatmul.mubr.bf16.gmra.mrb[0].mxu0 %v105
  %v415 = vpop.f32.mrb[0].mxu0
  %v416 = vadd.f32 %v119, %v415
  %v417 = vpop.f32.mrb[0].mxu0
  %v418 = vadd.f32 %v123, %v417
  %v419 = vpop.f32.mrb[0].mxu0
  %v420 = vadd.f32 %v119, %v419
  %v421 = vpop.f32.mrb[0].mxu0
  %v422 = vadd.f32 %v123, %v421
  %423 = vmatprep.mubr.bf16.mxu0 0
  %424 = vmatmul.mubr.bf16.gmra.mrb[0].mxu0 %v106
  %v425 = vpop.f32.mrb[0].mxu0
  %v426 = vadd.f32 %v119, %v425
  %v427 = vpop.f32.mrb[0].mxu0
  %v428 = vadd.f32 %v123, %v427
  %v429 = vpop.f32.mrb[0].mxu0
  %v430 = vadd.f32 %v119, %v429
  %v431 = vpop.f32.mrb[0].mxu0
  %v432 = vadd.f32 %v123, %v431
  %433 = vdwg.mxu0
  %v434 = vld [vmem:[#allocation2] sm:$0xff]
  %v435 = vld [vmem:[#allocation3] sm:$0xff]
  %v436 = vpack.c.bf16 %v434, %v434
  %v469 = vunpack.c.l.b16 %v62
  %v470 = vunpack.c.h.b16 %v62
  %v471 = vunpack.c.l.b16 %v63
  %v472 = vunpack.c.h.b16 %v63
  %v473 = vunpack.c.l.b16 %v64
  %v474 = vunpack.c.h.b16 %v64
  %v475 = vunpack.c.l.b16 %v65
  %v476 = vunpack.c.h.b16 %v65
  %v477 = vunpack.c.l.b16 %v66
  %v478 = vunpack.c.h.b16 %v66
  %v479 = vunpack.c.l.b16 %v67
  %v480 = vunpack.c.h.b16 %v67
  %v481 = vunpack.c.l.b16 %v68
  %v482 = vunpack.c.h.b16 %v68
  %v483 = vunpack.c.l.b16 %v69
  %v484 = vunpack.c.h.b16 %v69
  %v485 = vunpack.c.l.b16 %v70
  %v486 = vunpack.c.h.b16 %v70
  %v487 = vunpack.c.l.b16 %v71
  %v488 = vunpack.c.h.b16 %v71
  %v489 = vunpack.c.l.b16 %v72
  %v490 = vunpack.c.h.b16 %v72
  %v491 = vunpack.c.l.b16 %v73
  %v492 = vunpack.c.h.b16 %v73
  %v493 = vunpack.c.l.b16 %v74
  %v494 = vunpack.c.h.b16 %v74
  %v495 = vunpack.c.l.b16 %v75
  %v496 = vunpack.c.h.b16 %v75
  %v497 = vunpack.c.l.b16 %v76
  %v498 = vunpack.c.h.b16 %v76
  %v499 = vunpack.c.l.b16 %v77
  %v500 = vunpack.c.h.b16 %v77
  %v501 = vunpack.c.l.b16 %v78
  %v502 = vunpack.c.h.b16 %v78
  %v503 = vunpack.c.l.b16 %v79
  %v504 = vunpack.c.h.b16 %v79
  %v505 = vunpack.c.l.b16 %v80
  %v506 = vunpack.c.h.b16 %v80
  %v507 = vunpack.c.l.b16 %v81
  %v508 = vunpack.c.h.b16 %v81
  %v509 = vunpack.c.l.b16 %v82
  %v510 = vunpack.c.h.b16 %v82
  %v511 = vunpack.c.l.b16 %v83
  %v512 = vunpack.c.h.b16 %v83
  %v513 = vunpack.c.l.b16 %v84
  %v514 = vunpack.c.h.b16 %v84
  %v515 = vunpack.c.l.b16 %v85
  %v516 = vunpack.c.h.b16 %v85
  %v517 = vunpack.c.l.b16 %v86
  %v518 = vunpack.c.h.b16 %v86
  %v519 = vunpack.c.l.b16 %v87
  %v520 = vunpack.c.h.b16 %v87
  %v521 = vunpack.c.l.b16 %v88
  %v522 = vunpack.c.h.b16 %v88
  %v523 = vunpack.c.l.b16 %v89
  %v524 = vunpack.c.h.b16 %v89
  %v525 = vunpack.c.l.b16 %v90
  %v526 = vunpack.c.h.b16 %v90
  %v527 = vunpack.c.l.b16 %v91
  %v528 = vunpack.c.h.b16 %v91
  %v529 = vunpack.c.l.b16 %v92
  %v530 = vunpack.c.h.b16 %v92
  %v531 = vunpack.c.l.b16 %v93
  %v532 = vunpack.c.h.b16 %v93
  %v533 = vpack.c.b16 %v473, %v469
  %v534 = vpack.c.b16 %v474, %v470
  %v535 = vpack.c.b16 %v475, %v471
  %v536 = vpack.c.b16 %v476, %v472
  %v537 = vpack.c.b16 %v481, %v477
  %v538 = vpack.c.b16 %v482, %v478
  %v539 = vpack.c.b16 %v483, %v479
  %v540 = vpack.c.b16 %v484, %v480
  %v541 = vpack.c.b16 %v489, %v485
  %v542 = vpack.c.b16 %v490, %v486
  %v543 = vpack.c.b16 %v491, %v487
  %v544 = vpack.c.b16 %v492, %v488
  %v545 = vpack.c.b16 %v497, %v493
  %v546 = vpack.c.b16 %v498, %v494
  %v547 = vpack.c.b16 %v499, %v495
  %v548 = vpack.c.b16 %v500, %v496
  %v549 = vpack.c.b16 %v505, %v501
  %v550 = vpack.c.b16 %v506, %v502
  %v551 = vpack.c.b16 %v507, %v503
  %v552 = vpack.c.b16 %v508, %v504
  %v553 = vpack.c.b16 %v513, %v509
  %v554 = vpack.c.b16 %v514, %v510
  %v555 = vpack.c.b16 %v515, %v511
  %v556 = vpack.c.b16 %v516, %v512
  %v557 = vpack.c.b16 %v521, %v517
  %v558 = vpack.c.b16 %v522, %v518
  %v559 = vpack.c.b16 %v523, %v519
  %v560 = vpack.c.b16 %v524, %v520
  %v561 = vpack.c.b16 %v529, %v525
  %v562 = vpack.c.b16 %v530, %v526
  %v563 = vpack.c.b16 %v531, %v527
  %v564 = vpack.c.b16 %v532, %v528
  %597 = vmatprep.subr.bf16.mxu0 %v534
  %598 = vmatpush1.bf16.msra.mxu0 %v533
  %599 = vmatprep.subr.bf16.mxu0 %v538
  %600 = vmatpush1.bf16.msra.mxu0 %v537
  %601 = vmatprep.subr.bf16.mxu0 %v542
  %602 = vmatpush1.bf16.msra.mxu0 %v541
  %603 = vmatprep.subr.bf16.mxu0 %v546
  %604 = vmatpush1.bf16.msra.mxu0 %v545
  %605 = vmatprep.subr.bf16.mxu0 %v550
  %606 = vmatpush1.bf16.msra.mxu0 %v549
  %607 = vmatprep.subr.bf16.mxu0 %v554
  %608 = vmatpush1.bf16.msra.mxu0 %v553
  %609 = vmatprep.subr.bf16.mxu0 %v558
  %610 = vmatpush1.bf16.msra.mxu0 %v557
  %611 = vmatprep.subr.bf16.mxu0 %v562
  %612 = vmatpush1.bf16.msra.mxu0 %v561
  %613 = vmatprep.subr.bf16.mxu0 0
  %614 = vmatpush1.bf16.msra.mxu0 0
  %615 = vmatprep.subr.bf16.mxu0 0
  %616 = vmatpush1.bf16.msra.mxu0 0
  %617 = vmatprep.subr.bf16.mxu0 0
  %618 = vmatpush1.bf16.msra.mxu0 0
  %619 = vmatprep.subr.bf16.mxu0 0
  %620 = vmatpush1.bf16.msra.mxu0 0
  %621 = vmatprep.subr.bf16.mxu0 0
  %622 = vmatpush1.bf16.msra.mxu0 0
  %623 = vmatprep.subr.bf16.mxu0 0
  %624 = vmatpush1.bf16.msra.mxu0 0
  %625 = vmatprep.subr.bf16.mxu0 0
  %626 = vmatpush1.bf16.msra.mxu0 0
  %627 = vmatprep.subr.bf16.mxu0 0
  %628 = vmatpush1.bf16.msra.mxu0 0
  %629 = vmatprep.mubr.bf16.mxu0 0
  %630 = vmatmul.mubr.bf16.gmra.mrb[0].mxu0 %v436
  %v631 = vpop.f32.mrb[0].mxu0
  %v632 = vadd.f32 0.0, %v631
  %v633 = vpop.f32.mrb[0].mxu0
  %v634 = vadd.f32 0.0, %v633
  %v635 = vpop.f32.mrb[0].mxu0
  %v636 = vpop.f32.mrb[0].mxu0
  %637 = vdwg.mxu0
  %638 = vmatprep.subr.bf16.mxu0 %v536
  %639 = vmatpush1.bf16.msra.mxu0 %v535
  %640 = vmatprep.subr.bf16.mxu0 %v540
  %641 = vmatpush1.bf16.msra.mxu0 %v539
  %642 = vmatprep.subr.bf16.mxu0 %v544
  %643 = vmatpush1.bf16.msra.mxu0 %v543
  %644 = vmatprep.subr.bf16.mxu0 %v548
  %645 = vmatpush1.bf16.msra.mxu0 %v547
  %646 = vmatprep.subr.bf16.mxu0 %v552
  %647 = vmatpush1.bf16.msra.mxu0 %v551
  %648 = vmatprep.subr.bf16.mxu0 %v556
  %649 = vmatpush1.bf16.msra.mxu0 %v555
  %650 = vmatprep.subr.bf16.mxu0 %v560
  %651 = vmatpush1.bf16.msra.mxu0 %v559
  %652 = vmatprep.subr.bf16.mxu0 %v564
  %653 = vmatpush1.bf16.msra.mxu0 %v563
  %654 = vmatprep.subr.bf16.mxu0 0
  %655 = vmatpush1.bf16.msra.mxu0 0
  %656 = vmatprep.subr.bf16.mxu0 0
  %657 = vmatpush1.bf16.msra.mxu0 0
  %658 = vmatprep.subr.bf16.mxu0 0
  %659 = vmatpush1.bf16.msra.mxu0 0
  %660 = vmatprep.subr.bf16.mxu0 0
  %661 = vmatpush1.bf16.msra.mxu0 0
  %662 = vmatprep.subr.bf16.mxu0 0
  %663 = vmatpush1.bf16.msra.mxu0 0
  %664 = vmatprep.subr.bf16.mxu0 0
  %665 = vmatpush1.bf16.msra.mxu0 0
  %666 = vmatprep.subr.bf16.mxu0 0
  %667 = vmatpush1.bf16.msra.mxu0 0
  %668 = vmatprep.subr.bf16.mxu0 0
  %669 = vmatpush1.bf16.msra.mxu0 0
  %670 = vmatprep.mubr.bf16.mxu0 0
  %671 = vmatmul.mubr.bf16.gmra.mrb[0].mxu0 %v436
  %v672 = vpop.f32.mrb[0].mxu0
  %v673 = vadd.f32 0.0, %v672
  %v674 = vpop.f32.mrb[0].mxu0
  %v675 = vadd.f32 0.0, %v674
  %v676 = vpop.f32.mrb[0].mxu0
  %v677 = vpop.f32.mrb[0].mxu0
  %678 = vdwg.mxu0
  %v679 = vadd.f32 %v323, %v632
  %v680 = vadd.f32 %v325, %v634
  %v681 = vadd.f32 %v396, %v673
  %v682 = vadd.f32 %v398, %v675
  %v683 = vmul.f32 %v679, 0.5
  %v684 = vtanh.pop %v683
  %v685 = vmul.f32 %v684, 0.5
  %v686 = vadd.f32 %v685, 0.5
  %v687 = vmul.f32 %v680, 0.5
  %v688 = vtanh.pop %v687
  %v689 = vmul.f32 %v688, 0.5
  %v690 = vadd.f32 %v689, 0.5
  %v691 = vtanh.pop %v681
  %v692 = vmul.f32 %v682, 0.5
  %v693 = vtanh.pop %v692
  %v694 = vmul.f32 %v693, 0.5
  %v695 = vadd.f32 %v694, 0.5
  %v696 = vmul.f32 %v690, %v435
  %v697 = vmul.f32 %v686, %v691
  %v698 = vadd.f32 %v696, %v697
  %v699 = vtanh.pop %v698
  %v700 = vmul.f32 %v695, %v699
  %v701 = vpack.c.bf16 %v700, %v700
  %702 = vmatprep.subr.bf16.mxu0 %v534
  %703 = vmatpush1.bf16.msra.mxu0 %v533
  %704 = vmatprep.subr.bf16.mxu0 %v538
  %705 = vmatpush1.bf16.msra.mxu0 %v537
  %706 = vmatprep.subr.bf16.mxu0 %v542
  %707 = vmatpush1.bf16.msra.mxu0 %v541
  %708 = vmatprep.subr.bf16.mxu0 %v546
  %709 = vmatpush1.bf16.msra.mxu0 %v545
  %710 = vmatprep.subr.bf16.mxu0 %v550
  %711 = vmatpush1.bf16.msra.mxu0 %v549
  %712 = vmatprep.subr.bf16.mxu0 %v554
  %713 = vmatpush1.bf16.msra.mxu0 %v553
  %714 = vmatprep.subr.bf16.mxu0 %v558
  %715 = vmatpush1.bf16.msra.mxu0 %v557
  %716 = vmatprep.subr.bf16.mxu0 %v562
  %717 = vmatpush1.bf16.msra.mxu0 %v561
  %718 = vmatprep.subr.bf16.mxu0 0
  %719 = vmatpush1.bf16.msra.mxu0 0
  %720 = vmatprep.subr.bf16.mxu0 0
  %721 = vmatpush1.bf16.msra.mxu0 0
  %722 = vmatprep.subr.bf16.mxu0 0
  %723 = vmatpush1.bf16.msra.mxu0 0
  %724 = vmatprep.subr.bf16.mxu0 0
  %725 = vmatpush1.bf16.msra.mxu0 0
  %726 = vmatprep.subr.bf16.mxu0 0
  %727 = vmatpush1.bf16.msra.mxu0 0
  %728 = vmatprep.subr.bf16.mxu0 0
  %729 = vmatpush1.bf16.msra.mxu0 0
  %730 = vmatprep.subr.bf16.mxu0 0
  %731 = vmatpush1.bf16.msra.mxu0 0
  %732 = vmatprep.subr.bf16.mxu0 0
  %733 = vmatpush1.bf16.msra.mxu0 0
  %734 = vmatprep.mubr.bf16.mxu0 0
  %735 = vmatmul.mubr.bf16.gmra.mrb[0].mxu0 %v701
  %v736 = vpop.f32.mrb[0].mxu0
  %v737 = vadd.f32 0.0, %v736
  %v738 = vpop.f32.mrb[0].mxu0
  %v739 = vadd.f32 0.0, %v738
  %v740 = vpop.f32.mrb[0].mxu0
  %v741 = vpop.f32.mrb[0].mxu0
  %742 = vdwg.mxu0
  %743 = vmatprep.subr.bf16.mxu0 %v536
  %744 = vmatpush1.bf16.msra.mxu0 %v535
  %745 = vmatprep.subr.bf16.mxu0 %v540
  %746 = vmatpush1.bf16.msra.mxu0 %v539
  %747 = vmatprep.subr.bf16.mxu0 %v544
  %748 = vmatpush1.bf16.msra.mxu0 %v543
  %749 = vmatprep.subr.bf16.mxu0 %v548
  %750 = vmatpush1.bf16.msra.mxu0 %v547
  %751 = vmatprep.subr.bf16.mxu0 %v552
  %752 = vmatpush1.bf16.msra.mxu0 %v551
  %753 = vmatprep.subr.bf16.mxu0 %v556
  %754 = vmatpush1.bf16.msra.mxu0 %v555
  %755 = vmatprep.subr.bf16.mxu0 %v560
  %756 = vmatpush1.bf16.msra.mxu0 %v559
  %757 = vmatprep.subr.bf16.mxu0 %v564
  %758 = vmatpush1.bf16.msra.mxu0 %v563
  %759 = vmatprep.subr.bf16.mxu0 0
  %760 = vmatpush1.bf16.msra.mxu0 0
  %761 = vmatprep.subr.bf16.mxu0 0
  %762 = vmatpush1.bf16.msra.mxu0 0
  %763 = vmatprep.subr.bf16.mxu0 0
  %764 = vmatpush1.bf16.msra.mxu0 0
  %765 = vmatprep.subr.bf16.mxu0 0
  %766 = vmatpush1.bf16.msra.mxu0 0
  %767 = vmatprep.subr.bf16.mxu0 0
  %768 = vmatpush1.bf16.msra.mxu0 0
  %769 = vmatprep.subr.bf16.mxu0 0
  %770 = vmatpush1.bf16.msra.mxu0 0
  %771 = vmatprep.subr.bf16.mxu0 0
  %772 = vmatpush1.bf16.msra.mxu0 0
  %773 = vmatprep.subr.bf16.mxu0 0
  %774 = vmatpush1.bf16.msra.mxu0 0
  %775 = vmatprep.mubr.bf16.mxu0 0
  %776 = vmatmul.mubr.bf16.gmra.mrb[0].mxu0 %v701
  %v777 = vpop.f32.mrb[0].mxu0
  %v778 = vadd.f32 0.0, %v777
  %v779 = vpop.f32.mrb[0].mxu0
  %v780 = vadd.f32 0.0, %v779
  %v781 = vpop.f32.mrb[0].mxu0
  %v782 = vpop.f32.mrb[0].mxu0
  %783 = vdwg.mxu0
  %v784 = vadd.f32 %v327, %v737
  %v785 = vadd.f32 %v329, %v739
  %v786 = vadd.f32 %v400, %v778
  %v787 = vadd.f32 %v402, %v780
  %v788 = vmul.f32 %v784, 0.5
  %v789 = vtanh.pop %v788
  %v790 = vmul.f32 %v789, 0.5
  %v791 = vadd.f32 %v790, 0.5
  %v792 = vmul.f32 %v785, 0.5
  %v793 = vtanh.pop %v792
  %v794 = vmul.f32 %v793, 0.5
  %v795 = vadd.f32 %v794, 0.5
  %v796 = vtanh.pop %v786
  %v797 = vmul.f32 %v787, 0.5
  %v798 = vtanh.pop %v797
  %v799 = vmul.f32 %v798, 0.5
  %v800 = vadd.f32 %v799, 0.5
  %v801 = vmul.f32 %v795, %v698
  %v802 = vmul.f32 %v791, %v796
  %v803 = vadd.f32 %v801, %v802
  %v804 = vtanh.pop %v803
  %v805 = vmul.f32 %v800, %v804
  %v806 = vpack.c.bf16 %v805, %v805
  %807 = vmatprep.subr.bf16.mxu0 %v534
  %808 = vmatpush1.bf16.msra.mxu0 %v533
  %809 = vmatprep.subr.bf16.mxu0 %v538
  %810 = vmatpush1.bf16.msra.mxu0 %v537
  %811 = vmatprep.subr.bf16.mxu0 %v542
  %812 = vmatpush1.bf16.msra.mxu0 %v541
  %813 = vmatprep.subr.bf16.mxu0 %v546
  %814 = vmatpush1.bf16.msra.mxu0 %v545
  %815 = vmatprep.subr.bf16.mxu0 %v550
  %816 = vmatpush1.bf16.msra.mxu0 %v549
  %817 = vmatprep.subr.bf16.mxu0 %v554
  %818 = vmatpush1.bf16.msra.mxu0 %v553
  %819 = vmatprep.subr.bf16.mxu0 %v558
  %820 = vmatpush1.bf16.msra.mxu0 %v557
  %821 = vmatprep.subr.bf16.mxu0 %v562
  %822 = vmatpush1.bf16.msra.mxu0 %v561
  %823 = vmatprep.subr.bf16.mxu0 0
  %824 = vmatpush1.bf16.msra.mxu0 0
  %825 = vmatprep.subr.bf16.mxu0 0
  %826 = vmatpush1.bf16.msra.mxu0 0
  %827 = vmatprep.subr.bf16.mxu0 0
  %828 = vmatpush1.bf16.msra.mxu0 0
  %829 = vmatprep.subr.bf16.mxu0 0
  %830 = vmatpush1.bf16.msra.mxu0 0
  %831 = vmatprep.subr.bf16.mxu0 0
  %832 = vmatpush1.bf16.msra.mxu0 0
  %833 = vmatprep.subr.bf16.mxu0 0
  %834 = vmatpush1.bf16.msra.mxu0 0
  %835 = vmatprep.subr.bf16.mxu0 0
  %836 = vmatpush1.bf16.msra.mxu0 0
  %837 = vmatprep.subr.bf16.mxu0 0
  %838 = vmatpush1.bf16.msra.mxu0 0
  %839 = vmatprep.mubr.bf16.mxu0 0
  %840 = vmatmul.mubr.bf16.gmra.mrb[0].mxu0 %v806
  %v841 = vpop.f32.mrb[0].mxu0
  %v842 = vadd.f32 0.0, %v841
  %v843 = vpop.f32.mrb[0].mxu0
  %v844 = vadd.f32 0.0, %v843
  %v845 = vpop.f32.mrb[0].mxu0
  %v846 = vpop.f32.mrb[0].mxu0
  %847 = vdwg.mxu0
  %848 = vmatprep.subr.bf16.mxu0 %v536
  %849 = vmatpush1.bf16.msra.mxu0 %v535
  %850 = vmatprep.subr.bf16.mxu0 %v540
  %851 = vmatpush1.bf16.msra.mxu0 %v539
  %852 = vmatprep.subr.bf16.mxu0 %v544
  %853 = vmatpush1.bf16.msra.mxu0 %v543
  %854 = vmatprep.subr.bf16.mxu0 %v548
  %855 = vmatpush1.bf16.msra.mxu0 %v547
  %856 = vmatprep.subr.bf16.mxu0 %v552
  %857 = vmatpush1.bf16.msra.mxu0 %v551
  %858 = vmatprep.subr.bf16.mxu0 %v556
  %859 = vmatpush1.bf16.msra.mxu0 %v555
  %860 = vmatprep.subr.bf16.mxu0 %v560
  %861 = vmatpush1.bf16.msra.mxu0 %v559
  %862 = vmatprep.subr.bf16.mxu0 %v564
  %863 = vmatpush1.bf16.msra.mxu0 %v563
  %864 = vmatprep.subr.bf16.mxu0 0
  %865 = vmatpush1.bf16.msra.mxu0 0
  %866 = vmatprep.subr.bf16.mxu0 0
  %867 = vmatpush1.bf16.msra.mxu0 0
  %868 = vmatprep.subr.bf16.mxu0 0
  %869 = vmatpush1.bf16.msra.mxu0 0
  %870 = vmatprep.subr.bf16.mxu0 0
  %871 = vmatpush1.bf16.msra.mxu0 0
  %872 = vmatprep.subr.bf16.mxu0 0
  %873 = vmatpush1.bf16.msra.mxu0 0
  %874 = vmatprep.subr.bf16.mxu0 0
  %875 = vmatpush1.bf16.msra.mxu0 0
  %876 = vmatprep.subr.bf16.mxu0 0
  %877 = vmatpush1.bf16.msra.mxu0 0
  %878 = vmatprep.subr.bf16.mxu0 0
  %879 = vmatpush1.bf16.msra.mxu0 0
  %880 = vmatprep.mubr.bf16.mxu0 0
  %881 = vmatmul.mubr.bf16.gmra.mrb[0].mxu0 %v806
  %v882 = vpop.f32.mrb[0].mxu0
  %v883 = vadd.f32 0.0, %v882
  %v884 = vpop.f32.mrb[0].mxu0
  %v885 = vadd.f32 0.0, %v884
  %v886 = vpop.f32.mrb[0].mxu0
  %v887 = vpop.f32.mrb[0].mxu0
  %888 = vdwg.mxu0
  %v889 = vadd.f32 %v333, %v842
  %v890 = vadd.f32 %v335, %v844
  %v891 = vadd.f32 %v406, %v883
  %v892 = vadd.f32 %v408, %v885
  %v893 = vmul.f32 %v889, 0.5
  %v894 = vtanh.pop %v893
  %v895 = vmul.f32 %v894, 0.5
  %v896 = vadd.f32 %v895, 0.5
  %v897 = vmul.f32 %v890, 0.5
  %v898 = vtanh.pop %v897
  %v899 = vmul.f32 %v898, 0.5
  %v900 = vadd.f32 %v899, 0.5
  %v901 = vtanh.pop %v891
  %v902 = vmul.f32 %v892, 0.5
  %v903 = vtanh.pop %v902
  %v904 = vmul.f32 %v903, 0.5
  %v905 = vadd.f32 %v904, 0.5
  %v906 = vmul.f32 %v900, %v803
  %v907 = vmul.f32 %v896, %v901
  %v908 = vadd.f32 %v906, %v907
  %v909 = vtanh.pop %v908
  %v910 = vmul.f32 %v905, %v909
  %v911 = vpack.c.bf16 %v910, %v910
  %912 = vmatprep.subr.bf16.mxu0 %v534
  %913 = vmatpush1.bf16.msra.mxu0 %v533
  %914 = vmatprep.subr.bf16.mxu0 %v538
  %915 = vmatpush1.bf16.msra.mxu0 %v537
  %916 = vmatprep.subr.bf16.mxu0 %v542
  %917 = vmatpush1.bf16.msra.mxu0 %v541
  %918 = vmatprep.subr.bf16.mxu0 %v546
  %919 = vmatpush1.bf16.msra.mxu0 %v545
  %920 = vmatprep.subr.bf16.mxu0 %v550
  %921 = vmatpush1.bf16.msra.mxu0 %v549
  %922 = vmatprep.subr.bf16.mxu0 %v554
  %923 = vmatpush1.bf16.msra.mxu0 %v553
  %924 = vmatprep.subr.bf16.mxu0 %v558
  %925 = vmatpush1.bf16.msra.mxu0 %v557
  %926 = vmatprep.subr.bf16.mxu0 %v562
  %927 = vmatpush1.bf16.msra.mxu0 %v561
  %928 = vmatprep.subr.bf16.mxu0 0
  %929 = vmatpush1.bf16.msra.mxu0 0
  %930 = vmatprep.subr.bf16.mxu0 0
  %931 = vmatpush1.bf16.msra.mxu0 0
  %932 = vmatprep.subr.bf16.mxu0 0
  %933 = vmatpush1.bf16.msra.mxu0 0
  %934 = vmatprep.subr.bf16.mxu0 0
  %935 = vmatpush1.bf16.msra.mxu0 0
  %936 = vmatprep.subr.bf16.mxu0 0
  %937 = vmatpush1.bf16.msra.mxu0 0
  %938 = vmatprep.subr.bf16.mxu0 0
  %939 = vmatpush1.bf16.msra.mxu0 0
  %940 = vmatprep.subr.bf16.mxu0 0
  %941 = vmatpush1.bf16.msra.mxu0 0
  %942 = vmatprep.subr.bf16.mxu0 0
  %943 = vmatpush1.bf16.msra.mxu0 0
  %944 = vmatprep.mubr.bf16.mxu0 0
  %945 = vmatmul.mubr.bf16.gmra.mrb[0].mxu0 %v911
  %v946 = vpop.f32.mrb[0].mxu0
  %v947 = vadd.f32 0.0, %v946
  %v948 = vpop.f32.mrb[0].mxu0
  %v949 = vadd.f32 0.0, %v948
  %v950 = vpop.f32.mrb[0].mxu0
  %v951 = vpop.f32.mrb[0].mxu0
  %952 = vdwg.mxu0
  %953 = vmatprep.subr.bf16.mxu0 %v536
  %954 = vmatpush1.bf16.msra.mxu0 %v535
  %955 = vmatprep.subr.bf16.mxu0 %v540
  %956 = vmatpush1.bf16.msra.mxu0 %v539
  %957 = vmatprep.subr.bf16.mxu0 %v544
  %958 = vmatpush1.bf16.msra.mxu0 %v543
  %959 = vmatprep.subr.bf16.mxu0 %v548
  %960 = vmatpush1.bf16.msra.mxu0 %v547
  %961 = vmatprep.subr.bf16.mxu0 %v552
  %962 = vmatpush1.bf16.msra.mxu0 %v551
  %963 = vmatprep.subr.bf16.mxu0 %v556
  %964 = vmatpush1.bf16.msra.mxu0 %v555
  %965 = vmatprep.subr.bf16.mxu0 %v560
  %966 = vmatpush1.bf16.msra.mxu0 %v559
  %967 = vmatprep.subr.bf16.mxu0 %v564
  %968 = vmatpush1.bf16.msra.mxu0 %v563
  %969 = vmatprep.subr.bf16.mxu0 0
  %970 = vmatpush1.bf16.msra.mxu0 0
  %971 = vmatprep.subr.bf16.mxu0 0
  %972 = vmatpush1.bf16.msra.mxu0 0
  %973 = vmatprep.subr.bf16.mxu0 0
  %974 = vmatpush1.bf16.msra.mxu0 0
  %975 = vmatprep.subr.bf16.mxu0 0
  %976 = vmatpush1.bf16.msra.mxu0 0
  %977 = vmatprep.subr.bf16.mxu0 0
  %978 = vmatpush1.bf16.msra.mxu0 0
  %979 = vmatprep.subr.bf16.mxu0 0
  %980 = vmatpush1.bf16.msra.mxu0 0
  %981 = vmatprep.subr.bf16.mxu0 0
  %982 = vmatpush1.bf16.msra.mxu0 0
  %983 = vmatprep.subr.bf16.mxu0 0
  %984 = vmatpush1.bf16.msra.mxu0 0
  %985 = vmatprep.mubr.bf16.mxu0 0
  %986 = vmatmul.mubr.bf16.gmra.mrb[0].mxu0 %v911
  %v987 = vpop.f32.mrb[0].mxu0
  %v988 = vadd.f32 0.0, %v987
  %v989 = vpop.f32.mrb[0].mxu0
  %v990 = vadd.f32 0.0, %v989
  %v991 = vpop.f32.mrb[0].mxu0
  %v992 = vpop.f32.mrb[0].mxu0
  %993 = vdwg.mxu0
  %v994 = vadd.f32 %v337, %v947
  %v995 = vadd.f32 %v339, %v949
  %v996 = vadd.f32 %v410, %v988
  %v997 = vadd.f32 %v412, %v990
  %v998 = vmul.f32 %v994, 0.5
  %v999 = vtanh.pop %v998
  %v1000 = vmul.f32 %v999, 0.5
  %v1001 = vadd.f32 %v1000, 0.5
  %v1002 = vmul.f32 %v995, 0.5
  %v1003 = vtanh.pop %v1002
  %v1004 = vmul.f32 %v1003, 0.5
  %v1005 = vadd.f32 %v1004, 0.5
  %v1006 = vtanh.pop %v996
  %v1007 = vmul.f32 %v997, 0.5
  %v1008 = vtanh.pop %v1007
  %v1009 = vmul.f32 %v1008, 0.5
  %v1010 = vadd.f32 %v1009, 0.5
  %v1011 = vmul.f32 %v1005, %v908
  %v1012 = vmul.f32 %v1001, %v1006
  %v1013 = vadd.f32 %v1011, %v1012
  %v1014 = vtanh.pop %v1013
  %v1015 = vmul.f32 %v1010, %v1014
  %v1016 = vpack.c.bf16 %v1015, %v1015
  %1017 = vmatprep.subr.bf16.mxu0 %v534
  %1018 = vmatpush1.bf16.msra.mxu0 %v533
  %1019 = vmatprep.subr.bf16.mxu0 %v538
  %1020 = vmatpush1.bf16.msra.mxu0 %v537
  %1021 = vmatprep.subr.bf16.mxu0 %v542
  %1022 = vmatpush1.bf16.msra.mxu0 %v541
  %1023 = vmatprep.subr.bf16.mxu0 %v546
  %1024 = vmatpush1.bf16.msra.mxu0 %v545
  %1025 = vmatprep.subr.bf16.mxu0 %v550
  %1026 = vmatpush1.bf16.msra.mxu0 %v549
  %1027 = vmatprep.subr.bf16.mxu0 %v554
  %1028 = vmatpush1.bf16.msra.mxu0 %v553
  %1029 = vmatprep.subr.bf16.mxu0 %v558
  %1030 = vmatpush1.bf16.msra.mxu0 %v557
  %1031 = vmatprep.subr.bf16.mxu0 %v562
  %1032 = vmatpush1.bf16.msra.mxu0 %v561
  %1033 = vmatprep.subr.bf16.mxu0 0
  %1034 = vmatpush1.bf16.msra.mxu0 0
  %1035 = vmatprep.subr.bf16.mxu0 0
  %1036 = vmatpush1.bf16.msra.mxu0 0
  %1037 = vmatprep.subr.bf16.mxu0 0
  %1038 = vmatpush1.bf16.msra.mxu0 0
  %1039 = vmatprep.subr.bf16.mxu0 0
  %1040 = vmatpush1.bf16.msra.mxu0 0
  %1041 = vmatprep.subr.bf16.mxu0 0
  %1042 = vmatpush1.bf16.msra.mxu0 0
  %1043 = vmatprep.subr.bf16.mxu0 0
  %1044 = vmatpush1.bf16.msra.mxu0 0
  %1045 = vmatprep.subr.bf16.mxu0 0
  %1046 = vmatpush1.bf16.msra.mxu0 0
  %1047 = vmatprep.subr.bf16.mxu0 0
  %1048 = vmatpush1.bf16.msra.mxu0 0
  %1049 = vmatprep.mubr.bf16.mxu0 0
  %1050 = vmatmul.mubr.bf16.gmra.mrb[0].mxu0 %v1016
  %v1051 = vpop.f32.mrb[0].mxu0
  %v1052 = vadd.f32 0.0, %v1051
  %v1053 = vpop.f32.mrb[0].mxu0
  %v1054 = vadd.f32 0.0, %v1053
  %v1055 = vpop.f32.mrb[0].mxu0
  %v1056 = vpop.f32.mrb[0].mxu0
  %1057 = vdwg.mxu0
  %1058 = vmatprep.subr.bf16.mxu0 %v536
  %1059 = vmatpush1.bf16.msra.mxu0 %v535
  %1060 = vmatprep.subr.bf16.mxu0 %v540
  %1061 = vmatpush1.bf16.msra.mxu0 %v539
  %1062 = vmatprep.subr.bf16.mxu0 %v544
  %1063 = vmatpush1.bf16.msra.mxu0 %v543
  %1064 = vmatprep.subr.bf16.mxu0 %v548
  %1065 = vmatpush1.bf16.msra.mxu0 %v547
  %1066 = vmatprep.subr.bf16.mxu0 %v552
  %1067 = vmatpush1.bf16.msra.mxu0 %v551
  %1068 = vmatprep.subr.bf16.mxu0 %v556
  %1069 = vmatpush1.bf16.msra.mxu0 %v555
  %1070 = vmatprep.subr.bf16.mxu0 %v560
  %1071 = vmatpush1.bf16.msra.mxu0 %v559
  %1072 = vmatprep.subr.bf16.mxu0 %v564
  %1073 = vmatpush1.bf16.msra.mxu0 %v563
  %1074 = vmatprep.subr.bf16.mxu0 0
  %1075 = vmatpush1.bf16.msra.mxu0 0
  %1076 = vmatprep.subr.bf16.mxu0 0
  %1077 = vmatpush1.bf16.msra.mxu0 0
  %1078 = vmatprep.subr.bf16.mxu0 0
  %1079 = vmatpush1.bf16.msra.mxu0 0
  %1080 = vmatprep.subr.bf16.mxu0 0
  %1081 = vmatpush1.bf16.msra.mxu0 0
  %1082 = vmatprep.subr.bf16.mxu0 0
  %1083 = vmatpush1.bf16.msra.mxu0 0
  %1084 = vmatprep.subr.bf16.mxu0 0
  %1085 = vmatpush1.bf16.msra.mxu0 0
  %1086 = vmatprep.subr.bf16.mxu0 0
  %1087 = vmatpush1.bf16.msra.mxu0 0
  %1088 = vmatprep.subr.bf16.mxu0 0
  %1089 = vmatpush1.bf16.msra.mxu0 0
  %1090 = vmatprep.mubr.bf16.mxu0 0
  %1091 = vmatmul.mubr.bf16.gmra.mrb[0].mxu0 %v1016
  %v1092 = vpop.f32.mrb[0].mxu0
  %v1093 = vadd.f32 0.0, %v1092
  %v1094 = vpop.f32.mrb[0].mxu0
  %v1095 = vadd.f32 0.0, %v1094
  %v1096 = vpop.f32.mrb[0].mxu0
  %v1097 = vpop.f32.mrb[0].mxu0
  %1098 = vdwg.mxu0
  %v1099 = vadd.f32 %v343, %v1052
  %v1100 = vadd.f32 %v345, %v1054
  %v1101 = vadd.f32 %v416, %v1093
  %v1102 = vadd.f32 %v418, %v1095
  %v1103 = vmul.f32 %v1099, 0.5
  %v1104 = vtanh.pop %v1103
  %v1105 = vmul.f32 %v1104, 0.5
  %v1106 = vadd.f32 %v1105, 0.5
  %v1107 = vmul.f32 %v1100, 0.5
  %v1108 = vtanh.pop %v1107
  %v1109 = vmul.f32 %v1108, 0.5
  %v1110 = vadd.f32 %v1109, 0.5
  %v1111 = vtanh.pop %v1101
  %v1112 = vmul.f32 %v1102, 0.5
  %v1113 = vtanh.pop %v1112
  %v1114 = vmul.f32 %v1113, 0.5
  %v1115 = vadd.f32 %v1114, 0.5
  %v1116 = vmul.f32 %v1110, %v1013
  %v1117 = vmul.f32 %v1106, %v1111
  %v1118 = vadd.f32 %v1116, %v1117
  %v1119 = vtanh.pop %v1118
  %v1120 = vmul.f32 %v1115, %v1119
  %v1121 = vpack.c.bf16 %v1120, %v1120
  %1122 = vmatprep.subr.bf16.mxu0 %v534
  %1123 = vmatpush1.bf16.msra.mxu0 %v533
  %1124 = vmatprep.subr.bf16.mxu0 %v538
  %1125 = vmatpush1.bf16.msra.mxu0 %v537
  %1126 = vmatprep.subr.bf16.mxu0 %v542
  %1127 = vmatpush1.bf16.msra.mxu0 %v541
  %1128 = vmatprep.subr.bf16.mxu0 %v546
  %1129 = vmatpush1.bf16.msra.mxu0 %v545
  %1130 = vmatprep.subr.bf16.mxu0 %v550
  %1131 = vmatpush1.bf16.msra.mxu0 %v549
  %1132 = vmatprep.subr.bf16.mxu0 %v554
  %1133 = vmatpush1.bf16.msra.mxu0 %v553
  %1134 = vmatprep.subr.bf16.mxu0 %v558
  %1135 = vmatpush1.bf16.msra.mxu0 %v557
  %1136 = vmatprep.subr.bf16.mxu0 %v562
  %1137 = vmatpush1.bf16.msra.mxu0 %v561
  %1138 = vmatprep.subr.bf16.mxu0 0
  %1139 = vmatpush1.bf16.msra.mxu0 0
  %1140 = vmatprep.subr.bf16.mxu0 0
  %1141 = vmatpush1.bf16.msra.mxu0 0
  %1142 = vmatprep.subr.bf16.mxu0 0
  %1143 = vmatpush1.bf16.msra.mxu0 0
  %1144 = vmatprep.subr.bf16.mxu0 0
  %1145 = vmatpush1.bf16.msra.mxu0 0
  %1146 = vmatprep.subr.bf16.mxu0 0
  %1147 = vmatpush1.bf16.msra.mxu0 0
  %1148 = vmatprep.subr.bf16.mxu0 0
  %1149 = vmatpush1.bf16.msra.mxu0 0
  %1150 = vmatprep.subr.bf16.mxu0 0
  %1151 = vmatpush1.bf16.msra.mxu0 0
  %1152 = vmatprep.subr.bf16.mxu0 0
  %1153 = vmatpush1.bf16.msra.mxu0 0
  %1154 = vmatprep.mubr.bf16.mxu0 0
  %1155 = vmatmul.mubr.bf16.gmra.mrb[0].mxu0 %v1121
  %v1156 = vpop.f32.mrb[0].mxu0
  %v1157 = vadd.f32 0.0, %v1156
  %v1158 = vpop.f32.mrb[0].mxu0
  %v1159 = vadd.f32 0.0, %v1158
  %v1160 = vpop.f32.mrb[0].mxu0
  %v1161 = vpop.f32.mrb[0].mxu0
  %1162 = vdwg.mxu0
  %1163 = vmatprep.subr.bf16.mxu0 %v536
  %1164 = vmatpush1.bf16.msra.mxu0 %v535
  %1165 = vmatprep.subr.bf16.mxu0 %v540
  %1166 = vmatpush1.bf16.msra.mxu0 %v539
  %1167 = vmatprep.subr.bf16.mxu0 %v544
  %1168 = vmatpush1.bf16.msra.mxu0 %v543
  %1169 = vmatprep.subr.bf16.mxu0 %v548
  %1170 = vmatpush1.bf16.msra.mxu0 %v547
  %1171 = vmatprep.subr.bf16.mxu0 %v552
  %1172 = vmatpush1.bf16.msra.mxu0 %v551
  %1173 = vmatprep.subr.bf16.mxu0 %v556
  %1174 = vmatpush1.bf16.msra.mxu0 %v555
  %1175 = vmatprep.subr.bf16.mxu0 %v560
  %1176 = vmatpush1.bf16.msra.mxu0 %v559
  %1177 = vmatprep.subr.bf16.mxu0 %v564
  %1178 = vmatpush1.bf16.msra.mxu0 %v563
  %1179 = vmatprep.subr.bf16.mxu0 0
  %1180 = vmatpush1.bf16.msra.mxu0 0
  %1181 = vmatprep.subr.bf16.mxu0 0
  %1182 = vmatpush1.bf16.msra.mxu0 0
  %1183 = vmatprep.subr.bf16.mxu0 0
  %1184 = vmatpush1.bf16.msra.mxu0 0
  %1185 = vmatprep.subr.bf16.mxu0 0
  %1186 = vmatpush1.bf16.msra.mxu0 0
  %1187 = vmatprep.subr.bf16.mxu0 0
  %1188 = vmatpush1.bf16.msra.mxu0 0
  %1189 = vmatprep.subr.bf16.mxu0 0
  %1190 = vmatpush1.bf16.msra.mxu0 0
  %1191 = vmatprep.subr.bf16.mxu0 0
  %1192 = vmatpush1.bf16.msra.mxu0 0
  %1193 = vmatprep.subr.bf16.mxu0 0
  %1194 = vmatpush1.bf16.msra.mxu0 0
  %1195 = vmatprep.mubr.bf16.mxu0 0
  %1196 = vmatmul.mubr.bf16.gmra.mrb[0].mxu0 %v1121
  %v1197 = vpop.f32.mrb[0].mxu0
  %v1198 = vadd.f32 0.0, %v1197
  %v1199 = vpop.f32.mrb[0].mxu0
  %v1200 = vadd.f32 0.0, %v1199
  %v1201 = vpop.f32.mrb[0].mxu0
  %v1202 = vpop.f32.mrb[0].mxu0
  %1203 = vdwg.mxu0
  %v1204 = vadd.f32 %v347, %v1157
  %v1205 = vadd.f32 %v349, %v1159
  %v1206 = vadd.f32 %v420, %v1198
  %v1207 = vadd.f32 %v422, %v1200
  %v1208 = vmul.f32 %v1204, 0.5
  %v1209 = vtanh.pop %v1208
  %v1210 = vmul.f32 %v1209, 0.5
  %v1211 = vadd.f32 %v1210, 0.5
  %v1212 = vmul.f32 %v1205, 0.5
  %v1213 = vtanh.pop %v1212
  %v1214 = vmul.f32 %v1213, 0.5
  %v1215 = vadd.f32 %v1214, 0.5
  %v1216 = vtanh.pop %v1206
  %v1217 = vmul.f32 %v1207, 0.5
  %v1218 = vtanh.pop %v1217
  %v1219 = vmul.f32 %v1218, 0.5
  %v1220 = vadd.f32 %v1219, 0.5
  %v1221 = vmul.f32 %v1215, %v1118
  %v1222 = vmul.f32 %v1211, %v1216
  %v1223 = vadd.f32 %v1221, %v1222
  %v1224 = vtanh.pop %v1223
  %v1225 = vmul.f32 %v1220, %v1224
  %v1226 = vpack.c.bf16 %v1225, %v1225
  %1227 = vmatprep.subr.bf16.mxu0 %v534
  %1228 = vmatpush1.bf16.msra.mxu0 %v533
  %1229 = vmatprep.subr.bf16.mxu0 %v538
  %1230 = vmatpush1.bf16.msra.mxu0 %v537
  %1231 = vmatprep.subr.bf16.mxu0 %v542
  %1232 = vmatpush1.bf16.msra.mxu0 %v541
  %1233 = vmatprep.subr.bf16.mxu0 %v546
  %1234 = vmatpush1.bf16.msra.mxu0 %v545
  %1235 = vmatprep.subr.bf16.mxu0 %v550
  %1236 = vmatpush1.bf16.msra.mxu0 %v549
  %1237 = vmatprep.subr.bf16.mxu0 %v554
  %1238 = vmatpush1.bf16.msra.mxu0 %v553
  %1239 = vmatprep.subr.bf16.mxu0 %v558
  %1240 = vmatpush1.bf16.msra.mxu0 %v557
  %1241 = vmatprep.subr.bf16.mxu0 %v562
  %1242 = vmatpush1.bf16.msra.mxu0 %v561
  %1243 = vmatprep.subr.bf16.mxu0 0
  %1244 = vmatpush1.bf16.msra.mxu0 0
  %1245 = vmatprep.subr.bf16.mxu0 0
  %1246 = vmatpush1.bf16.msra.mxu0 0
  %1247 = vmatprep.subr.bf16.mxu0 0
  %1248 = vmatpush1.bf16.msra.mxu0 0
  %1249 = vmatprep.subr.bf16.mxu0 0
  %1250 = vmatpush1.bf16.msra.mxu0 0
  %1251 = vmatprep.subr.bf16.mxu0 0
  %1252 = vmatpush1.bf16.msra.mxu0 0
  %1253 = vmatprep.subr.bf16.mxu0 0
  %1254 = vmatpush1.bf16.msra.mxu0 0
  %1255 = vmatprep.subr.bf16.mxu0 0
  %1256 = vmatpush1.bf16.msra.mxu0 0
  %1257 = vmatprep.subr.bf16.mxu0 0
  %1258 = vmatpush1.bf16.msra.mxu0 0
  %1259 = vmatprep.mubr.bf16.mxu0 0
  %1260 = vmatmul.mubr.bf16.gmra.mrb[0].mxu0 %v1226
  %v1261 = vpop.f32.mrb[0].mxu0
  %v1262 = vadd.f32 0.0, %v1261
  %v1263 = vpop.f32.mrb[0].mxu0
  %v1264 = vadd.f32 0.0, %v1263
  %v1265 = vpop.f32.mrb[0].mxu0
  %v1266 = vpop.f32.mrb[0].mxu0
  %1267 = vdwg.mxu0
  %1268 = vmatprep.subr.bf16.mxu0 %v536
  %1269 = vmatpush1.bf16.msra.mxu0 %v535
  %1270 = vmatprep.subr.bf16.mxu0 %v540
  %1271 = vmatpush1.bf16.msra.mxu0 %v539
  %1272 = vmatprep.subr.bf16.mxu0 %v544
  %1273 = vmatpush1.bf16.msra.mxu0 %v543
  %1274 = vmatprep.subr.bf16.mxu0 %v548
  %1275 = vmatpush1.bf16.msra.mxu0 %v547
  %1276 = vmatprep.subr.bf16.mxu0 %v552
  %1277 = vmatpush1.bf16.msra.mxu0 %v551
  %1278 = vmatprep.subr.bf16.mxu0 %v556
  %1279 = vmatpush1.bf16.msra.mxu0 %v555
  %1280 = vmatprep.subr.bf16.mxu0 %v560
  %1281 = vmatpush1.bf16.msra.mxu0 %v559
  %1282 = vmatprep.subr.bf16.mxu0 %v564
  %1283 = vmatpush1.bf16.msra.mxu0 %v563
  %1284 = vmatprep.subr.bf16.mxu0 0
  %1285 = vmatpush1.bf16.msra.mxu0 0
  %1286 = vmatprep.subr.bf16.mxu0 0
  %1287 = vmatpush1.bf16.msra.mxu0 0
  %1288 = vmatprep.subr.bf16.mxu0 0
  %1289 = vmatpush1.bf16.msra.mxu0 0
  %1290 = vmatprep.subr.bf16.mxu0 0
  %1291 = vmatpush1.bf16.msra.mxu0 0
  %1292 = vmatprep.subr.bf16.mxu0 0
  %1293 = vmatpush1.bf16.msra.mxu0 0
  %1294 = vmatprep.subr.bf16.mxu0 0
  %1295 = vmatpush1.bf16.msra.mxu0 0
  %1296 = vmatprep.subr.bf16.mxu0 0
  %1297 = vmatpush1.bf16.msra.mxu0 0
  %1298 = vmatprep.subr.bf16.mxu0 0
  %1299 = vmatpush1.bf16.msra.mxu0 0
  %1300 = vmatprep.mubr.bf16.mxu0 0
  %1301 = vmatmul.mubr.bf16.gmra.mrb[0].mxu0 %v1226
  %v1302 = vpop.f32.mrb[0].mxu0
  %v1303 = vadd.f32 0.0, %v1302
  %v1304 = vpop.f32.mrb[0].mxu0
  %v1305 = vadd.f32 0.0, %v1304
  %v1306 = vpop.f32.mrb[0].mxu0
  %v1307 = vpop.f32.mrb[0].mxu0
  %1308 = vdwg.mxu0
  %v1309 = vadd.f32 %v353, %v1262
  %v1310 = vadd.f32 %v355, %v1264
  %v1311 = vadd.f32 %v426, %v1303
  %v1312 = vadd.f32 %v428, %v1305
  %v1313 = vmul.f32 %v1309, 0.5
  %v1314 = vtanh.pop %v1313
  %v1315 = vmul.f32 %v1314, 0.5
  %v1316 = vadd.f32 %v1315, 0.5
  %v1317 = vmul.f32 %v1310, 0.5
  %v1318 = vtanh.pop %v1317
  %v1319 = vmul.f32 %v1318, 0.5
  %v1320 = vadd.f32 %v1319, 0.5
  %v1321 = vtanh.pop %v1311
  %v1322 = vmul.f32 %v1312, 0.5
  %v1323 = vtanh.pop %v1322
  %v1324 = vmul.f32 %v1323, 0.5
  %v1325 = vadd.f32 %v1324, 0.5
  %v1326 = vmul.f32 %v1320, %v1223
  %v1327 = vmul.f32 %v1316, %v1321
  %v1328 = vadd.f32 %v1326, %v1327
  %v1329 = vtanh.pop %v1328
  %v1330 = vmul.f32 %v1325, %v1329
  %v1331 = vpack.c.bf16 %v1330, %v1330
  %1332 = vmatprep.subr.bf16.mxu0 %v534
  %1333 = vmatpush1.bf16.msra.mxu0 %v533
  %1334 = vmatprep.subr.bf16.mxu0 %v538
  %1335 = vmatpush1.bf16.msra.mxu0 %v537
  %1336 = vmatprep.subr.bf16.mxu0 %v542
  %1337 = vmatpush1.bf16.msra.mxu0 %v541
  %1338 = vmatprep.subr.bf16.mxu0 %v546
  %1339 = vmatpush1.bf16.msra.mxu0 %v545
  %1340 = vmatprep.subr.bf16.mxu0 %v550
  %1341 = vmatpush1.bf16.msra.mxu0 %v549
  %1342 = vmatprep.subr.bf16.mxu0 %v554
  %1343 = vmatpush1.bf16.msra.mxu0 %v553
  %1344 = vmatprep.subr.bf16.mxu0 %v558
  %1345 = vmatpush1.bf16.msra.mxu0 %v557
  %1346 = vmatprep.subr.bf16.mxu0 %v562
  %1347 = vmatpush1.bf16.msra.mxu0 %v561
  %1348 = vmatprep.subr.bf16.mxu0 0
  %1349 = vmatpush1.bf16.msra.mxu0 0
  %1350 = vmatprep.subr.bf16.mxu0 0
  %1351 = vmatpush1.bf16.msra.mxu0 0
  %1352 = vmatprep.subr.bf16.mxu0 0
  %1353 = vmatpush1.bf16.msra.mxu0 0
  %1354 = vmatprep.subr.bf16.mxu0 0
  %1355 = vmatpush1.bf16.msra.mxu0 0
  %1356 = vmatprep.subr.bf16.mxu0 0
  %1357 = vmatpush1.bf16.msra.mxu0 0
  %1358 = vmatprep.subr.bf16.mxu0 0
  %1359 = vmatpush1.bf16.msra.mxu0 0
  %1360 = vmatprep.subr.bf16.mxu0 0
  %1361 = vmatpush1.bf16.msra.mxu0 0
  %1362 = vmatprep.subr.bf16.mxu0 0
  %1363 = vmatpush1.bf16.msra.mxu0 0
  %1364 = vmatprep.mubr.bf16.mxu0 0
  %1365 = vmatmul.mubr.bf16.gmra.mrb[0].mxu0 %v1331
  %v1366 = vpop.f32.mrb[0].mxu0
  %v1367 = vadd.f32 0.0, %v1366
  %v1368 = vpop.f32.mrb[0].mxu0
  %v1369 = vadd.f32 0.0, %v1368
  %v1370 = vpop.f32.mrb[0].mxu0
  %v1371 = vpop.f32.mrb[0].mxu0
  %1372 = vdwg.mxu0
  %1373 = vmatprep.subr.bf16.mxu0 %v536
  %1374 = vmatpush1.bf16.msra.mxu0 %v535
  %1375 = vmatprep.subr.bf16.mxu0 %v540
  %1376 = vmatpush1.bf16.msra.mxu0 %v539
  %1377 = vmatprep.subr.bf16.mxu0 %v544
  %1378 = vmatpush1.bf16.msra.mxu0 %v543
  %1379 = vmatprep.subr.bf16.mxu0 %v548
  %1380 = vmatpush1.bf16.msra.mxu0 %v547
  %1381 = vmatprep.subr.bf16.mxu0 %v552
  %1382 = vmatpush1.bf16.msra.mxu0 %v551
  %1383 = vmatprep.subr.bf16.mxu0 %v556
  %1384 = vmatpush1.bf16.msra.mxu0 %v555
  %1385 = vmatprep.subr.bf16.mxu0 %v560
  %1386 = vmatpush1.bf16.msra.mxu0 %v559
  %1387 = vmatprep.subr.bf16.mxu0 %v564
  %1388 = vmatpush1.bf16.msra.mxu0 %v563
  %1389 = vmatprep.subr.bf16.mxu0 0
  %1390 = vmatpush1.bf16.msra.mxu0 0
  %1391 = vmatprep.subr.bf16.mxu0 0
  %1392 = vmatpush1.bf16.msra.mxu0 0
  %1393 = vmatprep.subr.bf16.mxu0 0
  %1394 = vmatpush1.bf16.msra.mxu0 0
  %1395 = vmatprep.subr.bf16.mxu0 0
  %1396 = vmatpush1.bf16.msra.mxu0 0
  %1397 = vmatprep.subr.bf16.mxu0 0
  %1398 = vmatpush1.bf16.msra.mxu0 0
  %1399 = vmatprep.subr.bf16.mxu0 0
  %1400 = vmatpush1.bf16.msra.mxu0 0
  %1401 = vmatprep.subr.bf16.mxu0 0
  %1402 = vmatpush1.bf16.msra.mxu0 0
  %1403 = vmatprep.subr.bf16.mxu0 0
  %1404 = vmatpush1.bf16.msra.mxu0 0
  %1405 = vmatprep.mubr.bf16.mxu0 0
  %1406 = vmatmul.mubr.bf16.gmra.mrb[0].mxu0 %v1331
  %v1407 = vpop.f32.mrb[0].mxu0
  %v1408 = vadd.f32 0.0, %v1407
  %v1409 = vpop.f32.mrb[0].mxu0
  %v1410 = vadd.f32 0.0, %v1409
  %v1411 = vpop.f32.mrb[0].mxu0
  %v1412 = vpop.f32.mrb[0].mxu0
  %1413 = vdwg.mxu0
  %v1414 = vadd.f32 %v357, %v1367
  %v1415 = vadd.f32 %v359, %v1369
  %v1416 = vadd.f32 %v430, %v1408
  %v1417 = vadd.f32 %v432, %v1410
  %v1418 = vmul.f32 %v1414, 0.5
  %v1419 = vtanh.pop %v1418
  %v1420 = vmul.f32 %v1419, 0.5
  %v1421 = vadd.f32 %v1420, 0.5
  %v1422 = vmul.f32 %v1415, 0.5
  %v1423 = vtanh.pop %v1422
  %v1424 = vmul.f32 %v1423, 0.5
  %v1425 = vadd.f32 %v1424, 0.5
  %v1426 = vtanh.pop %v1416
  %v1427 = vmul.f32 %v1417, 0.5
  %v1428 = vtanh.pop %v1427
  %v1429 = vmul.f32 %v1428, 0.5
  %v1430 = vadd.f32 %v1429, 0.5
  %v1431 = vmul.f32 %v1425, %v1328
  %v1432 = vmul.f32 %v1421, %v1426
  %v1433 = vadd.f32 %v1431, %v1432
  %v1434 = vtanh.pop %v1433
  %v1435 = vmul.f32 %v1430, %v1434
  %1436 = vst [vmem:[#allocation2] sm:$0xff] %v1435
  %1437 = vst [vmem:[#allocation3] sm:$0xff] %v1433
  %v1439 = vcombine.high %v700, %v700
  %v1441 = vunpack.c.l.s4 1966171168
  %v1442 = vunpack.c.0.s8 %v1441
  %v1443 = vlaneseq
  %v1444 = vshrl.u32 %v1443, 7
  %v1445 = vsub.s32 %v1442, %v1444
  %v1446 = vrot.slane %v700, %v1445
  %v1448 = vunpack.c.l.s4 1966171168
  %v1449 = vunpack.c.0.s8 %v1448
  %v1450 = vlaneseq
  %v1451 = vshrl.u32 %v1450, 7
  %v1452 = vsub.s32 %v1449, %v1451
  %v1453 = vrot.slane %v1439, %v1452
  %v1454 = vcombine.high %v1446, %v1446
  %v1455 = vcombine.high %v1453, %v1453
  %v1457 = vunpack.c.l.s4 1966171168
  %v1458 = vunpack.c.0.s8 %v1457
  %v1459 = vlaneseq
  %v1460 = vshrl.u32 %v1459, 7
  %v1461 = vsub.s32 %v1458, %v1460
  %v1462 = vrot.slane %v1446, %v1461
  %v1464 = vunpack.c.l.s4 1966171168
  %v1465 = vunpack.c.0.s8 %v1464
  %v1466 = vlaneseq
  %v1467 = vshrl.u32 %v1466, 7
  %v1468 = vsub.s32 %v1465, %v1467
  %v1469 = vrot.slane %v1453, %v1468
  %v1471 = vunpack.c.l.s4 1966171168
  %v1472 = vunpack.c.0.s8 %v1471
  %v1473 = vlaneseq
  %v1474 = vshrl.u32 %v1473, 7
  %v1475 = vsub.s32 %v1472, %v1474
  %v1476 = vrot.slane %v1454, %v1475
  %v1478 = vunpack.c.l.s4 1966171168
  %v1479 = vunpack.c.0.s8 %v1478
  %v1480 = vlaneseq
  %v1481 = vshrl.u32 %v1480, 7
  %v1482 = vsub.s32 %v1479, %v1481
  %v1483 = vrot.slane %v1455, %v1482
  %v1484 = vcombine.high %v1462, %v1462
  %v1485 = vcombine.high %v1469, %v1469
  %v1486 = vcombine.high %v1476, %v1476
  %v1487 = vcombine.high %v1483, %v1483
  %v1497 = vcombine.high %v805, %v805
  %v1499 = vunpack.c.l.s4 1966171168
  %v1500 = vunpack.c.0.s8 %v1499
  %v1501 = vlaneseq
  %v1502 = vshrl.u32 %v1501, 7
  %v1503 = vsub.s32 %v1500, %v1502
  %v1504 = vrot.slane %v805, %v1503
  %v1506 = vunpack.c.l.s4 1966171168
  %v1507 = vunpack.c.0.s8 %v1506
  %v1508 = vlaneseq
  %v1509 = vshrl.u32 %v1508, 7
  %v1510 = vsub.s32 %v1507, %v1509
  %v1511 = vrot.slane %v1497, %v1510
  %v1512 = vcombine.high %v1504, %v1504
  %v1513 = vcombine.high %v1511, %v1511
  %v1515 = vunpack.c.l.s4 1966171168
  %v1516 = vunpack.c.0.s8 %v1515
  %v1517 = vlaneseq
  %v1518 = vshrl.u32 %v1517, 7
  %v1519 = vsub.s32 %v1516, %v1518
  %v1520 = vrot.slane %v1504, %v1519
  %v1522 = vunpack.c.l.s4 1966171168
  %v1523 = vunpack.c.0.s8 %v1522
  %v1524 = vlaneseq
  %v1525 = vshrl.u32 %v1524, 7
  %v1526 = vsub.s32 %v1523, %v1525
  %v1527 = vrot.slane %v1511, %v1526
  %v1529 = vunpack.c.l.s4 1966171168
  %v1530 = vunpack.c.0.s8 %v1529
  %v1531 = vlaneseq
  %v1532 = vshrl.u32 %v1531, 7
  %v1533 = vsub.s32 %v1530, %v1532
  %v1534 = vrot.slane %v1512, %v1533
  %v1536 = vunpack.c.l.s4 1966171168
  %v1537 = vunpack.c.0.s8 %v1536
  %v1538 = vlaneseq
  %v1539 = vshrl.u32 %v1538, 7
  %v1540 = vsub.s32 %v1537, %v1539
  %v1541 = vrot.slane %v1513, %v1540
  %v1542 = vcombine.high %v1520, %v1520
  %v1543 = vcombine.high %v1527, %v1527
  %v1544 = vcombine.high %v1534, %v1534
  %v1545 = vcombine.high %v1541, %v1541
  %v1547 = vcombine.high %v910, %v910
  %v1549 = vunpack.c.l.s4 1966171168
  %v1550 = vunpack.c.0.s8 %v1549
  %v1551 = vlaneseq
  %v1552 = vshrl.u32 %v1551, 7
  %v1553 = vsub.s32 %v1550, %v1552
  %v1554 = vrot.slane %v910, %v1553
  %v1556 = vunpack.c.l.s4 1966171168
  %v1557 = vunpack.c.0.s8 %v1556
  %v1558 = vlaneseq
  %v1559 = vshrl.u32 %v1558, 7
  %v1560 = vsub.s32 %v1557, %v1559
  %v1561 = vrot.slane %v1547, %v1560
  %v1562 = vcombine.high %v1554, %v1554
  %v1563 = vcombine.high %v1561, %v1561
  %v1565 = vunpack.c.l.s4 1966171168
  %v1566 = vunpack.c.0.s8 %v1565
  %v1567 = vlaneseq
  %v1568 = vshrl.u32 %v1567, 7
  %v1569 = vsub.s32 %v1566, %v1568
  %v1570 = vrot.slane %v1554, %v1569
  %v1572 = vunpack.c.l.s4 1966171168
  %v1573 = vunpack.c.0.s8 %v1572
  %v1574 = vlaneseq
  %v1575 = vshrl.u32 %v1574, 7
  %v1576 = vsub.s32 %v1573, %v1575
  %v1577 = vrot.slane %v1561, %v1576
  %v1579 = vunpack.c.l.s4 1966171168
  %v1580 = vunpack.c.0.s8 %v1579
  %v1581 = vlaneseq
  %v1582 = vshrl.u32 %v1581, 7
  %v1583 = vsub.s32 %v1580, %v1582
  %v1584 = vrot.slane %v1562, %v1583
  %v1586 = vunpack.c.l.s4 1966171168
  %v1587 = vunpack.c.0.s8 %v1586
  %v1588 = vlaneseq
  %v1589 = vshrl.u32 %v1588, 7
  %v1590 = vsub.s32 %v1587, %v1589
  %v1591 = vrot.slane %v1563, %v1590
  %v1592 = vcombine.high %v1570, %v1570
  %v1593 = vcombine.high %v1577, %v1577
  %v1594 = vcombine.high %v1584, %v1584
  %v1595 = vcombine.high %v1591, %v1591
  %v1597 = vcombine.high %v1015, %v1015
  %v1599 = vunpack.c.l.s4 1966171168
  %v1600 = vunpack.c.0.s8 %v1599
  %v1601 = vlaneseq
  %v1602 = vshrl.u32 %v1601, 7
  %v1603 = vsub.s32 %v1600, %v1602
  %v1604 = vrot.slane %v1015, %v1603
  %v1606 = vunpack.c.l.s4 1966171168
  %v1607 = vunpack.c.0.s8 %v1606
  %v1608 = vlaneseq
  %v1609 = vshrl.u32 %v1608, 7
  %v1610 = vsub.s32 %v1607, %v1609
  %v1611 = vrot.slane %v1597, %v1610
  %v1612 = vcombine.high %v1604, %v1604
  %v1613 = vcombine.high %v1611, %v1611
  %v1615 = vunpack.c.l.s4 1966171168
  %v1616 = vunpack.c.0.s8 %v1615
  %v1617 = vlaneseq
  %v1618 = vshrl.u32 %v1617, 7
  %v1619 = vsub.s32 %v1616, %v1618
  %v1620 = vrot.slane %v1604, %v1619
  %v1622 = vunpack.c.l.s4 1966171168
  %v1623 = vunpack.c.0.s8 %v1622
  %v1624 = vlaneseq
  %v1625 = vshrl.u32 %v1624, 7
  %v1626 = vsub.s32 %v1623, %v1625
  %v1627 = vrot.slane %v1611, %v1626
  %v1629 = vunpack.c.l.s4 1966171168
  %v1630 = vunpack.c.0.s8 %v1629
  %v1631 = vlaneseq
  %v1632 = vshrl.u32 %v1631, 7
  %v1633 = vsub.s32 %v1630, %v1632
  %v1634 = vrot.slane %v1612, %v1633
  %v1636 = vunpack.c.l.s4 1966171168
  %v1637 = vunpack.c.0.s8 %v1636
  %v1638 = vlaneseq
  %v1639 = vshrl.u32 %v1638, 7
  %v1640 = vsub.s32 %v1637, %v1639
  %v1641 = vrot.slane %v1613, %v1640
  %v1642 = vcombine.high %v1620, %v1620
  %v1643 = vcombine.high %v1627, %v1627
  %v1644 = vcombine.high %v1634, %v1634
  %v1645 = vcombine.high %v1641, %v1641
  %v1647 = vcombine.high %v1120, %v1120
  %v1649 = vunpack.c.l.s4 1966171168
  %v1650 = vunpack.c.0.s8 %v1649
  %v1651 = vlaneseq
  %v1652 = vshrl.u32 %v1651, 7
  %v1653 = vsub.s32 %v1650, %v1652
  %v1654 = vrot.slane %v1120, %v1653
  %v1656 = vunpack.c.l.s4 1966171168
  %v1657 = vunpack.c.0.s8 %v1656
  %v1658 = vlaneseq
  %v1659 = vshrl.u32 %v1658, 7
  %v1660 = vsub.s32 %v1657, %v1659
  %v1661 = vrot.slane %v1647, %v1660
  %v1662 = vcombine.high %v1654, %v1654
  %v1663 = vcombine.high %v1661, %v1661
  %v1665 = vunpack.c.l.s4 1966171168
  %v1666 = vunpack.c.0.s8 %v1665
  %v1667 = vlaneseq
  %v1668 = vshrl.u32 %v1667, 7
  %v1669 = vsub.s32 %v1666, %v1668
  %v1670 = vrot.slane %v1654, %v1669
  %v1672 = vunpack.c.l.s4 1966171168
  %v1673 = vunpack.c.0.s8 %v1672
  %v1674 = vlaneseq
  %v1675 = vshrl.u32 %v1674, 7
  %v1676 = vsub.s32 %v1673, %v1675
  %v1677 = vrot.slane %v1661, %v1676
  %v1679 = vunpack.c.l.s4 1966171168
  %v1680 = vunpack.c.0.s8 %v1679
  %v1681 = vlaneseq
  %v1682 = vshrl.u32 %v1681, 7
  %v1683 = vsub.s32 %v1680, %v1682
  %v1684 = vrot.slane %v1662, %v1683
  %v1686 = vunpack.c.l.s4 1966171168
  %v1687 = vunpack.c.0.s8 %v1686
  %v1688 = vlaneseq
  %v1689 = vshrl.u32 %v1688, 7
  %v1690 = vsub.s32 %v1687, %v1689
  %v1691 = vrot.slane %v1663, %v1690
  %v1692 = vcombine.high %v1670, %v1670
  %v1693 = vcombine.high %v1677, %v1677
  %v1694 = vcombine.high %v1684, %v1684
  %v1695 = vcombine.high %v1691, %v1691
  %v1697 = vcombine.high %v1225, %v1225
  %v1699 = vunpack.c.l.s4 1966171168
  %v1700 = vunpack.c.0.s8 %v1699
  %v1701 = vlaneseq
  %v1702 = vshrl.u32 %v1701, 7
  %v1703 = vsub.s32 %v1700, %v1702
  %v1704 = vrot.slane %v1225, %v1703
  %v1706 = vunpack.c.l.s4 1966171168
  %v1707 = vunpack.c.0.s8 %v1706
  %v1708 = vlaneseq
  %v1709 = vshrl.u32 %v1708, 7
  %v1710 = vsub.s32 %v1707, %v1709
  %v1711 = vrot.slane %v1697, %v1710
  %v1712 = vcombine.high %v1704, %v1704
  %v1713 = vcombine.high %v1711, %v1711
  %v1715 = vunpack.c.l.s4 1966171168
  %v1716 = vunpack.c.0.s8 %v1715
  %v1717 = vlaneseq
  %v1718 = vshrl.u32 %v1717, 7
  %v1719 = vsub.s32 %v1716, %v1718
  %v1720 = vrot.slane %v1704, %v1719
  %v1722 = vunpack.c.l.s4 1966171168
  %v1723 = vunpack.c.0.s8 %v1722
  %v1724 = vlaneseq
  %v1725 = vshrl.u32 %v1724, 7
  %v1726 = vsub.s32 %v1723, %v1725
  %v1727 = vrot.slane %v1711, %v1726
  %v1729 = vunpack.c.l.s4 1966171168
  %v1730 = vunpack.c.0.s8 %v1729
  %v1731 = vlaneseq
  %v1732 = vshrl.u32 %v1731, 7
  %v1733 = vsub.s32 %v1730, %v1732
  %v1734 = vrot.slane %v1712, %v1733
  %v1736 = vunpack.c.l.s4 1966171168
  %v1737 = vunpack.c.0.s8 %v1736
  %v1738 = vlaneseq
  %v1739 = vshrl.u32 %v1738, 7
  %v1740 = vsub.s32 %v1737, %v1739
  %v1741 = vrot.slane %v1713, %v1740
  %v1742 = vcombine.high %v1720, %v1720
  %v1743 = vcombine.high %v1727, %v1727
  %v1744 = vcombine.high %v1734, %v1734
  %v1745 = vcombine.high %v1741, %v1741
  %v1747 = vcombine.high %v1330, %v1330
  %v1749 = vunpack.c.l.s4 1966171168
  %v1750 = vunpack.c.0.s8 %v1749
  %v1751 = vlaneseq
  %v1752 = vshrl.u32 %v1751, 7
  %v1753 = vsub.s32 %v1750, %v1752
  %v1754 = vrot.slane %v1330, %v1753
  %v1756 = vunpack.c.l.s4 1966171168
  %v1757 = vunpack.c.0.s8 %v1756
  %v1758 = vlaneseq
  %v1759 = vshrl.u32 %v1758, 7
  %v1760 = vsub.s32 %v1757, %v1759
  %v1761 = vrot.slane %v1747, %v1760
  %v1762 = vcombine.high %v1754, %v1754
  %v1763 = vcombine.high %v1761, %v1761
  %v1765 = vunpack.c.l.s4 1966171168
  %v1766 = vunpack.c.0.s8 %v1765
  %v1767 = vlaneseq
  %v1768 = vshrl.u32 %v1767, 7
  %v1769 = vsub.s32 %v1766, %v1768
  %v1770 = vrot.slane %v1754, %v1769
  %v1772 = vunpack.c.l.s4 1966171168
  %v1773 = vunpack.c.0.s8 %v1772
  %v1774 = vlaneseq
  %v1775 = vshrl.u32 %v1774, 7
  %v1776 = vsub.s32 %v1773, %v1775
  %v1777 = vrot.slane %v1761, %v1776
  %v1779 = vunpack.c.l.s4 1966171168
  %v1780 = vunpack.c.0.s8 %v1779
  %v1781 = vlaneseq
  %v1782 = vshrl.u32 %v1781, 7
  %v1783 = vsub.s32 %v1780, %v1782
  %v1784 = vrot.slane %v1762, %v1783
  %v1786 = vunpack.c.l.s4 1966171168
  %v1787 = vunpack.c.0.s8 %v1786
  %v1788 = vlaneseq
  %v1789 = vshrl.u32 %v1788, 7
  %v1790 = vsub.s32 %v1787, %v1789
  %v1791 = vrot.slane %v1763, %v1790
  %v1792 = vcombine.high %v1770, %v1770
  %v1793 = vcombine.high %v1777, %v1777
  %v1794 = vcombine.high %v1784, %v1784
  %v1795 = vcombine.high %v1791, %v1791
  %v1797 = vcombine.high %v1435, %v1435
  %v1799 = vunpack.c.l.s4 1966171168
  %v1800 = vunpack.c.0.s8 %v1799
  %v1801 = vlaneseq
  %v1802 = vshrl.u32 %v1801, 7
  %v1803 = vsub.s32 %v1800, %v1802
  %v1804 = vrot.slane %v1435, %v1803
  %v1806 = vunpack.c.l.s4 1966171168
  %v1807 = vunpack.c.0.s8 %v1806
  %v1808 = vlaneseq
  %v1809 = vshrl.u32 %v1808, 7
  %v1810 = vsub.s32 %v1807, %v1809
  %v1811 = vrot.slane %v1797, %v1810
  %v1812 = vcombine.high %v1804, %v1804
  %v1813 = vcombine.high %v1811, %v1811
  %v1815 = vunpack.c.l.s4 1966171168
  %v1816 = vunpack.c.0.s8 %v1815
  %v1817 = vlaneseq
  %v1818 = vshrl.u32 %v1817, 7
  %v1819 = vsub.s32 %v1816, %v1818
  %v1820 = vrot.slane %v1804, %v1819
  %v1822 = vunpack.c.l.s4 1966171168
  %v1823 = vunpack.c.0.s8 %v1822
  %v1824 = vlaneseq
  %v1825 = vshrl.u32 %v1824, 7
  %v1826 = vsub.s32 %v1823, %v1825
  %v1827 = vrot.slane %v1811, %v1826
  %v1829 = vunpack.c.l.s4 1966171168
  %v1830 = vunpack.c.0.s8 %v1829
  %v1831 = vlaneseq
  %v1832 = vshrl.u32 %v1831, 7
  %v1833 = vsub.s32 %v1830, %v1832
  %v1834 = vrot.slane %v1812, %v1833
  %v1836 = vunpack.c.l.s4 1966171168
  %v1837 = vunpack.c.0.s8 %v1836
  %v1838 = vlaneseq
  %v1839 = vshrl.u32 %v1838, 7
  %v1840 = vsub.s32 %v1837, %v1839
  %v1841 = vrot.slane %v1813, %v1840
  %v1842 = vcombine.high %v1820, %v1820
  %v1843 = vcombine.high %v1827, %v1827
  %v1844 = vcombine.high %v1834, %v1834
  %v1845 = vcombine.high %v1841, %v1841
  %v1846 = vlaneseq
  %v1847 = vshrl.u32 %v1846, 7
  %v1848 = vsub.s32 0, %v1847
  %v1849 = vrot.slane %v1520, %v1848
  %v1850 = vlaneseq
  %v1851 = vshrl.u32 %v1850, 7
  %v1852 = vsub.s32 0, %v1851
  %v1853 = vrot.slane %v1534, %v1852
  %v1854 = vlaneseq
  %v1855 = vshrl.u32 %v1854, 7
  %v1856 = vsub.s32 0, %v1855
  %v1857 = vrot.slane %v1542, %v1856
  %v1858 = vlaneseq
  %v1859 = vshrl.u32 %v1858, 7
  %v1860 = vsub.s32 0, %v1859
  %v1861 = vrot.slane %v1544, %v1860
  %v1862 = vlaneseq
  %v1863 = vshrl.u32 %v1862, 7
  %v1864 = vsub.s32 0, %v1863
  %v1865 = vrot.slane %v1527, %v1864
  %v1866 = vlaneseq
  %v1867 = vshrl.u32 %v1866, 7
  %v1868 = vsub.s32 0, %v1867
  %v1869 = vrot.slane %v1541, %v1868
  %v1870 = vlaneseq
  %v1871 = vshrl.u32 %v1870, 7
  %v1872 = vsub.s32 0, %v1871
  %v1873 = vrot.slane %v1543, %v1872
  %v1874 = vlaneseq
  %v1875 = vshrl.u32 %v1874, 7
  %v1876 = vsub.s32 0, %v1875
  %v1877 = vrot.slane %v1545, %v1876
  %v1886 = vlaneseq
  %v1887 = vshrl.u32 %v1886, 7
  %v1888 = vsub.s32 0, %v1887
  %v1889 = vrot.slane %v1570, %v1888
  %v1890 = vlaneseq
  %v1891 = vshrl.u32 %v1890, 7
  %v1892 = vsub.s32 0, %v1891
  %v1893 = vrot.slane %v1584, %v1892
  %v1894 = vlaneseq
  %v1895 = vshrl.u32 %v1894, 7
  %v1896 = vsub.s32 0, %v1895
  %v1897 = vrot.slane %v1592, %v1896
  %v1898 = vlaneseq
  %v1899 = vshrl.u32 %v1898, 7
  %v1900 = vsub.s32 0, %v1899
  %v1901 = vrot.slane %v1594, %v1900
  %v1902 = vlaneseq
  %v1903 = vshrl.u32 %v1902, 7
  %v1904 = vsub.s32 0, %v1903
  %v1905 = vrot.slane %v1577, %v1904
  %v1906 = vlaneseq
  %v1907 = vshrl.u32 %v1906, 7
  %v1908 = vsub.s32 0, %v1907
  %v1909 = vrot.slane %v1591, %v1908
  %v1910 = vlaneseq
  %v1911 = vshrl.u32 %v1910, 7
  %v1912 = vsub.s32 0, %v1911
  %v1913 = vrot.slane %v1593, %v1912
  %v1914 = vlaneseq
  %v1915 = vshrl.u32 %v1914, 7
  %v1916 = vsub.s32 0, %v1915
  %v1917 = vrot.slane %v1595, %v1916
  %v1926 = vlaneseq
  %v1927 = vshrl.u32 %v1926, 7
  %v1928 = vsub.s32 0, %v1927
  %v1929 = vrot.slane %v1620, %v1928
  %v1930 = vlaneseq
  %v1931 = vshrl.u32 %v1930, 7
  %v1932 = vsub.s32 0, %v1931
  %v1933 = vrot.slane %v1634, %v1932
  %v1934 = vlaneseq
  %v1935 = vshrl.u32 %v1934, 7
  %v1936 = vsub.s32 0, %v1935
  %v1937 = vrot.slane %v1642, %v1936
  %v1938 = vlaneseq
  %v1939 = vshrl.u32 %v1938, 7
  %v1940 = vsub.s32 0, %v1939
  %v1941 = vrot.slane %v1644, %v1940
  %v1942 = vlaneseq
  %v1943 = vshrl.u32 %v1942, 7
  %v1944 = vsub.s32 0, %v1943
  %v1945 = vrot.slane %v1627, %v1944
  %v1946 = vlaneseq
  %v1947 = vshrl.u32 %v1946, 7
  %v1948 = vsub.s32 0, %v1947
  %v1949 = vrot.slane %v1641, %v1948
  %v1950 = vlaneseq
  %v1951 = vshrl.u32 %v1950, 7
  %v1952 = vsub.s32 0, %v1951
  %v1953 = vrot.slane %v1643, %v1952
  %v1954 = vlaneseq
  %v1955 = vshrl.u32 %v1954, 7
  %v1956 = vsub.s32 0, %v1955
  %v1957 = vrot.slane %v1645, %v1956
  %v1966 = vlaneseq
  %v1967 = vshrl.u32 %v1966, 7
  %v1968 = vsub.s32 0, %v1967
  %v1969 = vrot.slane %v1670, %v1968
  %v1970 = vlaneseq
  %v1971 = vshrl.u32 %v1970, 7
  %v1972 = vsub.s32 0, %v1971
  %v1973 = vrot.slane %v1684, %v1972
  %v1974 = vlaneseq
  %v1975 = vshrl.u32 %v1974, 7
  %v1976 = vsub.s32 0, %v1975
  %v1977 = vrot.slane %v1692, %v1976
  %v1978 = vlaneseq
  %v1979 = vshrl.u32 %v1978, 7
  %v1980 = vsub.s32 0, %v1979
  %v1981 = vrot.slane %v1694, %v1980
  %v1982 = vlaneseq
  %v1983 = vshrl.u32 %v1982, 7
  %v1984 = vsub.s32 0, %v1983
  %v1985 = vrot.slane %v1677, %v1984
  %v1986 = vlaneseq
  %v1987 = vshrl.u32 %v1986, 7
  %v1988 = vsub.s32 0, %v1987
  %v1989 = vrot.slane %v1691, %v1988
  %v1990 = vlaneseq
  %v1991 = vshrl.u32 %v1990, 7
  %v1992 = vsub.s32 0, %v1991
  %v1993 = vrot.slane %v1693, %v1992
  %v1994 = vlaneseq
  %v1995 = vshrl.u32 %v1994, 7
  %v1996 = vsub.s32 0, %v1995
  %v1997 = vrot.slane %v1695, %v1996
  %v2006 = vlaneseq
  %v2007 = vshrl.u32 %v2006, 7
  %v2008 = vsub.s32 0, %v2007
  %v2009 = vrot.slane %v1720, %v2008
  %v2010 = vlaneseq
  %v2011 = vshrl.u32 %v2010, 7
  %v2012 = vsub.s32 0, %v2011
  %v2013 = vrot.slane %v1734, %v2012
  %v2014 = vlaneseq
  %v2015 = vshrl.u32 %v2014, 7
  %v2016 = vsub.s32 0, %v2015
  %v2017 = vrot.slane %v1742, %v2016
  %v2018 = vlaneseq
  %v2019 = vshrl.u32 %v2018, 7
  %v2020 = vsub.s32 0, %v2019
  %v2021 = vrot.slane %v1744, %v2020
  %v2022 = vlaneseq
  %v2023 = vshrl.u32 %v2022, 7
  %v2024 = vsub.s32 0, %v2023
  %v2025 = vrot.slane %v1727, %v2024
  %v2026 = vlaneseq
  %v2027 = vshrl.u32 %v2026, 7
  %v2028 = vsub.s32 0, %v2027
  %v2029 = vrot.slane %v1741, %v2028
  %v2030 = vlaneseq
  %v2031 = vshrl.u32 %v2030, 7
  %v2032 = vsub.s32 0, %v2031
  %v2033 = vrot.slane %v1743, %v2032
  %v2034 = vlaneseq
  %v2035 = vshrl.u32 %v2034, 7
  %v2036 = vsub.s32 0, %v2035
  %v2037 = vrot.slane %v1745, %v2036
  %v2046 = vlaneseq
  %v2047 = vshrl.u32 %v2046, 7
  %v2048 = vsub.s32 0, %v2047
  %v2049 = vrot.slane %v1770, %v2048
  %v2050 = vlaneseq
  %v2051 = vshrl.u32 %v2050, 7
  %v2052 = vsub.s32 0, %v2051
  %v2053 = vrot.slane %v1784, %v2052
  %v2054 = vlaneseq
  %v2055 = vshrl.u32 %v2054, 7
  %v2056 = vsub.s32 0, %v2055
  %v2057 = vrot.slane %v1792, %v2056
  %v2058 = vlaneseq
  %v2059 = vshrl.u32 %v2058, 7
  %v2060 = vsub.s32 0, %v2059
  %v2061 = vrot.slane %v1794, %v2060
  %v2062 = vlaneseq
  %v2063 = vshrl.u32 %v2062, 7
  %v2064 = vsub.s32 0, %v2063
  %v2065 = vrot.slane %v1777, %v2064
  %v2066 = vlaneseq
  %v2067 = vshrl.u32 %v2066, 7
  %v2068 = vsub.s32 0, %v2067
  %v2069 = vrot.slane %v1791, %v2068
  %v2070 = vlaneseq
  %v2071 = vshrl.u32 %v2070, 7
  %v2072 = vsub.s32 0, %v2071
  %v2073 = vrot.slane %v1793, %v2072
  %v2074 = vlaneseq
  %v2075 = vshrl.u32 %v2074, 7
  %v2076 = vsub.s32 0, %v2075
  %v2077 = vrot.slane %v1795, %v2076
  %v2086 = vlaneseq
  %v2087 = vshrl.u32 %v2086, 7
  %v2088 = vsub.s32 0, %v2087
  %v2089 = vrot.slane %v1820, %v2088
  %v2090 = vlaneseq
  %v2091 = vshrl.u32 %v2090, 7
  %v2092 = vsub.s32 0, %v2091
  %v2093 = vrot.slane %v1834, %v2092
  %v2094 = vlaneseq
  %v2095 = vshrl.u32 %v2094, 7
  %v2096 = vsub.s32 0, %v2095
  %v2097 = vrot.slane %v1842, %v2096
  %v2098 = vlaneseq
  %v2099 = vshrl.u32 %v2098, 7
  %v2100 = vsub.s32 0, %v2099
  %v2101 = vrot.slane %v1844, %v2100
  %v2102 = vlaneseq
  %v2103 = vshrl.u32 %v2102, 7
  %v2104 = vsub.s32 0, %v2103
  %v2105 = vrot.slane %v1827, %v2104
  %v2106 = vlaneseq
  %v2107 = vshrl.u32 %v2106, 7
  %v2108 = vsub.s32 0, %v2107
  %v2109 = vrot.slane %v1841, %v2108
  %v2110 = vlaneseq
  %v2111 = vshrl.u32 %v2110, 7
  %v2112 = vsub.s32 0, %v2111
  %v2113 = vrot.slane %v1843, %v2112
  %v2114 = vlaneseq
  %v2115 = vshrl.u32 %v2114, 7
  %v2116 = vsub.s32 0, %v2115
  %v2117 = vrot.slane %v1845, %v2116
  %vm2126 = vcmask 1040384
  %v2127 = vsel %vm2126, %v1462, %v1849
  %v2128 = vsel %vm2126, %v1476, %v1853
  %v2129 = vsel %vm2126, %v1484, %v1857
  %v2130 = vsel %vm2126, %v1486, %v1861
  %v2131 = vsel %vm2126, %v1469, %v1865
  %v2132 = vsel %vm2126, %v1483, %v1869
  %v2133 = vsel %vm2126, %v1485, %v1873
  %v2134 = vsel %vm2126, %v1487, %v1877
  %vm2135 = vcmask 1041408
  %v2136 = vsel %vm2135, %v2127, %v1889
  %v2137 = vsel %vm2135, %v2128, %v1893
  %v2138 = vsel %vm2135, %v2129, %v1897
  %v2139 = vsel %vm2135, %v2130, %v1901
  %v2140 = vsel %vm2135, %v2131, %v1905
  %v2141 = vsel %vm2135, %v2132, %v1909
  %v2142 = vsel %vm2135, %v2133, %v1913
  %v2143 = vsel %vm2135, %v2134, %v1917
  %vm2144 = vcmask 1042432
  %v2145 = vsel %vm2144, %v2136, %v1929
  %v2146 = vsel %vm2144, %v2137, %v1933
  %v2147 = vsel %vm2144, %v2138, %v1937
  %v2148 = vsel %vm2144, %v2139, %v1941
  %v2149 = vsel %vm2144, %v2140, %v1945
  %v2150 = vsel %vm2144, %v2141, %v1949
  %v2151 = vsel %vm2144, %v2142, %v1953
  %v2152 = vsel %vm2144, %v2143, %v1957
  %vm2153 = vcmask 1043456
  %v2154 = vsel %vm2153, %v2145, %v1969
  %v2155 = vsel %vm2153, %v2146, %v1973
  %v2156 = vsel %vm2153, %v2147, %v1977
  %v2157 = vsel %vm2153, %v2148, %v1981
  %v2158 = vsel %vm2153, %v2149, %v1985
  %v2159 = vsel %vm2153, %v2150, %v1989
  %v2160 = vsel %vm2153, %v2151, %v1993
  %v2161 = vsel %vm2153, %v2152, %v1997
  %vm2162 = vcmask 1044480
  %v2163 = vsel %vm2162, %v2154, %v2009
  %v2164 = vsel %vm2162, %v2155, %v2013
  %v2165 = vsel %vm2162, %v2156, %v2017
  %v2166 = vsel %vm2162, %v2157, %v2021
  %v2167 = vsel %vm2162, %v2158, %v2025
  %v2168 = vsel %vm2162, %v2159, %v2029
  %v2169 = vsel %vm2162, %v2160, %v2033
  %v2170 = vsel %vm2162, %v2161, %v2037
  %vm2171 = vcmask 1045504
  %v2172 = vsel %vm2171, %v2163, %v2049
  %v2173 = vsel %vm2171, %v2164, %v2053
  %v2174 = vsel %vm2171, %v2165, %v2057
  %v2175 = vsel %vm2171, %v2166, %v2061
  %v2176 = vsel %vm2171, %v2167, %v2065
  %v2177 = vsel %vm2171, %v2168, %v2069
  %v2178 = vsel %vm2171, %v2169, %v2073
  %v2179 = vsel %vm2171, %v2170, %v2077
  %vm2180 = vcmask 1046528
  %v2181 = vsel %vm2180, %v2172, %v2089
  %v2182 = vsel %vm2180, %v2173, %v2093
  %v2183 = vsel %vm2180, %v2174, %v2097
  %v2184 = vsel %vm2180, %v2175, %v2101
  %v2185 = vsel %vm2180, %v2176, %v2105
  %v2186 = vsel %vm2180, %v2177, %v2109
  %v2187 = vsel %vm2180, %v2178, %v2113
  %v2188 = vsel %vm2180, %v2179, %v2117
  %v2189 = vpack.c.bf16 %v2182, %v2181
  %v2190 = vpack.c.bf16 %v2184, %v2183
  %v2191 = vpack.c.bf16 %v2186, %v2185
  %v2192 = vpack.c.bf16 %v2188, %v2187
  %v2193 = vld [vmem:[%s4] sm:$0xf]
  %v2194 = vld [vmem:[%s4 + $0x4] sm:$0xf]
  %v2195 = vld [vmem:[%s4 + $0x8] sm:$0xf]
  %v2196 = vld [vmem:[%s4 + $0xc] sm:$0xf]
  %v2197 = vld [vmem:[%s4 + $0x10] sm:$0xf]
  %v2198 = vld [vmem:[%s4 + $0x14] sm:$0xf]
  %v2199 = vld [vmem:[%s4 + $0x18] sm:$0xf]
  %v2200 = vld [vmem:[%s4 + $0x1c] sm:$0xf]
  %v2201 = vld [vmem:[%s4 + $0x20] sm:$0xf]
  %v2202 = vld [vmem:[%s4 + $0x24] sm:$0xf]
  %v2203 = vld [vmem:[%s4 + $0x28] sm:$0xf]
  %v2204 = vld [vmem:[%s4 + $0x2c] sm:$0xf]
  %v2205 = vld [vmem:[%s4 + $0x30] sm:$0xf]
  %v2206 = vld [vmem:[%s4 + $0x34] sm:$0xf]
  %v2207 = vld [vmem:[%s4 + $0x38] sm:$0xf]
  %v2208 = vld [vmem:[%s4 + $0x3c] sm:$0xf]
  %v2209 = vld [vmem:[%s5] sm:$0x1]
  %v2211 = vlaneseq
  %v2212 = vshrl.u32 %v2211, 7
  %v2213 = vsub.s32 0, %v2212
  %v2214 = vrot.slane %v2209, %v2213
  %v2232 = vunpack.c.l.b16 %v2193
  %v2233 = vunpack.c.l.b16 %v2194
  %v2234 = vunpack.c.l.b16 %v2195
  %v2235 = vunpack.c.l.b16 %v2196
  %v2236 = vunpack.c.l.b16 %v2197
  %v2237 = vunpack.c.l.b16 %v2198
  %v2238 = vunpack.c.l.b16 %v2199
  %v2239 = vunpack.c.l.b16 %v2200
  %v2240 = vunpack.c.l.b16 %v2201
  %v2241 = vunpack.c.l.b16 %v2202
  %v2242 = vunpack.c.l.b16 %v2203
  %v2243 = vunpack.c.l.b16 %v2204
  %v2244 = vunpack.c.l.b16 %v2205
  %v2245 = vunpack.c.l.b16 %v2206
  %v2246 = vunpack.c.l.b16 %v2207
  %v2247 = vunpack.c.l.b16 %v2208
  %v2248 = vpack.c.b16 %v2233, %v2232
  %v2249 = vpack.c.b16 %v2235, %v2234
  %v2250 = vpack.c.b16 %v2237, %v2236
  %v2251 = vpack.c.b16 %v2239, %v2238
  %v2252 = vpack.c.b16 %v2241, %v2240
  %v2253 = vpack.c.b16 %v2243, %v2242
  %v2254 = vpack.c.b16 %v2245, %v2244
  %v2255 = vpack.c.b16 %v2247, %v2246
  %2264 = vmatprep.subr.bf16.mxu0 0
  %2265 = vmatpush1.bf16.msra.mxu0 %v2248
  %2266 = vmatprep.subr.bf16.mxu0 0
  %2267 = vmatpush1.bf16.msra.mxu0 %v2249
  %2268 = vmatprep.subr.bf16.mxu0 0
  %2269 = vmatpush1.bf16.msra.mxu0 %v2250
  %2270 = vmatprep.subr.bf16.mxu0 0
  %2271 = vmatpush1.bf16.msra.mxu0 %v2251
  %2272 = vmatprep.subr.bf16.mxu0 0
  %2273 = vmatpush1.bf16.msra.mxu0 %v2252
  %2274 = vmatprep.subr.bf16.mxu0 0
  %2275 = vmatpush1.bf16.msra.mxu0 %v2253
  %2276 = vmatprep.subr.bf16.mxu0 0
  %2277 = vmatpush1.bf16.msra.mxu0 %v2254
  %2278 = vmatprep.subr.bf16.mxu0 0
  %2279 = vmatpush1.bf16.msra.mxu0 %v2255
  %2280 = vmatprep.subr.bf16.mxu0 0
  %2281 = vmatpush1.bf16.msra.mxu0 0
  %2282 = vmatprep.subr.bf16.mxu0 0
  %2283 = vmatpush1.bf16.msra.mxu0 0
  %2284 = vmatprep.subr.bf16.mxu0 0
  %2285 = vmatpush1.bf16.msra.mxu0 0
  %2286 = vmatprep.subr.bf16.mxu0 0
  %2287 = vmatpush1.bf16.msra.mxu0 0
  %2288 = vmatprep.subr.bf16.mxu0 0
  %2289 = vmatpush1.bf16.msra.mxu0 0
  %2290 = vmatprep.subr.bf16.mxu0 0
  %2291 = vmatpush1.bf16.msra.mxu0 0
  %2292 = vmatprep.subr.bf16.mxu0 0
  %2293 = vmatpush1.bf16.msra.mxu0 0
  %2294 = vmatprep.subr.bf16.mxu0 0
  %2295 = vmatpush1.bf16.msra.mxu0 0
  %2296 = vmatprep.mubr.bf16.mxu0 0
  %2297 = vmatmul.mubr.bf16.gmra.mrb[0].mxu0 %v2189
  %v2298 = vpop.f32.mrb[0].mxu0
  %v2299 = vadd.f32 %v2214, %v2298
  %v2300 = vpop.f32.mrb[0].mxu0
  %v2301 = vpop.f32.mrb[0].mxu0
  %v2302 = vadd.f32 %v2214, %v2301
  %v2303 = vpop.f32.mrb[0].mxu0
  %2304 = vmatprep.mubr.bf16.mxu0 0
  %2305 = vmatmul.mubr.bf16.gmra.mrb[0].mxu0 %v2190
  %v2306 = vpop.f32.mrb[0].mxu0
  %v2307 = vadd.f32 %v2214, %v2306
  %v2308 = vpop.f32.mrb[0].mxu0
  %v2309 = vpop.f32.mrb[0].mxu0
  %v2310 = vadd.f32 %v2214, %v2309
  %v2311 = vpop.f32.mrb[0].mxu0
  %2312 = vmatprep.mubr.bf16.mxu0 0
  %2313 = vmatmul.mubr.bf16.gmra.mrb[0].mxu0 %v2191
  %v2314 = vpop.f32.mrb[0].mxu0
  %v2315 = vadd.f32 %v2214, %v2314
  %v2316 = vpop.f32.mrb[0].mxu0
  %v2317 = vpop.f32.mrb[0].mxu0
  %v2318 = vadd.f32 %v2214, %v2317
  %v2319 = vpop.f32.mrb[0].mxu0
  %2320 = vmatprep.mubr.bf16.mxu0 0
  %2321 = vmatmul.mubr.bf16.gmra.mrb[0].mxu0 %v2192
  %v2322 = vpop.f32.mrb[0].mxu0
  %v2323 = vadd.f32 %v2214, %v2322
  %v2324 = vpop.f32.mrb[0].mxu0
  %v2325 = vpop.f32.mrb[0].mxu0
  %v2326 = vadd.f32 %v2214, %v2325
  %v2327 = vpop.f32.mrb[0].mxu0
  %2328 = vdwg.mxu0
  %vm2329 = vcmask 130048
  %2330 = vst.msk [vmem:[%s6] sm:$0xff] %vm2329, %v2299
  %2331 = vst.msk [vmem:[%s6 + $0x8] sm:$0xff] %vm2329, %v2302
  %2332 = vst.msk [vmem:[%s6 + $0x10] sm:$0xff] %vm2329, %v2307
  %2333 = vst.msk [vmem:[%s6 + $0x18] sm:$0xff] %vm2329, %v2310
  %2334 = vst.msk [vmem:[%s6 + $0x20] sm:$0xff] %vm2329, %v2315
  %2335 = vst.msk [vmem:[%s6 + $0x28] sm:$0xff] %vm2329, %v2318
  %2336 = vst.msk [vmem:[%s6 + $0x30] sm:$0xff] %vm2329, %v2323
  %2337 = vst.msk [vmem:[%s6 + $0x38] sm:$0xff] %vm2329, %v2326
  // Predicated region
  $region30: #{lstmae_forward.7} parent=0 // pred_check
    _
  $region31: #{lstmae_forward.7} parent=0 // pred_check_branch
    %2339 = sbr.rel (0) target = $region33
  $region32: #{lstmae_forward.7} parent=0 // pred_region
    _
  $region33: #{lstmae_forward.7} parent=0 // pred_fallthru
    _
  // Predicated region
  $region34: #{lstmae_forward.7} parent=0 // pred_check
    _
  $region35: #{lstmae_forward.7} parent=0 // pred_check_branch
    %2341 = sbr.rel (0) target = $region37
  $region36: #{lstmae_forward.7} parent=0 // pred_region
    _
  $region37: #{lstmae_forward.7} parent=0 // pred_fallthru
    _

// kernel: lstmae_forward.4
$region0: #{lstmae_forward.4}
  #allocation0 [shape = 'u32[]', space=smem, size = 0x4, offset = 0x4, fixed_abs, tag = 'smem constant byte address 0x4 - core index']
  #allocation1 [shape = 'u32[144,128]{1,0:T(1,128)}', space=vmem, size = 0x12000, scoped, tag = 'internal scratch']
  #allocation2 [shape = 'f32[8,128]{1,0:T(8,128)}', space=vmem, size = 0x1000, scoped, tag = 'scratch operand']
  #allocation3 [shape = 'f32[8,128]{1,0:T(8,128)}', space=vmem, size = 0x1000, scoped, tag = 'scratch operand']
  %s0 = inlined_call_operand.vmem [shape: f32[8,8,16], index: 0, kind: input, shape index: {}]
  %s1 = inlined_call_operand.vmem [shape: bf16[16,512], index: 1, kind: input, shape index: {}]
  %s2 = inlined_call_operand.hbm [shape: bf16[128,512], index: 2, kind: input, shape index: {}]
  %s3 = inlined_call_operand.vmem [shape: f32[1,512], index: 3, kind: input, shape index: {}]
  %s4 = inlined_call_operand.vmem [shape: f32[8,8,128], index: 4, kind: output, shape index: {}]
  %s5 = sld [smem:[#allocation0]]
  $region34: #{lstmae_forward.4} parent=0
    _
  %s7 = ssub.s32 1, %s5
  %s8 = scalar_select 0, %s7, %s5
  $region1: #{lstmae_forward.4} parent=0
    #allocation4 [shape = 'u8[131072]{0}', space=vmem, size = 0x20000, scoped, tag = 'input window, operand 2, single buffered']
    #allocation5 [shape = 's32[1]{0}', space=sflag, size = 0x4, scoped, tag = 'scoped memory for lstmae_forward.4']
    %9 = vsyncpa [#allocation5], 0
    // Predicated region
    $region2: #{lstmae_forward.4} parent=1 // pred_check
      _
    $region3: #{lstmae_forward.4} parent=1 // pred_check_branch
      %11 = sbr.rel (0) target = $region5
    $region4: #{lstmae_forward.4} parent=1 // pred_region
      _
    $region5: #{lstmae_forward.4} parent=1 // pred_fallthru
      _
    // Predicated region
    $region6: #{lstmae_forward.4} parent=1 // pred_check
      _
    $region7: #{lstmae_forward.4} parent=1 // pred_check_branch
      %13 = sbr.rel (0) target = $region9
    $region8: #{lstmae_forward.4} parent=1 // pred_region
      _
    $region9: #{lstmae_forward.4} parent=1 // pred_fallthru
      _
    // Predicated region
    $region10: #{lstmae_forward.4} parent=1 // pred_check
      _
    $region11: #{lstmae_forward.4} parent=1 // pred_check_branch
      %15 = sbr.rel (0) target = $region13
    $region12: #{lstmae_forward.4} parent=1 // pred_region
      %s17 = ssub.s32 4096, 4096
      %18 = vsyncadd [#allocation5], %s17
      %s19 = sshll.u32 [#allocation4], 4
      %s20 = int_to_ptr.vmem [resolvable:$true] %s19
      %25 = dma.hbm_to_vmem [thread:$0]  %s2, 4096, %s20, [#allocation5], 256, 256, 16
    $region13: #{lstmae_forward.4} parent=1 // pred_fallthru
      _
    // Predicated region
    $region14: #{lstmae_forward.4} parent=1 // pred_check
      _
    $region15: #{lstmae_forward.4} parent=1 // pred_check_branch
      %27 = sbr.rel (0) target = $region17
    $region16: #{lstmae_forward.4} parent=1 // pred_region
      _
    $region17: #{lstmae_forward.4} parent=1 // pred_fallthru
      _
    // Predicated region
    $region18: #{lstmae_forward.4} parent=1 // pred_check
      _
    $region19: #{lstmae_forward.4} parent=1 // pred_check_branch
      %29 = sbr.rel (0) target = $region21
    $region20: #{lstmae_forward.4} parent=1 // pred_region
      %30 = dma.done [#allocation5], 4096
    $region21: #{lstmae_forward.4} parent=1 // pred_fallthru
      _
    %p32 = scmp.eq.s32.totalorder 0, 0
    // Predicated region
    $region22: #{lstmae_forward.4} parent=1 // pred_check
      %p33 = pneg %p32
    $region23: #{lstmae_forward.4} parent=1 // pred_check_branch
      %35 = sbr.rel (%p33) target = $region25
    $region24: #{lstmae_forward.4} parent=1 // pred_region
      %36 = vst [vmem:[#allocation2] sm:$0xff] 0.0
      %37 = vst [vmem:[#allocation3] sm:$0xff] 0.0
    $region25: #{lstmae_forward.4} parent=1 // pred_fallthru
      _
    %v38 = vld [vmem:[%s1] sm:$0xff]
    %v39 = vld [vmem:[%s1 + $0x8] sm:$0xff]
    %v40 = vld [vmem:[%s1 + $0x10] sm:$0xff]
    %v41 = vld [vmem:[%s1 + $0x18] sm:$0xff]
    %v42 = vld [vmem:[#allocation4] sm:$0xff]
    %v43 = vld [vmem:[#allocation4 + $0x8] sm:$0xff]
    %v44 = vld [vmem:[#allocation4 + $0x10] sm:$0xff]
    %v45 = vld [vmem:[#allocation4 + $0x18] sm:$0xff]
    %v46 = vld [vmem:[#allocation4 + $0x20] sm:$0xff]
    %v47 = vld [vmem:[#allocation4 + $0x28] sm:$0xff]
    %v48 = vld [vmem:[#allocation4 + $0x30] sm:$0xff]
    %v49 = vld [vmem:[#allocation4 + $0x38] sm:$0xff]
    %v50 = vld [vmem:[#allocation4 + $0x40] sm:$0xff]
    %v51 = vld [vmem:[#allocation4 + $0x48] sm:$0xff]
    %v52 = vld [vmem:[#allocation4 + $0x50] sm:$0xff]
    %v53 = vld [vmem:[#allocation4 + $0x58] sm:$0xff]
    %v54 = vld [vmem:[#allocation4 + $0x60] sm:$0xff]
    %v55 = vld [vmem:[#allocation4 + $0x68] sm:$0xff]
    %v56 = vld [vmem:[#allocation4 + $0x70] sm:$0xff]
    %v57 = vld [vmem:[#allocation4 + $0x78] sm:$0xff]
    %v58 = vld [vmem:[#allocation4 + $0x80] sm:$0xff]
    %v59 = vld [vmem:[#allocation4 + $0x88] sm:$0xff]
    %v60 = vld [vmem:[#allocation4 + $0x90] sm:$0xff]
    %v61 = vld [vmem:[#allocation4 + $0x98] sm:$0xff]
    %v62 = vld [vmem:[#allocation4 + $0xa0] sm:$0xff]
    %v63 = vld [vmem:[#allocation4 + $0xa8] sm:$0xff]
    %v64 = vld [vmem:[#allocation4 + $0xb0] sm:$0xff]
    %v65 = vld [vmem:[#allocation4 + $0xb8] sm:$0xff]
    %v66 = vld [vmem:[#allocation4 + $0xc0] sm:$0xff]
    %v67 = vld [vmem:[#allocation4 + $0xc8] sm:$0xff]
    %v68 = vld [vmem:[#allocation4 + $0xd0] sm:$0xff]
    %v69 = vld [vmem:[#allocation4 + $0xd8] sm:$0xff]
    %v70 = vld [vmem:[#allocation4 + $0xe0] sm:$0xff]
    %v71 = vld [vmem:[#allocation4 + $0xe8] sm:$0xff]
    %v72 = vld [vmem:[#allocation4 + $0xf0] sm:$0xff]
    %v73 = vld [vmem:[#allocation4 + $0xf8] sm:$0xff]
    %v74 = vld [vmem:[%s3] sm:$0xf]
    %v75 = vld [vmem:[%s0] sm:$0xff]
    %v76 = vld [vmem:[%s0 + $0x8] sm:$0xff]
    %v77 = vld [vmem:[%s0 + $0x10] sm:$0xff]
    %v78 = vld [vmem:[%s0 + $0x18] sm:$0xff]
    %v79 = vld [vmem:[%s0 + $0x20] sm:$0xff]
    %v80 = vld [vmem:[%s0 + $0x28] sm:$0xff]
    %v81 = vld [vmem:[%s0 + $0x30] sm:$0xff]
    %v82 = vld [vmem:[%s0 + $0x38] sm:$0xff]
    %v83 = vpack.c.bf16 %v76, %v75
    %v84 = vpack.c.bf16 %v78, %v77
    %v85 = vpack.c.bf16 %v80, %v79
    %v86 = vpack.c.bf16 %v82, %v81
    %v88 = vlaneseq
    %v89 = vshrl.u32 %v88, 7
    %v90 = vsub.s32 0, %v89
    %v91 = vrot.slane %v74, %v90
    %v92 = vlaneseq
    %v93 = vshrl.u32 %v92, 7
    %v94 = vsub.s32 1, %v93
    %v95 = vrot.slane %v74, %v94
    %v96 = vlaneseq
    %v97 = vshrl.u32 %v96, 7
    %v98 = vsub.s32 2, %v97
    %v99 = vrot.slane %v74, %v98
    %v100 = vlaneseq
    %v101 = vshrl.u32 %v100, 7
    %v102 = vsub.s32 3, %v101
    %v103 = vrot.slane %v74, %v102
    %v112 = vunpack.c.l.b16 %v38
    %v113 = vunpack.c.h.b16 %v38
    %v114 = vunpack.c.l.b16 %v39
    %v115 = vunpack.c.h.b16 %v39
    %v116 = vunpack.c.l.b16 %v40
    %v117 = vunpack.c.h.b16 %v40
    %v118 = vunpack.c.l.b16 %v41
    %v119 = vunpack.c.h.b16 %v41
    %v120 = vpack.c.b16 %v116, %v112
    %v121 = vpack.c.b16 %v117, %v113
    %v122 = vpack.c.b16 %v118, %v114
    %v123 = vpack.c.b16 %v119, %v115
    %vm128 = vcmask 130048
    %v130 = vsel %vm128, %v83, 0
    %v133 = vsel %vm128, %v84, 0
    %v136 = vsel %vm128, %v85, 0
    %v139 = vsel %vm128, %v86, 0
    %141 = vmatprep.subr.bf16.mxu0 %v121
    %142 = vmatpush1.bf16.msra.mxu0 %v120
    %143 = vmatprep.subr.bf16.mxu0 0
    %144 = vmatpush1.bf16.msra.mxu0 0
    %145 = vmatprep.subr.bf16.mxu0 0
    %146 = vmatpush1.bf16.msra.mxu0 0
    %147 = vmatprep.subr.bf16.mxu0 0
    %148 = vmatpush1.bf16.msra.mxu0 0
    %149 = vmatprep.subr.bf16.mxu0 0
    %150 = vmatpush1.bf16.msra.mxu0 0
    %151 = vmatprep.subr.bf16.mxu0 0
    %152 = vmatpush1.bf16.msra.mxu0 0
    %153 = vmatprep.subr.bf16.mxu0 0
    %154 = vmatpush1.bf16.msra.mxu0 0
    %155 = vmatprep.subr.bf16.mxu0 0
    %156 = vmatpush1.bf16.msra.mxu0 0
    %157 = vmatprep.subr.bf16.mxu0 0
    %158 = vmatpush1.bf16.msra.mxu0 0
    %159 = vmatprep.subr.bf16.mxu0 0
    %160 = vmatpush1.bf16.msra.mxu0 0
    %161 = vmatprep.subr.bf16.mxu0 0
    %162 = vmatpush1.bf16.msra.mxu0 0
    %163 = vmatprep.subr.bf16.mxu0 0
    %164 = vmatpush1.bf16.msra.mxu0 0
    %165 = vmatprep.subr.bf16.mxu0 0
    %166 = vmatpush1.bf16.msra.mxu0 0
    %167 = vmatprep.subr.bf16.mxu0 0
    %168 = vmatpush1.bf16.msra.mxu0 0
    %169 = vmatprep.subr.bf16.mxu0 0
    %170 = vmatpush1.bf16.msra.mxu0 0
    %171 = vmatprep.subr.bf16.mxu0 0
    %172 = vmatpush1.bf16.msra.mxu0 0
    %173 = vmatprep.mubr.bf16.mxu0 0
    %174 = vmatmul.mubr.bf16.gmra.mrb[0].mxu0 %v130
    %v175 = vpop.f32.mrb[0].mxu0
    %v176 = vadd.f32 %v91, %v175
    %v177 = vpop.f32.mrb[0].mxu0
    %v178 = vadd.f32 %v95, %v177
    %v179 = vpop.f32.mrb[0].mxu0
    %v180 = vadd.f32 %v91, %v179
    %v181 = vpop.f32.mrb[0].mxu0
    %v182 = vadd.f32 %v95, %v181
    %183 = vmatprep.mubr.bf16.mxu0 0
    %184 = vmatmul.mubr.bf16.gmra.mrb[0].mxu0 %v133
    %v185 = vpop.f32.mrb[0].mxu0
    %v186 = vadd.f32 %v91, %v185
    %v187 = vpop.f32.mrb[0].mxu0
    %v188 = vadd.f32 %v95, %v187
    %v189 = vpop.f32.mrb[0].mxu0
    %v190 = vadd.f32 %v91, %v189
    %v191 = vpop.f32.mrb[0].mxu0
    %v192 = vadd.f32 %v95, %v191
    %193 = vmatprep.mubr.bf16.mxu0 0
    %194 = vmatmul.mubr.bf16.gmra.mrb[0].mxu0 %v136
    %v195 = vpop.f32.mrb[0].mxu0
    %v196 = vadd.f32 %v91, %v195
    %v197 = vpop.f32.mrb[0].mxu0
    %v198 = vadd.f32 %v95, %v197
    %v199 = vpop.f32.mrb[0].mxu0
    %v200 = vadd.f32 %v91, %v199
    %v201 = vpop.f32.mrb[0].mxu0
    %v202 = vadd.f32 %v95, %v201
    %203 = vmatprep.mubr.bf16.mxu0 0
    %204 = vmatmul.mubr.bf16.gmra.mrb[0].mxu0 %v139
    %v205 = vpop.f32.mrb[0].mxu0
    %v206 = vadd.f32 %v91, %v205
    %v207 = vpop.f32.mrb[0].mxu0
    %v208 = vadd.f32 %v95, %v207
    %v209 = vpop.f32.mrb[0].mxu0
    %v210 = vadd.f32 %v91, %v209
    %v211 = vpop.f32.mrb[0].mxu0
    %v212 = vadd.f32 %v95, %v211
    %213 = vdwg.mxu0
    %214 = vmatprep.subr.bf16.mxu0 %v123
    %215 = vmatpush1.bf16.msra.mxu0 %v122
    %216 = vmatprep.subr.bf16.mxu0 0
    %217 = vmatpush1.bf16.msra.mxu0 0
    %218 = vmatprep.subr.bf16.mxu0 0
    %219 = vmatpush1.bf16.msra.mxu0 0
    %220 = vmatprep.subr.bf16.mxu0 0
    %221 = vmatpush1.bf16.msra.mxu0 0
    %222 = vmatprep.subr.bf16.mxu0 0
    %223 = vmatpush1.bf16.msra.mxu0 0
    %224 = vmatprep.subr.bf16.mxu0 0
    %225 = vmatpush1.bf16.msra.mxu0 0
    %226 = vmatprep.subr.bf16.mxu0 0
    %227 = vmatpush1.bf16.msra.mxu0 0
    %228 = vmatprep.subr.bf16.mxu0 0
    %229 = vmatpush1.bf16.msra.mxu0 0
    %230 = vmatprep.subr.bf16.mxu0 0
    %231 = vmatpush1.bf16.msra.mxu0 0
    %232 = vmatprep.subr.bf16.mxu0 0
    %233 = vmatpush1.bf16.msra.mxu0 0
    %234 = vmatprep.subr.bf16.mxu0 0
    %235 = vmatpush1.bf16.msra.mxu0 0
    %236 = vmatprep.subr.bf16.mxu0 0
    %237 = vmatpush1.bf16.msra.mxu0 0
    %238 = vmatprep.subr.bf16.mxu0 0
    %239 = vmatpush1.bf16.msra.mxu0 0
    %240 = vmatprep.subr.bf16.mxu0 0
    %241 = vmatpush1.bf16.msra.mxu0 0
    %242 = vmatprep.subr.bf16.mxu0 0
    %243 = vmatpush1.bf16.msra.mxu0 0
    %244 = vmatprep.subr.bf16.mxu0 0
    %245 = vmatpush1.bf16.msra.mxu0 0
    %246 = vmatprep.mubr.bf16.mxu0 0
    %247 = vmatmul.mubr.bf16.gmra.mrb[0].mxu0 %v130
    %v248 = vpop.f32.mrb[0].mxu0
    %v249 = vadd.f32 %v99, %v248
    %v250 = vpop.f32.mrb[0].mxu0
    %v251 = vadd.f32 %v103, %v250
    %v252 = vpop.f32.mrb[0].mxu0
    %v253 = vadd.f32 %v99, %v252
    %v254 = vpop.f32.mrb[0].mxu0
    %v255 = vadd.f32 %v103, %v254
    %256 = vmatprep.mubr.bf16.mxu0 0
    %257 = vmatmul.mubr.bf16.gmra.mrb[0].mxu0 %v133
    %v258 = vpop.f32.mrb[0].mxu0
    %v259 = vadd.f32 %v99, %v258
    %v260 = vpop.f32.mrb[0].mxu0
    %v261 = vadd.f32 %v103, %v260
    %v262 = vpop.f32.mrb[0].mxu0
    %v263 = vadd.f32 %v99, %v262
    %v264 = vpop.f32.mrb[0].mxu0
    %v265 = vadd.f32 %v103, %v264
    %266 = vmatprep.mubr.bf16.mxu0 0
    %267 = vmatmul.mubr.bf16.gmra.mrb[0].mxu0 %v136
    %v268 = vpop.f32.mrb[0].mxu0
    %v269 = vadd.f32 %v99, %v268
    %v270 = vpop.f32.mrb[0].mxu0
    %v271 = vadd.f32 %v103, %v270
    %v272 = vpop.f32.mrb[0].mxu0
    %v273 = vadd.f32 %v99, %v272
    %v274 = vpop.f32.mrb[0].mxu0
    %v275 = vadd.f32 %v103, %v274
    %276 = vmatprep.mubr.bf16.mxu0 0
    %277 = vmatmul.mubr.bf16.gmra.mrb[0].mxu0 %v139
    %v278 = vpop.f32.mrb[0].mxu0
    %v279 = vadd.f32 %v99, %v278
    %v280 = vpop.f32.mrb[0].mxu0
    %v281 = vadd.f32 %v103, %v280
    %v282 = vpop.f32.mrb[0].mxu0
    %v283 = vadd.f32 %v99, %v282
    %v284 = vpop.f32.mrb[0].mxu0
    %v285 = vadd.f32 %v103, %v284
    %286 = vdwg.mxu0
    %v287 = vld [vmem:[#allocation2] sm:$0xff]
    %v288 = vld [vmem:[#allocation3] sm:$0xff]
    %v289 = vpack.c.bf16 %v287, %v287
    %v322 = vunpack.c.l.b16 %v42
    %v323 = vunpack.c.h.b16 %v42
    %v324 = vunpack.c.l.b16 %v43
    %v325 = vunpack.c.h.b16 %v43
    %v326 = vunpack.c.l.b16 %v44
    %v327 = vunpack.c.h.b16 %v44
    %v328 = vunpack.c.l.b16 %v45
    %v329 = vunpack.c.h.b16 %v45
    %v330 = vunpack.c.l.b16 %v46
    %v331 = vunpack.c.h.b16 %v46
    %v332 = vunpack.c.l.b16 %v47
    %v333 = vunpack.c.h.b16 %v47
    %v334 = vunpack.c.l.b16 %v48
    %v335 = vunpack.c.h.b16 %v48
    %v336 = vunpack.c.l.b16 %v49
    %v337 = vunpack.c.h.b16 %v49
    %v338 = vunpack.c.l.b16 %v50
    %v339 = vunpack.c.h.b16 %v50
    %v340 = vunpack.c.l.b16 %v51
    %v341 = vunpack.c.h.b16 %v51
    %v342 = vunpack.c.l.b16 %v52
    %v343 = vunpack.c.h.b16 %v52
    %v344 = vunpack.c.l.b16 %v53
    %v345 = vunpack.c.h.b16 %v53
    %v346 = vunpack.c.l.b16 %v54
    %v347 = vunpack.c.h.b16 %v54
    %v348 = vunpack.c.l.b16 %v55
    %v349 = vunpack.c.h.b16 %v55
    %v350 = vunpack.c.l.b16 %v56
    %v351 = vunpack.c.h.b16 %v56
    %v352 = vunpack.c.l.b16 %v57
    %v353 = vunpack.c.h.b16 %v57
    %v354 = vunpack.c.l.b16 %v58
    %v355 = vunpack.c.h.b16 %v58
    %v356 = vunpack.c.l.b16 %v59
    %v357 = vunpack.c.h.b16 %v59
    %v358 = vunpack.c.l.b16 %v60
    %v359 = vunpack.c.h.b16 %v60
    %v360 = vunpack.c.l.b16 %v61
    %v361 = vunpack.c.h.b16 %v61
    %v362 = vunpack.c.l.b16 %v62
    %v363 = vunpack.c.h.b16 %v62
    %v364 = vunpack.c.l.b16 %v63
    %v365 = vunpack.c.h.b16 %v63
    %v366 = vunpack.c.l.b16 %v64
    %v367 = vunpack.c.h.b16 %v64
    %v368 = vunpack.c.l.b16 %v65
    %v369 = vunpack.c.h.b16 %v65
    %v370 = vunpack.c.l.b16 %v66
    %v371 = vunpack.c.h.b16 %v66
    %v372 = vunpack.c.l.b16 %v67
    %v373 = vunpack.c.h.b16 %v67
    %v374 = vunpack.c.l.b16 %v68
    %v375 = vunpack.c.h.b16 %v68
    %v376 = vunpack.c.l.b16 %v69
    %v377 = vunpack.c.h.b16 %v69
    %v378 = vunpack.c.l.b16 %v70
    %v379 = vunpack.c.h.b16 %v70
    %v380 = vunpack.c.l.b16 %v71
    %v381 = vunpack.c.h.b16 %v71
    %v382 = vunpack.c.l.b16 %v72
    %v383 = vunpack.c.h.b16 %v72
    %v384 = vunpack.c.l.b16 %v73
    %v385 = vunpack.c.h.b16 %v73
    %v386 = vpack.c.b16 %v326, %v322
    %v387 = vpack.c.b16 %v327, %v323
    %v388 = vpack.c.b16 %v328, %v324
    %v389 = vpack.c.b16 %v329, %v325
    %v390 = vpack.c.b16 %v334, %v330
    %v391 = vpack.c.b16 %v335, %v331
    %v392 = vpack.c.b16 %v336, %v332
    %v393 = vpack.c.b16 %v337, %v333
    %v394 = vpack.c.b16 %v342, %v338
    %v395 = vpack.c.b16 %v343, %v339
    %v396 = vpack.c.b16 %v344, %v340
    %v397 = vpack.c.b16 %v345, %v341
    %v398 = vpack.c.b16 %v350, %v346
    %v399 = vpack.c.b16 %v351, %v347
    %v400 = vpack.c.b16 %v352, %v348
    %v401 = vpack.c.b16 %v353, %v349
    %v402 = vpack.c.b16 %v358, %v354
    %v403 = vpack.c.b16 %v359, %v355
    %v404 = vpack.c.b16 %v360, %v356
    %v405 = vpack.c.b16 %v361, %v357
    %v406 = vpack.c.b16 %v366, %v362
    %v407 = vpack.c.b16 %v367, %v363
    %v408 = vpack.c.b16 %v368, %v364
    %v409 = vpack.c.b16 %v369, %v365
    %v410 = vpack.c.b16 %v374, %v370
    %v411 = vpack.c.b16 %v375, %v371
    %v412 = vpack.c.b16 %v376, %v372
    %v413 = vpack.c.b16 %v377, %v373
    %v414 = vpack.c.b16 %v382, %v378
    %v415 = vpack.c.b16 %v383, %v379
    %v416 = vpack.c.b16 %v384, %v380
    %v417 = vpack.c.b16 %v385, %v381
    %450 = vmatprep.subr.bf16.mxu0 %v387
    %451 = vmatpush1.bf16.msra.mxu0 %v386
    %452 = vmatprep.subr.bf16.mxu0 %v391
    %453 = vmatpush1.bf16.msra.mxu0 %v390
    %454 = vmatprep.subr.bf16.mxu0 %v395
    %455 = vmatpush1.bf16.msra.mxu0 %v394
    %456 = vmatprep.subr.bf16.mxu0 %v399
    %457 = vmatpush1.bf16.msra.mxu0 %v398
    %458 = vmatprep.subr.bf16.mxu0 %v403
    %459 = vmatpush1.bf16.msra.mxu0 %v402
    %460 = vmatprep.subr.bf16.mxu0 %v407
    %461 = vmatpush1.bf16.msra.mxu0 %v406
    %462 = vmatprep.subr.bf16.mxu0 %v411
    %463 = vmatpush1.bf16.msra.mxu0 %v410
    %464 = vmatprep.subr.bf16.mxu0 %v415
    %465 = vmatpush1.bf16.msra.mxu0 %v414
    %466 = vmatprep.subr.bf16.mxu0 0
    %467 = vmatpush1.bf16.msra.mxu0 0
    %468 = vmatprep.subr.bf16.mxu0 0
    %469 = vmatpush1.bf16.msra.mxu0 0
    %470 = vmatprep.subr.bf16.mxu0 0
    %471 = vmatpush1.bf16.msra.mxu0 0
    %472 = vmatprep.subr.bf16.mxu0 0
    %473 = vmatpush1.bf16.msra.mxu0 0
    %474 = vmatprep.subr.bf16.mxu0 0
    %475 = vmatpush1.bf16.msra.mxu0 0
    %476 = vmatprep.subr.bf16.mxu0 0
    %477 = vmatpush1.bf16.msra.mxu0 0
    %478 = vmatprep.subr.bf16.mxu0 0
    %479 = vmatpush1.bf16.msra.mxu0 0
    %480 = vmatprep.subr.bf16.mxu0 0
    %481 = vmatpush1.bf16.msra.mxu0 0
    %482 = vmatprep.mubr.bf16.mxu0 0
    %483 = vmatmul.mubr.bf16.gmra.mrb[0].mxu0 %v289
    %v484 = vpop.f32.mrb[0].mxu0
    %v485 = vadd.f32 0.0, %v484
    %v486 = vpop.f32.mrb[0].mxu0
    %v487 = vadd.f32 0.0, %v486
    %v488 = vpop.f32.mrb[0].mxu0
    %v489 = vpop.f32.mrb[0].mxu0
    %490 = vdwg.mxu0
    %491 = vmatprep.subr.bf16.mxu0 %v389
    %492 = vmatpush1.bf16.msra.mxu0 %v388
    %493 = vmatprep.subr.bf16.mxu0 %v393
    %494 = vmatpush1.bf16.msra.mxu0 %v392
    %495 = vmatprep.subr.bf16.mxu0 %v397
    %496 = vmatpush1.bf16.msra.mxu0 %v396
    %497 = vmatprep.subr.bf16.mxu0 %v401
    %498 = vmatpush1.bf16.msra.mxu0 %v400
    %499 = vmatprep.subr.bf16.mxu0 %v405
    %500 = vmatpush1.bf16.msra.mxu0 %v404
    %501 = vmatprep.subr.bf16.mxu0 %v409
    %502 = vmatpush1.bf16.msra.mxu0 %v408
    %503 = vmatprep.subr.bf16.mxu0 %v413
    %504 = vmatpush1.bf16.msra.mxu0 %v412
    %505 = vmatprep.subr.bf16.mxu0 %v417
    %506 = vmatpush1.bf16.msra.mxu0 %v416
    %507 = vmatprep.subr.bf16.mxu0 0
    %508 = vmatpush1.bf16.msra.mxu0 0
    %509 = vmatprep.subr.bf16.mxu0 0
    %510 = vmatpush1.bf16.msra.mxu0 0
    %511 = vmatprep.subr.bf16.mxu0 0
    %512 = vmatpush1.bf16.msra.mxu0 0
    %513 = vmatprep.subr.bf16.mxu0 0
    %514 = vmatpush1.bf16.msra.mxu0 0
    %515 = vmatprep.subr.bf16.mxu0 0
    %516 = vmatpush1.bf16.msra.mxu0 0
    %517 = vmatprep.subr.bf16.mxu0 0
    %518 = vmatpush1.bf16.msra.mxu0 0
    %519 = vmatprep.subr.bf16.mxu0 0
    %520 = vmatpush1.bf16.msra.mxu0 0
    %521 = vmatprep.subr.bf16.mxu0 0
    %522 = vmatpush1.bf16.msra.mxu0 0
    %523 = vmatprep.mubr.bf16.mxu0 0
    %524 = vmatmul.mubr.bf16.gmra.mrb[0].mxu0 %v289
    %v525 = vpop.f32.mrb[0].mxu0
    %v526 = vadd.f32 0.0, %v525
    %v527 = vpop.f32.mrb[0].mxu0
    %v528 = vadd.f32 0.0, %v527
    %v529 = vpop.f32.mrb[0].mxu0
    %v530 = vpop.f32.mrb[0].mxu0
    %531 = vdwg.mxu0
    %v536 = vrot.slane %v485, 1
    %v537 = vrot.slane %v487, 1
    %v538 = vrot.slane %v526, 1
    %v539 = vrot.slane %v528, 1
    %v540 = vrot.slane %v485, 2
    %v541 = vrot.slane %v487, 2
    %v542 = vrot.slane %v526, 2
    %v543 = vrot.slane %v528, 2
    %v544 = vrot.slane %v485, 3
    %v545 = vrot.slane %v487, 3
    %v546 = vrot.slane %v526, 3
    %v547 = vrot.slane %v528, 3
    %v548 = vrot.slane %v485, 4
    %v549 = vrot.slane %v487, 4
    %v550 = vrot.slane %v526, 4
    %v551 = vrot.slane %v528, 4
    %v552 = vrot.slane %v485, 5
    %v553 = vrot.slane %v487, 5
    %v554 = vrot.slane %v526, 5
    %v555 = vrot.slane %v528, 5
    %v556 = vrot.slane %v485, 6
    %v557 = vrot.slane %v487, 6
    %v558 = vrot.slane %v526, 6
    %v559 = vrot.slane %v528, 6
    %v560 = vrot.slane %v485, 7
    %v561 = vrot.slane %v487, 7
    %v562 = vrot.slane %v526, 7
    %v563 = vrot.slane %v528, 7
    %v596 = vadd.f32 %v176, %v485
    %v597 = vadd.f32 %v178, %v487
    %v598 = vadd.f32 %v249, %v526
    %v599 = vadd.f32 %v251, %v528
    %v600 = vadd.f32 %v180, %v536
    %v601 = vadd.f32 %v182, %v537
    %v602 = vadd.f32 %v253, %v538
    %v603 = vadd.f32 %v255, %v539
    %v604 = vadd.f32 %v186, %v540
    %v605 = vadd.f32 %v188, %v541
    %v606 = vadd.f32 %v259, %v542
    %v607 = vadd.f32 %v261, %v543
    %v608 = vadd.f32 %v190, %v544
    %v609 = vadd.f32 %v192, %v545
    %v610 = vadd.f32 %v263, %v546
    %v611 = vadd.f32 %v265, %v547
    %v612 = vadd.f32 %v196, %v548
    %v613 = vadd.f32 %v198, %v549
    %v614 = vadd.f32 %v269, %v550
    %v615 = vadd.f32 %v271, %v551
    %v616 = vadd.f32 %v200, %v552
    %v617 = vadd.f32 %v202, %v553
    %v618 = vadd.f32 %v273, %v554
    %v619 = vadd.f32 %v275, %v555
    %v620 = vadd.f32 %v206, %v556
    %v621 = vadd.f32 %v208, %v557
    %v622 = vadd.f32 %v279, %v558
    %v623 = vadd.f32 %v281, %v559
    %v624 = vadd.f32 %v210, %v560
    %v625 = vadd.f32 %v212, %v561
    %v626 = vadd.f32 %v283, %v562
    %v627 = vadd.f32 %v285, %v563
    %v628 = vmul.f32 %v596, 0.5
    %v629 = vmul.f32 %v600, 0.5
    %v630 = vmul.f32 %v604, 0.5
    %v631 = vmul.f32 %v608, 0.5
    %v632 = vmul.f32 %v612, 0.5
    %v633 = vmul.f32 %v616, 0.5
    %v634 = vmul.f32 %v620, 0.5
    %v635 = vmul.f32 %v624, 0.5
    %v636 = vtanh.pop %v628
    %v637 = vtanh.pop %v629
    %v638 = vtanh.pop %v630
    %v639 = vtanh.pop %v631
    %v640 = vtanh.pop %v632
    %v641 = vtanh.pop %v633
    %v642 = vtanh.pop %v634
    %v643 = vtanh.pop %v635
    %v644 = vmul.f32 %v636, 0.5
    %v645 = vmul.f32 %v637, 0.5
    %v646 = vmul.f32 %v638, 0.5
    %v647 = vmul.f32 %v639, 0.5
    %v648 = vmul.f32 %v640, 0.5
    %v649 = vmul.f32 %v641, 0.5
    %v650 = vmul.f32 %v642, 0.5
    %v651 = vmul.f32 %v643, 0.5
    %v652 = vadd.f32 %v644, 0.5
    %v653 = vadd.f32 %v645, 0.5
    %v654 = vadd.f32 %v646, 0.5
    %v655 = vadd.f32 %v647, 0.5
    %v656 = vadd.f32 %v648, 0.5
    %v657 = vadd.f32 %v649, 0.5
    %v658 = vadd.f32 %v650, 0.5
    %v659 = vadd.f32 %v651, 0.5
    %v660 = vmul.f32 %v597, 0.5
    %v661 = vmul.f32 %v601, 0.5
    %v662 = vmul.f32 %v605, 0.5
    %v663 = vmul.f32 %v609, 0.5
    %v664 = vmul.f32 %v613, 0.5
    %v665 = vmul.f32 %v617, 0.5
    %v666 = vmul.f32 %v621, 0.5
    %v667 = vmul.f32 %v625, 0.5
    %v668 = vtanh.pop %v660
    %v669 = vtanh.pop %v661
    %v670 = vtanh.pop %v662
    %v671 = vtanh.pop %v663
    %v672 = vtanh.pop %v664
    %v673 = vtanh.pop %v665
    %v674 = vtanh.pop %v666
    %v675 = vtanh.pop %v667
    %v676 = vmul.f32 %v668, 0.5
    %v677 = vmul.f32 %v669, 0.5
    %v678 = vmul.f32 %v670, 0.5
    %v679 = vmul.f32 %v671, 0.5
    %v680 = vmul.f32 %v672, 0.5
    %v681 = vmul.f32 %v673, 0.5
    %v682 = vmul.f32 %v674, 0.5
    %v683 = vmul.f32 %v675, 0.5
    %v684 = vadd.f32 %v676, 0.5
    %v685 = vadd.f32 %v677, 0.5
    %v686 = vadd.f32 %v678, 0.5
    %v687 = vadd.f32 %v679, 0.5
    %v688 = vadd.f32 %v680, 0.5
    %v689 = vadd.f32 %v681, 0.5
    %v690 = vadd.f32 %v682, 0.5
    %v691 = vadd.f32 %v683, 0.5
    %v692 = vtanh.pop %v598
    %v693 = vtanh.pop %v602
    %v694 = vtanh.pop %v606
    %v695 = vtanh.pop %v610
    %v696 = vtanh.pop %v614
    %v697 = vtanh.pop %v618
    %v698 = vtanh.pop %v622
    %v699 = vtanh.pop %v626
    %v700 = vmul.f32 %v599, 0.5
    %v701 = vmul.f32 %v603, 0.5
    %v702 = vmul.f32 %v607, 0.5
    %v703 = vmul.f32 %v611, 0.5
    %v704 = vmul.f32 %v615, 0.5
    %v705 = vmul.f32 %v619, 0.5
    %v706 = vmul.f32 %v623, 0.5
    %v707 = vmul.f32 %v627, 0.5
    %v708 = vtanh.pop %v700
    %v709 = vtanh.pop %v701
    %v710 = vtanh.pop %v702
    %v711 = vtanh.pop %v703
    %v712 = vtanh.pop %v704
    %v713 = vtanh.pop %v705
    %v714 = vtanh.pop %v706
    %v715 = vtanh.pop %v707
    %v716 = vmul.f32 %v708, 0.5
    %v717 = vmul.f32 %v709, 0.5
    %v718 = vmul.f32 %v710, 0.5
    %v719 = vmul.f32 %v711, 0.5
    %v720 = vmul.f32 %v712, 0.5
    %v721 = vmul.f32 %v713, 0.5
    %v722 = vmul.f32 %v714, 0.5
    %v723 = vmul.f32 %v715, 0.5
    %v724 = vadd.f32 %v716, 0.5
    %v725 = vadd.f32 %v717, 0.5
    %v726 = vadd.f32 %v718, 0.5
    %v727 = vadd.f32 %v719, 0.5
    %v728 = vadd.f32 %v720, 0.5
    %v729 = vadd.f32 %v721, 0.5
    %v730 = vadd.f32 %v722, 0.5
    %v731 = vadd.f32 %v723, 0.5
    %v733 = vrot.slane %v288, 1
    %v734 = vrot.slane %v288, 2
    %v735 = vrot.slane %v288, 3
    %v736 = vrot.slane %v288, 4
    %v737 = vrot.slane %v288, 5
    %v738 = vrot.slane %v288, 6
    %v739 = vrot.slane %v288, 7
    %v748 = vmul.f32 %v684, %v288
    %v749 = vmul.f32 %v685, %v733
    %v750 = vmul.f32 %v686, %v734
    %v751 = vmul.f32 %v687, %v735
    %v752 = vmul.f32 %v688, %v736
    %v753 = vmul.f32 %v689, %v737
    %v754 = vmul.f32 %v690, %v738
    %v755 = vmul.f32 %v691, %v739
    %v756 = vmul.f32 %v652, %v692
    %v757 = vmul.f32 %v653, %v693
    %v758 = vmul.f32 %v654, %v694
    %v759 = vmul.f32 %v655, %v695
    %v760 = vmul.f32 %v656, %v696
    %v761 = vmul.f32 %v657, %v697
    %v762 = vmul.f32 %v658, %v698
    %v763 = vmul.f32 %v659, %v699
    %v764 = vadd.f32 %v748, %v756
    %v765 = vadd.f32 %v749, %v757
    %v766 = vadd.f32 %v750, %v758
    %v767 = vadd.f32 %v751, %v759
    %v768 = vadd.f32 %v752, %v760
    %v769 = vadd.f32 %v753, %v761
    %v770 = vadd.f32 %v754, %v762
    %v771 = vadd.f32 %v755, %v763
    %v772 = vtanh.pop %v764
    %v773 = vtanh.pop %v765
    %v774 = vtanh.pop %v766
    %v775 = vtanh.pop %v767
    %v776 = vtanh.pop %v768
    %v777 = vtanh.pop %v769
    %v778 = vtanh.pop %v770
    %v779 = vtanh.pop %v771
    %v780 = vmul.f32 %v724, %v772
    %v781 = vmul.f32 %v725, %v773
    %v782 = vmul.f32 %v726, %v774
    %v783 = vmul.f32 %v727, %v775
    %v784 = vmul.f32 %v728, %v776
    %v785 = vmul.f32 %v729, %v777
    %v786 = vmul.f32 %v730, %v778
    %v787 = vmul.f32 %v731, %v779
    %v788 = vpack.c.bf16 %v780, %v780
    %v789 = vpack.c.bf16 %v781, %v781
    %v790 = vpack.c.bf16 %v782, %v782
    %v791 = vpack.c.bf16 %v783, %v783
    %v792 = vpack.c.bf16 %v784, %v784
    %v793 = vpack.c.bf16 %v785, %v785
    %v794 = vpack.c.bf16 %v786, %v786
    %v795 = vpack.c.bf16 %v787, %v787
    %v804 = vunpack.c.l.b16 %v788
    %v805 = vunpack.c.l.b16 %v789
    %v806 = vunpack.c.l.b16 %v790
    %v807 = vunpack.c.l.b16 %v791
    %v808 = vunpack.c.l.b16 %v792
    %v809 = vunpack.c.l.b16 %v793
    %v810 = vunpack.c.l.b16 %v794
    %v811 = vunpack.c.l.b16 %v795
    %v812 = vrot.slane %v805, 7
    %vm813 = vcmask 1041409
    %v814 = vsel %vm813, %v812, %v804
    %v815 = vrot.slane %v806, 6
    %vm816 = vcmask 1042434
    %v817 = vsel %vm816, %v815, %v814
    %v818 = vrot.slane %v807, 5
    %vm819 = vcmask 1043459
    %v820 = vsel %vm819, %v818, %v817
    %v821 = vrot.slane %v808, 4
    %vm822 = vcmask 1044484
    %v823 = vsel %vm822, %v821, %v820
    %v824 = vrot.slane %v809, 3
    %vm825 = vcmask 1045509
    %v826 = vsel %vm825, %v824, %v823
    %v827 = vrot.slane %v810, 2
    %vm828 = vcmask 1046534
    %v829 = vsel %vm828, %v827, %v826
    %v830 = vrot.slane %v811, 1
    %vm831 = vcmask 1047559
    %v832 = vsel %vm831, %v830, %v829
    %v833 = vpack.c.b16 %v832, %v832
    %835 = vmatprep.subr.bf16.mxu0 %v387
    %836 = vmatpush1.bf16.msra.mxu0 %v386
    %837 = vmatprep.subr.bf16.mxu0 %v391
    %838 = vmatpush1.bf16.msra.mxu0 %v390
    %839 = vmatprep.subr.bf16.mxu0 %v395
    %840 = vmatpush1.bf16.msra.mxu0 %v394
    %841 = vmatprep.subr.bf16.mxu0 %v399
    %842 = vmatpush1.bf16.msra.mxu0 %v398
    %843 = vmatprep.subr.bf16.mxu0 %v403
    %844 = vmatpush1.bf16.msra.mxu0 %v402
    %845 = vmatprep.subr.bf16.mxu0 %v407
    %846 = vmatpush1.bf16.msra.mxu0 %v406
    %847 = vmatprep.subr.bf16.mxu0 %v411
    %848 = vmatpush1.bf16.msra.mxu0 %v410
    %849 = vmatprep.subr.bf16.mxu0 %v415
    %850 = vmatpush1.bf16.msra.mxu0 %v414
    %851 = vmatprep.subr.bf16.mxu0 0
    %852 = vmatpush1.bf16.msra.mxu0 0
    %853 = vmatprep.subr.bf16.mxu0 0
    %854 = vmatpush1.bf16.msra.mxu0 0
    %855 = vmatprep.subr.bf16.mxu0 0
    %856 = vmatpush1.bf16.msra.mxu0 0
    %857 = vmatprep.subr.bf16.mxu0 0
    %858 = vmatpush1.bf16.msra.mxu0 0
    %859 = vmatprep.subr.bf16.mxu0 0
    %860 = vmatpush1.bf16.msra.mxu0 0
    %861 = vmatprep.subr.bf16.mxu0 0
    %862 = vmatpush1.bf16.msra.mxu0 0
    %863 = vmatprep.subr.bf16.mxu0 0
    %864 = vmatpush1.bf16.msra.mxu0 0
    %865 = vmatprep.subr.bf16.mxu0 0
    %866 = vmatpush1.bf16.msra.mxu0 0
    %867 = vmatprep.mubr.bf16.mxu0 0
    %868 = vmatmul.mubr.bf16.gmra.mrb[0].mxu0 %v833
    %v869 = vpop.f32.mrb[0].mxu0
    %v870 = vadd.f32 0.0, %v869
    %v871 = vpop.f32.mrb[0].mxu0
    %v872 = vadd.f32 0.0, %v871
    %v873 = vpop.f32.mrb[0].mxu0
    %v874 = vpop.f32.mrb[0].mxu0
    %875 = vdwg.mxu0
    %876 = vmatprep.subr.bf16.mxu0 %v389
    %877 = vmatpush1.bf16.msra.mxu0 %v388
    %878 = vmatprep.subr.bf16.mxu0 %v393
    %879 = vmatpush1.bf16.msra.mxu0 %v392
    %880 = vmatprep.subr.bf16.mxu0 %v397
    %881 = vmatpush1.bf16.msra.mxu0 %v396
    %882 = vmatprep.subr.bf16.mxu0 %v401
    %883 = vmatpush1.bf16.msra.mxu0 %v400
    %884 = vmatprep.subr.bf16.mxu0 %v405
    %885 = vmatpush1.bf16.msra.mxu0 %v404
    %886 = vmatprep.subr.bf16.mxu0 %v409
    %887 = vmatpush1.bf16.msra.mxu0 %v408
    %888 = vmatprep.subr.bf16.mxu0 %v413
    %889 = vmatpush1.bf16.msra.mxu0 %v412
    %890 = vmatprep.subr.bf16.mxu0 %v417
    %891 = vmatpush1.bf16.msra.mxu0 %v416
    %892 = vmatprep.subr.bf16.mxu0 0
    %893 = vmatpush1.bf16.msra.mxu0 0
    %894 = vmatprep.subr.bf16.mxu0 0
    %895 = vmatpush1.bf16.msra.mxu0 0
    %896 = vmatprep.subr.bf16.mxu0 0
    %897 = vmatpush1.bf16.msra.mxu0 0
    %898 = vmatprep.subr.bf16.mxu0 0
    %899 = vmatpush1.bf16.msra.mxu0 0
    %900 = vmatprep.subr.bf16.mxu0 0
    %901 = vmatpush1.bf16.msra.mxu0 0
    %902 = vmatprep.subr.bf16.mxu0 0
    %903 = vmatpush1.bf16.msra.mxu0 0
    %904 = vmatprep.subr.bf16.mxu0 0
    %905 = vmatpush1.bf16.msra.mxu0 0
    %906 = vmatprep.subr.bf16.mxu0 0
    %907 = vmatpush1.bf16.msra.mxu0 0
    %908 = vmatprep.mubr.bf16.mxu0 0
    %909 = vmatmul.mubr.bf16.gmra.mrb[0].mxu0 %v833
    %v910 = vpop.f32.mrb[0].mxu0
    %v911 = vadd.f32 0.0, %v910
    %v912 = vpop.f32.mrb[0].mxu0
    %v913 = vadd.f32 0.0, %v912
    %v914 = vpop.f32.mrb[0].mxu0
    %v915 = vpop.f32.mrb[0].mxu0
    %916 = vdwg.mxu0
    %v921 = vrot.slane %v870, 7
    %v922 = vrot.slane %v872, 7
    %v923 = vrot.slane %v911, 7
    %v924 = vrot.slane %v913, 7
    %v925 = vrot.slane %v870, 1
    %v926 = vrot.slane %v872, 1
    %v927 = vrot.slane %v911, 1
    %v928 = vrot.slane %v913, 1
    %v929 = vrot.slane %v870, 2
    %v930 = vrot.slane %v872, 2
    %v931 = vrot.slane %v911, 2
    %v932 = vrot.slane %v913, 2
    %v933 = vrot.slane %v870, 3
    %v934 = vrot.slane %v872, 3
    %v935 = vrot.slane %v911, 3
    %v936 = vrot.slane %v913, 3
    %v937 = vrot.slane %v870, 4
    %v938 = vrot.slane %v872, 4
    %v939 = vrot.slane %v911, 4
    %v940 = vrot.slane %v913, 4
    %v941 = vrot.slane %v870, 5
    %v942 = vrot.slane %v872, 5
    %v943 = vrot.slane %v911, 5
    %v944 = vrot.slane %v913, 5
    %v945 = vrot.slane %v870, 6
    %v946 = vrot.slane %v872, 6
    %v947 = vrot.slane %v911, 6
    %v948 = vrot.slane %v913, 6
    %v981 = vadd.f32 %v176, %v921
    %v982 = vadd.f32 %v178, %v922
    %v983 = vadd.f32 %v249, %v923
    %v984 = vadd.f32 %v251, %v924
    %v985 = vadd.f32 %v180, %v870
    %v986 = vadd.f32 %v182, %v872
    %v987 = vadd.f32 %v253, %v911
    %v988 = vadd.f32 %v255, %v913
    %v989 = vadd.f32 %v186, %v925
    %v990 = vadd.f32 %v188, %v926
    %v991 = vadd.f32 %v259, %v927
    %v992 = vadd.f32 %v261, %v928
    %v993 = vadd.f32 %v190, %v929
    %v994 = vadd.f32 %v192, %v930
    %v995 = vadd.f32 %v263, %v931
    %v996 = vadd.f32 %v265, %v932
    %v997 = vadd.f32 %v196, %v933
    %v998 = vadd.f32 %v198, %v934
    %v999 = vadd.f32 %v269, %v935
    %v1000 = vadd.f32 %v271, %v936
    %v1001 = vadd.f32 %v200, %v937
    %v1002 = vadd.f32 %v202, %v938
    %v1003 = vadd.f32 %v273, %v939
    %v1004 = vadd.f32 %v275, %v940
    %v1005 = vadd.f32 %v206, %v941
    %v1006 = vadd.f32 %v208, %v942
    %v1007 = vadd.f32 %v279, %v943
    %v1008 = vadd.f32 %v281, %v944
    %v1009 = vadd.f32 %v210, %v945
    %v1010 = vadd.f32 %v212, %v946
    %v1011 = vadd.f32 %v283, %v947
    %v1012 = vadd.f32 %v285, %v948
    %v1013 = vmul.f32 %v981, 0.5
    %v1014 = vmul.f32 %v985, 0.5
    %v1015 = vmul.f32 %v989, 0.5
    %v1016 = vmul.f32 %v993, 0.5
    %v1017 = vmul.f32 %v997, 0.5
    %v1018 = vmul.f32 %v1001, 0.5
    %v1019 = vmul.f32 %v1005, 0.5
    %v1020 = vmul.f32 %v1009, 0.5
    %v1021 = vtanh.pop %v1013
    %v1022 = vtanh.pop %v1014
    %v1023 = vtanh.pop %v1015
    %v1024 = vtanh.pop %v1016
    %v1025 = vtanh.pop %v1017
    %v1026 = vtanh.pop %v1018
    %v1027 = vtanh.pop %v1019
    %v1028 = vtanh.pop %v1020
    %v1029 = vmul.f32 %v1021, 0.5
    %v1030 = vmul.f32 %v1022, 0.5
    %v1031 = vmul.f32 %v1023, 0.5
    %v1032 = vmul.f32 %v1024, 0.5
    %v1033 = vmul.f32 %v1025, 0.5
    %v1034 = vmul.f32 %v1026, 0.5
    %v1035 = vmul.f32 %v1027, 0.5
    %v1036 = vmul.f32 %v1028, 0.5
    %v1037 = vadd.f32 %v1029, 0.5
    %v1038 = vadd.f32 %v1030, 0.5
    %v1039 = vadd.f32 %v1031, 0.5
    %v1040 = vadd.f32 %v1032, 0.5
    %v1041 = vadd.f32 %v1033, 0.5
    %v1042 = vadd.f32 %v1034, 0.5
    %v1043 = vadd.f32 %v1035, 0.5
    %v1044 = vadd.f32 %v1036, 0.5
    %v1045 = vmul.f32 %v982, 0.5
    %v1046 = vmul.f32 %v986, 0.5
    %v1047 = vmul.f32 %v990, 0.5
    %v1048 = vmul.f32 %v994, 0.5
    %v1049 = vmul.f32 %v998, 0.5
    %v1050 = vmul.f32 %v1002, 0.5
    %v1051 = vmul.f32 %v1006, 0.5
    %v1052 = vmul.f32 %v1010, 0.5
    %v1053 = vtanh.pop %v1045
    %v1054 = vtanh.pop %v1046
    %v1055 = vtanh.pop %v1047
    %v1056 = vtanh.pop %v1048
    %v1057 = vtanh.pop %v1049
    %v1058 = vtanh.pop %v1050
    %v1059 = vtanh.pop %v1051
    %v1060 = vtanh.pop %v1052
    %v1061 = vmul.f32 %v1053, 0.5
    %v1062 = vmul.f32 %v1054, 0.5
    %v1063 = vmul.f32 %v1055, 0.5
    %v1064 = vmul.f32 %v1056, 0.5
    %v1065 = vmul.f32 %v1057, 0.5
    %v1066 = vmul.f32 %v1058, 0.5
    %v1067 = vmul.f32 %v1059, 0.5
    %v1068 = vmul.f32 %v1060, 0.5
    %v1069 = vadd.f32 %v1061, 0.5
    %v1070 = vadd.f32 %v1062, 0.5
    %v1071 = vadd.f32 %v1063, 0.5
    %v1072 = vadd.f32 %v1064, 0.5
    %v1073 = vadd.f32 %v1065, 0.5
    %v1074 = vadd.f32 %v1066, 0.5
    %v1075 = vadd.f32 %v1067, 0.5
    %v1076 = vadd.f32 %v1068, 0.5
    %v1077 = vtanh.pop %v983
    %v1078 = vtanh.pop %v987
    %v1079 = vtanh.pop %v991
    %v1080 = vtanh.pop %v995
    %v1081 = vtanh.pop %v999
    %v1082 = vtanh.pop %v1003
    %v1083 = vtanh.pop %v1007
    %v1084 = vtanh.pop %v1011
    %v1085 = vmul.f32 %v984, 0.5
    %v1086 = vmul.f32 %v988, 0.5
    %v1087 = vmul.f32 %v992, 0.5
    %v1088 = vmul.f32 %v996, 0.5
    %v1089 = vmul.f32 %v1000, 0.5
    %v1090 = vmul.f32 %v1004, 0.5
    %v1091 = vmul.f32 %v1008, 0.5
    %v1092 = vmul.f32 %v1012, 0.5
    %v1093 = vtanh.pop %v1085
    %v1094 = vtanh.pop %v1086
    %v1095 = vtanh.pop %v1087
    %v1096 = vtanh.pop %v1088
    %v1097 = vtanh.pop %v1089
    %v1098 = vtanh.pop %v1090
    %v1099 = vtanh.pop %v1091
    %v1100 = vtanh.pop %v1092
    %v1101 = vmul.f32 %v1093, 0.5
    %v1102 = vmul.f32 %v1094, 0.5
    %v1103 = vmul.f32 %v1095, 0.5
    %v1104 = vmul.f32 %v1096, 0.5
    %v1105 = vmul.f32 %v1097, 0.5
    %v1106 = vmul.f32 %v1098, 0.5
    %v1107 = vmul.f32 %v1099, 0.5
    %v1108 = vmul.f32 %v1100, 0.5
    %v1109 = vadd.f32 %v1101, 0.5
    %v1110 = vadd.f32 %v1102, 0.5
    %v1111 = vadd.f32 %v1103, 0.5
    %v1112 = vadd.f32 %v1104, 0.5
    %v1113 = vadd.f32 %v1105, 0.5
    %v1114 = vadd.f32 %v1106, 0.5
    %v1115 = vadd.f32 %v1107, 0.5
    %v1116 = vadd.f32 %v1108, 0.5
    %v1125 = vrot.slane %v764, 7
    %v1126 = vrot.slane %v765, 7
    %v1127 = vrot.slane %v766, 7
    %v1128 = vrot.slane %v767, 7
    %v1129 = vrot.slane %v768, 7
    %v1130 = vrot.slane %v769, 7
    %v1131 = vrot.slane %v770, 7
    %v1132 = vrot.slane %v771, 7
    %v1141 = vmul.f32 %v1069, %v1125
    %v1142 = vmul.f32 %v1070, %v1126
    %v1143 = vmul.f32 %v1071, %v1127
    %v1144 = vmul.f32 %v1072, %v1128
    %v1145 = vmul.f32 %v1073, %v1129
    %v1146 = vmul.f32 %v1074, %v1130
    %v1147 = vmul.f32 %v1075, %v1131
    %v1148 = vmul.f32 %v1076, %v1132
    %v1149 = vmul.f32 %v1037, %v1077
    %v1150 = vmul.f32 %v1038, %v1078
    %v1151 = vmul.f32 %v1039, %v1079
    %v1152 = vmul.f32 %v1040, %v1080
    %v1153 = vmul.f32 %v1041, %v1081
    %v1154 = vmul.f32 %v1042, %v1082
    %v1155 = vmul.f32 %v1043, %v1083
    %v1156 = vmul.f32 %v1044, %v1084
    %v1157 = vadd.f32 %v1141, %v1149
    %v1158 = vadd.f32 %v1142, %v1150
    %v1159 = vadd.f32 %v1143, %v1151
    %v1160 = vadd.f32 %v1144, %v1152
    %v1161 = vadd.f32 %v1145, %v1153
    %v1162 = vadd.f32 %v1146, %v1154
    %v1163 = vadd.f32 %v1147, %v1155
    %v1164 = vadd.f32 %v1148, %v1156
    %v1165 = vtanh.pop %v1157
    %v1166 = vtanh.pop %v1158
    %v1167 = vtanh.pop %v1159
    %v1168 = vtanh.pop %v1160
    %v1169 = vtanh.pop %v1161
    %v1170 = vtanh.pop %v1162
    %v1171 = vtanh.pop %v1163
    %v1172 = vtanh.pop %v1164
    %v1173 = vmul.f32 %v1109, %v1165
    %v1174 = vmul.f32 %v1110, %v1166
    %v1175 = vmul.f32 %v1111, %v1167
    %v1176 = vmul.f32 %v1112, %v1168
    %v1177 = vmul.f32 %v1113, %v1169
    %v1178 = vmul.f32 %v1114, %v1170
    %v1179 = vmul.f32 %v1115, %v1171
    %v1180 = vmul.f32 %v1116, %v1172
    %v1181 = vpack.c.bf16 %v1173, %v1173
    %v1182 = vpack.c.bf16 %v1174, %v1174
    %v1183 = vpack.c.bf16 %v1175, %v1175
    %v1184 = vpack.c.bf16 %v1176, %v1176
    %v1185 = vpack.c.bf16 %v1177, %v1177
    %v1186 = vpack.c.bf16 %v1178, %v1178
    %v1187 = vpack.c.bf16 %v1179, %v1179
    %v1188 = vpack.c.bf16 %v1180, %v1180
    %v1197 = vunpack.c.l.b16 %v1181
    %v1198 = vunpack.c.l.b16 %v1182
    %v1199 = vunpack.c.l.b16 %v1183
    %v1200 = vunpack.c.l.b16 %v1184
    %v1201 = vunpack.c.l.b16 %v1185
    %v1202 = vunpack.c.l.b16 %v1186
    %v1203 = vunpack.c.l.b16 %v1187
    %v1204 = vunpack.c.l.b16 %v1188
    %v1205 = vrot.slane %v1197, 1
    %v1206 = vsel %vm813, %v1198, %v1205
    %v1207 = vrot.slane %v1199, 7
    %v1208 = vsel %vm816, %v1207, %v1206
    %v1209 = vrot.slane %v1200, 6
    %v1210 = vsel %vm819, %v1209, %v1208
    %v1211 = vrot.slane %v1201, 5
    %v1212 = vsel %vm822, %v1211, %v1210
    %v1213 = vrot.slane %v1202, 4
    %v1214 = vsel %vm825, %v1213, %v1212
    %v1215 = vrot.slane %v1203, 3
    %v1216 = vsel %vm828, %v1215, %v1214
    %v1217 = vrot.slane %v1204, 2
    %v1218 = vsel %vm831, %v1217, %v1216
    %v1219 = vpack.c.b16 %v1218, %v1218
    %1221 = vmatprep.subr.bf16.mxu0 %v387
    %1222 = vmatpush1.bf16.msra.mxu0 %v386
    %1223 = vmatprep.subr.bf16.mxu0 %v391
    %1224 = vmatpush1.bf16.msra.mxu0 %v390
    %1225 = vmatprep.subr.bf16.mxu0 %v395
    %1226 = vmatpush1.bf16.msra.mxu0 %v394
    %1227 = vmatprep.subr.bf16.mxu0 %v399
    %1228 = vmatpush1.bf16.msra.mxu0 %v398
    %1229 = vmatprep.subr.bf16.mxu0 %v403
    %1230 = vmatpush1.bf16.msra.mxu0 %v402
    %1231 = vmatprep.subr.bf16.mxu0 %v407
    %1232 = vmatpush1.bf16.msra.mxu0 %v406
    %1233 = vmatprep.subr.bf16.mxu0 %v411
    %1234 = vmatpush1.bf16.msra.mxu0 %v410
    %1235 = vmatprep.subr.bf16.mxu0 %v415
    %1236 = vmatpush1.bf16.msra.mxu0 %v414
    %1237 = vmatprep.subr.bf16.mxu0 0
    %1238 = vmatpush1.bf16.msra.mxu0 0
    %1239 = vmatprep.subr.bf16.mxu0 0
    %1240 = vmatpush1.bf16.msra.mxu0 0
    %1241 = vmatprep.subr.bf16.mxu0 0
    %1242 = vmatpush1.bf16.msra.mxu0 0
    %1243 = vmatprep.subr.bf16.mxu0 0
    %1244 = vmatpush1.bf16.msra.mxu0 0
    %1245 = vmatprep.subr.bf16.mxu0 0
    %1246 = vmatpush1.bf16.msra.mxu0 0
    %1247 = vmatprep.subr.bf16.mxu0 0
    %1248 = vmatpush1.bf16.msra.mxu0 0
    %1249 = vmatprep.subr.bf16.mxu0 0
    %1250 = vmatpush1.bf16.msra.mxu0 0
    %1251 = vmatprep.subr.bf16.mxu0 0
    %1252 = vmatpush1.bf16.msra.mxu0 0
    %1253 = vmatprep.mubr.bf16.mxu0 0
    %1254 = vmatmul.mubr.bf16.gmra.mrb[0].mxu0 %v1219
    %v1255 = vpop.f32.mrb[0].mxu0
    %v1256 = vadd.f32 0.0, %v1255
    %v1257 = vpop.f32.mrb[0].mxu0
    %v1258 = vadd.f32 0.0, %v1257
    %v1259 = vpop.f32.mrb[0].mxu0
    %v1260 = vpop.f32.mrb[0].mxu0
    %1261 = vdwg.mxu0
    %1262 = vmatprep.subr.bf16.mxu0 %v389
    %1263 = vmatpush1.bf16.msra.mxu0 %v388
    %1264 = vmatprep.subr.bf16.mxu0 %v393
    %1265 = vmatpush1.bf16.msra.mxu0 %v392
    %1266 = vmatprep.subr.bf16.mxu0 %v397
    %1267 = vmatpush1.bf16.msra.mxu0 %v396
    %1268 = vmatprep.subr.bf16.mxu0 %v401
    %1269 = vmatpush1.bf16.msra.mxu0 %v400
    %1270 = vmatprep.subr.bf16.mxu0 %v405
    %1271 = vmatpush1.bf16.msra.mxu0 %v404
    %1272 = vmatprep.subr.bf16.mxu0 %v409
    %1273 = vmatpush1.bf16.msra.mxu0 %v408
    %1274 = vmatprep.subr.bf16.mxu0 %v413
    %1275 = vmatpush1.bf16.msra.mxu0 %v412
    %1276 = vmatprep.subr.bf16.mxu0 %v417
    %1277 = vmatpush1.bf16.msra.mxu0 %v416
    %1278 = vmatprep.subr.bf16.mxu0 0
    %1279 = vmatpush1.bf16.msra.mxu0 0
    %1280 = vmatprep.subr.bf16.mxu0 0
    %1281 = vmatpush1.bf16.msra.mxu0 0
    %1282 = vmatprep.subr.bf16.mxu0 0
    %1283 = vmatpush1.bf16.msra.mxu0 0
    %1284 = vmatprep.subr.bf16.mxu0 0
    %1285 = vmatpush1.bf16.msra.mxu0 0
    %1286 = vmatprep.subr.bf16.mxu0 0
    %1287 = vmatpush1.bf16.msra.mxu0 0
    %1288 = vmatprep.subr.bf16.mxu0 0
    %1289 = vmatpush1.bf16.msra.mxu0 0
    %1290 = vmatprep.subr.bf16.mxu0 0
    %1291 = vmatpush1.bf16.msra.mxu0 0
    %1292 = vmatprep.subr.bf16.mxu0 0
    %1293 = vmatpush1.bf16.msra.mxu0 0
    %1294 = vmatprep.mubr.bf16.mxu0 0
    %1295 = vmatmul.mubr.bf16.gmra.mrb[0].mxu0 %v1219
    %v1296 = vpop.f32.mrb[0].mxu0
    %v1297 = vadd.f32 0.0, %v1296
    %v1298 = vpop.f32.mrb[0].mxu0
    %v1299 = vadd.f32 0.0, %v1298
    %v1300 = vpop.f32.mrb[0].mxu0
    %v1301 = vpop.f32.mrb[0].mxu0
    %1302 = vdwg.mxu0
    %v1307 = vrot.slane %v1256, 6
    %v1308 = vrot.slane %v1258, 6
    %v1309 = vrot.slane %v1297, 6
    %v1310 = vrot.slane %v1299, 6
    %v1311 = vrot.slane %v1256, 7
    %v1312 = vrot.slane %v1258, 7
    %v1313 = vrot.slane %v1297, 7
    %v1314 = vrot.slane %v1299, 7
    %v1315 = vrot.slane %v1256, 1
    %v1316 = vrot.slane %v1258, 1
    %v1317 = vrot.slane %v1297, 1
    %v1318 = vrot.slane %v1299, 1
    %v1319 = vrot.slane %v1256, 2
    %v1320 = vrot.slane %v1258, 2
    %v1321 = vrot.slane %v1297, 2
    %v1322 = vrot.slane %v1299, 2
    %v1323 = vrot.slane %v1256, 3
    %v1324 = vrot.slane %v1258, 3
    %v1325 = vrot.slane %v1297, 3
    %v1326 = vrot.slane %v1299, 3
    %v1327 = vrot.slane %v1256, 4
    %v1328 = vrot.slane %v1258, 4
    %v1329 = vrot.slane %v1297, 4
    %v1330 = vrot.slane %v1299, 4
    %v1331 = vrot.slane %v1256, 5
    %v1332 = vrot.slane %v1258, 5
    %v1333 = vrot.slane %v1297, 5
    %v1334 = vrot.slane %v1299, 5
    %v1367 = vadd.f32 %v176, %v1307
    %v1368 = vadd.f32 %v178, %v1308
    %v1369 = vadd.f32 %v249, %v1309
    %v1370 = vadd.f32 %v251, %v1310
    %v1371 = vadd.f32 %v180, %v1311
    %v1372 = vadd.f32 %v182, %v1312
    %v1373 = vadd.f32 %v253, %v1313
    %v1374 = vadd.f32 %v255, %v1314
    %v1375 = vadd.f32 %v186, %v1256
    %v1376 = vadd.f32 %v188, %v1258
    %v1377 = vadd.f32 %v259, %v1297
    %v1378 = vadd.f32 %v261, %v1299
    %v1379 = vadd.f32 %v190, %v1315
    %v1380 = vadd.f32 %v192, %v1316
    %v1381 = vadd.f32 %v263, %v1317
    %v1382 = vadd.f32 %v265, %v1318
    %v1383 = vadd.f32 %v196, %v1319
    %v1384 = vadd.f32 %v198, %v1320
    %v1385 = vadd.f32 %v269, %v1321
    %v1386 = vadd.f32 %v271, %v1322
    %v1387 = vadd.f32 %v200, %v1323
    %v1388 = vadd.f32 %v202, %v1324
    %v1389 = vadd.f32 %v273, %v1325
    %v1390 = vadd.f32 %v275, %v1326
    %v1391 = vadd.f32 %v206, %v1327
    %v1392 = vadd.f32 %v208, %v1328
    %v1393 = vadd.f32 %v279, %v1329
    %v1394 = vadd.f32 %v281, %v1330
    %v1395 = vadd.f32 %v210, %v1331
    %v1396 = vadd.f32 %v212, %v1332
    %v1397 = vadd.f32 %v283, %v1333
    %v1398 = vadd.f32 %v285, %v1334
    %v1399 = vmul.f32 %v1367, 0.5
    %v1400 = vmul.f32 %v1371, 0.5
    %v1401 = vmul.f32 %v1375, 0.5
    %v1402 = vmul.f32 %v1379, 0.5
    %v1403 = vmul.f32 %v1383, 0.5
    %v1404 = vmul.f32 %v1387, 0.5
    %v1405 = vmul.f32 %v1391, 0.5
    %v1406 = vmul.f32 %v1395, 0.5
    %v1407 = vtanh.pop %v1399
    %v1408 = vtanh.pop %v1400
    %v1409 = vtanh.pop %v1401
    %v1410 = vtanh.pop %v1402
    %v1411 = vtanh.pop %v1403
    %v1412 = vtanh.pop %v1404
    %v1413 = vtanh.pop %v1405
    %v1414 = vtanh.pop %v1406
    %v1415 = vmul.f32 %v1407, 0.5
    %v1416 = vmul.f32 %v1408, 0.5
    %v1417 = vmul.f32 %v1409, 0.5
    %v1418 = vmul.f32 %v1410, 0.5
    %v1419 = vmul.f32 %v1411, 0.5
    %v1420 = vmul.f32 %v1412, 0.5
    %v1421 = vmul.f32 %v1413, 0.5
    %v1422 = vmul.f32 %v1414, 0.5
    %v1423 = vadd.f32 %v1415, 0.5
    %v1424 = vadd.f32 %v1416, 0.5
    %v1425 = vadd.f32 %v1417, 0.5
    %v1426 = vadd.f32 %v1418, 0.5
    %v1427 = vadd.f32 %v1419, 0.5
    %v1428 = vadd.f32 %v1420, 0.5
    %v1429 = vadd.f32 %v1421, 0.5
    %v1430 = vadd.f32 %v1422, 0.5
    %v1431 = vmul.f32 %v1368, 0.5
    %v1432 = vmul.f32 %v1372, 0.5
    %v1433 = vmul.f32 %v1376, 0.5
    %v1434 = vmul.f32 %v1380, 0.5
    %v1435 = vmul.f32 %v1384, 0.5
    %v1436 = vmul.f32 %v1388, 0.5
    %v1437 = vmul.f32 %v1392, 0.5
    %v1438 = vmul.f32 %v1396, 0.5
    %v1439 = vtanh.pop %v1431
    %v1440 = vtanh.pop %v1432
    %v1441 = vtanh.pop %v1433
    %v1442 = vtanh.pop %v1434
    %v1443 = vtanh.pop %v1435
    %v1444 = vtanh.pop %v1436
    %v1445 = vtanh.pop %v1437
    %v1446 = vtanh.pop %v1438
    %v1447 = vmul.f32 %v1439, 0.5
    %v1448 = vmul.f32 %v1440, 0.5
    %v1449 = vmul.f32 %v1441, 0.5
    %v1450 = vmul.f32 %v1442, 0.5
    %v1451 = vmul.f32 %v1443, 0.5
    %v1452 = vmul.f32 %v1444, 0.5
    %v1453 = vmul.f32 %v1445, 0.5
    %v1454 = vmul.f32 %v1446, 0.5
    %v1455 = vadd.f32 %v1447, 0.5
    %v1456 = vadd.f32 %v1448, 0.5
    %v1457 = vadd.f32 %v1449, 0.5
    %v1458 = vadd.f32 %v1450, 0.5
    %v1459 = vadd.f32 %v1451, 0.5
    %v1460 = vadd.f32 %v1452, 0.5
    %v1461 = vadd.f32 %v1453, 0.5
    %v1462 = vadd.f32 %v1454, 0.5
    %v1463 = vtanh.pop %v1369
    %v1464 = vtanh.pop %v1373
    %v1465 = vtanh.pop %v1377
    %v1466 = vtanh.pop %v1381
    %v1467 = vtanh.pop %v1385
    %v1468 = vtanh.pop %v1389
    %v1469 = vtanh.pop %v1393
    %v1470 = vtanh.pop %v1397
    %v1471 = vmul.f32 %v1370, 0.5
    %v1472 = vmul.f32 %v1374, 0.5
    %v1473 = vmul.f32 %v1378, 0.5
    %v1474 = vmul.f32 %v1382, 0.5
    %v1475 = vmul.f32 %v1386, 0.5
    %v1476 = vmul.f32 %v1390, 0.5
    %v1477 = vmul.f32 %v1394, 0.5
    %v1478 = vmul.f32 %v1398, 0.5
    %v1479 = vtanh.pop %v1471
    %v1480 = vtanh.pop %v1472
    %v1481 = vtanh.pop %v1473
    %v1482 = vtanh.pop %v1474
    %v1483 = vtanh.pop %v1475
    %v1484 = vtanh.pop %v1476
    %v1485 = vtanh.pop %v1477
    %v1486 = vtanh.pop %v1478
    %v1487 = vmul.f32 %v1479, 0.5
    %v1488 = vmul.f32 %v1480, 0.5
    %v1489 = vmul.f32 %v1481, 0.5
    %v1490 = vmul.f32 %v1482, 0.5
    %v1491 = vmul.f32 %v1483, 0.5
    %v1492 = vmul.f32 %v1484, 0.5
    %v1493 = vmul.f32 %v1485, 0.5
    %v1494 = vmul.f32 %v1486, 0.5
    %v1495 = vadd.f32 %v1487, 0.5
    %v1496 = vadd.f32 %v1488, 0.5
    %v1497 = vadd.f32 %v1489, 0.5
    %v1498 = vadd.f32 %v1490, 0.5
    %v1499 = vadd.f32 %v1491, 0.5
    %v1500 = vadd.f32 %v1492, 0.5
    %v1501 = vadd.f32 %v1493, 0.5
    %v1502 = vadd.f32 %v1494, 0.5
    %v1511 = vrot.slane %v1157, 7
    %v1512 = vrot.slane %v1158, 7
    %v1513 = vrot.slane %v1159, 7
    %v1514 = vrot.slane %v1160, 7
    %v1515 = vrot.slane %v1161, 7
    %v1516 = vrot.slane %v1162, 7
    %v1517 = vrot.slane %v1163, 7
    %v1518 = vrot.slane %v1164, 7
    %v1527 = vmul.f32 %v1455, %v1511
    %v1528 = vmul.f32 %v1456, %v1512
    %v1529 = vmul.f32 %v1457, %v1513
    %v1530 = vmul.f32 %v1458, %v1514
    %v1531 = vmul.f32 %v1459, %v1515
    %v1532 = vmul.f32 %v1460, %v1516
    %v1533 = vmul.f32 %v1461, %v1517
    %v1534 = vmul.f32 %v1462, %v1518
    %v1535 = vmul.f32 %v1423, %v1463
    %v1536 = vmul.f32 %v1424, %v1464
    %v1537 = vmul.f32 %v1425, %v1465
    %v1538 = vmul.f32 %v1426, %v1466
    %v1539 = vmul.f32 %v1427, %v1467
    %v1540 = vmul.f32 %v1428, %v1468
    %v1541 = vmul.f32 %v1429, %v1469
    %v1542 = vmul.f32 %v1430, %v1470
    %v1543 = vadd.f32 %v1527, %v1535
    %v1544 = vadd.f32 %v1528, %v1536
    %v1545 = vadd.f32 %v1529, %v1537
    %v1546 = vadd.f32 %v1530, %v1538
    %v1547 = vadd.f32 %v1531, %v1539
    %v1548 = vadd.f32 %v1532, %v1540
    %v1549 = vadd.f32 %v1533, %v1541
    %v1550 = vadd.f32 %v1534, %v1542
    %v1551 = vtanh.pop %v1543
    %v1552 = vtanh.pop %v1544
    %v1553 = vtanh.pop %v1545
    %v1554 = vtanh.pop %v1546
    %v1555 = vtanh.pop %v1547
    %v1556 = vtanh.pop %v1548
    %v1557 = vtanh.pop %v1549
    %v1558 = vtanh.pop %v1550
    %v1559 = vmul.f32 %v1495, %v1551
    %v1560 = vmul.f32 %v1496, %v1552
    %v1561 = vmul.f32 %v1497, %v1553
    %v1562 = vmul.f32 %v1498, %v1554
    %v1563 = vmul.f32 %v1499, %v1555
    %v1564 = vmul.f32 %v1500, %v1556
    %v1565 = vmul.f32 %v1501, %v1557
    %v1566 = vmul.f32 %v1502, %v1558
    %v1567 = vpack.c.bf16 %v1559, %v1559
    %v1568 = vpack.c.bf16 %v1560, %v1560
    %v1569 = vpack.c.bf16 %v1561, %v1561
    %v1570 = vpack.c.bf16 %v1562, %v1562
    %v1571 = vpack.c.bf16 %v1563, %v1563
    %v1572 = vpack.c.bf16 %v1564, %v1564
    %v1573 = vpack.c.bf16 %v1565, %v1565
    %v1574 = vpack.c.bf16 %v1566, %v1566
    %v1583 = vunpack.c.l.b16 %v1567
    %v1584 = vunpack.c.l.b16 %v1568
    %v1585 = vunpack.c.l.b16 %v1569
    %v1586 = vunpack.c.l.b16 %v1570
    %v1587 = vunpack.c.l.b16 %v1571
    %v1588 = vunpack.c.l.b16 %v1572
    %v1589 = vunpack.c.l.b16 %v1573
    %v1590 = vunpack.c.l.b16 %v1574
    %v1591 = vrot.slane %v1583, 2
    %v1592 = vrot.slane %v1584, 1
    %v1593 = vsel %vm813, %v1592, %v1591
    %v1594 = vsel %vm816, %v1585, %v1593
    %v1595 = vrot.slane %v1586, 7
    %v1596 = vsel %vm819, %v1595, %v1594
    %v1597 = vrot.slane %v1587, 6
    %v1598 = vsel %vm822, %v1597, %v1596
    %v1599 = vrot.slane %v1588, 5
    %v1600 = vsel %vm825, %v1599, %v1598
    %v1601 = vrot.slane %v1589, 4
    %v1602 = vsel %vm828, %v1601, %v1600
    %v1603 = vrot.slane %v1590, 3
    %v1604 = vsel %vm831, %v1603, %v1602
    %v1605 = vpack.c.b16 %v1604, %v1604
    %1607 = vmatprep.subr.bf16.mxu0 %v387
    %1608 = vmatpush1.bf16.msra.mxu0 %v386
    %1609 = vmatprep.subr.bf16.mxu0 %v391
    %1610 = vmatpush1.bf16.msra.mxu0 %v390
    %1611 = vmatprep.subr.bf16.mxu0 %v395
    %1612 = vmatpush1.bf16.msra.mxu0 %v394
    %1613 = vmatprep.subr.bf16.mxu0 %v399
    %1614 = vmatpush1.bf16.msra.mxu0 %v398
    %1615 = vmatprep.subr.bf16.mxu0 %v403
    %1616 = vmatpush1.bf16.msra.mxu0 %v402
    %1617 = vmatprep.subr.bf16.mxu0 %v407
    %1618 = vmatpush1.bf16.msra.mxu0 %v406
    %1619 = vmatprep.subr.bf16.mxu0 %v411
    %1620 = vmatpush1.bf16.msra.mxu0 %v410
    %1621 = vmatprep.subr.bf16.mxu0 %v415
    %1622 = vmatpush1.bf16.msra.mxu0 %v414
    %1623 = vmatprep.subr.bf16.mxu0 0
    %1624 = vmatpush1.bf16.msra.mxu0 0
    %1625 = vmatprep.subr.bf16.mxu0 0
    %1626 = vmatpush1.bf16.msra.mxu0 0
    %1627 = vmatprep.subr.bf16.mxu0 0
    %1628 = vmatpush1.bf16.msra.mxu0 0
    %1629 = vmatprep.subr.bf16.mxu0 0
    %1630 = vmatpush1.bf16.msra.mxu0 0
    %1631 = vmatprep.subr.bf16.mxu0 0
    %1632 = vmatpush1.bf16.msra.mxu0 0
    %1633 = vmatprep.subr.bf16.mxu0 0
    %1634 = vmatpush1.bf16.msra.mxu0 0
    %1635 = vmatprep.subr.bf16.mxu0 0
    %1636 = vmatpush1.bf16.msra.mxu0 0
    %1637 = vmatprep.subr.bf16.mxu0 0
    %1638 = vmatpush1.bf16.msra.mxu0 0
    %1639 = vmatprep.mubr.bf16.mxu0 0
    %1640 = vmatmul.mubr.bf16.gmra.mrb[0].mxu0 %v1605
    %v1641 = vpop.f32.mrb[0].mxu0
    %v1642 = vadd.f32 0.0, %v1641
    %v1643 = vpop.f32.mrb[0].mxu0
    %v1644 = vadd.f32 0.0, %v1643
    %v1645 = vpop.f32.mrb[0].mxu0
    %v1646 = vpop.f32.mrb[0].mxu0
    %1647 = vdwg.mxu0
    %1648 = vmatprep.subr.bf16.mxu0 %v389
    %1649 = vmatpush1.bf16.msra.mxu0 %v388
    %1650 = vmatprep.subr.bf16.mxu0 %v393
    %1651 = vmatpush1.bf16.msra.mxu0 %v392
    %1652 = vmatprep.subr.bf16.mxu0 %v397
    %1653 = vmatpush1.bf16.msra.mxu0 %v396
    %1654 = vmatprep.subr.bf16.mxu0 %v401
    %1655 = vmatpush1.bf16.msra.mxu0 %v400
    %1656 = vmatprep.subr.bf16.mxu0 %v405
    %1657 = vmatpush1.bf16.msra.mxu0 %v404
    %1658 = vmatprep.subr.bf16.mxu0 %v409
    %1659 = vmatpush1.bf16.msra.mxu0 %v408
    %1660 = vmatprep.subr.bf16.mxu0 %v413
    %1661 = vmatpush1.bf16.msra.mxu0 %v412
    %1662 = vmatprep.subr.bf16.mxu0 %v417
    %1663 = vmatpush1.bf16.msra.mxu0 %v416
    %1664 = vmatprep.subr.bf16.mxu0 0
    %1665 = vmatpush1.bf16.msra.mxu0 0
    %1666 = vmatprep.subr.bf16.mxu0 0
    %1667 = vmatpush1.bf16.msra.mxu0 0
    %1668 = vmatprep.subr.bf16.mxu0 0
    %1669 = vmatpush1.bf16.msra.mxu0 0
    %1670 = vmatprep.subr.bf16.mxu0 0
    %1671 = vmatpush1.bf16.msra.mxu0 0
    %1672 = vmatprep.subr.bf16.mxu0 0
    %1673 = vmatpush1.bf16.msra.mxu0 0
    %1674 = vmatprep.subr.bf16.mxu0 0
    %1675 = vmatpush1.bf16.msra.mxu0 0
    %1676 = vmatprep.subr.bf16.mxu0 0
    %1677 = vmatpush1.bf16.msra.mxu0 0
    %1678 = vmatprep.subr.bf16.mxu0 0
    %1679 = vmatpush1.bf16.msra.mxu0 0
    %1680 = vmatprep.mubr.bf16.mxu0 0
    %1681 = vmatmul.mubr.bf16.gmra.mrb[0].mxu0 %v1605
    %v1682 = vpop.f32.mrb[0].mxu0
    %v1683 = vadd.f32 0.0, %v1682
    %v1684 = vpop.f32.mrb[0].mxu0
    %v1685 = vadd.f32 0.0, %v1684
    %v1686 = vpop.f32.mrb[0].mxu0
    %v1687 = vpop.f32.mrb[0].mxu0
    %1688 = vdwg.mxu0
    %v1693 = vrot.slane %v1642, 5
    %v1694 = vrot.slane %v1644, 5
    %v1695 = vrot.slane %v1683, 5
    %v1696 = vrot.slane %v1685, 5
    %v1697 = vrot.slane %v1642, 6
    %v1698 = vrot.slane %v1644, 6
    %v1699 = vrot.slane %v1683, 6
    %v1700 = vrot.slane %v1685, 6
    %v1701 = vrot.slane %v1642, 7
    %v1702 = vrot.slane %v1644, 7
    %v1703 = vrot.slane %v1683, 7
    %v1704 = vrot.slane %v1685, 7
    %v1705 = vrot.slane %v1642, 1
    %v1706 = vrot.slane %v1644, 1
    %v1707 = vrot.slane %v1683, 1
    %v1708 = vrot.slane %v1685, 1
    %v1709 = vrot.slane %v1642, 2
    %v1710 = vrot.slane %v1644, 2
    %v1711 = vrot.slane %v1683, 2
    %v1712 = vrot.slane %v1685, 2
    %v1713 = vrot.slane %v1642, 3
    %v1714 = vrot.slane %v1644, 3
    %v1715 = vrot.slane %v1683, 3
    %v1716 = vrot.slane %v1685, 3
    %v1717 = vrot.slane %v1642, 4
    %v1718 = vrot.slane %v1644, 4
    %v1719 = vrot.slane %v1683, 4
    %v1720 = vrot.slane %v1685, 4
    %v1753 = vadd.f32 %v176, %v1693
    %v1754 = vadd.f32 %v178, %v1694
    %v1755 = vadd.f32 %v249, %v1695
    %v1756 = vadd.f32 %v251, %v1696
    %v1757 = vadd.f32 %v180, %v1697
    %v1758 = vadd.f32 %v182, %v1698
    %v1759 = vadd.f32 %v253, %v1699
    %v1760 = vadd.f32 %v255, %v1700
    %v1761 = vadd.f32 %v186, %v1701
    %v1762 = vadd.f32 %v188, %v1702
    %v1763 = vadd.f32 %v259, %v1703
    %v1764 = vadd.f32 %v261, %v1704
    %v1765 = vadd.f32 %v190, %v1642
    %v1766 = vadd.f32 %v192, %v1644
    %v1767 = vadd.f32 %v263, %v1683
    %v1768 = vadd.f32 %v265, %v1685
    %v1769 = vadd.f32 %v196, %v1705
    %v1770 = vadd.f32 %v198, %v1706
    %v1771 = vadd.f32 %v269, %v1707
    %v1772 = vadd.f32 %v271, %v1708
    %v1773 = vadd.f32 %v200, %v1709
    %v1774 = vadd.f32 %v202, %v1710
    %v1775 = vadd.f32 %v273, %v1711
    %v1776 = vadd.f32 %v275, %v1712
    %v1777 = vadd.f32 %v206, %v1713
    %v1778 = vadd.f32 %v208, %v1714
    %v1779 = vadd.f32 %v279, %v1715
    %v1780 = vadd.f32 %v281, %v1716
    %v1781 = vadd.f32 %v210, %v1717
    %v1782 = vadd.f32 %v212, %v1718
    %v1783 = vadd.f32 %v283, %v1719
    %v1784 = vadd.f32 %v285, %v1720
    %v1785 = vmul.f32 %v1753, 0.5
    %v1786 = vmul.f32 %v1757, 0.5
    %v1787 = vmul.f32 %v1761, 0.5
    %v1788 = vmul.f32 %v1765, 0.5
    %v1789 = vmul.f32 %v1769, 0.5
    %v1790 = vmul.f32 %v1773, 0.5
    %v1791 = vmul.f32 %v1777, 0.5
    %v1792 = vmul.f32 %v1781, 0.5
    %v1793 = vtanh.pop %v1785
    %v1794 = vtanh.pop %v1786
    %v1795 = vtanh.pop %v1787
    %v1796 = vtanh.pop %v1788
    %v1797 = vtanh.pop %v1789
    %v1798 = vtanh.pop %v1790
    %v1799 = vtanh.pop %v1791
    %v1800 = vtanh.pop %v1792
    %v1801 = vmul.f32 %v1793, 0.5
    %v1802 = vmul.f32 %v1794, 0.5
    %v1803 = vmul.f32 %v1795, 0.5
    %v1804 = vmul.f32 %v1796, 0.5
    %v1805 = vmul.f32 %v1797, 0.5
    %v1806 = vmul.f32 %v1798, 0.5
    %v1807 = vmul.f32 %v1799, 0.5
    %v1808 = vmul.f32 %v1800, 0.5
    %v1809 = vadd.f32 %v1801, 0.5
    %v1810 = vadd.f32 %v1802, 0.5
    %v1811 = vadd.f32 %v1803, 0.5
    %v1812 = vadd.f32 %v1804, 0.5
    %v1813 = vadd.f32 %v1805, 0.5
    %v1814 = vadd.f32 %v1806, 0.5
    %v1815 = vadd.f32 %v1807, 0.5
    %v1816 = vadd.f32 %v1808, 0.5
    %v1817 = vmul.f32 %v1754, 0.5
    %v1818 = vmul.f32 %v1758, 0.5
    %v1819 = vmul.f32 %v1762, 0.5
    %v1820 = vmul.f32 %v1766, 0.5
    %v1821 = vmul.f32 %v1770, 0.5
    %v1822 = vmul.f32 %v1774, 0.5
    %v1823 = vmul.f32 %v1778, 0.5
    %v1824 = vmul.f32 %v1782, 0.5
    %v1825 = vtanh.pop %v1817
    %v1826 = vtanh.pop %v1818
    %v1827 = vtanh.pop %v1819
    %v1828 = vtanh.pop %v1820
    %v1829 = vtanh.pop %v1821
    %v1830 = vtanh.pop %v1822
    %v1831 = vtanh.pop %v1823
    %v1832 = vtanh.pop %v1824
    %v1833 = vmul.f32 %v1825, 0.5
    %v1834 = vmul.f32 %v1826, 0.5
    %v1835 = vmul.f32 %v1827, 0.5
    %v1836 = vmul.f32 %v1828, 0.5
    %v1837 = vmul.f32 %v1829, 0.5
    %v1838 = vmul.f32 %v1830, 0.5
    %v1839 = vmul.f32 %v1831, 0.5
    %v1840 = vmul.f32 %v1832, 0.5
    %v1841 = vadd.f32 %v1833, 0.5
    %v1842 = vadd.f32 %v1834, 0.5
    %v1843 = vadd.f32 %v1835, 0.5
    %v1844 = vadd.f32 %v1836, 0.5
    %v1845 = vadd.f32 %v1837, 0.5
    %v1846 = vadd.f32 %v1838, 0.5
    %v1847 = vadd.f32 %v1839, 0.5
    %v1848 = vadd.f32 %v1840, 0.5
    %v1849 = vtanh.pop %v1755
    %v1850 = vtanh.pop %v1759
    %v1851 = vtanh.pop %v1763
    %v1852 = vtanh.pop %v1767
    %v1853 = vtanh.pop %v1771
    %v1854 = vtanh.pop %v1775
    %v1855 = vtanh.pop %v1779
    %v1856 = vtanh.pop %v1783
    %v1857 = vmul.f32 %v1756, 0.5
    %v1858 = vmul.f32 %v1760, 0.5
    %v1859 = vmul.f32 %v1764, 0.5
    %v1860 = vmul.f32 %v1768, 0.5
    %v1861 = vmul.f32 %v1772, 0.5
    %v1862 = vmul.f32 %v1776, 0.5
    %v1863 = vmul.f32 %v1780, 0.5
    %v1864 = vmul.f32 %v1784, 0.5
    %v1865 = vtanh.pop %v1857
    %v1866 = vtanh.pop %v1858
    %v1867 = vtanh.pop %v1859
    %v1868 = vtanh.pop %v1860
    %v1869 = vtanh.pop %v1861
    %v1870 = vtanh.pop %v1862
    %v1871 = vtanh.pop %v1863
    %v1872 = vtanh.pop %v1864
    %v1873 = vmul.f32 %v1865, 0.5
    %v1874 = vmul.f32 %v1866, 0.5
    %v1875 = vmul.f32 %v1867, 0.5
    %v1876 = vmul.f32 %v1868, 0.5
    %v1877 = vmul.f32 %v1869, 0.5
    %v1878 = vmul.f32 %v1870, 0.5
    %v1879 = vmul.f32 %v1871, 0.5
    %v1880 = vmul.f32 %v1872, 0.5
    %v1881 = vadd.f32 %v1873, 0.5
    %v1882 = vadd.f32 %v1874, 0.5
    %v1883 = vadd.f32 %v1875, 0.5
    %v1884 = vadd.f32 %v1876, 0.5
    %v1885 = vadd.f32 %v1877, 0.5
    %v1886 = vadd.f32 %v1878, 0.5
    %v1887 = vadd.f32 %v1879, 0.5
    %v1888 = vadd.f32 %v1880, 0.5
    %v1897 = vrot.slane %v1543, 7
    %v1898 = vrot.slane %v1544, 7
    %v1899 = vrot.slane %v1545, 7
    %v1900 = vrot.slane %v1546, 7
    %v1901 = vrot.slane %v1547, 7
    %v1902 = vrot.slane %v1548, 7
    %v1903 = vrot.slane %v1549, 7
    %v1904 = vrot.slane %v1550, 7
    %v1913 = vmul.f32 %v1841, %v1897
    %v1914 = vmul.f32 %v1842, %v1898
    %v1915 = vmul.f32 %v1843, %v1899
    %v1916 = vmul.f32 %v1844, %v1900
    %v1917 = vmul.f32 %v1845, %v1901
    %v1918 = vmul.f32 %v1846, %v1902
    %v1919 = vmul.f32 %v1847, %v1903
    %v1920 = vmul.f32 %v1848, %v1904
    %v1921 = vmul.f32 %v1809, %v1849
    %v1922 = vmul.f32 %v1810, %v1850
    %v1923 = vmul.f32 %v1811, %v1851
    %v1924 = vmul.f32 %v1812, %v1852
    %v1925 = vmul.f32 %v1813, %v1853
    %v1926 = vmul.f32 %v1814, %v1854
    %v1927 = vmul.f32 %v1815, %v1855
    %v1928 = vmul.f32 %v1816, %v1856
    %v1929 = vadd.f32 %v1913, %v1921
    %v1930 = vadd.f32 %v1914, %v1922
    %v1931 = vadd.f32 %v1915, %v1923
    %v1932 = vadd.f32 %v1916, %v1924
    %v1933 = vadd.f32 %v1917, %v1925
    %v1934 = vadd.f32 %v1918, %v1926
    %v1935 = vadd.f32 %v1919, %v1927
    %v1936 = vadd.f32 %v1920, %v1928
    %v1937 = vtanh.pop %v1929
    %v1938 = vtanh.pop %v1930
    %v1939 = vtanh.pop %v1931
    %v1940 = vtanh.pop %v1932
    %v1941 = vtanh.pop %v1933
    %v1942 = vtanh.pop %v1934
    %v1943 = vtanh.pop %v1935
    %v1944 = vtanh.pop %v1936
    %v1945 = vmul.f32 %v1881, %v1937
    %v1946 = vmul.f32 %v1882, %v1938
    %v1947 = vmul.f32 %v1883, %v1939
    %v1948 = vmul.f32 %v1884, %v1940
    %v1949 = vmul.f32 %v1885, %v1941
    %v1950 = vmul.f32 %v1886, %v1942
    %v1951 = vmul.f32 %v1887, %v1943
    %v1952 = vmul.f32 %v1888, %v1944
    %v1953 = vpack.c.bf16 %v1945, %v1945
    %v1954 = vpack.c.bf16 %v1946, %v1946
    %v1955 = vpack.c.bf16 %v1947, %v1947
    %v1956 = vpack.c.bf16 %v1948, %v1948
    %v1957 = vpack.c.bf16 %v1949, %v1949
    %v1958 = vpack.c.bf16 %v1950, %v1950
    %v1959 = vpack.c.bf16 %v1951, %v1951
    %v1960 = vpack.c.bf16 %v1952, %v1952
    %v1969 = vunpack.c.l.b16 %v1953
    %v1970 = vunpack.c.l.b16 %v1954
    %v1971 = vunpack.c.l.b16 %v1955
    %v1972 = vunpack.c.l.b16 %v1956
    %v1973 = vunpack.c.l.b16 %v1957
    %v1974 = vunpack.c.l.b16 %v1958
    %v1975 = vunpack.c.l.b16 %v1959
    %v1976 = vunpack.c.l.b16 %v1960
    %v1977 = vrot.slane %v1969, 3
    %v1978 = vrot.slane %v1970, 2
    %v1979 = vsel %vm813, %v1978, %v1977
    %v1980 = vrot.slane %v1971, 1
    %v1981 = vsel %vm816, %v1980, %v1979
    %v1982 = vsel %vm819, %v1972, %v1981
    %v1983 = vrot.slane %v1973, 7
    %v1984 = vsel %vm822, %v1983, %v1982
    %v1985 = vrot.slane %v1974, 6
    %v1986 = vsel %vm825, %v1985, %v1984
    %v1987 = vrot.slane %v1975, 5
    %v1988 = vsel %vm828, %v1987, %v1986
    %v1989 = vrot.slane %v1976, 4
    %v1990 = vsel %vm831, %v1989, %v1988
    %v1991 = vpack.c.b16 %v1990, %v1990
    %1993 = vmatprep.subr.bf16.mxu0 %v387
    %1994 = vmatpush1.bf16.msra.mxu0 %v386
    %1995 = vmatprep.subr.bf16.mxu0 %v391
    %1996 = vmatpush1.bf16.msra.mxu0 %v390
    %1997 = vmatprep.subr.bf16.mxu0 %v395
    %1998 = vmatpush1.bf16.msra.mxu0 %v394
    %1999 = vmatprep.subr.bf16.mxu0 %v399
    %2000 = vmatpush1.bf16.msra.mxu0 %v398
    %2001 = vmatprep.subr.bf16.mxu0 %v403
    %2002 = vmatpush1.bf16.msra.mxu0 %v402
    %2003 = vmatprep.subr.bf16.mxu0 %v407
    %2004 = vmatpush1.bf16.msra.mxu0 %v406
    %2005 = vmatprep.subr.bf16.mxu0 %v411
    %2006 = vmatpush1.bf16.msra.mxu0 %v410
    %2007 = vmatprep.subr.bf16.mxu0 %v415
    %2008 = vmatpush1.bf16.msra.mxu0 %v414
    %2009 = vmatprep.subr.bf16.mxu0 0
    %2010 = vmatpush1.bf16.msra.mxu0 0
    %2011 = vmatprep.subr.bf16.mxu0 0
    %2012 = vmatpush1.bf16.msra.mxu0 0
    %2013 = vmatprep.subr.bf16.mxu0 0
    %2014 = vmatpush1.bf16.msra.mxu0 0
    %2015 = vmatprep.subr.bf16.mxu0 0
    %2016 = vmatpush1.bf16.msra.mxu0 0
    %2017 = vmatprep.subr.bf16.mxu0 0
    %2018 = vmatpush1.bf16.msra.mxu0 0
    %2019 = vmatprep.subr.bf16.mxu0 0
    %2020 = vmatpush1.bf16.msra.mxu0 0
    %2021 = vmatprep.subr.bf16.mxu0 0
    %2022 = vmatpush1.bf16.msra.mxu0 0
    %2023 = vmatprep.subr.bf16.mxu0 0
    %2024 = vmatpush1.bf16.msra.mxu0 0
    %2025 = vmatprep.mubr.bf16.mxu0 0
    %2026 = vmatmul.mubr.bf16.gmra.mrb[0].mxu0 %v1991
    %v2027 = vpop.f32.mrb[0].mxu0
    %v2028 = vadd.f32 0.0, %v2027
    %v2029 = vpop.f32.mrb[0].mxu0
    %v2030 = vadd.f32 0.0, %v2029
    %v2031 = vpop.f32.mrb[0].mxu0
    %v2032 = vpop.f32.mrb[0].mxu0
    %2033 = vdwg.mxu0
    %2034 = vmatprep.subr.bf16.mxu0 %v389
    %2035 = vmatpush1.bf16.msra.mxu0 %v388
    %2036 = vmatprep.subr.bf16.mxu0 %v393
    %2037 = vmatpush1.bf16.msra.mxu0 %v392
    %2038 = vmatprep.subr.bf16.mxu0 %v397
    %2039 = vmatpush1.bf16.msra.mxu0 %v396
    %2040 = vmatprep.subr.bf16.mxu0 %v401
    %2041 = vmatpush1.bf16.msra.mxu0 %v400
    %2042 = vmatprep.subr.bf16.mxu0 %v405
    %2043 = vmatpush1.bf16.msra.mxu0 %v404
    %2044 = vmatprep.subr.bf16.mxu0 %v409
    %2045 = vmatpush1.bf16.msra.mxu0 %v408
    %2046 = vmatprep.subr.bf16.mxu0 %v413
    %2047 = vmatpush1.bf16.msra.mxu0 %v412
    %2048 = vmatprep.subr.bf16.mxu0 %v417
    %2049 = vmatpush1.bf16.msra.mxu0 %v416
    %2050 = vmatprep.subr.bf16.mxu0 0
    %2051 = vmatpush1.bf16.msra.mxu0 0
    %2052 = vmatprep.subr.bf16.mxu0 0
    %2053 = vmatpush1.bf16.msra.mxu0 0
    %2054 = vmatprep.subr.bf16.mxu0 0
    %2055 = vmatpush1.bf16.msra.mxu0 0
    %2056 = vmatprep.subr.bf16.mxu0 0
    %2057 = vmatpush1.bf16.msra.mxu0 0
    %2058 = vmatprep.subr.bf16.mxu0 0
    %2059 = vmatpush1.bf16.msra.mxu0 0
    %2060 = vmatprep.subr.bf16.mxu0 0
    %2061 = vmatpush1.bf16.msra.mxu0 0
    %2062 = vmatprep.subr.bf16.mxu0 0
    %2063 = vmatpush1.bf16.msra.mxu0 0
    %2064 = vmatprep.subr.bf16.mxu0 0
    %2065 = vmatpush1.bf16.msra.mxu0 0
    %2066 = vmatprep.mubr.bf16.mxu0 0
    %2067 = vmatmul.mubr.bf16.gmra.mrb[0].mxu0 %v1991
    %v2068 = vpop.f32.mrb[0].mxu0
    %v2069 = vadd.f32 0.0, %v2068
    %v2070 = vpop.f32.mrb[0].mxu0
    %v2071 = vadd.f32 0.0, %v2070
    %v2072 = vpop.f32.mrb[0].mxu0
    %v2073 = vpop.f32.mrb[0].mxu0
    %2074 = vdwg.mxu0
    %v2079 = vrot.slane %v2028, 4
    %v2080 = vrot.slane %v2030, 4
    %v2081 = vrot.slane %v2069, 4
    %v2082 = vrot.slane %v2071, 4
    %v2083 = vrot.slane %v2028, 5
    %v2084 = vrot.slane %v2030, 5
    %v2085 = vrot.slane %v2069, 5
    %v2086 = vrot.slane %v2071, 5
    %v2087 = vrot.slane %v2028, 6
    %v2088 = vrot.slane %v2030, 6
    %v2089 = vrot.slane %v2069, 6
    %v2090 = vrot.slane %v2071, 6
    %v2091 = vrot.slane %v2028, 7
    %v2092 = vrot.slane %v2030, 7
    %v2093 = vrot.slane %v2069, 7
    %v2094 = vrot.slane %v2071, 7
    %v2095 = vrot.slane %v2028, 1
    %v2096 = vrot.slane %v2030, 1
    %v2097 = vrot.slane %v2069, 1
    %v2098 = vrot.slane %v2071, 1
    %v2099 = vrot.slane %v2028, 2
    %v2100 = vrot.slane %v2030, 2
    %v2101 = vrot.slane %v2069, 2
    %v2102 = vrot.slane %v2071, 2
    %v2103 = vrot.slane %v2028, 3
    %v2104 = vrot.slane %v2030, 3
    %v2105 = vrot.slane %v2069, 3
    %v2106 = vrot.slane %v2071, 3
    %v2139 = vadd.f32 %v176, %v2079
    %v2140 = vadd.f32 %v178, %v2080
    %v2141 = vadd.f32 %v249, %v2081
    %v2142 = vadd.f32 %v251, %v2082
    %v2143 = vadd.f32 %v180, %v2083
    %v2144 = vadd.f32 %v182, %v2084
    %v2145 = vadd.f32 %v253, %v2085
    %v2146 = vadd.f32 %v255, %v2086
    %v2147 = vadd.f32 %v186, %v2087
    %v2148 = vadd.f32 %v188, %v2088
    %v2149 = vadd.f32 %v259, %v2089
    %v2150 = vadd.f32 %v261, %v2090
    %v2151 = vadd.f32 %v190, %v2091
    %v2152 = vadd.f32 %v192, %v2092
    %v2153 = vadd.f32 %v263, %v2093
    %v2154 = vadd.f32 %v265, %v2094
    %v2155 = vadd.f32 %v196, %v2028
    %v2156 = vadd.f32 %v198, %v2030
    %v2157 = vadd.f32 %v269, %v2069
    %v2158 = vadd.f32 %v271, %v2071
    %v2159 = vadd.f32 %v200, %v2095
    %v2160 = vadd.f32 %v202, %v2096
    %v2161 = vadd.f32 %v273, %v2097
    %v2162 = vadd.f32 %v275, %v2098
    %v2163 = vadd.f32 %v206, %v2099
    %v2164 = vadd.f32 %v208, %v2100
    %v2165 = vadd.f32 %v279, %v2101
    %v2166 = vadd.f32 %v281, %v2102
    %v2167 = vadd.f32 %v210, %v2103
    %v2168 = vadd.f32 %v212, %v2104
    %v2169 = vadd.f32 %v283, %v2105
    %v2170 = vadd.f32 %v285, %v2106
    %v2171 = vmul.f32 %v2139, 0.5
    %v2172 = vmul.f32 %v2143, 0.5
    %v2173 = vmul.f32 %v2147, 0.5
    %v2174 = vmul.f32 %v2151, 0.5
    %v2175 = vmul.f32 %v2155, 0.5
    %v2176 = vmul.f32 %v2159, 0.5
    %v2177 = vmul.f32 %v2163, 0.5
    %v2178 = vmul.f32 %v2167, 0.5
    %v2179 = vtanh.pop %v2171
    %v2180 = vtanh.pop %v2172
    %v2181 = vtanh.pop %v2173
    %v2182 = vtanh.pop %v2174
    %v2183 = vtanh.pop %v2175
    %v2184 = vtanh.pop %v2176
    %v2185 = vtanh.pop %v2177
    %v2186 = vtanh.pop %v2178
    %v2187 = vmul.f32 %v2179, 0.5
    %v2188 = vmul.f32 %v2180, 0.5
    %v2189 = vmul.f32 %v2181, 0.5
    %v2190 = vmul.f32 %v2182, 0.5
    %v2191 = vmul.f32 %v2183, 0.5
    %v2192 = vmul.f32 %v2184, 0.5
    %v2193 = vmul.f32 %v2185, 0.5
    %v2194 = vmul.f32 %v2186, 0.5
    %v2195 = vadd.f32 %v2187, 0.5
    %v2196 = vadd.f32 %v2188, 0.5
    %v2197 = vadd.f32 %v2189, 0.5
    %v2198 = vadd.f32 %v2190, 0.5
    %v2199 = vadd.f32 %v2191, 0.5
    %v2200 = vadd.f32 %v2192, 0.5
    %v2201 = vadd.f32 %v2193, 0.5
    %v2202 = vadd.f32 %v2194, 0.5
    %v2203 = vmul.f32 %v2140, 0.5
    %v2204 = vmul.f32 %v2144, 0.5
    %v2205 = vmul.f32 %v2148, 0.5
    %v2206 = vmul.f32 %v2152, 0.5
    %v2207 = vmul.f32 %v2156, 0.5
    %v2208 = vmul.f32 %v2160, 0.5
    %v2209 = vmul.f32 %v2164, 0.5
    %v2210 = vmul.f32 %v2168, 0.5
    %v2211 = vtanh.pop %v2203
    %v2212 = vtanh.pop %v2204
    %v2213 = vtanh.pop %v2205
    %v2214 = vtanh.pop %v2206
    %v2215 = vtanh.pop %v2207
    %v2216 = vtanh.pop %v2208
    %v2217 = vtanh.pop %v2209
    %v2218 = vtanh.pop %v2210
    %v2219 = vmul.f32 %v2211, 0.5
    %v2220 = vmul.f32 %v2212, 0.5
    %v2221 = vmul.f32 %v2213, 0.5
    %v2222 = vmul.f32 %v2214, 0.5
    %v2223 = vmul.f32 %v2215, 0.5
    %v2224 = vmul.f32 %v2216, 0.5
    %v2225 = vmul.f32 %v2217, 0.5
    %v2226 = vmul.f32 %v2218, 0.5
    %v2227 = vadd.f32 %v2219, 0.5
    %v2228 = vadd.f32 %v2220, 0.5
    %v2229 = vadd.f32 %v2221, 0.5
    %v2230 = vadd.f32 %v2222, 0.5
    %v2231 = vadd.f32 %v2223, 0.5
    %v2232 = vadd.f32 %v2224, 0.5
    %v2233 = vadd.f32 %v2225, 0.5
    %v2234 = vadd.f32 %v2226, 0.5
    %v2235 = vtanh.pop %v2141
    %v2236 = vtanh.pop %v2145
    %v2237 = vtanh.pop %v2149
    %v2238 = vtanh.pop %v2153
    %v2239 = vtanh.pop %v2157
    %v2240 = vtanh.pop %v2161
    %v2241 = vtanh.pop %v2165
    %v2242 = vtanh.pop %v2169
    %v2243 = vmul.f32 %v2142, 0.5
    %v2244 = vmul.f32 %v2146, 0.5
    %v2245 = vmul.f32 %v2150, 0.5
    %v2246 = vmul.f32 %v2154, 0.5
    %v2247 = vmul.f32 %v2158, 0.5
    %v2248 = vmul.f32 %v2162, 0.5
    %v2249 = vmul.f32 %v2166, 0.5
    %v2250 = vmul.f32 %v2170, 0.5
    %v2251 = vtanh.pop %v2243
    %v2252 = vtanh.pop %v2244
    %v2253 = vtanh.pop %v2245
    %v2254 = vtanh.pop %v2246
    %v2255 = vtanh.pop %v2247
    %v2256 = vtanh.pop %v2248
    %v2257 = vtanh.pop %v2249
    %v2258 = vtanh.pop %v2250
    %v2259 = vmul.f32 %v2251, 0.5
    %v2260 = vmul.f32 %v2252, 0.5
    %v2261 = vmul.f32 %v2253, 0.5
    %v2262 = vmul.f32 %v2254, 0.5
    %v2263 = vmul.f32 %v2255, 0.5
    %v2264 = vmul.f32 %v2256, 0.5
    %v2265 = vmul.f32 %v2257, 0.5
    %v2266 = vmul.f32 %v2258, 0.5
    %v2267 = vadd.f32 %v2259, 0.5
    %v2268 = vadd.f32 %v2260, 0.5
    %v2269 = vadd.f32 %v2261, 0.5
    %v2270 = vadd.f32 %v2262, 0.5
    %v2271 = vadd.f32 %v2263, 0.5
    %v2272 = vadd.f32 %v2264, 0.5
    %v2273 = vadd.f32 %v2265, 0.5
    %v2274 = vadd.f32 %v2266, 0.5
    %v2283 = vrot.slane %v1929, 7
    %v2284 = vrot.slane %v1930, 7
    %v2285 = vrot.slane %v1931, 7
    %v2286 = vrot.slane %v1932, 7
    %v2287 = vrot.slane %v1933, 7
    %v2288 = vrot.slane %v1934, 7
    %v2289 = vrot.slane %v1935, 7
    %v2290 = vrot.slane %v1936, 7
    %v2299 = vmul.f32 %v2227, %v2283
    %v2300 = vmul.f32 %v2228, %v2284
    %v2301 = vmul.f32 %v2229, %v2285
    %v2302 = vmul.f32 %v2230, %v2286
    %v2303 = vmul.f32 %v2231, %v2287
    %v2304 = vmul.f32 %v2232, %v2288
    %v2305 = vmul.f32 %v2233, %v2289
    %v2306 = vmul.f32 %v2234, %v2290
    %v2307 = vmul.f32 %v2195, %v2235
    %v2308 = vmul.f32 %v2196, %v2236
    %v2309 = vmul.f32 %v2197, %v2237
    %v2310 = vmul.f32 %v2198, %v2238
    %v2311 = vmul.f32 %v2199, %v2239
    %v2312 = vmul.f32 %v2200, %v2240
    %v2313 = vmul.f32 %v2201, %v2241
    %v2314 = vmul.f32 %v2202, %v2242
    %v2315 = vadd.f32 %v2299, %v2307
    %v2316 = vadd.f32 %v2300, %v2308
    %v2317 = vadd.f32 %v2301, %v2309
    %v2318 = vadd.f32 %v2302, %v2310
    %v2319 = vadd.f32 %v2303, %v2311
    %v2320 = vadd.f32 %v2304, %v2312
    %v2321 = vadd.f32 %v2305, %v2313
    %v2322 = vadd.f32 %v2306, %v2314
    %v2323 = vtanh.pop %v2315
    %v2324 = vtanh.pop %v2316
    %v2325 = vtanh.pop %v2317
    %v2326 = vtanh.pop %v2318
    %v2327 = vtanh.pop %v2319
    %v2328 = vtanh.pop %v2320
    %v2329 = vtanh.pop %v2321
    %v2330 = vtanh.pop %v2322
    %v2331 = vmul.f32 %v2267, %v2323
    %v2332 = vmul.f32 %v2268, %v2324
    %v2333 = vmul.f32 %v2269, %v2325
    %v2334 = vmul.f32 %v2270, %v2326
    %v2335 = vmul.f32 %v2271, %v2327
    %v2336 = vmul.f32 %v2272, %v2328
    %v2337 = vmul.f32 %v2273, %v2329
    %v2338 = vmul.f32 %v2274, %v2330
    %v2339 = vpack.c.bf16 %v2331, %v2331
    %v2340 = vpack.c.bf16 %v2332, %v2332
    %v2341 = vpack.c.bf16 %v2333, %v2333
    %v2342 = vpack.c.bf16 %v2334, %v2334
    %v2343 = vpack.c.bf16 %v2335, %v2335
    %v2344 = vpack.c.bf16 %v2336, %v2336
    %v2345 = vpack.c.bf16 %v2337, %v2337
    %v2346 = vpack.c.bf16 %v2338, %v2338
    %v2355 = vunpack.c.l.b16 %v2339
    %v2356 = vunpack.c.l.b16 %v2340
    %v2357 = vunpack.c.l.b16 %v2341
    %v2358 = vunpack.c.l.b16 %v2342
    %v2359 = vunpack.c.l.b16 %v2343
    %v2360 = vunpack.c.l.b16 %v2344
    %v2361 = vunpack.c.l.b16 %v2345
    %v2362 = vunpack.c.l.b16 %v2346
    %v2363 = vrot.slane %v2355, 4
    %v2364 = vrot.slane %v2356, 3
    %v2365 = vsel %vm813, %v2364, %v2363
    %v2366 = vrot.slane %v2357, 2
    %v2367 = vsel %vm816, %v2366, %v2365
    %v2368 = vrot.slane %v2358, 1
    %v2369 = vsel %vm819, %v2368, %v2367
    %v2370 = vsel %vm822, %v2359, %v2369
    %v2371 = vrot.slane %v2360, 7
    %v2372 = vsel %vm825, %v2371, %v2370
    %v2373 = vrot.slane %v2361, 6
    %v2374 = vsel %vm828, %v2373, %v2372
    %v2375 = vrot.slane %v2362, 5
    %v2376 = vsel %vm831, %v2375, %v2374
    %v2377 = vpack.c.b16 %v2376, %v2376
    %2379 = vmatprep.subr.bf16.mxu0 %v387
    %2380 = vmatpush1.bf16.msra.mxu0 %v386
    %2381 = vmatprep.subr.bf16.mxu0 %v391
    %2382 = vmatpush1.bf16.msra.mxu0 %v390
    %2383 = vmatprep.subr.bf16.mxu0 %v395
    %2384 = vmatpush1.bf16.msra.mxu0 %v394
    %2385 = vmatprep.subr.bf16.mxu0 %v399
    %2386 = vmatpush1.bf16.msra.mxu0 %v398
    %2387 = vmatprep.subr.bf16.mxu0 %v403
    %2388 = vmatpush1.bf16.msra.mxu0 %v402
    %2389 = vmatprep.subr.bf16.mxu0 %v407
    %2390 = vmatpush1.bf16.msra.mxu0 %v406
    %2391 = vmatprep.subr.bf16.mxu0 %v411
    %2392 = vmatpush1.bf16.msra.mxu0 %v410
    %2393 = vmatprep.subr.bf16.mxu0 %v415
    %2394 = vmatpush1.bf16.msra.mxu0 %v414
    %2395 = vmatprep.subr.bf16.mxu0 0
    %2396 = vmatpush1.bf16.msra.mxu0 0
    %2397 = vmatprep.subr.bf16.mxu0 0
    %2398 = vmatpush1.bf16.msra.mxu0 0
    %2399 = vmatprep.subr.bf16.mxu0 0
    %2400 = vmatpush1.bf16.msra.mxu0 0
    %2401 = vmatprep.subr.bf16.mxu0 0
    %2402 = vmatpush1.bf16.msra.mxu0 0
    %2403 = vmatprep.subr.bf16.mxu0 0
    %2404 = vmatpush1.bf16.msra.mxu0 0
    %2405 = vmatprep.subr.bf16.mxu0 0
    %2406 = vmatpush1.bf16.msra.mxu0 0
    %2407 = vmatprep.subr.bf16.mxu0 0
    %2408 = vmatpush1.bf16.msra.mxu0 0
    %2409 = vmatprep.subr.bf16.mxu0 0
    %2410 = vmatpush1.bf16.msra.mxu0 0
    %2411 = vmatprep.mubr.bf16.mxu0 0
    %2412 = vmatmul.mubr.bf16.gmra.mrb[0].mxu0 %v2377
    %v2413 = vpop.f32.mrb[0].mxu0
    %v2414 = vadd.f32 0.0, %v2413
    %v2415 = vpop.f32.mrb[0].mxu0
    %v2416 = vadd.f32 0.0, %v2415
    %v2417 = vpop.f32.mrb[0].mxu0
    %v2418 = vpop.f32.mrb[0].mxu0
    %2419 = vdwg.mxu0
    %2420 = vmatprep.subr.bf16.mxu0 %v389
    %2421 = vmatpush1.bf16.msra.mxu0 %v388
    %2422 = vmatprep.subr.bf16.mxu0 %v393
    %2423 = vmatpush1.bf16.msra.mxu0 %v392
    %2424 = vmatprep.subr.bf16.mxu0 %v397
    %2425 = vmatpush1.bf16.msra.mxu0 %v396
    %2426 = vmatprep.subr.bf16.mxu0 %v401
    %2427 = vmatpush1.bf16.msra.mxu0 %v400
    %2428 = vmatprep.subr.bf16.mxu0 %v405
    %2429 = vmatpush1.bf16.msra.mxu0 %v404
    %2430 = vmatprep.subr.bf16.mxu0 %v409
    %2431 = vmatpush1.bf16.msra.mxu0 %v408
    %2432 = vmatprep.subr.bf16.mxu0 %v413
    %2433 = vmatpush1.bf16.msra.mxu0 %v412
    %2434 = vmatprep.subr.bf16.mxu0 %v417
    %2435 = vmatpush1.bf16.msra.mxu0 %v416
    %2436 = vmatprep.subr.bf16.mxu0 0
    %2437 = vmatpush1.bf16.msra.mxu0 0
    %2438 = vmatprep.subr.bf16.mxu0 0
    %2439 = vmatpush1.bf16.msra.mxu0 0
    %2440 = vmatprep.subr.bf16.mxu0 0
    %2441 = vmatpush1.bf16.msra.mxu0 0
    %2442 = vmatprep.subr.bf16.mxu0 0
    %2443 = vmatpush1.bf16.msra.mxu0 0
    %2444 = vmatprep.subr.bf16.mxu0 0
    %2445 = vmatpush1.bf16.msra.mxu0 0
    %2446 = vmatprep.subr.bf16.mxu0 0
    %2447 = vmatpush1.bf16.msra.mxu0 0
    %2448 = vmatprep.subr.bf16.mxu0 0
    %2449 = vmatpush1.bf16.msra.mxu0 0
    %2450 = vmatprep.subr.bf16.mxu0 0
    %2451 = vmatpush1.bf16.msra.mxu0 0
    %2452 = vmatprep.mubr.bf16.mxu0 0
    %2453 = vmatmul.mubr.bf16.gmra.mrb[0].mxu0 %v2377
    %v2454 = vpop.f32.mrb[0].mxu0
    %v2455 = vadd.f32 0.0, %v2454
    %v2456 = vpop.f32.mrb[0].mxu0
    %v2457 = vadd.f32 0.0, %v2456
    %v2458 = vpop.f32.mrb[0].mxu0
    %v2459 = vpop.f32.mrb[0].mxu0
    %2460 = vdwg.mxu0
    %v2465 = vrot.slane %v2414, 3
    %v2466 = vrot.slane %v2416, 3
    %v2467 = vrot.slane %v2455, 3
    %v2468 = vrot.slane %v2457, 3
    %v2469 = vrot.slane %v2414, 4
    %v2470 = vrot.slane %v2416, 4
    %v2471 = vrot.slane %v2455, 4
    %v2472 = vrot.slane %v2457, 4
    %v2473 = vrot.slane %v2414, 5
    %v2474 = vrot.slane %v2416, 5
    %v2475 = vrot.slane %v2455, 5
    %v2476 = vrot.slane %v2457, 5
    %v2477 = vrot.slane %v2414, 6
    %v2478 = vrot.slane %v2416, 6
    %v2479 = vrot.slane %v2455, 6
    %v2480 = vrot.slane %v2457, 6
    %v2481 = vrot.slane %v2414, 7
    %v2482 = vrot.slane %v2416, 7
    %v2483 = vrot.slane %v2455, 7
    %v2484 = vrot.slane %v2457, 7
    %v2485 = vrot.slane %v2414, 1
    %v2486 = vrot.slane %v2416, 1
    %v2487 = vrot.slane %v2455, 1
    %v2488 = vrot.slane %v2457, 1
    %v2489 = vrot.slane %v2414, 2
    %v2490 = vrot.slane %v2416, 2
    %v2491 = vrot.slane %v2455, 2
    %v2492 = vrot.slane %v2457, 2
    %v2525 = vadd.f32 %v176, %v2465
    %v2526 = vadd.f32 %v178, %v2466
    %v2527 = vadd.f32 %v249, %v2467
    %v2528 = vadd.f32 %v251, %v2468
    %v2529 = vadd.f32 %v180, %v2469
    %v2530 = vadd.f32 %v182, %v2470
    %v2531 = vadd.f32 %v253, %v2471
    %v2532 = vadd.f32 %v255, %v2472
    %v2533 = vadd.f32 %v186, %v2473
    %v2534 = vadd.f32 %v188, %v2474
    %v2535 = vadd.f32 %v259, %v2475
    %v2536 = vadd.f32 %v261, %v2476
    %v2537 = vadd.f32 %v190, %v2477
    %v2538 = vadd.f32 %v192, %v2478
    %v2539 = vadd.f32 %v263, %v2479
    %v2540 = vadd.f32 %v265, %v2480
    %v2541 = vadd.f32 %v196, %v2481
    %v2542 = vadd.f32 %v198, %v2482
    %v2543 = vadd.f32 %v269, %v2483
    %v2544 = vadd.f32 %v271, %v2484
    %v2545 = vadd.f32 %v200, %v2414
    %v2546 = vadd.f32 %v202, %v2416
    %v2547 = vadd.f32 %v273, %v2455
    %v2548 = vadd.f32 %v275, %v2457
    %v2549 = vadd.f32 %v206, %v2485
    %v2550 = vadd.f32 %v208, %v2486
    %v2551 = vadd.f32 %v279, %v2487
    %v2552 = vadd.f32 %v281, %v2488
    %v2553 = vadd.f32 %v210, %v2489
    %v2554 = vadd.f32 %v212, %v2490
    %v2555 = vadd.f32 %v283, %v2491
    %v2556 = vadd.f32 %v285, %v2492
    %v2557 = vmul.f32 %v2525, 0.5
    %v2558 = vmul.f32 %v2529, 0.5
    %v2559 = vmul.f32 %v2533, 0.5
    %v2560 = vmul.f32 %v2537, 0.5
    %v2561 = vmul.f32 %v2541, 0.5
    %v2562 = vmul.f32 %v2545, 0.5
    %v2563 = vmul.f32 %v2549, 0.5
    %v2564 = vmul.f32 %v2553, 0.5
    %v2565 = vtanh.pop %v2557
    %v2566 = vtanh.pop %v2558
    %v2567 = vtanh.pop %v2559
    %v2568 = vtanh.pop %v2560
    %v2569 = vtanh.pop %v2561
    %v2570 = vtanh.pop %v2562
    %v2571 = vtanh.pop %v2563
    %v2572 = vtanh.pop %v2564
    %v2573 = vmul.f32 %v2565, 0.5
    %v2574 = vmul.f32 %v2566, 0.5
    %v2575 = vmul.f32 %v2567, 0.5
    %v2576 = vmul.f32 %v2568, 0.5
    %v2577 = vmul.f32 %v2569, 0.5
    %v2578 = vmul.f32 %v2570, 0.5
    %v2579 = vmul.f32 %v2571, 0.5
    %v2580 = vmul.f32 %v2572, 0.5
    %v2581 = vadd.f32 %v2573, 0.5
    %v2582 = vadd.f32 %v2574, 0.5
    %v2583 = vadd.f32 %v2575, 0.5
    %v2584 = vadd.f32 %v2576, 0.5
    %v2585 = vadd.f32 %v2577, 0.5
    %v2586 = vadd.f32 %v2578, 0.5
    %v2587 = vadd.f32 %v2579, 0.5
    %v2588 = vadd.f32 %v2580, 0.5
    %v2589 = vmul.f32 %v2526, 0.5
    %v2590 = vmul.f32 %v2530, 0.5
    %v2591 = vmul.f32 %v2534, 0.5
    %v2592 = vmul.f32 %v2538, 0.5
    %v2593 = vmul.f32 %v2542, 0.5
    %v2594 = vmul.f32 %v2546, 0.5
    %v2595 = vmul.f32 %v2550, 0.5
    %v2596 = vmul.f32 %v2554, 0.5
    %v2597 = vtanh.pop %v2589
    %v2598 = vtanh.pop %v2590
    %v2599 = vtanh.pop %v2591
    %v2600 = vtanh.pop %v2592
    %v2601 = vtanh.pop %v2593
    %v2602 = vtanh.pop %v2594
    %v2603 = vtanh.pop %v2595
    %v2604 = vtanh.pop %v2596
    %v2605 = vmul.f32 %v2597, 0.5
    %v2606 = vmul.f32 %v2598, 0.5
    %v2607 = vmul.f32 %v2599, 0.5
    %v2608 = vmul.f32 %v2600, 0.5
    %v2609 = vmul.f32 %v2601, 0.5
    %v2610 = vmul.f32 %v2602, 0.5
    %v2611 = vmul.f32 %v2603, 0.5
    %v2612 = vmul.f32 %v2604, 0.5
    %v2613 = vadd.f32 %v2605, 0.5
    %v2614 = vadd.f32 %v2606, 0.5
    %v2615 = vadd.f32 %v2607, 0.5
    %v2616 = vadd.f32 %v2608, 0.5
    %v2617 = vadd.f32 %v2609, 0.5
    %v2618 = vadd.f32 %v2610, 0.5
    %v2619 = vadd.f32 %v2611, 0.5
    %v2620 = vadd.f32 %v2612, 0.5
    %v2621 = vtanh.pop %v2527
    %v2622 = vtanh.pop %v2531
    %v2623 = vtanh.pop %v2535
    %v2624 = vtanh.pop %v2539
    %v2625 = vtanh.pop %v2543
    %v2626 = vtanh.pop %v2547
    %v2627 = vtanh.pop %v2551
    %v2628 = vtanh.pop %v2555
    %v2629 = vmul.f32 %v2528, 0.5
    %v2630 = vmul.f32 %v2532, 0.5
    %v2631 = vmul.f32 %v2536, 0.5
    %v2632 = vmul.f32 %v2540, 0.5
    %v2633 = vmul.f32 %v2544, 0.5
    %v2634 = vmul.f32 %v2548, 0.5
    %v2635 = vmul.f32 %v2552, 0.5
    %v2636 = vmul.f32 %v2556, 0.5
    %v2637 = vtanh.pop %v2629
    %v2638 = vtanh.pop %v2630
    %v2639 = vtanh.pop %v2631
    %v2640 = vtanh.pop %v2632
    %v2641 = vtanh.pop %v2633
    %v2642 = vtanh.pop %v2634
    %v2643 = vtanh.pop %v2635
    %v2644 = vtanh.pop %v2636
    %v2645 = vmul.f32 %v2637, 0.5
    %v2646 = vmul.f32 %v2638, 0.5
    %v2647 = vmul.f32 %v2639, 0.5
    %v2648 = vmul.f32 %v2640, 0.5
    %v2649 = vmul.f32 %v2641, 0.5
    %v2650 = vmul.f32 %v2642, 0.5
    %v2651 = vmul.f32 %v2643, 0.5
    %v2652 = vmul.f32 %v2644, 0.5
    %v2653 = vadd.f32 %v2645, 0.5
    %v2654 = vadd.f32 %v2646, 0.5
    %v2655 = vadd.f32 %v2647, 0.5
    %v2656 = vadd.f32 %v2648, 0.5
    %v2657 = vadd.f32 %v2649, 0.5
    %v2658 = vadd.f32 %v2650, 0.5
    %v2659 = vadd.f32 %v2651, 0.5
    %v2660 = vadd.f32 %v2652, 0.5
    %v2669 = vrot.slane %v2315, 7
    %v2670 = vrot.slane %v2316, 7
    %v2671 = vrot.slane %v2317, 7
    %v2672 = vrot.slane %v2318, 7
    %v2673 = vrot.slane %v2319, 7
    %v2674 = vrot.slane %v2320, 7
    %v2675 = vrot.slane %v2321, 7
    %v2676 = vrot.slane %v2322, 7
    %v2685 = vmul.f32 %v2613, %v2669
    %v2686 = vmul.f32 %v2614, %v2670
    %v2687 = vmul.f32 %v2615, %v2671
    %v2688 = vmul.f32 %v2616, %v2672
    %v2689 = vmul.f32 %v2617, %v2673
    %v2690 = vmul.f32 %v2618, %v2674
    %v2691 = vmul.f32 %v2619, %v2675
    %v2692 = vmul.f32 %v2620, %v2676
    %v2693 = vmul.f32 %v2581, %v2621
    %v2694 = vmul.f32 %v2582, %v2622
    %v2695 = vmul.f32 %v2583, %v2623
    %v2696 = vmul.f32 %v2584, %v2624
    %v2697 = vmul.f32 %v2585, %v2625
    %v2698 = vmul.f32 %v2586, %v2626
    %v2699 = vmul.f32 %v2587, %v2627
    %v2700 = vmul.f32 %v2588, %v2628
    %v2701 = vadd.f32 %v2685, %v2693
    %v2702 = vadd.f32 %v2686, %v2694
    %v2703 = vadd.f32 %v2687, %v2695
    %v2704 = vadd.f32 %v2688, %v2696
    %v2705 = vadd.f32 %v2689, %v2697
    %v2706 = vadd.f32 %v2690, %v2698
    %v2707 = vadd.f32 %v2691, %v2699
    %v2708 = vadd.f32 %v2692, %v2700
    %v2709 = vtanh.pop %v2701
    %v2710 = vtanh.pop %v2702
    %v2711 = vtanh.pop %v2703
    %v2712 = vtanh.pop %v2704
    %v2713 = vtanh.pop %v2705
    %v2714 = vtanh.pop %v2706
    %v2715 = vtanh.pop %v2707
    %v2716 = vtanh.pop %v2708
    %v2717 = vmul.f32 %v2653, %v2709
    %v2718 = vmul.f32 %v2654, %v2710
    %v2719 = vmul.f32 %v2655, %v2711
    %v2720 = vmul.f32 %v2656, %v2712
    %v2721 = vmul.f32 %v2657, %v2713
    %v2722 = vmul.f32 %v2658, %v2714
    %v2723 = vmul.f32 %v2659, %v2715
    %v2724 = vmul.f32 %v2660, %v2716
    %v2725 = vpack.c.bf16 %v2717, %v2717
    %v2726 = vpack.c.bf16 %v2718, %v2718
    %v2727 = vpack.c.bf16 %v2719, %v2719
    %v2728 = vpack.c.bf16 %v2720, %v2720
    %v2729 = vpack.c.bf16 %v2721, %v2721
    %v2730 = vpack.c.bf16 %v2722, %v2722
    %v2731 = vpack.c.bf16 %v2723, %v2723
    %v2732 = vpack.c.bf16 %v2724, %v2724
    %v2741 = vunpack.c.l.b16 %v2725
    %v2742 = vunpack.c.l.b16 %v2726
    %v2743 = vunpack.c.l.b16 %v2727
    %v2744 = vunpack.c.l.b16 %v2728
    %v2745 = vunpack.c.l.b16 %v2729
    %v2746 = vunpack.c.l.b16 %v2730
    %v2747 = vunpack.c.l.b16 %v2731
    %v2748 = vunpack.c.l.b16 %v2732
    %v2749 = vrot.slane %v2741, 5
    %v2750 = vrot.slane %v2742, 4
    %v2751 = vsel %vm813, %v2750, %v2749
    %v2752 = vrot.slane %v2743, 3
    %v2753 = vsel %vm816, %v2752, %v2751
    %v2754 = vrot.slane %v2744, 2
    %v2755 = vsel %vm819, %v2754, %v2753
    %v2756 = vrot.slane %v2745, 1
    %v2757 = vsel %vm822, %v2756, %v2755
    %v2758 = vsel %vm825, %v2746, %v2757
    %v2759 = vrot.slane %v2747, 7
    %v2760 = vsel %vm828, %v2759, %v2758
    %v2761 = vrot.slane %v2748, 6
    %v2762 = vsel %vm831, %v2761, %v2760
    %v2763 = vpack.c.b16 %v2762, %v2762
    %2765 = vmatprep.subr.bf16.mxu0 %v387
    %2766 = vmatpush1.bf16.msra.mxu0 %v386
    %2767 = vmatprep.subr.bf16.mxu0 %v391
    %2768 = vmatpush1.bf16.msra.mxu0 %v390
    %2769 = vmatprep.subr.bf16.mxu0 %v395
    %2770 = vmatpush1.bf16.msra.mxu0 %v394
    %2771 = vmatprep.subr.bf16.mxu0 %v399
    %2772 = vmatpush1.bf16.msra.mxu0 %v398
    %2773 = vmatprep.subr.bf16.mxu0 %v403
    %2774 = vmatpush1.bf16.msra.mxu0 %v402
    %2775 = vmatprep.subr.bf16.mxu0 %v407
    %2776 = vmatpush1.bf16.msra.mxu0 %v406
    %2777 = vmatprep.subr.bf16.mxu0 %v411
    %2778 = vmatpush1.bf16.msra.mxu0 %v410
    %2779 = vmatprep.subr.bf16.mxu0 %v415
    %2780 = vmatpush1.bf16.msra.mxu0 %v414
    %2781 = vmatprep.subr.bf16.mxu0 0
    %2782 = vmatpush1.bf16.msra.mxu0 0
    %2783 = vmatprep.subr.bf16.mxu0 0
    %2784 = vmatpush1.bf16.msra.mxu0 0
    %2785 = vmatprep.subr.bf16.mxu0 0
    %2786 = vmatpush1.bf16.msra.mxu0 0
    %2787 = vmatprep.subr.bf16.mxu0 0
    %2788 = vmatpush1.bf16.msra.mxu0 0
    %2789 = vmatprep.subr.bf16.mxu0 0
    %2790 = vmatpush1.bf16.msra.mxu0 0
    %2791 = vmatprep.subr.bf16.mxu0 0
    %2792 = vmatpush1.bf16.msra.mxu0 0
    %2793 = vmatprep.subr.bf16.mxu0 0
    %2794 = vmatpush1.bf16.msra.mxu0 0
    %2795 = vmatprep.subr.bf16.mxu0 0
    %2796 = vmatpush1.bf16.msra.mxu0 0
    %2797 = vmatprep.mubr.bf16.mxu0 0
    %2798 = vmatmul.mubr.bf16.gmra.mrb[0].mxu0 %v2763
    %v2799 = vpop.f32.mrb[0].mxu0
    %v2800 = vadd.f32 0.0, %v2799
    %v2801 = vpop.f32.mrb[0].mxu0
    %v2802 = vadd.f32 0.0, %v2801
    %v2803 = vpop.f32.mrb[0].mxu0
    %v2804 = vpop.f32.mrb[0].mxu0
    %2805 = vdwg.mxu0
    %2806 = vmatprep.subr.bf16.mxu0 %v389
    %2807 = vmatpush1.bf16.msra.mxu0 %v388
    %2808 = vmatprep.subr.bf16.mxu0 %v393
    %2809 = vmatpush1.bf16.msra.mxu0 %v392
    %2810 = vmatprep.subr.bf16.mxu0 %v397
    %2811 = vmatpush1.bf16.msra.mxu0 %v396
    %2812 = vmatprep.subr.bf16.mxu0 %v401
    %2813 = vmatpush1.bf16.msra.mxu0 %v400
    %2814 = vmatprep.subr.bf16.mxu0 %v405
    %2815 = vmatpush1.bf16.msra.mxu0 %v404
    %2816 = vmatprep.subr.bf16.mxu0 %v409
    %2817 = vmatpush1.bf16.msra.mxu0 %v408
    %2818 = vmatprep.subr.bf16.mxu0 %v413
    %2819 = vmatpush1.bf16.msra.mxu0 %v412
    %2820 = vmatprep.subr.bf16.mxu0 %v417
    %2821 = vmatpush1.bf16.msra.mxu0 %v416
    %2822 = vmatprep.subr.bf16.mxu0 0
    %2823 = vmatpush1.bf16.msra.mxu0 0
    %2824 = vmatprep.subr.bf16.mxu0 0
    %2825 = vmatpush1.bf16.msra.mxu0 0
    %2826 = vmatprep.subr.bf16.mxu0 0
    %2827 = vmatpush1.bf16.msra.mxu0 0
    %2828 = vmatprep.subr.bf16.mxu0 0
    %2829 = vmatpush1.bf16.msra.mxu0 0
    %2830 = vmatprep.subr.bf16.mxu0 0
    %2831 = vmatpush1.bf16.msra.mxu0 0
    %2832 = vmatprep.subr.bf16.mxu0 0
    %2833 = vmatpush1.bf16.msra.mxu0 0
    %2834 = vmatprep.subr.bf16.mxu0 0
    %2835 = vmatpush1.bf16.msra.mxu0 0
    %2836 = vmatprep.subr.bf16.mxu0 0
    %2837 = vmatpush1.bf16.msra.mxu0 0
    %2838 = vmatprep.mubr.bf16.mxu0 0
    %2839 = vmatmul.mubr.bf16.gmra.mrb[0].mxu0 %v2763
    %v2840 = vpop.f32.mrb[0].mxu0
    %v2841 = vadd.f32 0.0, %v2840
    %v2842 = vpop.f32.mrb[0].mxu0
    %v2843 = vadd.f32 0.0, %v2842
    %v2844 = vpop.f32.mrb[0].mxu0
    %v2845 = vpop.f32.mrb[0].mxu0
    %2846 = vdwg.mxu0
    %v2851 = vrot.slane %v2800, 2
    %v2852 = vrot.slane %v2802, 2
    %v2853 = vrot.slane %v2841, 2
    %v2854 = vrot.slane %v2843, 2
    %v2855 = vrot.slane %v2800, 3
    %v2856 = vrot.slane %v2802, 3
    %v2857 = vrot.slane %v2841, 3
    %v2858 = vrot.slane %v2843, 3
    %v2859 = vrot.slane %v2800, 4
    %v2860 = vrot.slane %v2802, 4
    %v2861 = vrot.slane %v2841, 4
    %v2862 = vrot.slane %v2843, 4
    %v2863 = vrot.slane %v2800, 5
    %v2864 = vrot.slane %v2802, 5
    %v2865 = vrot.slane %v2841, 5
    %v2866 = vrot.slane %v2843, 5
    %v2867 = vrot.slane %v2800, 6
    %v2868 = vrot.slane %v2802, 6
    %v2869 = vrot.slane %v2841, 6
    %v2870 = vrot.slane %v2843, 6
    %v2871 = vrot.slane %v2800, 7
    %v2872 = vrot.slane %v2802, 7
    %v2873 = vrot.slane %v2841, 7
    %v2874 = vrot.slane %v2843, 7
    %v2875 = vrot.slane %v2800, 1
    %v2876 = vrot.slane %v2802, 1
    %v2877 = vrot.slane %v2841, 1
    %v2878 = vrot.slane %v2843, 1
    %v2911 = vadd.f32 %v176, %v2851
    %v2912 = vadd.f32 %v178, %v2852
    %v2913 = vadd.f32 %v249, %v2853
    %v2914 = vadd.f32 %v251, %v2854
    %v2915 = vadd.f32 %v180, %v2855
    %v2916 = vadd.f32 %v182, %v2856
    %v2917 = vadd.f32 %v253, %v2857
    %v2918 = vadd.f32 %v255, %v2858
    %v2919 = vadd.f32 %v186, %v2859
    %v2920 = vadd.f32 %v188, %v2860
    %v2921 = vadd.f32 %v259, %v2861
    %v2922 = vadd.f32 %v261, %v2862
    %v2923 = vadd.f32 %v190, %v2863
    %v2924 = vadd.f32 %v192, %v2864
    %v2925 = vadd.f32 %v263, %v2865
    %v2926 = vadd.f32 %v265, %v2866
    %v2927 = vadd.f32 %v196, %v2867
    %v2928 = vadd.f32 %v198, %v2868
    %v2929 = vadd.f32 %v269, %v2869
    %v2930 = vadd.f32 %v271, %v2870
    %v2931 = vadd.f32 %v200, %v2871
    %v2932 = vadd.f32 %v202, %v2872
    %v2933 = vadd.f32 %v273, %v2873
    %v2934 = vadd.f32 %v275, %v2874
    %v2935 = vadd.f32 %v206, %v2800
    %v2936 = vadd.f32 %v208, %v2802
    %v2937 = vadd.f32 %v279, %v2841
    %v2938 = vadd.f32 %v281, %v2843
    %v2939 = vadd.f32 %v210, %v2875
    %v2940 = vadd.f32 %v212, %v2876
    %v2941 = vadd.f32 %v283, %v2877
    %v2942 = vadd.f32 %v285, %v2878
    %v2943 = vmul.f32 %v2911, 0.5
    %v2944 = vmul.f32 %v2915, 0.5
    %v2945 = vmul.f32 %v2919, 0.5
    %v2946 = vmul.f32 %v2923, 0.5
    %v2947 = vmul.f32 %v2927, 0.5
    %v2948 = vmul.f32 %v2931, 0.5
    %v2949 = vmul.f32 %v2935, 0.5
    %v2950 = vmul.f32 %v2939, 0.5
    %v2951 = vtanh.pop %v2943
    %v2952 = vtanh.pop %v2944
    %v2953 = vtanh.pop %v2945
    %v2954 = vtanh.pop %v2946
    %v2955 = vtanh.pop %v2947
    %v2956 = vtanh.pop %v2948
    %v2957 = vtanh.pop %v2949
    %v2958 = vtanh.pop %v2950
    %v2959 = vmul.f32 %v2951, 0.5
    %v2960 = vmul.f32 %v2952, 0.5
    %v2961 = vmul.f32 %v2953, 0.5
    %v2962 = vmul.f32 %v2954, 0.5
    %v2963 = vmul.f32 %v2955, 0.5
    %v2964 = vmul.f32 %v2956, 0.5
    %v2965 = vmul.f32 %v2957, 0.5
    %v2966 = vmul.f32 %v2958, 0.5
    %v2967 = vadd.f32 %v2959, 0.5
    %v2968 = vadd.f32 %v2960, 0.5
    %v2969 = vadd.f32 %v2961, 0.5
    %v2970 = vadd.f32 %v2962, 0.5
    %v2971 = vadd.f32 %v2963, 0.5
    %v2972 = vadd.f32 %v2964, 0.5
    %v2973 = vadd.f32 %v2965, 0.5
    %v2974 = vadd.f32 %v2966, 0.5
    %v2975 = vmul.f32 %v2912, 0.5
    %v2976 = vmul.f32 %v2916, 0.5
    %v2977 = vmul.f32 %v2920, 0.5
    %v2978 = vmul.f32 %v2924, 0.5
    %v2979 = vmul.f32 %v2928, 0.5
    %v2980 = vmul.f32 %v2932, 0.5
    %v2981 = vmul.f32 %v2936, 0.5
    %v2982 = vmul.f32 %v2940, 0.5
    %v2983 = vtanh.pop %v2975
    %v2984 = vtanh.pop %v2976
    %v2985 = vtanh.pop %v2977
    %v2986 = vtanh.pop %v2978
    %v2987 = vtanh.pop %v2979
    %v2988 = vtanh.pop %v2980
    %v2989 = vtanh.pop %v2981
    %v2990 = vtanh.pop %v2982
    %v2991 = vmul.f32 %v2983, 0.5
    %v2992 = vmul.f32 %v2984, 0.5
    %v2993 = vmul.f32 %v2985, 0.5
    %v2994 = vmul.f32 %v2986, 0.5
    %v2995 = vmul.f32 %v2987, 0.5
    %v2996 = vmul.f32 %v2988, 0.5
    %v2997 = vmul.f32 %v2989, 0.5
    %v2998 = vmul.f32 %v2990, 0.5
    %v2999 = vadd.f32 %v2991, 0.5
    %v3000 = vadd.f32 %v2992, 0.5
    %v3001 = vadd.f32 %v2993, 0.5
    %v3002 = vadd.f32 %v2994, 0.5
    %v3003 = vadd.f32 %v2995, 0.5
    %v3004 = vadd.f32 %v2996, 0.5
    %v3005 = vadd.f32 %v2997, 0.5
    %v3006 = vadd.f32 %v2998, 0.5
    %v3007 = vtanh.pop %v2913
    %v3008 = vtanh.pop %v2917
    %v3009 = vtanh.pop %v2921
    %v3010 = vtanh.pop %v2925
    %v3011 = vtanh.pop %v2929
    %v3012 = vtanh.pop %v2933
    %v3013 = vtanh.pop %v2937
    %v3014 = vtanh.pop %v2941
    %v3015 = vmul.f32 %v2914, 0.5
    %v3016 = vmul.f32 %v2918, 0.5
    %v3017 = vmul.f32 %v2922, 0.5
    %v3018 = vmul.f32 %v2926, 0.5
    %v3019 = vmul.f32 %v2930, 0.5
    %v3020 = vmul.f32 %v2934, 0.5
    %v3021 = vmul.f32 %v2938, 0.5
    %v3022 = vmul.f32 %v2942, 0.5
    %v3023 = vtanh.pop %v3015
    %v3024 = vtanh.pop %v3016
    %v3025 = vtanh.pop %v3017
    %v3026 = vtanh.pop %v3018
    %v3027 = vtanh.pop %v3019
    %v3028 = vtanh.pop %v3020
    %v3029 = vtanh.pop %v3021
    %v3030 = vtanh.pop %v3022
    %v3031 = vmul.f32 %v3023, 0.5
    %v3032 = vmul.f32 %v3024, 0.5
    %v3033 = vmul.f32 %v3025, 0.5
    %v3034 = vmul.f32 %v3026, 0.5
    %v3035 = vmul.f32 %v3027, 0.5
    %v3036 = vmul.f32 %v3028, 0.5
    %v3037 = vmul.f32 %v3029, 0.5
    %v3038 = vmul.f32 %v3030, 0.5
    %v3039 = vadd.f32 %v3031, 0.5
    %v3040 = vadd.f32 %v3032, 0.5
    %v3041 = vadd.f32 %v3033, 0.5
    %v3042 = vadd.f32 %v3034, 0.5
    %v3043 = vadd.f32 %v3035, 0.5
    %v3044 = vadd.f32 %v3036, 0.5
    %v3045 = vadd.f32 %v3037, 0.5
    %v3046 = vadd.f32 %v3038, 0.5
    %v3055 = vrot.slane %v2701, 7
    %v3056 = vrot.slane %v2702, 7
    %v3057 = vrot.slane %v2703, 7
    %v3058 = vrot.slane %v2704, 7
    %v3059 = vrot.slane %v2705, 7
    %v3060 = vrot.slane %v2706, 7
    %v3061 = vrot.slane %v2707, 7
    %v3062 = vrot.slane %v2708, 7
    %v3071 = vmul.f32 %v2999, %v3055
    %v3072 = vmul.f32 %v3000, %v3056
    %v3073 = vmul.f32 %v3001, %v3057
    %v3074 = vmul.f32 %v3002, %v3058
    %v3075 = vmul.f32 %v3003, %v3059
    %v3076 = vmul.f32 %v3004, %v3060
    %v3077 = vmul.f32 %v3005, %v3061
    %v3078 = vmul.f32 %v3006, %v3062
    %v3079 = vmul.f32 %v2967, %v3007
    %v3080 = vmul.f32 %v2968, %v3008
    %v3081 = vmul.f32 %v2969, %v3009
    %v3082 = vmul.f32 %v2970, %v3010
    %v3083 = vmul.f32 %v2971, %v3011
    %v3084 = vmul.f32 %v2972, %v3012
    %v3085 = vmul.f32 %v2973, %v3013
    %v3086 = vmul.f32 %v2974, %v3014
    %v3087 = vadd.f32 %v3071, %v3079
    %v3088 = vadd.f32 %v3072, %v3080
    %v3089 = vadd.f32 %v3073, %v3081
    %v3090 = vadd.f32 %v3074, %v3082
    %v3091 = vadd.f32 %v3075, %v3083
    %v3092 = vadd.f32 %v3076, %v3084
    %v3093 = vadd.f32 %v3077, %v3085
    %v3094 = vadd.f32 %v3078, %v3086
    %v3095 = vtanh.pop %v3087
    %v3096 = vtanh.pop %v3088
    %v3097 = vtanh.pop %v3089
    %v3098 = vtanh.pop %v3090
    %v3099 = vtanh.pop %v3091
    %v3100 = vtanh.pop %v3092
    %v3101 = vtanh.pop %v3093
    %v3102 = vtanh.pop %v3094
    %v3103 = vmul.f32 %v3039, %v3095
    %v3104 = vmul.f32 %v3040, %v3096
    %v3105 = vmul.f32 %v3041, %v3097
    %v3106 = vmul.f32 %v3042, %v3098
    %v3107 = vmul.f32 %v3043, %v3099
    %v3108 = vmul.f32 %v3044, %v3100
    %v3109 = vmul.f32 %v3045, %v3101
    %v3110 = vmul.f32 %v3046, %v3102
    %v3111 = vpack.c.bf16 %v3103, %v3103
    %v3112 = vpack.c.bf16 %v3104, %v3104
    %v3113 = vpack.c.bf16 %v3105, %v3105
    %v3114 = vpack.c.bf16 %v3106, %v3106
    %v3115 = vpack.c.bf16 %v3107, %v3107
    %v3116 = vpack.c.bf16 %v3108, %v3108
    %v3117 = vpack.c.bf16 %v3109, %v3109
    %v3118 = vpack.c.bf16 %v3110, %v3110
    %v3127 = vunpack.c.l.b16 %v3111
    %v3128 = vunpack.c.l.b16 %v3112
    %v3129 = vunpack.c.l.b16 %v3113
    %v3130 = vunpack.c.l.b16 %v3114
    %v3131 = vunpack.c.l.b16 %v3115
    %v3132 = vunpack.c.l.b16 %v3116
    %v3133 = vunpack.c.l.b16 %v3117
    %v3134 = vunpack.c.l.b16 %v3118
    %v3135 = vrot.slane %v3127, 6
    %v3136 = vrot.slane %v3128, 5
    %v3137 = vsel %vm813, %v3136, %v3135
    %v3138 = vrot.slane %v3129, 4
    %v3139 = vsel %vm816, %v3138, %v3137
    %v3140 = vrot.slane %v3130, 3
    %v3141 = vsel %vm819, %v3140, %v3139
    %v3142 = vrot.slane %v3131, 2
    %v3143 = vsel %vm822, %v3142, %v3141
    %v3144 = vrot.slane %v3132, 1
    %v3145 = vsel %vm825, %v3144, %v3143
    %v3146 = vsel %vm828, %v3133, %v3145
    %v3147 = vrot.slane %v3134, 7
    %v3148 = vsel %vm831, %v3147, %v3146
    %v3149 = vpack.c.b16 %v3148, %v3148
    %3151 = vmatprep.subr.bf16.mxu0 %v387
    %3152 = vmatpush1.bf16.msra.mxu0 %v386
    %3153 = vmatprep.subr.bf16.mxu0 %v391
    %3154 = vmatpush1.bf16.msra.mxu0 %v390
    %3155 = vmatprep.subr.bf16.mxu0 %v395
    %3156 = vmatpush1.bf16.msra.mxu0 %v394
    %3157 = vmatprep.subr.bf16.mxu0 %v399
    %3158 = vmatpush1.bf16.msra.mxu0 %v398
    %3159 = vmatprep.subr.bf16.mxu0 %v403
    %3160 = vmatpush1.bf16.msra.mxu0 %v402
    %3161 = vmatprep.subr.bf16.mxu0 %v407
    %3162 = vmatpush1.bf16.msra.mxu0 %v406
    %3163 = vmatprep.subr.bf16.mxu0 %v411
    %3164 = vmatpush1.bf16.msra.mxu0 %v410
    %3165 = vmatprep.subr.bf16.mxu0 %v415
    %3166 = vmatpush1.bf16.msra.mxu0 %v414
    %3167 = vmatprep.subr.bf16.mxu0 0
    %3168 = vmatpush1.bf16.msra.mxu0 0
    %3169 = vmatprep.subr.bf16.mxu0 0
    %3170 = vmatpush1.bf16.msra.mxu0 0
    %3171 = vmatprep.subr.bf16.mxu0 0
    %3172 = vmatpush1.bf16.msra.mxu0 0
    %3173 = vmatprep.subr.bf16.mxu0 0
    %3174 = vmatpush1.bf16.msra.mxu0 0
    %3175 = vmatprep.subr.bf16.mxu0 0
    %3176 = vmatpush1.bf16.msra.mxu0 0
    %3177 = vmatprep.subr.bf16.mxu0 0
    %3178 = vmatpush1.bf16.msra.mxu0 0
    %3179 = vmatprep.subr.bf16.mxu0 0
    %3180 = vmatpush1.bf16.msra.mxu0 0
    %3181 = vmatprep.subr.bf16.mxu0 0
    %3182 = vmatpush1.bf16.msra.mxu0 0
    %3183 = vmatprep.mubr.bf16.mxu0 0
    %3184 = vmatmul.mubr.bf16.gmra.mrb[0].mxu0 %v3149
    %v3185 = vpop.f32.mrb[0].mxu0
    %v3186 = vadd.f32 0.0, %v3185
    %v3187 = vpop.f32.mrb[0].mxu0
    %v3188 = vadd.f32 0.0, %v3187
    %v3189 = vpop.f32.mrb[0].mxu0
    %v3190 = vpop.f32.mrb[0].mxu0
    %3191 = vdwg.mxu0
    %3192 = vmatprep.subr.bf16.mxu0 %v389
    %3193 = vmatpush1.bf16.msra.mxu0 %v388
    %3194 = vmatprep.subr.bf16.mxu0 %v393
    %3195 = vmatpush1.bf16.msra.mxu0 %v392
    %3196 = vmatprep.subr.bf16.mxu0 %v397
    %3197 = vmatpush1.bf16.msra.mxu0 %v396
    %3198 = vmatprep.subr.bf16.mxu0 %v401
    %3199 = vmatpush1.bf16.msra.mxu0 %v400
    %3200 = vmatprep.subr.bf16.mxu0 %v405
    %3201 = vmatpush1.bf16.msra.mxu0 %v404
    %3202 = vmatprep.subr.bf16.mxu0 %v409
    %3203 = vmatpush1.bf16.msra.mxu0 %v408
    %3204 = vmatprep.subr.bf16.mxu0 %v413
    %3205 = vmatpush1.bf16.msra.mxu0 %v412
    %3206 = vmatprep.subr.bf16.mxu0 %v417
    %3207 = vmatpush1.bf16.msra.mxu0 %v416
    %3208 = vmatprep.subr.bf16.mxu0 0
    %3209 = vmatpush1.bf16.msra.mxu0 0
    %3210 = vmatprep.subr.bf16.mxu0 0
    %3211 = vmatpush1.bf16.msra.mxu0 0
    %3212 = vmatprep.subr.bf16.mxu0 0
    %3213 = vmatpush1.bf16.msra.mxu0 0
    %3214 = vmatprep.subr.bf16.mxu0 0
    %3215 = vmatpush1.bf16.msra.mxu0 0
    %3216 = vmatprep.subr.bf16.mxu0 0
    %3217 = vmatpush1.bf16.msra.mxu0 0
    %3218 = vmatprep.subr.bf16.mxu0 0
    %3219 = vmatpush1.bf16.msra.mxu0 0
    %3220 = vmatprep.subr.bf16.mxu0 0
    %3221 = vmatpush1.bf16.msra.mxu0 0
    %3222 = vmatprep.subr.bf16.mxu0 0
    %3223 = vmatpush1.bf16.msra.mxu0 0
    %3224 = vmatprep.mubr.bf16.mxu0 0
    %3225 = vmatmul.mubr.bf16.gmra.mrb[0].mxu0 %v3149
    %v3226 = vpop.f32.mrb[0].mxu0
    %v3227 = vadd.f32 0.0, %v3226
    %v3228 = vpop.f32.mrb[0].mxu0
    %v3229 = vadd.f32 0.0, %v3228
    %v3230 = vpop.f32.mrb[0].mxu0
    %v3231 = vpop.f32.mrb[0].mxu0
    %3232 = vdwg.mxu0
    %v3237 = vrot.slane %v3186, 1
    %v3238 = vrot.slane %v3188, 1
    %v3239 = vrot.slane %v3227, 1
    %v3240 = vrot.slane %v3229, 1
    %v3241 = vrot.slane %v3186, 2
    %v3242 = vrot.slane %v3188, 2
    %v3243 = vrot.slane %v3227, 2
    %v3244 = vrot.slane %v3229, 2
    %v3245 = vrot.slane %v3186, 3
    %v3246 = vrot.slane %v3188, 3
    %v3247 = vrot.slane %v3227, 3
    %v3248 = vrot.slane %v3229, 3
    %v3249 = vrot.slane %v3186, 4
    %v3250 = vrot.slane %v3188, 4
    %v3251 = vrot.slane %v3227, 4
    %v3252 = vrot.slane %v3229, 4
    %v3253 = vrot.slane %v3186, 5
    %v3254 = vrot.slane %v3188, 5
    %v3255 = vrot.slane %v3227, 5
    %v3256 = vrot.slane %v3229, 5
    %v3257 = vrot.slane %v3186, 6
    %v3258 = vrot.slane %v3188, 6
    %v3259 = vrot.slane %v3227, 6
    %v3260 = vrot.slane %v3229, 6
    %v3261 = vrot.slane %v3186, 7
    %v3262 = vrot.slane %v3188, 7
    %v3263 = vrot.slane %v3227, 7
    %v3264 = vrot.slane %v3229, 7
    %v3297 = vadd.f32 %v176, %v3237
    %v3298 = vadd.f32 %v178, %v3238
    %v3299 = vadd.f32 %v249, %v3239
    %v3300 = vadd.f32 %v251, %v3240
    %v3301 = vadd.f32 %v180, %v3241
    %v3302 = vadd.f32 %v182, %v3242
    %v3303 = vadd.f32 %v253, %v3243
    %v3304 = vadd.f32 %v255, %v3244
    %v3305 = vadd.f32 %v186, %v3245
    %v3306 = vadd.f32 %v188, %v3246
    %v3307 = vadd.f32 %v259, %v3247
    %v3308 = vadd.f32 %v261, %v3248
    %v3309 = vadd.f32 %v190, %v3249
    %v3310 = vadd.f32 %v192, %v3250
    %v3311 = vadd.f32 %v263, %v3251
    %v3312 = vadd.f32 %v265, %v3252
    %v3313 = vadd.f32 %v196, %v3253
    %v3314 = vadd.f32 %v198, %v3254
    %v3315 = vadd.f32 %v269, %v3255
    %v3316 = vadd.f32 %v271, %v3256
    %v3317 = vadd.f32 %v200, %v3257
    %v3318 = vadd.f32 %v202, %v3258
    %v3319 = vadd.f32 %v273, %v3259
    %v3320 = vadd.f32 %v275, %v3260
    %v3321 = vadd.f32 %v206, %v3261
    %v3322 = vadd.f32 %v208, %v3262
    %v3323 = vadd.f32 %v279, %v3263
    %v3324 = vadd.f32 %v281, %v3264
    %v3325 = vadd.f32 %v210, %v3186
    %v3326 = vadd.f32 %v212, %v3188
    %v3327 = vadd.f32 %v283, %v3227
    %v3328 = vadd.f32 %v285, %v3229
    %v3329 = vmul.f32 %v3297, 0.5
    %v3330 = vmul.f32 %v3301, 0.5
    %v3331 = vmul.f32 %v3305, 0.5
    %v3332 = vmul.f32 %v3309, 0.5
    %v3333 = vmul.f32 %v3313, 0.5
    %v3334 = vmul.f32 %v3317, 0.5
    %v3335 = vmul.f32 %v3321, 0.5
    %v3336 = vmul.f32 %v3325, 0.5
    %v3337 = vtanh.pop %v3329
    %v3338 = vtanh.pop %v3330
    %v3339 = vtanh.pop %v3331
    %v3340 = vtanh.pop %v3332
    %v3341 = vtanh.pop %v3333
    %v3342 = vtanh.pop %v3334
    %v3343 = vtanh.pop %v3335
    %v3344 = vtanh.pop %v3336
    %v3345 = vmul.f32 %v3337, 0.5
    %v3346 = vmul.f32 %v3338, 0.5
    %v3347 = vmul.f32 %v3339, 0.5
    %v3348 = vmul.f32 %v3340, 0.5
    %v3349 = vmul.f32 %v3341, 0.5
    %v3350 = vmul.f32 %v3342, 0.5
    %v3351 = vmul.f32 %v3343, 0.5
    %v3352 = vmul.f32 %v3344, 0.5
    %v3353 = vadd.f32 %v3345, 0.5
    %v3354 = vadd.f32 %v3346, 0.5
    %v3355 = vadd.f32 %v3347, 0.5
    %v3356 = vadd.f32 %v3348, 0.5
    %v3357 = vadd.f32 %v3349, 0.5
    %v3358 = vadd.f32 %v3350, 0.5
    %v3359 = vadd.f32 %v3351, 0.5
    %v3360 = vadd.f32 %v3352, 0.5
    %v3361 = vmul.f32 %v3298, 0.5
    %v3362 = vmul.f32 %v3302, 0.5
    %v3363 = vmul.f32 %v3306, 0.5
    %v3364 = vmul.f32 %v3310, 0.5
    %v3365 = vmul.f32 %v3314, 0.5
    %v3366 = vmul.f32 %v3318, 0.5
    %v3367 = vmul.f32 %v3322, 0.5
    %v3368 = vmul.f32 %v3326, 0.5
    %v3369 = vtanh.pop %v3361
    %v3370 = vtanh.pop %v3362
    %v3371 = vtanh.pop %v3363
    %v3372 = vtanh.pop %v3364
    %v3373 = vtanh.pop %v3365
    %v3374 = vtanh.pop %v3366
    %v3375 = vtanh.pop %v3367
    %v3376 = vtanh.pop %v3368
    %v3377 = vmul.f32 %v3369, 0.5
    %v3378 = vmul.f32 %v3370, 0.5
    %v3379 = vmul.f32 %v3371, 0.5
    %v3380 = vmul.f32 %v3372, 0.5
    %v3381 = vmul.f32 %v3373, 0.5
    %v3382 = vmul.f32 %v3374, 0.5
    %v3383 = vmul.f32 %v3375, 0.5
    %v3384 = vmul.f32 %v3376, 0.5
    %v3385 = vadd.f32 %v3377, 0.5
    %v3386 = vadd.f32 %v3378, 0.5
    %v3387 = vadd.f32 %v3379, 0.5
    %v3388 = vadd.f32 %v3380, 0.5
    %v3389 = vadd.f32 %v3381, 0.5
    %v3390 = vadd.f32 %v3382, 0.5
    %v3391 = vadd.f32 %v3383, 0.5
    %v3392 = vadd.f32 %v3384, 0.5
    %v3393 = vtanh.pop %v3299
    %v3394 = vtanh.pop %v3303
    %v3395 = vtanh.pop %v3307
    %v3396 = vtanh.pop %v3311
    %v3397 = vtanh.pop %v3315
    %v3398 = vtanh.pop %v3319
    %v3399 = vtanh.pop %v3323
    %v3400 = vtanh.pop %v3327
    %v3401 = vmul.f32 %v3300, 0.5
    %v3402 = vmul.f32 %v3304, 0.5
    %v3403 = vmul.f32 %v3308, 0.5
    %v3404 = vmul.f32 %v3312, 0.5
    %v3405 = vmul.f32 %v3316, 0.5
    %v3406 = vmul.f32 %v3320, 0.5
    %v3407 = vmul.f32 %v3324, 0.5
    %v3408 = vmul.f32 %v3328, 0.5
    %v3409 = vtanh.pop %v3401
    %v3410 = vtanh.pop %v3402
    %v3411 = vtanh.pop %v3403
    %v3412 = vtanh.pop %v3404
    %v3413 = vtanh.pop %v3405
    %v3414 = vtanh.pop %v3406
    %v3415 = vtanh.pop %v3407
    %v3416 = vtanh.pop %v3408
    %v3417 = vmul.f32 %v3409, 0.5
    %v3418 = vmul.f32 %v3410, 0.5
    %v3419 = vmul.f32 %v3411, 0.5
    %v3420 = vmul.f32 %v3412, 0.5
    %v3421 = vmul.f32 %v3413, 0.5
    %v3422 = vmul.f32 %v3414, 0.5
    %v3423 = vmul.f32 %v3415, 0.5
    %v3424 = vmul.f32 %v3416, 0.5
    %v3425 = vadd.f32 %v3417, 0.5
    %v3426 = vadd.f32 %v3418, 0.5
    %v3427 = vadd.f32 %v3419, 0.5
    %v3428 = vadd.f32 %v3420, 0.5
    %v3429 = vadd.f32 %v3421, 0.5
    %v3430 = vadd.f32 %v3422, 0.5
    %v3431 = vadd.f32 %v3423, 0.5
    %v3432 = vadd.f32 %v3424, 0.5
    %v3441 = vrot.slane %v3087, 7
    %v3442 = vrot.slane %v3088, 7
    %v3443 = vrot.slane %v3089, 7
    %v3444 = vrot.slane %v3090, 7
    %v3445 = vrot.slane %v3091, 7
    %v3446 = vrot.slane %v3092, 7
    %v3447 = vrot.slane %v3093, 7
    %v3448 = vrot.slane %v3094, 7
    %v3457 = vmul.f32 %v3385, %v3441
    %v3458 = vmul.f32 %v3386, %v3442
    %v3459 = vmul.f32 %v3387, %v3443
    %v3460 = vmul.f32 %v3388, %v3444
    %v3461 = vmul.f32 %v3389, %v3445
    %v3462 = vmul.f32 %v3390, %v3446
    %v3463 = vmul.f32 %v3391, %v3447
    %v3464 = vmul.f32 %v3392, %v3448
    %v3465 = vmul.f32 %v3353, %v3393
    %v3466 = vmul.f32 %v3354, %v3394
    %v3467 = vmul.f32 %v3355, %v3395
    %v3468 = vmul.f32 %v3356, %v3396
    %v3469 = vmul.f32 %v3357, %v3397
    %v3470 = vmul.f32 %v3358, %v3398
    %v3471 = vmul.f32 %v3359, %v3399
    %v3472 = vmul.f32 %v3360, %v3400
    %v3473 = vadd.f32 %v3457, %v3465
    %v3474 = vadd.f32 %v3458, %v3466
    %v3475 = vadd.f32 %v3459, %v3467
    %v3476 = vadd.f32 %v3460, %v3468
    %v3477 = vadd.f32 %v3461, %v3469
    %v3478 = vadd.f32 %v3462, %v3470
    %v3479 = vadd.f32 %v3463, %v3471
    %v3480 = vadd.f32 %v3464, %v3472
    %v3481 = vtanh.pop %v3473
    %v3482 = vtanh.pop %v3474
    %v3483 = vtanh.pop %v3475
    %v3484 = vtanh.pop %v3476
    %v3485 = vtanh.pop %v3477
    %v3486 = vtanh.pop %v3478
    %v3487 = vtanh.pop %v3479
    %v3488 = vtanh.pop %v3480
    %v3489 = vmul.f32 %v3425, %v3481
    %v3490 = vmul.f32 %v3426, %v3482
    %v3491 = vmul.f32 %v3427, %v3483
    %v3492 = vmul.f32 %v3428, %v3484
    %v3493 = vmul.f32 %v3429, %v3485
    %v3494 = vmul.f32 %v3430, %v3486
    %v3495 = vmul.f32 %v3431, %v3487
    %v3496 = vmul.f32 %v3432, %v3488
    %v3505 = vrot.slane %v3490, 7
    %v3506 = vrot.slane %v3491, 6
    %v3507 = vsel %vm813, %v3506, %v3505
    %v3508 = vrot.slane %v3492, 5
    %v3509 = vsel %vm816, %v3508, %v3507
    %v3510 = vrot.slane %v3493, 4
    %v3511 = vsel %vm819, %v3510, %v3509
    %v3512 = vrot.slane %v3494, 3
    %v3513 = vsel %vm822, %v3512, %v3511
    %v3514 = vrot.slane %v3495, 2
    %v3515 = vsel %vm825, %v3514, %v3513
    %v3516 = vrot.slane %v3496, 1
    %v3517 = vsel %vm828, %v3516, %v3515
    %3520 = vst [vmem:[#allocation2 - $0x7] sm:$0x80] %v3489
    %3521 = vst [vmem:[#allocation2 + $0x1] sm:$0x7f] %v3517
    %v3530 = vrot.slane %v3474, 7
    %v3531 = vrot.slane %v3475, 6
    %v3532 = vsel %vm813, %v3531, %v3530
    %v3533 = vrot.slane %v3476, 5
    %v3534 = vsel %vm816, %v3533, %v3532
    %v3535 = vrot.slane %v3477, 4
    %v3536 = vsel %vm819, %v3535, %v3534
    %v3537 = vrot.slane %v3478, 3
    %v3538 = vsel %vm822, %v3537, %v3536
    %v3539 = vrot.slane %v3479, 2
    %v3540 = vsel %vm825, %v3539, %v3538
    %v3541 = vrot.slane %v3480, 1
    %v3542 = vsel %vm828, %v3541, %v3540
    %3545 = vst [vmem:[#allocation3 - $0x7] sm:$0x80] %v3473
    %3546 = vst [vmem:[#allocation3 + $0x1] sm:$0x7f] %v3542
    %v3555 = vrot.slane %v1173, 1
    %v3556 = vrot.slane %v1174, 1
    %v3557 = vrot.slane %v1175, 1
    %v3558 = vrot.slane %v1176, 1
    %v3559 = vrot.slane %v1177, 1
    %v3560 = vrot.slane %v1178, 1
    %v3561 = vrot.slane %v1179, 1
    %v3562 = vrot.slane %v1180, 1
    %v3571 = vrot.slane %v1559, 2
    %v3572 = vrot.slane %v1560, 2
    %v3573 = vrot.slane %v1561, 2
    %v3574 = vrot.slane %v1562, 2
    %v3575 = vrot.slane %v1563, 2
    %v3576 = vrot.slane %v1564, 2
    %v3577 = vrot.slane %v1565, 2
    %v3578 = vrot.slane %v1566, 2
    %v3587 = vrot.slane %v1945, 3
    %v3588 = vrot.slane %v1946, 3
    %v3589 = vrot.slane %v1947, 3
    %v3590 = vrot.slane %v1948, 3
    %v3591 = vrot.slane %v1949, 3
    %v3592 = vrot.slane %v1950, 3
    %v3593 = vrot.slane %v1951, 3
    %v3594 = vrot.slane %v1952, 3
    %v3603 = vrot.slane %v2331, 4
    %v3604 = vrot.slane %v2332, 4
    %v3605 = vrot.slane %v2333, 4
    %v3606 = vrot.slane %v2334, 4
    %v3607 = vrot.slane %v2335, 4
    %v3608 = vrot.slane %v2336, 4
    %v3609 = vrot.slane %v2337, 4
    %v3610 = vrot.slane %v2338, 4
    %v3619 = vrot.slane %v2717, 5
    %v3620 = vrot.slane %v2718, 5
    %v3621 = vrot.slane %v2719, 5
    %v3622 = vrot.slane %v2720, 5
    %v3623 = vrot.slane %v2721, 5
    %v3624 = vrot.slane %v2722, 5
    %v3625 = vrot.slane %v2723, 5
    %v3626 = vrot.slane %v2724, 5
    %v3635 = vrot.slane %v3103, 6
    %v3636 = vrot.slane %v3104, 6
    %v3637 = vrot.slane %v3105, 6
    %v3638 = vrot.slane %v3106, 6
    %v3639 = vrot.slane %v3107, 6
    %v3640 = vrot.slane %v3108, 6
    %v3641 = vrot.slane %v3109, 6
    %v3642 = vrot.slane %v3110, 6
    %v3643 = vrot.slane %v3489, 7
    %v3644 = vrot.slane %v3491, 7
    %v3645 = vrot.slane %v3492, 7
    %v3646 = vrot.slane %v3493, 7
    %v3647 = vrot.slane %v3494, 7
    %v3648 = vrot.slane %v3495, 7
    %v3649 = vrot.slane %v3496, 7
    %v3658 = vrot.slane %v781, 7
    %v3659 = vsel %vm813, %v3658, %v780
    %v3660 = vrot.slane %v782, 6
    %v3661 = vsel %vm816, %v3660, %v3659
    %v3662 = vrot.slane %v783, 5
    %v3663 = vsel %vm819, %v3662, %v3661
    %v3664 = vrot.slane %v784, 4
    %v3665 = vsel %vm822, %v3664, %v3663
    %v3666 = vrot.slane %v785, 3
    %v3667 = vsel %vm825, %v3666, %v3665
    %v3668 = vrot.slane %v786, 2
    %v3669 = vsel %vm828, %v3668, %v3667
    %v3670 = vrot.slane %v787, 1
    %v3671 = vsel %vm831, %v3670, %v3669
    %v3672 = vrot.slane %v3556, 7
    %v3673 = vsel %vm813, %v3672, %v3555
    %v3674 = vrot.slane %v3557, 6
    %v3675 = vsel %vm816, %v3674, %v3673
    %v3676 = vrot.slane %v3558, 5
    %v3677 = vsel %vm819, %v3676, %v3675
    %v3678 = vrot.slane %v3559, 4
    %v3679 = vsel %vm822, %v3678, %v3677
    %v3680 = vrot.slane %v3560, 3
    %v3681 = vsel %vm825, %v3680, %v3679
    %v3682 = vrot.slane %v3561, 2
    %v3683 = vsel %vm828, %v3682, %v3681
    %v3684 = vrot.slane %v3562, 1
    %v3685 = vsel %vm831, %v3684, %v3683
    %v3686 = vrot.slane %v3572, 7
    %v3687 = vsel %vm813, %v3686, %v3571
    %v3688 = vrot.slane %v3573, 6
    %v3689 = vsel %vm816, %v3688, %v3687
    %v3690 = vrot.slane %v3574, 5
    %v3691 = vsel %vm819, %v3690, %v3689
    %v3692 = vrot.slane %v3575, 4
    %v3693 = vsel %vm822, %v3692, %v3691
    %v3694 = vrot.slane %v3576, 3
    %v3695 = vsel %vm825, %v3694, %v3693
    %v3696 = vrot.slane %v3577, 2
    %v3697 = vsel %vm828, %v3696, %v3695
    %v3698 = vrot.slane %v3578, 1
    %v3699 = vsel %vm831, %v3698, %v3697
    %v3700 = vrot.slane %v3588, 7
    %v3701 = vsel %vm813, %v3700, %v3587
    %v3702 = vrot.slane %v3589, 6
    %v3703 = vsel %vm816, %v3702, %v3701
    %v3704 = vrot.slane %v3590, 5
    %v3705 = vsel %vm819, %v3704, %v3703
    %v3706 = vrot.slane %v3591, 4
    %v3707 = vsel %vm822, %v3706, %v3705
    %v3708 = vrot.slane %v3592, 3
    %v3709 = vsel %vm825, %v3708, %v3707
    %v3710 = vrot.slane %v3593, 2
    %v3711 = vsel %vm828, %v3710, %v3709
    %v3712 = vrot.slane %v3594, 1
    %v3713 = vsel %vm831, %v3712, %v3711
    %v3714 = vrot.slane %v3604, 7
    %v3715 = vsel %vm813, %v3714, %v3603
    %v3716 = vrot.slane %v3605, 6
    %v3717 = vsel %vm816, %v3716, %v3715
    %v3718 = vrot.slane %v3606, 5
    %v3719 = vsel %vm819, %v3718, %v3717
    %v3720 = vrot.slane %v3607, 4
    %v3721 = vsel %vm822, %v3720, %v3719
    %v3722 = vrot.slane %v3608, 3
    %v3723 = vsel %vm825, %v3722, %v3721
    %v3724 = vrot.slane %v3609, 2
    %v3725 = vsel %vm828, %v3724, %v3723
    %v3726 = vrot.slane %v3610, 1
    %v3727 = vsel %vm831, %v3726, %v3725
    %v3728 = vrot.slane %v3620, 7
    %v3729 = vsel %vm813, %v3728, %v3619
    %v3730 = vrot.slane %v3621, 6
    %v3731 = vsel %vm816, %v3730, %v3729
    %v3732 = vrot.slane %v3622, 5
    %v3733 = vsel %vm819, %v3732, %v3731
    %v3734 = vrot.slane %v3623, 4
    %v3735 = vsel %vm822, %v3734, %v3733
    %v3736 = vrot.slane %v3624, 3
    %v3737 = vsel %vm825, %v3736, %v3735
    %v3738 = vrot.slane %v3625, 2
    %v3739 = vsel %vm828, %v3738, %v3737
    %v3740 = vrot.slane %v3626, 1
    %v3741 = vsel %vm831, %v3740, %v3739
    %v3742 = vrot.slane %v3636, 7
    %v3743 = vsel %vm813, %v3742, %v3635
    %v3744 = vrot.slane %v3637, 6
    %v3745 = vsel %vm816, %v3744, %v3743
    %v3746 = vrot.slane %v3638, 5
    %v3747 = vsel %vm819, %v3746, %v3745
    %v3748 = vrot.slane %v3639, 4
    %v3749 = vsel %vm822, %v3748, %v3747
    %v3750 = vrot.slane %v3640, 3
    %v3751 = vsel %vm825, %v3750, %v3749
    %v3752 = vrot.slane %v3641, 2
    %v3753 = vsel %vm828, %v3752, %v3751
    %v3754 = vrot.slane %v3642, 1
    %v3755 = vsel %vm831, %v3754, %v3753
    %v3756 = vrot.slane %v3505, 7
    %v3757 = vsel %vm813, %v3756, %v3643
    %v3758 = vrot.slane %v3644, 6
    %v3759 = vsel %vm816, %v3758, %v3757
    %v3760 = vrot.slane %v3645, 5
    %v3761 = vsel %vm819, %v3760, %v3759
    %v3762 = vrot.slane %v3646, 4
    %v3763 = vsel %vm822, %v3762, %v3761
    %v3764 = vrot.slane %v3647, 3
    %v3765 = vsel %vm825, %v3764, %v3763
    %v3766 = vrot.slane %v3648, 2
    %v3767 = vsel %vm828, %v3766, %v3765
    %v3768 = vrot.slane %v3649, 1
    %v3769 = vsel %vm831, %v3768, %v3767
    %3778 = vst [vmem:[%s4] sm:$0xff] %v3671
    %3779 = vst [vmem:[%s4 + $0x8] sm:$0xff] %v3685
    %3780 = vst [vmem:[%s4 + $0x10] sm:$0xff] %v3699
    %3781 = vst [vmem:[%s4 + $0x18] sm:$0xff] %v3713
    %3782 = vst [vmem:[%s4 + $0x20] sm:$0xff] %v3727
    %3783 = vst [vmem:[%s4 + $0x28] sm:$0xff] %v3741
    %3784 = vst [vmem:[%s4 + $0x30] sm:$0xff] %v3755
    %3785 = vst [vmem:[%s4 + $0x38] sm:$0xff] %v3769
    // Predicated region
    $region26: #{lstmae_forward.4} parent=1 // pred_check
      _
    $region27: #{lstmae_forward.4} parent=1 // pred_check_branch
      %3787 = sbr.rel (0) target = $region29
    $region28: #{lstmae_forward.4} parent=1 // pred_region
      _
    $region29: #{lstmae_forward.4} parent=1 // pred_fallthru
      _
    // Predicated region
    $region30: #{lstmae_forward.4} parent=1 // pred_check
      _
    $region31: #{lstmae_forward.4} parent=1 // pred_check_branch
      %3789 = sbr.rel (0) target = $region33
    $region32: #{lstmae_forward.4} parent=1 // pred_region
      _
    $region33: #{lstmae_forward.4} parent=1 // pred_fallthru
      _
    %3790 = vsyncpa [#allocation5], 1

</llo_original>
